<compile_context>
chip_gen: v5e
topology: v5e:2x2
jax: 0.10.0
libtpu: 0.0.40
codegen_flags: <defaults>
</compile_context>

<pallas_src>
import jax
import jax.numpy as jnp
import numpy as np
from jax.experimental import pallas as pl
from jax.experimental.pallas import tpu as pltpu

# ---- static configuration (small demo shapes) ----
B = 2
IN_C = 16           # decoder (x) channels
OUT_C = 8           # out_channels
SKIP_C = 8          # skip_channels (= out_channels, default)
H = W = 8           # input spatial size
H2, W2 = 2 * H, 2 * W
N1 = H * W
N2 = H2 * W2
CAT_C = OUT_C + SKIP_C
PAD = 24            # >= W2 + 1, multiple of 8 so interior scratch rows are aligned
EPS = 1e-5
LOG2_W2 = 4
assert W2 == (1 << LOG2_W2)

# row offsets inside the packed (256, OUT_C) weight table
W_GATE_OFF = 0                       # 16 rows: [Wg (x_up part) ; Wx (skip part)]
W_PSI_OFF = W_GATE_OFF + CAT_C       # 8 rows, psi weight in column 0
W_C1_OFF = W_PSI_OFF + SKIP_C        # 144 rows: conv1 (tap, cin) x OUT_C
W_C2_OFF = W_C1_OFF + 9 * CAT_C      # 72 rows:  conv2 (tap, cin) x OUT_C
W_SC_OFF = W_C2_OFF + 9 * OUT_C      # 16 rows:  shortcut 1x1
W_REST_ROWS = W_SC_OFF + CAT_C       # = 256

# row indices inside the packed (16, OUT_C) bias/affine table
V_BT, V_BXG, V_BPSI, V_B1, V_G1, V_BE1, V_B2, V_G2, V_BE2, V_BSC = range(10)
VEC_ROWS = 16


# ============================ fused decoder-block kernel ============================
def decoder_kernel(xnn_ref, skip_ref, wct_ref, wrest_ref, vec_ref, out_ref,
                   pad_cat, pad_h, imcol1, imcol2):
    # ---- zero only the padded border rows (interior is fully rewritten below) ----
    pad_cat[0:PAD, :] = jnp.zeros((PAD, CAT_C), jnp.float32)
    pad_cat[PAD + N2:PAD + N2 + PAD, :] = jnp.zeros((PAD, CAT_C), jnp.float32)
    pad_h[0:PAD, :] = jnp.zeros((PAD, OUT_C), jnp.float32)
    pad_h[PAD + N2:PAD + N2 + PAD, :] = jnp.zeros((PAD, OUT_C), jnp.float32)

    xnn = xnn_ref[0]                     # (N2, IN_C)  nearest-neighbour upsampled x
    skip = skip_ref[0]                   # (N2, SKIP_C)

    # ---- iota-derived masks (no extra inputs) ----
    r = jax.lax.broadcasted_iota(jnp.int32, (N2, 1), 0)       # flat index n2 = h2*W2 + w2
    wcol = jnp.bitwise_and(r, W2 - 1)                          # w2
    ph = jnp.bitwise_and(jnp.right_shift(r, LOG2_W2), 1)       # h2 % 2
    pw = jnp.bitwise_and(r, 1)                                 # w2 % 2
    mask_l = jnp.where(wcol > 0, 1.0, 0.0)                     # kills dx = -1 wrap
    mask_r = jnp.where(wcol < W2 - 1, 1.0, 0.0)                # kills dx = +1 wrap

    # ---- ConvTranspose2d(k=2, s=2): one matmul + parity select ----
    # xup[n2, oc] = sum_ic x[h2//2, w2//2, ic] * Wt[ic, oc, h2%2, w2%2] + bt[oc]
    u = jnp.dot(xnn, wct_ref[...], preferred_element_type=jnp.float32)   # (N2, 4*OUT_C)
    xup = jnp.zeros((N2, OUT_C), jnp.float32)
    for dh in range(2):
        for dw in range(2):
            j = 2 * dh + dw
            m = jnp.where((ph == dh) & (pw == dw), 1.0, 0.0)
            xup = xup + m * u[:, j * OUT_C:(j + 1) * OUT_C]
    xup = xup + vec_ref[V_BT:V_BT + 1, :]

    # ---- attention gate: Wg(x_up) + Wx(skip) fused into one K=16 matmul ----
    pad_cat[PAD:PAD + N2, 0:OUT_C] = xup
    pad_cat[PAD:PAD + N2, OUT_C:CAT_C] = skip
    cat_gate = pad_cat[PAD:PAD + N2, :]                        # [x_up | skip]
    s = jnp.dot(cat_gate, wrest_ref[W_GATE_OFF:W_GATE_OFF + CAT_C, :],
                preferred_element_type=jnp.float32) + vec_ref[V_BXG:V_BXG + 1, :]
    s = jnp.maximum(s, 0.0)
    z = jnp.dot(s, wrest_ref[W_PSI_OFF:W_PSI_OFF + SKIP_C, :],
                preferred_element_type=jnp.float32)            # psi lives in column 0
    zz = z[:, 0:1] + vec_ref[V_BPSI:V_BPSI + 1, 0:1]
    e = jnp.exp(-jnp.abs(zz))                                  # EUP exp, never overflows
    alpha = jnp.where(zz >= 0.0, 1.0, e) / (1.0 + e)           # stable sigmoid
    gated = skip * alpha
    pad_cat[PAD:PAD + N2, OUT_C:CAT_C] = gated                 # pad_cat now = [x_up | gated]

    # ---- K-stacked im2col 3x3 convolution ----
    def conv3x3(pad_src, imcol, c, w_off, bias):
        # out(h,w) = sum_{dy,dx} in(h+dy, w+dx) @ W[dy,dx]; flat offset dy*W2+dx.
        # Vertical OOB -> zero border rows; horizontal wrap -> column masks.
        for k in range(9):
            dy, dx = k // 3 - 1, k % 3 - 1
            off = dy * W2 + dx
            v = pad_src[PAD + off:PAD + off + N2, :]
            if dx == -1:
                v = v * mask_l
            elif dx == 1:
                v = v * mask_r
            imcol[:, k * c:(k + 1) * c] = v
        return jnp.dot(imcol[...], wrest_ref[w_off:w_off + 9 * c, :],
                       preferred_element_type=jnp.float32) + bias

    def group_norm(v, g, be):
        # GroupNorm(1, C): normalize over all (C, H, W) of this batch element.
        mu = jnp.mean(v)
        var = jnp.mean((v - mu) * (v - mu))
        return (v - mu) * jax.lax.rsqrt(var + EPS) * g + be

    # ---- residual conv block ----
    h1 = conv3x3(pad_cat, imcol1, CAT_C, W_C1_OFF, vec_ref[V_B1:V_B1 + 1, :])
    h1 = jnp.maximum(group_norm(h1, vec_ref[V_G1:V_G1 + 1, :],
                                vec_ref[V_BE1:V_BE1 + 1, :]), 0.0)

    pad_h[PAD:PAD + N2, :] = h1
    h2 = conv3x3(pad_h, imcol2, OUT_C, W_C2_OFF, vec_ref[V_B2:V_B2 + 1, :])
    h2 = group_norm(h2, vec_ref[V_G2:V_G2 + 1, :], vec_ref[V_BE2:V_BE2 + 1, :])

    cat = pad_cat[PAD:PAD + N2, :]                             # [x_up | gated]
    sc = jnp.dot(cat, wrest_ref[W_SC_OFF:W_SC_OFF + CAT_C, :],
                 preferred_element_type=jnp.float32) + vec_ref[V_BSC:V_BSC + 1, :]

    out_ref[0] = jnp.maximum(h2 + sc, 0.0)


def attention_decoder_block(x_nn, skip_flat, wct, wrest, vecs):
    return pl.pallas_call(
        decoder_kernel,
        out_shape=jax.ShapeDtypeStruct((B, N2, OUT_C), jnp.float32),
        grid=(B,),
        in_specs=[
            pl.BlockSpec((1, N2, IN_C), lambda b: (b, 0, 0)),      # NN-upsampled x
            pl.BlockSpec((1, N2, SKIP_C), lambda b: (b, 0, 0)),    # skip features
            pl.BlockSpec((IN_C, 4 * OUT_C), lambda b: (0, 0)),     # packed conv-T weight
            pl.BlockSpec((W_REST_ROWS, OUT_C), lambda b: (0, 0)),  # packed weight table
            pl.BlockSpec((VEC_ROWS, OUT_C), lambda b: (0, 0)),     # packed bias/affine table
        ],
        out_specs=pl.BlockSpec((1, N2, OUT_C), lambda b: (b, 0, 0)),
        scratch_shapes=[
            pltpu.VMEM((N2 + 2 * PAD, CAT_C), jnp.float32),        # padded [x_up | gated]
            pltpu.VMEM((N2 + 2 * PAD, OUT_C), jnp.float32),        # padded h1
            pltpu.VMEM((N2, 9 * CAT_C), jnp.float32),              # im2col for conv1
            pltpu.VMEM((N2, 9 * OUT_C), jnp.float32),              # im2col for conv2
        ],
        compiler_params=pltpu.CompilerParams(dimension_semantics=("parallel",)),
    )(x_nn, skip_flat, wct, wrest, vecs)


# ===================================== driver =====================================
if __name__ == "__main__":
    key = jax.random.PRNGKey(0)
    keys = jax.random.split(key, 24)

    def rnd(k, shape, scale=0.1):
        return scale * jax.random.normal(k, shape, dtype=jnp.float32)

    # Parameters in PyTorch weight layouts (deterministic synthetic init).
    wt_t = rnd(keys[0], (IN_C, OUT_C, 2, 2))          # ConvTranspose2d weight
    bt_v = rnd(keys[1], (OUT_C,))
    wx_t = rnd(keys[2], (SKIP_C, SKIP_C, 1, 1))       # AttentionGate.Wx
    bx_v = rnd(keys[3], (SKIP_C,))
    wg_t = rnd(keys[4], (SKIP_C, OUT_C, 1, 1))        # AttentionGate.Wg
    bg_v = rnd(keys[5], (SKIP_C,))
    wpsi_t = rnd(keys[6], (1, SKIP_C, 1, 1))          # AttentionGate.psi
    bpsi_v = rnd(keys[7], (1,))
    w1_t = rnd(keys[8], (OUT_C, CAT_C, 3, 3))         # ResidualConvBlock.conv1
    b1_v = rnd(keys[9], (OUT_C,))
    g1_v = 1.0 + rnd(keys[10], (OUT_C,))              # GroupNorm(1, OUT_C) affine
    be1_v = rnd(keys[11], (OUT_C,))
    w2_t = rnd(keys[12], (OUT_C, OUT_C, 3, 3))        # ResidualConvBlock.conv2
    b2_v = rnd(keys[13], (OUT_C,))
    g2_v = 1.0 + rnd(keys[14], (OUT_C,))
    be2_v = rnd(keys[15], (OUT_C,))
    wsc_t = rnd(keys[16], (OUT_C, CAT_C, 1, 1))       # shortcut 1x1
    bsc_v = rnd(keys[17], (OUT_C,))

    x = jax.random.normal(keys[18], (B, H, W, IN_C), jnp.float32)         # NHWC
    skip = jax.random.normal(keys[19], (B, H2, W2, SKIP_C), jnp.float32)  # NHWC

    # ---- kernel-side packed parameter layouts ----
    wct = jnp.transpose(wt_t, (0, 2, 3, 1)).reshape(IN_C, 4 * OUT_C)  # cols = (dh, dw, oc)
    wg_m = wg_t[:, :, 0, 0].T                                         # (OUT_C, SKIP_C)
    wx_m = wx_t[:, :, 0, 0].T                                         # (SKIP_C, SKIP_C)
    wpsi_m = wpsi_t[:, :, 0, 0].T                                     # (SKIP_C, 1)
    w1s = jnp.transpose(w1_t, (2, 3, 1, 0)).reshape(9 * CAT_C, OUT_C)
    w2s = jnp.transpose(w2_t, (2, 3, 1, 0)).reshape(9 * OUT_C, OUT_C)
    wsc_m = wsc_t[:, :, 0, 0].T                                       # (CAT_C, OUT_C)

    wrest = jnp.concatenate([
        jnp.concatenate([wg_m, wx_m], axis=0),                                          # gate
        jnp.concatenate([wpsi_m, jnp.zeros((SKIP_C, OUT_C - 1), jnp.float32)], axis=1), # psi
        w1s, w2s, wsc_m,
    ], axis=0)
    assert wrest.shape == (W_REST_ROWS, OUT_C)

    vec_rows = [bt_v, bx_v + bg_v,
                jnp.concatenate([bpsi_v, jnp.zeros((OUT_C - 1,), jnp.float32)]),
                b1_v, g1_v, be1_v, b2_v, g2_v, be2_v, bsc_v]
    vecs = jnp.stack(vec_rows + [jnp.zeros((OUT_C,), jnp.float32)] * (VEC_ROWS - 10), axis=0)

    # TODO(synk): the 2x nearest-neighbour replication of x is done by XLA outside the
    # kernel (a single cheap broadcast fusion); folding it in-kernel would need a
    # sublane gather, which is not worth the lowering risk at these shapes.
    x_nn = jnp.repeat(jnp.repeat(x, 2, axis=1), 2, axis=2).reshape(B, N2, IN_C)
    skip_flat = skip.reshape(B, N2, SKIP_C)

    out_flat = attention_decoder_block(x_nn, skip_flat, wct, wrest, vecs)
    out = jax.block_until_ready(out_flat.reshape(B, H2, W2, OUT_C))

    # ---- pure-JAX reference (mirrors PyTorch semantics, f32) ----
    def reference(x, skip):
        xup = jnp.zeros((B, H2, W2, OUT_C), jnp.float32)
        for dh in range(2):
            for dw in range(2):
                xup = xup.at[:, dh::2, dw::2, :].set(
                    jnp.einsum('bhwi,io->bhwo', x, wt_t[:, :, dh, dw]))
        xup = xup + bt_v
        xp = jnp.einsum('bhwc,cd->bhwd', skip, wx_m) + bx_v
        gp = jnp.einsum('bhwc,cd->bhwd', xup, wg_m) + bg_v
        s = jax.nn.relu(xp + gp)
        alpha = jax.nn.sigmoid(jnp.einsum('bhwc,cd->bhwd', s, wpsi_m) + bpsi_v)
        gated = skip * alpha
        xcat = jnp.concatenate([xup, gated], axis=-1)

        def conv3x3(v, w_torch, b):
            w_hwio = jnp.transpose(w_torch, (2, 3, 1, 0))
            return jax.lax.conv_general_dilated(
                v, w_hwio, (1, 1), ((1, 1), (1, 1)),
                dimension_numbers=('NHWC', 'HWIO', 'NHWC')) + b

        def gn(v, g, b):
            mu = v.mean(axis=(1, 2, 3), keepdims=True)
            var = ((v - mu) ** 2).mean(axis=(1, 2, 3), keepdims=True)
            return (v - mu) * jax.lax.rsqrt(var + EPS) * g + b

        h = jax.nn.relu(gn(conv3x3(xcat, w1_t, b1_v), g1_v, be1_v))
        h2 = gn(conv3x3(h, w2_t, b2_v), g2_v, be2_v)
        sc = jnp.einsum('bhwc,cd->bhwd', xcat, wsc_m) + bsc_v
        return jax.nn.relu(h2 + sc)

    ref = jax.block_until_ready(reference(x, skip))
    err = float(jnp.max(jnp.abs(out - ref)))
    if not np.isfinite(err) or err > 1e-2:
        raise AssertionError(f"Pallas output mismatch, max abs err = {err}")
    print("KERNEL_OK")
</pallas_src>

<mosaic_0001>
module attributes {stable_mosaic.version = 11 : i64} {
  func.func @decoder_kernel(%arg0: i32, %arg1: memref<1x256x16xf32, #tpu.memory_space<vmem>>, %arg2: memref<1x256x8xf32, #tpu.memory_space<vmem>>, %arg3: memref<16x32xf32, #tpu.memory_space<vmem>>, %arg4: memref<256x8xf32, #tpu.memory_space<vmem>>, %arg5: memref<16x8xf32, #tpu.memory_space<vmem>>, %arg6: memref<1x256x8xf32, #tpu.memory_space<vmem>>, %arg7: memref<304x16xf32, #tpu.memory_space<vmem>>, %arg8: memref<304x8xf32, #tpu.memory_space<vmem>>, %arg9: memref<256x144xf32, #tpu.memory_space<vmem>>, %arg10: memref<256x72xf32, #tpu.memory_space<vmem>>) attributes {dimension_semantics = [#tpu.dimension_semantics<parallel>], iteration_bounds = array<i64: 2>, scalar_prefetch = 0 : i64, scratch_operands = 4 : i64, tpu.core_type = #tpu.core_type<tc>, window_params = [{transform_indices = @transform_0, window_bounds = array<i64: 1, 256, 16>}, {transform_indices = @transform_1, window_bounds = array<i64: 1, 256, 8>}, {pipeline_mode = #tpu.pipeline_mode<synchronous>, transform_indices = @transform_2, window_bounds = array<i64: 16, 32>}, {pipeline_mode = #tpu.pipeline_mode<synchronous>, transform_indices = @transform_3, window_bounds = array<i64: 256, 8>}, {pipeline_mode = #tpu.pipeline_mode<synchronous>, transform_indices = @transform_4, window_bounds = array<i64: 16, 8>}, {transform_indices = @transform_5, window_bounds = array<i64: 1, 256, 8>}]} {
    %cst = arith.constant 0.000000e+00 : f32
    %0 = vector.broadcast %cst : f32 to vector<24x16xf32>
    %c0 = arith.constant 0 : index
    %c0_0 = arith.constant 0 : index
    %1 = vector.load %arg7[%c0, %c0_0] : memref<304x16xf32, #tpu.memory_space<vmem>>, vector<24x16xf32>
    tpu.vector_store %arg7[%c0, %c0_0], %0 {strides = array<i32>} : memref<304x16xf32, #tpu.memory_space<vmem>>, vector<24x16xf32>,
    %cst_1 = arith.constant 0.000000e+00 : f32
    %2 = vector.broadcast %cst_1 : f32 to vector<24x16xf32>
    %c280 = arith.constant 280 : index
    %c0_2 = arith.constant 0 : index
    %3 = vector.load %arg7[%c280, %c0_2] : memref<304x16xf32, #tpu.memory_space<vmem>>, vector<24x16xf32>
    tpu.vector_store %arg7[%c280, %c0_2], %2 {strides = array<i32>} : memref<304x16xf32, #tpu.memory_space<vmem>>, vector<24x16xf32>,
    %cst_3 = arith.constant 0.000000e+00 : f32
    %4 = vector.broadcast %cst_3 : f32 to vector<24x8xf32>
    %c0_4 = arith.constant 0 : index
    %c0_5 = arith.constant 0 : index
    %5 = vector.load %arg8[%c0_4, %c0_5] : memref<304x8xf32, #tpu.memory_space<vmem>>, vector<24x8xf32>
    tpu.vector_store %arg8[%c0_4, %c0_5], %4 {strides = array<i32>} : memref<304x8xf32, #tpu.memory_space<vmem>>, vector<24x8xf32>,
    %cst_6 = arith.constant 0.000000e+00 : f32
    %6 = vector.broadcast %cst_6 : f32 to vector<24x8xf32>
    %c280_7 = arith.constant 280 : index
    %c0_8 = arith.constant 0 : index
    %7 = vector.load %arg8[%c280_7, %c0_8] : memref<304x8xf32, #tpu.memory_space<vmem>>, vector<24x8xf32>
    tpu.vector_store %arg8[%c280_7, %c0_8], %6 {strides = array<i32>} : memref<304x8xf32, #tpu.memory_space<vmem>>, vector<24x8xf32>,
    %c0_9 = arith.constant 0 : index
    %c0_10 = arith.constant 0 : index
    %c0_11 = arith.constant 0 : index
    %8 = vector.load %arg1[%c0_9, %c0_10, %c0_11] : memref<1x256x16xf32, #tpu.memory_space<vmem>>, vector<1x256x16xf32>
    %9 = vector.shape_cast %8 : vector<1x256x16xf32> to vector<256x16xf32>
    %c0_12 = arith.constant 0 : index
    %c0_13 = arith.constant 0 : index
    %c0_14 = arith.constant 0 : index
    %10 = vector.load %arg2[%c0_12, %c0_13, %c0_14] : memref<1x256x8xf32, #tpu.memory_space<vmem>>, vector<1x256x8xf32>
    %11 = vector.shape_cast %10 : vector<1x256x8xf32> to vector<256x8xf32>
    %12 = tpu.iota {dimensions = array<i32: 0>} : vector<256x1xi32>
    %c15_i32 = arith.constant 15 : i32
    %13 = vector.broadcast %c15_i32 : i32 to vector<256x1xi32>
    %14 = arith.andi %12, %13 : vector<256x1xi32>
    %c4_i32 = arith.constant 4 : i32
    %15 = vector.broadcast %c4_i32 : i32 to vector<256x1xi32>
    %16 = arith.shrsi %12, %15 : vector<256x1xi32>
    %c1_i32 = arith.constant 1 : i32
    %17 = vector.broadcast %c1_i32 : i32 to vector<256x1xi32>
    %18 = arith.andi %16, %17 : vector<256x1xi32>
    %c1_i32_15 = arith.constant 1 : i32
    %19 = vector.broadcast %c1_i32_15 : i32 to vector<256x1xi32>
    %20 = arith.andi %12, %19 : vector<256x1xi32>
    %c0_i32 = arith.constant 0 : i32
    %21 = vector.broadcast %c0_i32 : i32 to vector<256x1xi32>
    %22 = arith.cmpi sgt, %14, %21 : vector<256x1xi32>
    %cst_16 = arith.constant 1.000000e+00 : f32
    %cst_17 = arith.constant 0.000000e+00 : f32
    %23 = vector.broadcast %cst_16 : f32 to vector<256x1xf32>
    %24 = vector.broadcast %cst_17 : f32 to vector<256x1xf32>
    %25 = arith.select %22, %23, %24 : vector<256x1xi1>, vector<256x1xf32>
    %c15_i32_18 = arith.constant 15 : i32
    %26 = vector.broadcast %c15_i32_18 : i32 to vector<256x1xi32>
    %27 = arith.cmpi slt, %14, %26 : vector<256x1xi32>
    %cst_19 = arith.constant 1.000000e+00 : f32
    %cst_20 = arith.constant 0.000000e+00 : f32
    %28 = vector.broadcast %cst_19 : f32 to vector<256x1xf32>
    %29 = vector.broadcast %cst_20 : f32 to vector<256x1xf32>
    %30 = arith.select %27, %28, %29 : vector<256x1xi1>, vector<256x1xf32>
    %c0_21 = arith.constant 0 : index
    %c0_22 = arith.constant 0 : index
    %31 = vector.load %arg3[%c0_21, %c0_22] : memref<16x32xf32, #tpu.memory_space<vmem>>, vector<16x32xf32>
    %cst_23 = arith.constant dense<0.000000e+00> : vector<256x32xf32>
    %32 = tpu.matmul %9, %31, %cst_23 {dimension_numbers = #tpu.dot_dimension_numbers<[1], [0], [0], [1], [0, 0, 1, 1], [], []>} : vector<256x16xf32>, vector<16x32xf32>, vector<256x32xf32> -> vector<256x32xf32>
    %cst_24 = arith.constant 0.000000e+00 : f32
    %33 = vector.broadcast %cst_24 : f32 to vector<256x8xf32>
    %c0_i32_25 = arith.constant 0 : i32
    %34 = vector.broadcast %c0_i32_25 : i32 to vector<256x1xi32>
    %35 = arith.cmpi eq, %18, %34 : vector<256x1xi32>
    %c0_i32_26 = arith.constant 0 : i32
    %36 = vector.broadcast %c0_i32_26 : i32 to vector<256x1xi32>
    %37 = arith.cmpi eq, %20, %36 : vector<256x1xi32>
    %38 = arith.andi %35, %37 : vector<256x1xi1>
    %cst_27 = arith.constant 1.000000e+00 : f32
    %cst_28 = arith.constant 0.000000e+00 : f32
    %39 = vector.broadcast %cst_27 : f32 to vector<256x1xf32>
    %40 = vector.broadcast %cst_28 : f32 to vector<256x1xf32>
    %41 = arith.select %38, %39, %40 : vector<256x1xi1>, vector<256x1xf32>
    %42 = vector.extract_strided_slice %32 {offsets = [0, 0], sizes = [256, 8], strides = [1, 1]} : vector<256x32xf32> to vector<256x8xf32>
    %43 = vector.broadcast %41 : vector<256x1xf32> to vector<256x8xf32>
    %44 = arith.mulf %43, %42 : vector<256x8xf32>
    %45 = arith.addf %33, %44 : vector<256x8xf32>
    %c0_i32_29 = arith.constant 0 : i32
    %46 = vector.broadcast %c0_i32_29 : i32 to vector<256x1xi32>
    %47 = arith.cmpi eq, %18, %46 : vector<256x1xi32>
    %c1_i32_30 = arith.constant 1 : i32
    %48 = vector.broadcast %c1_i32_30 : i32 to vector<256x1xi32>
    %49 = arith.cmpi eq, %20, %48 : vector<256x1xi32>
    %50 = arith.andi %47, %49 : vector<256x1xi1>
    %cst_31 = arith.constant 1.000000e+00 : f32
    %cst_32 = arith.constant 0.000000e+00 : f32
    %51 = vector.broadcast %cst_31 : f32 to vector<256x1xf32>
    %52 = vector.broadcast %cst_32 : f32 to vector<256x1xf32>
    %53 = arith.select %50, %51, %52 : vector<256x1xi1>, vector<256x1xf32>
    %54 = vector.extract_strided_slice %32 {offsets = [0, 8], sizes = [256, 8], strides = [1, 1]} : vector<256x32xf32> to vector<256x8xf32>
    %55 = vector.broadcast %53 : vector<256x1xf32> to vector<256x8xf32>
    %56 = arith.mulf %55, %54 : vector<256x8xf32>
    %57 = arith.addf %45, %56 : vector<256x8xf32>
    %c1_i32_33 = arith.constant 1 : i32
    %58 = vector.broadcast %c1_i32_33 : i32 to vector<256x1xi32>
    %59 = arith.cmpi eq, %18, %58 : vector<256x1xi32>
    %c0_i32_34 = arith.constant 0 : i32
    %60 = vector.broadcast %c0_i32_34 : i32 to vector<256x1xi32>
    %61 = arith.cmpi eq, %20, %60 : vector<256x1xi32>
    %62 = arith.andi %59, %61 : vector<256x1xi1>
    %cst_35 = arith.constant 1.000000e+00 : f32
    %cst_36 = arith.constant 0.000000e+00 : f32
    %63 = vector.broadcast %cst_35 : f32 to vector<256x1xf32>
    %64 = vector.broadcast %cst_36 : f32 to vector<256x1xf32>
    %65 = arith.select %62, %63, %64 : vector<256x1xi1>, vector<256x1xf32>
    %66 = vector.extract_strided_slice %32 {offsets = [0, 16], sizes = [256, 8], strides = [1, 1]} : vector<256x32xf32> to vector<256x8xf32>
    %67 = vector.broadcast %65 : vector<256x1xf32> to vector<256x8xf32>
    %68 = arith.mulf %67, %66 : vector<256x8xf32>
    %69 = arith.addf %57, %68 : vector<256x8xf32>
    %c1_i32_37 = arith.constant 1 : i32
    %70 = vector.broadcast %c1_i32_37 : i32 to vector<256x1xi32>
    %71 = arith.cmpi eq, %18, %70 : vector<256x1xi32>
    %c1_i32_38 = arith.constant 1 : i32
    %72 = vector.broadcast %c1_i32_38 : i32 to vector<256x1xi32>
    %73 = arith.cmpi eq, %20, %72 : vector<256x1xi32>
    %74 = arith.andi %71, %73 : vector<256x1xi1>
    %cst_39 = arith.constant 1.000000e+00 : f32
    %cst_40 = arith.constant 0.000000e+00 : f32
    %75 = vector.broadcast %cst_39 : f32 to vector<256x1xf32>
    %76 = vector.broadcast %cst_40 : f32 to vector<256x1xf32>
    %77 = arith.select %74, %75, %76 : vector<256x1xi1>, vector<256x1xf32>
    %78 = vector.extract_strided_slice %32 {offsets = [0, 24], sizes = [256, 8], strides = [1, 1]} : vector<256x32xf32> to vector<256x8xf32>
    %79 = vector.broadcast %77 : vector<256x1xf32> to vector<256x8xf32>
    %80 = arith.mulf %79, %78 : vector<256x8xf32>
    %81 = arith.addf %69, %80 : vector<256x8xf32>
    %c0_41 = arith.constant 0 : index
    %c0_42 = arith.constant 0 : index
    %82 = vector.load %arg5[%c0_41, %c0_42] : memref<16x8xf32, #tpu.memory_space<vmem>>, vector<1x8xf32>
    %83 = vector.broadcast %82 : vector<1x8xf32> to vector<256x8xf32>
    %84 = arith.addf %81, %83 : vector<256x8xf32>
    %c24 = arith.constant 24 : index
    %c0_43 = arith.constant 0 : index
    %85 = vector.load %arg7[%c24, %c0_43] : memref<304x16xf32, #tpu.memory_space<vmem>>, vector<256x8xf32>
    tpu.vector_store %arg7[%c24, %c0_43], %84 {strides = array<i32>} : memref<304x16xf32, #tpu.memory_space<vmem>>, vector<256x8xf32>,
    %c24_44 = arith.constant 24 : index
    %c8 = arith.constant 8 : index
    %86 = vector.load %arg7[%c24_44, %c8] : memref<304x16xf32, #tpu.memory_space<vmem>>, vector<256x8xf32>
    tpu.vector_store %arg7[%c24_44, %c8], %11 {strides = array<i32>} : memref<304x16xf32, #tpu.memory_space<vmem>>, vector<256x8xf32>,
    %c24_45 = arith.constant 24 : index
    %c0_46 = arith.constant 0 : index
    %87 = vector.load %arg7[%c24_45, %c0_46] : memref<304x16xf32, #tpu.memory_space<vmem>>, vector<256x16xf32>
    %c0_47 = arith.constant 0 : index
    %c0_48 = arith.constant 0 : index
    %88 = vector.load %arg4[%c0_47, %c0_48] : memref<256x8xf32, #tpu.memory_space<vmem>>, vector<16x8xf32>
    %cst_49 = arith.constant dense<0.000000e+00> : vector<256x8xf32>
    %89 = tpu.matmul %87, %88, %cst_49 {dimension_numbers = #tpu.dot_dimension_numbers<[1], [0], [0], [1], [0, 0, 1, 1], [], []>} : vector<256x16xf32>, vector<16x8xf32>, vector<256x8xf32> -> vector<256x8xf32>
    %c1 = arith.constant 1 : index
    %c0_50 = arith.constant 0 : index
    %90 = vector.load %arg5[%c1, %c0_50] : memref<16x8xf32, #tpu.memory_space<vmem>>, vector<1x8xf32>
    %91 = vector.broadcast %90 : vector<1x8xf32> to vector<256x8xf32>
    %92 = arith.addf %89, %91 : vector<256x8xf32>
    %cst_51 = arith.constant 0.000000e+00 : f32
    %93 = vector.broadcast %cst_51 : f32 to vector<256x8xf32>
    %94 = arith.maximumf %92, %93 : vector<256x8xf32>
    %c16 = arith.constant 16 : index
    %c0_52 = arith.constant 0 : index
    %95 = vector.load %arg4[%c16, %c0_52] : memref<256x8xf32, #tpu.memory_space<vmem>>, vector<8x8xf32>
    %cst_53 = arith.constant dense<0.000000e+00> : vector<256x8xf32>
    %96 = tpu.matmul %94, %95, %cst_53 {dimension_numbers = #tpu.dot_dimension_numbers<[1], [0], [0], [1], [0, 0, 1, 1], [], []>} : vector<256x8xf32>, vector<8x8xf32>, vector<256x8xf32> -> vector<256x8xf32>
    %97 = vector.extract_strided_slice %96 {offsets = [0, 0], sizes = [256, 1], strides = [1, 1]} : vector<256x8xf32> to vector<256x1xf32>
    %c2 = arith.constant 2 : index
    %c0_54 = arith.constant 0 : index
    %98 = vector.load %arg5[%c2, %c0_54] : memref<16x8xf32, #tpu.memory_space<vmem>>, vector<1x1xf32>
    %99 = vector.broadcast %98 : vector<1x1xf32> to vector<256x1xf32>
    %100 = arith.addf %97, %99 : vector<256x1xf32>
    %101 = math.absf %100 : vector<256x1xf32>
    %cst_55 = arith.constant 0.000000e+00 : f32
    %102 = vector.broadcast %cst_55 : f32 to vector<256x1xf32>
    %103 = arith.subf %102, %101 : vector<256x1xf32>
    %104 = math.exp %103 : vector<256x1xf32>
    %cst_56 = arith.constant 0.000000e+00 : f32
    %105 = vector.broadcast %cst_56 : f32 to vector<256x1xf32>
    %106 = arith.cmpf oge, %100, %105 : vector<256x1xf32>
    %cst_57 = arith.constant 1.000000e+00 : f32
    %107 = vector.broadcast %cst_57 : f32 to vector<256x1xf32>
    %108 = arith.select %106, %107, %104 : vector<256x1xi1>, vector<256x1xf32>
    %cst_58 = arith.constant 1.000000e+00 : f32
    %109 = vector.broadcast %cst_58 : f32 to vector<256x1xf32>
    %110 = arith.addf %109, %104 : vector<256x1xf32>
    %111 = arith.divf %108, %110 : vector<256x1xf32>
    %112 = vector.broadcast %111 : vector<256x1xf32> to vector<256x8xf32>
    %113 = arith.mulf %11, %112 : vector<256x8xf32>
    %c24_59 = arith.constant 24 : index
    %c8_60 = arith.constant 8 : index
    %114 = vector.load %arg7[%c24_59, %c8_60] : memref<304x16xf32, #tpu.memory_space<vmem>>, vector<256x8xf32>
    tpu.vector_store %arg7[%c24_59, %c8_60], %113 {strides = array<i32>} : memref<304x16xf32, #tpu.memory_space<vmem>>, vector<256x8xf32>,
    %c3 = arith.constant 3 : index
    %c0_61 = arith.constant 0 : index
    %115 = vector.load %arg5[%c3, %c0_61] : memref<16x8xf32, #tpu.memory_space<vmem>>, vector<1x8xf32>
    %c7 = arith.constant 7 : index
    %c0_62 = arith.constant 0 : index
    %116 = vector.load %arg7[%c7, %c0_62] : memref<304x16xf32, #tpu.memory_space<vmem>>, vector<256x16xf32>
    %117 = vector.broadcast %25 : vector<256x1xf32> to vector<256x16xf32>
    %118 = arith.mulf %116, %117 : vector<256x16xf32>
    %c0_63 = arith.constant 0 : index
    %c0_64 = arith.constant 0 : index
    %119 = vector.load %arg9[%c0_63, %c0_64] : memref<256x144xf32, #tpu.memory_space<vmem>>, vector<256x16xf32>
    tpu.vector_store %arg9[%c0_63, %c0_64], %118 {strides = array<i32>} : memref<256x144xf32, #tpu.memory_space<vmem>>, vector<256x16xf32>,
    %c8_65 = arith.constant 8 : index
    %c0_66 = arith.constant 0 : index
    %120 = vector.load %arg7[%c8_65, %c0_66] : memref<304x16xf32, #tpu.memory_space<vmem>>, vector<256x16xf32>
    %c0_67 = arith.constant 0 : index
    %c16_68 = arith.constant 16 : index
    %121 = vector.load %arg9[%c0_67, %c16_68] : memref<256x144xf32, #tpu.memory_space<vmem>>, vector<256x16xf32>
    tpu.vector_store %arg9[%c0_67, %c16_68], %120 {strides = array<i32>} : memref<256x144xf32, #tpu.memory_space<vmem>>, vector<256x16xf32>,
    %c9 = arith.constant 9 : index
    %c0_69 = arith.constant 0 : index
    %122 = vector.load %arg7[%c9, %c0_69] : memref<304x16xf32, #tpu.memory_space<vmem>>, vector<256x16xf32>
    %123 = vector.broadcast %30 : vector<256x1xf32> to vector<256x16xf32>
    %124 = arith.mulf %122, %123 : vector<256x16xf32>
    %c0_70 = arith.constant 0 : index
    %c32 = arith.constant 32 : index
    %125 = vector.load %arg9[%c0_70, %c32] : memref<256x144xf32, #tpu.memory_space<vmem>>, vector<256x16xf32>
    tpu.vector_store %arg9[%c0_70, %c32], %124 {strides = array<i32>} : memref<256x144xf32, #tpu.memory_space<vmem>>, vector<256x16xf32>,
    %c23 = arith.constant 23 : index
    %c0_71 = arith.constant 0 : index
    %126 = vector.load %arg7[%c23, %c0_71] : memref<304x16xf32, #tpu.memory_space<vmem>>, vector<256x16xf32>
    %127 = vector.broadcast %25 : vector<256x1xf32> to vector<256x16xf32>
    %128 = arith.mulf %126, %127 : vector<256x16xf32>
    %c0_72 = arith.constant 0 : index
    %c48 = arith.constant 48 : index
    %129 = vector.load %arg9[%c0_72, %c48] : memref<256x144xf32, #tpu.memory_space<vmem>>, vector<256x16xf32>
    tpu.vector_store %arg9[%c0_72, %c48], %128 {strides = array<i32>} : memref<256x144xf32, #tpu.memory_space<vmem>>, vector<256x16xf32>,
    %c24_73 = arith.constant 24 : index
    %c0_74 = arith.constant 0 : index
    %130 = vector.load %arg7[%c24_73, %c0_74] : memref<304x16xf32, #tpu.memory_space<vmem>>, vector<256x16xf32>
    %c0_75 = arith.constant 0 : index
    %c64 = arith.constant 64 : index
    %131 = vector.load %arg9[%c0_75, %c64] : memref<256x144xf32, #tpu.memory_space<vmem>>, vector<256x16xf32>
    tpu.vector_store %arg9[%c0_75, %c64], %130 {strides = array<i32>} : memref<256x144xf32, #tpu.memory_space<vmem>>, vector<256x16xf32>,
    %c25 = arith.constant 25 : index
    %c0_76 = arith.constant 0 : index
    %132 = vector.load %arg7[%c25, %c0_76] : memref<304x16xf32, #tpu.memory_space<vmem>>, vector<256x16xf32>
    %133 = vector.broadcast %30 : vector<256x1xf32> to vector<256x16xf32>
    %134 = arith.mulf %132, %133 : vector<256x16xf32>
    %c0_77 = arith.constant 0 : index
    %c80 = arith.constant 80 : index
    %135 = vector.load %arg9[%c0_77, %c80] : memref<256x144xf32, #tpu.memory_space<vmem>>, vector<256x16xf32>
    tpu.vector_store %arg9[%c0_77, %c80], %134 {strides = array<i32>} : memref<256x144xf32, #tpu.memory_space<vmem>>, vector<256x16xf32>,
    %c39 = arith.constant 39 : index
    %c0_78 = arith.constant 0 : index
    %136 = vector.load %arg7[%c39, %c0_78] : memref<304x16xf32, #tpu.memory_space<vmem>>, vector<256x16xf32>
    %137 = vector.broadcast %25 : vector<256x1xf32> to vector<256x16xf32>
    %138 = arith.mulf %136, %137 : vector<256x16xf32>
    %c0_79 = arith.constant 0 : index
    %c96 = arith.constant 96 : index
    %139 = vector.load %arg9[%c0_79, %c96] : memref<256x144xf32, #tpu.memory_space<vmem>>, vector<256x16xf32>
    tpu.vector_store %arg9[%c0_79, %c96], %138 {strides = array<i32>} : memref<256x144xf32, #tpu.memory_space<vmem>>, vector<256x16xf32>,
    %c40 = arith.constant 40 : index
    %c0_80 = arith.constant 0 : index
    %140 = vector.load %arg7[%c40, %c0_80] : memref<304x16xf32, #tpu.memory_space<vmem>>, vector<256x16xf32>
    %c0_81 = arith.constant 0 : index
    %c112 = arith.constant 112 : index
    %141 = vector.load %arg9[%c0_81, %c112] : memref<256x144xf32, #tpu.memory_space<vmem>>, vector<256x16xf32>
    tpu.vector_store %arg9[%c0_81, %c112], %140 {strides = array<i32>} : memref<256x144xf32, #tpu.memory_space<vmem>>, vector<256x16xf32>,
    %c41 = arith.constant 41 : index
    %c0_82 = arith.constant 0 : index
    %142 = vector.load %arg7[%c41, %c0_82] : memref<304x16xf32, #tpu.memory_space<vmem>>, vector<256x16xf32>
    %143 = vector.broadcast %30 : vector<256x1xf32> to vector<256x16xf32>
    %144 = arith.mulf %142, %143 : vector<256x16xf32>
    %c0_83 = arith.constant 0 : index
    %c128 = arith.constant 128 : index
    %145 = vector.load %arg9[%c0_83, %c128] : memref<256x144xf32, #tpu.memory_space<vmem>>, vector<256x16xf32>
    tpu.vector_store %arg9[%c0_83, %c128], %144 {strides = array<i32>} : memref<256x144xf32, #tpu.memory_space<vmem>>, vector<256x16xf32>,
    %c0_84 = arith.constant 0 : index
    %c0_85 = arith.constant 0 : index
    %146 = vector.load %arg9[%c0_84, %c0_85] : memref<256x144xf32, #tpu.memory_space<vmem>>, vector<256x144xf32>
    %c24_86 = arith.constant 24 : index
    %c0_87 = arith.constant 0 : index
    %147 = vector.load %arg4[%c24_86, %c0_87] : memref<256x8xf32, #tpu.memory_space<vmem>>, vector<144x8xf32>
    %cst_88 = arith.constant dense<0.000000e+00> : vector<256x8xf32>
    %148 = tpu.matmul %146, %147, %cst_88 {dimension_numbers = #tpu.dot_dimension_numbers<[1], [0], [0], [1], [0, 0, 1, 1], [], []>} : vector<256x144xf32>, vector<144x8xf32>, vector<256x8xf32> -> vector<256x8xf32>
    %149 = vector.broadcast %115 : vector<1x8xf32> to vector<256x8xf32>
    %150 = arith.addf %148, %149 : vector<256x8xf32>
    %c4 = arith.constant 4 : index
    %c0_89 = arith.constant 0 : index
    %151 = vector.load %arg5[%c4, %c0_89] : memref<16x8xf32, #tpu.memory_space<vmem>>, vector<1x8xf32>
    %c5 = arith.constant 5 : index
    %c0_90 = arith.constant 0 : index
    %152 = vector.load %arg5[%c5, %c0_90] : memref<16x8xf32, #tpu.memory_space<vmem>>, vector<1x8xf32>
    %153 = vector.shape_cast %150 : vector<256x8xf32> to vector<1x256x8xf32>
    %cst_91 = arith.constant dense<0.000000e+00> : vector<1xf32>
    %154 = vector.multi_reduction <add>, %153, %cst_91 [1, 2] : vector<1x256x8xf32> to vector<1xf32>
    %155 = vector.shape_cast %154 : vector<1xf32> to vector<1x1x1xf32>
    %156 = vector.extract %155[0, 0, 0] : f32 from vector<1x1x1xf32>
    %cst_92 = arith.constant 2.048000e+03 : f32
    %157 = arith.divf %156, %cst_92 : f32
    %158 = vector.broadcast %157 : f32 to vector<256x8xf32>
    %159 = arith.subf %150, %158 : vector<256x8xf32>
    %160 = vector.broadcast %157 : f32 to vector<256x8xf32>
    %161 = arith.subf %150, %160 : vector<256x8xf32>
    %162 = arith.mulf %159, %161 : vector<256x8xf32>
    %163 = vector.shape_cast %162 : vector<256x8xf32> to vector<1x256x8xf32>
    %cst_93 = arith.constant dense<0.000000e+00> : vector<1xf32>
    %164 = vector.multi_reduction <add>, %163, %cst_93 [1, 2] : vector<1x256x8xf32> to vector<1xf32>
    %165 = vector.shape_cast %164 : vector<1xf32> to vector<1x1x1xf32>
    %166 = vector.extract %165[0, 0, 0] : f32 from vector<1x1x1xf32>
    %cst_94 = arith.constant 2.048000e+03 : f32
    %167 = arith.divf %166, %cst_94 : f32
    %168 = vector.broadcast %157 : f32 to vector<256x8xf32>
    %169 = arith.subf %150, %168 : vector<256x8xf32>
    %cst_95 = arith.constant 9.99999974E-6 : f32
    %170 = arith.addf %167, %cst_95 : f32
    %171 = math.rsqrt %170 : f32
    %172 = vector.broadcast %171 : f32 to vector<256x8xf32>
    %173 = arith.mulf %169, %172 : vector<256x8xf32>
    %174 = vector.broadcast %151 : vector<1x8xf32> to vector<256x8xf32>
    %175 = arith.mulf %173, %174 : vector<256x8xf32>
    %176 = vector.broadcast %152 : vector<1x8xf32> to vector<256x8xf32>
    %177 = arith.addf %175, %176 : vector<256x8xf32>
    %cst_96 = arith.constant 0.000000e+00 : f32
    %178 = vector.broadcast %cst_96 : f32 to vector<256x8xf32>
    %179 = arith.maximumf %177, %178 : vector<256x8xf32>
    %c24_97 = arith.constant 24 : index
    %c0_98 = arith.constant 0 : index
    %180 = vector.load %arg8[%c24_97, %c0_98] : memref<304x8xf32, #tpu.memory_space<vmem>>, vector<256x8xf32>
    tpu.vector_store %arg8[%c24_97, %c0_98], %179 {strides = array<i32>} : memref<304x8xf32, #tpu.memory_space<vmem>>, vector<256x8xf32>,
    %c6 = arith.constant 6 : index
    %c0_99 = arith.constant 0 : index
    %181 = vector.load %arg5[%c6, %c0_99] : memref<16x8xf32, #tpu.memory_space<vmem>>, vector<1x8xf32>
    %c7_100 = arith.constant 7 : index
    %c0_101 = arith.constant 0 : index
    %182 = vector.load %arg8[%c7_100, %c0_101] : memref<304x8xf32, #tpu.memory_space<vmem>>, vector<256x8xf32>
    %183 = vector.broadcast %25 : vector<256x1xf32> to vector<256x8xf32>
    %184 = arith.mulf %182, %183 : vector<256x8xf32>
    %c0_102 = arith.constant 0 : index
    %c0_103 = arith.constant 0 : index
    %185 = vector.load %arg10[%c0_102, %c0_103] : memref<256x72xf32, #tpu.memory_space<vmem>>, vector<256x8xf32>
    tpu.vector_store %arg10[%c0_102, %c0_103], %184 {strides = array<i32>} : memref<256x72xf32, #tpu.memory_space<vmem>>, vector<256x8xf32>,
    %c8_104 = arith.constant 8 : index
    %c0_105 = arith.constant 0 : index
    %186 = vector.load %arg8[%c8_104, %c0_105] : memref<304x8xf32, #tpu.memory_space<vmem>>, vector<256x8xf32>
    %c0_106 = arith.constant 0 : index
    %c8_107 = arith.constant 8 : index
    %187 = vector.load %arg10[%c0_106, %c8_107] : memref<256x72xf32, #tpu.memory_space<vmem>>, vector<256x8xf32>
    tpu.vector_store %arg10[%c0_106, %c8_107], %186 {strides = array<i32>} : memref<256x72xf32, #tpu.memory_space<vmem>>, vector<256x8xf32>,
    %c9_108 = arith.constant 9 : index
    %c0_109 = arith.constant 0 : index
    %188 = vector.load %arg8[%c9_108, %c0_109] : memref<304x8xf32, #tpu.memory_space<vmem>>, vector<256x8xf32>
    %189 = vector.broadcast %30 : vector<256x1xf32> to vector<256x8xf32>
    %190 = arith.mulf %188, %189 : vector<256x8xf32>
    %c0_110 = arith.constant 0 : index
    %c16_111 = arith.constant 16 : index
    %191 = vector.load %arg10[%c0_110, %c16_111] : memref<256x72xf32, #tpu.memory_space<vmem>>, vector<256x8xf32>
    tpu.vector_store %arg10[%c0_110, %c16_111], %190 {strides = array<i32>} : memref<256x72xf32, #tpu.memory_space<vmem>>, vector<256x8xf32>,
    %c23_112 = arith.constant 23 : index
    %c0_113 = arith.constant 0 : index
    %192 = vector.load %arg8[%c23_112, %c0_113] : memref<304x8xf32, #tpu.memory_space<vmem>>, vector<256x8xf32>
    %193 = vector.broadcast %25 : vector<256x1xf32> to vector<256x8xf32>
    %194 = arith.mulf %192, %193 : vector<256x8xf32>
    %c0_114 = arith.constant 0 : index
    %c24_115 = arith.constant 24 : index
    %195 = vector.load %arg10[%c0_114, %c24_115] : memref<256x72xf32, #tpu.memory_space<vmem>>, vector<256x8xf32>
    tpu.vector_store %arg10[%c0_114, %c24_115], %194 {strides = array<i32>} : memref<256x72xf32, #tpu.memory_space<vmem>>, vector<256x8xf32>,
    %c24_116 = arith.constant 24 : index
    %c0_117 = arith.constant 0 : index
    %196 = vector.load %arg8[%c24_116, %c0_117] : memref<304x8xf32, #tpu.memory_space<vmem>>, vector<256x8xf32>
    %c0_118 = arith.constant 0 : index
    %c32_119 = arith.constant 32 : index
    %197 = vector.load %arg10[%c0_118, %c32_119] : memref<256x72xf32, #tpu.memory_space<vmem>>, vector<256x8xf32>
    tpu.vector_store %arg10[%c0_118, %c32_119], %196 {strides = array<i32>} : memref<256x72xf32, #tpu.memory_space<vmem>>, vector<256x8xf32>,
    %c25_120 = arith.constant 25 : index
    %c0_121 = arith.constant 0 : index
    %198 = vector.load %arg8[%c25_120, %c0_121] : memref<304x8xf32, #tpu.memory_space<vmem>>, vector<256x8xf32>
    %199 = vector.broadcast %30 : vector<256x1xf32> to vector<256x8xf32>
    %200 = arith.mulf %198, %199 : vector<256x8xf32>
    %c0_122 = arith.constant 0 : index
    %c40_123 = arith.constant 40 : index
    %201 = vector.load %arg10[%c0_122, %c40_123] : memref<256x72xf32, #tpu.memory_space<vmem>>, vector<256x8xf32>
    tpu.vector_store %arg10[%c0_122, %c40_123], %200 {strides = array<i32>} : memref<256x72xf32, #tpu.memory_space<vmem>>, vector<256x8xf32>,
    %c39_124 = arith.constant 39 : index
    %c0_125 = arith.constant 0 : index
    %202 = vector.load %arg8[%c39_124, %c0_125] : memref<304x8xf32, #tpu.memory_space<vmem>>, vector<256x8xf32>
    %203 = vector.broadcast %25 : vector<256x1xf32> to vector<256x8xf32>
    %204 = arith.mulf %202, %203 : vector<256x8xf32>
    %c0_126 = arith.constant 0 : index
    %c48_127 = arith.constant 48 : index
    %205 = vector.load %arg10[%c0_126, %c48_127] : memref<256x72xf32, #tpu.memory_space<vmem>>, vector<256x8xf32>
    tpu.vector_store %arg10[%c0_126, %c48_127], %204 {strides = array<i32>} : memref<256x72xf32, #tpu.memory_space<vmem>>, vector<256x8xf32>,
    %c40_128 = arith.constant 40 : index
    %c0_129 = arith.constant 0 : index
    %206 = vector.load %arg8[%c40_128, %c0_129] : memref<304x8xf32, #tpu.memory_space<vmem>>, vector<256x8xf32>
    %c0_130 = arith.constant 0 : index
    %c56 = arith.constant 56 : index
    %207 = vector.load %arg10[%c0_130, %c56] : memref<256x72xf32, #tpu.memory_space<vmem>>, vector<256x8xf32>
    tpu.vector_store %arg10[%c0_130, %c56], %206 {strides = array<i32>} : memref<256x72xf32, #tpu.memory_space<vmem>>, vector<256x8xf32>,
    %c41_131 = arith.constant 41 : index
    %c0_132 = arith.constant 0 : index
    %208 = vector.load %arg8[%c41_131, %c0_132] : memref<304x8xf32, #tpu.memory_space<vmem>>, vector<256x8xf32>
    %209 = vector.broadcast %30 : vector<256x1xf32> to vector<256x8xf32>
    %210 = arith.mulf %208, %209 : vector<256x8xf32>
    %c0_133 = arith.constant 0 : index
    %c64_134 = arith.constant 64 : index
    %211 = vector.load %arg10[%c0_133, %c64_134] : memref<256x72xf32, #tpu.memory_space<vmem>>, vector<256x8xf32>
    tpu.vector_store %arg10[%c0_133, %c64_134], %210 {strides = array<i32>} : memref<256x72xf32, #tpu.memory_space<vmem>>, vector<256x8xf32>,
    %c0_135 = arith.constant 0 : index
    %c0_136 = arith.constant 0 : index
    %212 = vector.load %arg10[%c0_135, %c0_136] : memref<256x72xf32, #tpu.memory_space<vmem>>, vector<256x72xf32>
    %c168 = arith.constant 168 : index
    %c0_137 = arith.constant 0 : index
    %213 = vector.load %arg4[%c168, %c0_137] : memref<256x8xf32, #tpu.memory_space<vmem>>, vector<72x8xf32>
    %cst_138 = arith.constant dense<0.000000e+00> : vector<256x8xf32>
    %214 = tpu.matmul %212, %213, %cst_138 {dimension_numbers = #tpu.dot_dimension_numbers<[1], [0], [0], [1], [0, 0, 1, 1], [], []>} : vector<256x72xf32>, vector<72x8xf32>, vector<256x8xf32> -> vector<256x8xf32>
    %215 = vector.broadcast %181 : vector<1x8xf32> to vector<256x8xf32>
    %216 = arith.addf %214, %215 : vector<256x8xf32>
    %c7_139 = arith.constant 7 : index
    %c0_140 = arith.constant 0 : index
    %217 = vector.load %arg5[%c7_139, %c0_140] : memref<16x8xf32, #tpu.memory_space<vmem>>, vector<1x8xf32>
    %c8_141 = arith.constant 8 : index
    %c0_142 = arith.constant 0 : index
    %218 = vector.load %arg5[%c8_141, %c0_142] : memref<16x8xf32, #tpu.memory_space<vmem>>, vector<1x8xf32>
    %219 = vector.shape_cast %216 : vector<256x8xf32> to vector<1x256x8xf32>
    %cst_143 = arith.constant dense<0.000000e+00> : vector<1xf32>
    %220 = vector.multi_reduction <add>, %219, %cst_143 [1, 2] : vector<1x256x8xf32> to vector<1xf32>
    %221 = vector.shape_cast %220 : vector<1xf32> to vector<1x1x1xf32>
    %222 = vector.extract %221[0, 0, 0] : f32 from vector<1x1x1xf32>
    %cst_144 = arith.constant 2.048000e+03 : f32
    %223 = arith.divf %222, %cst_144 : f32
    %224 = vector.broadcast %223 : f32 to vector<256x8xf32>
    %225 = arith.subf %216, %224 : vector<256x8xf32>
    %226 = vector.broadcast %223 : f32 to vector<256x8xf32>
    %227 = arith.subf %216, %226 : vector<256x8xf32>
    %228 = arith.mulf %225, %227 : vector<256x8xf32>
    %229 = vector.shape_cast %228 : vector<256x8xf32> to vector<1x256x8xf32>
    %cst_145 = arith.constant dense<0.000000e+00> : vector<1xf32>
    %230 = vector.multi_reduction <add>, %229, %cst_145 [1, 2] : vector<1x256x8xf32> to vector<1xf32>
    %231 = vector.shape_cast %230 : vector<1xf32> to vector<1x1x1xf32>
    %232 = vector.extract %231[0, 0, 0] : f32 from vector<1x1x1xf32>
    %cst_146 = arith.constant 2.048000e+03 : f32
    %233 = arith.divf %232, %cst_146 : f32
    %234 = vector.broadcast %223 : f32 to vector<256x8xf32>
    %235 = arith.subf %216, %234 : vector<256x8xf32>
    %cst_147 = arith.constant 9.99999974E-6 : f32
    %236 = arith.addf %233, %cst_147 : f32
    %237 = math.rsqrt %236 : f32
    %238 = vector.broadcast %237 : f32 to vector<256x8xf32>
    %239 = arith.mulf %235, %238 : vector<256x8xf32>
    %240 = vector.broadcast %217 : vector<1x8xf32> to vector<256x8xf32>
    %241 = arith.mulf %239, %240 : vector<256x8xf32>
    %242 = vector.broadcast %218 : vector<1x8xf32> to vector<256x8xf32>
    %243 = arith.addf %241, %242 : vector<256x8xf32>
    %c24_148 = arith.constant 24 : index
    %c0_149 = arith.constant 0 : index
    %244 = vector.load %arg7[%c24_148, %c0_149] : memref<304x16xf32, #tpu.memory_space<vmem>>, vector<256x16xf32>
    %c240 = arith.constant 240 : index
    %c0_150 = arith.constant 0 : index
    %245 = vector.load %arg4[%c240, %c0_150] : memref<256x8xf32, #tpu.memory_space<vmem>>, vector<16x8xf32>
    %cst_151 = arith.constant dense<0.000000e+00> : vector<256x8xf32>
    %246 = tpu.matmul %244, %245, %cst_151 {dimension_numbers = #tpu.dot_dimension_numbers<[1], [0], [0], [1], [0, 0, 1, 1], [], []>} : vector<256x16xf32>, vector<16x8xf32>, vector<256x8xf32> -> vector<256x8xf32>
    %c9_152 = arith.constant 9 : index
    %c0_153 = arith.constant 0 : index
    %247 = vector.load %arg5[%c9_152, %c0_153] : memref<16x8xf32, #tpu.memory_space<vmem>>, vector<1x8xf32>
    %248 = vector.broadcast %247 : vector<1x8xf32> to vector<256x8xf32>
    %249 = arith.addf %246, %248 : vector<256x8xf32>
    %250 = arith.addf %243, %249 : vector<256x8xf32>
    %cst_154 = arith.constant 0.000000e+00 : f32
    %251 = vector.broadcast %cst_154 : f32 to vector<256x8xf32>
    %252 = arith.maximumf %250, %251 : vector<256x8xf32>
    %c0_155 = arith.constant 0 : index
    %c0_156 = arith.constant 0 : index
    %c0_157 = arith.constant 0 : index
    %253 = vector.load %arg6[%c0_155, %c0_156, %c0_157] : memref<1x256x8xf32, #tpu.memory_space<vmem>>, vector<1x256x8xf32>
    %254 = vector.shape_cast %253 : vector<1x256x8xf32> to vector<256x8xf32>
    %255 = vector.shape_cast %252 : vector<256x8xf32> to vector<1x256x8xf32>
    tpu.vector_store %arg6[%c0_155, %c0_156, %c0_157], %255 {strides = array<i32>} : memref<1x256x8xf32, #tpu.memory_space<vmem>>, vector<1x256x8xf32>,
    return
  }
  func.func @transform_0(%arg0: i32) -> (i32, i32, i32) {
    %c0_i32 = arith.constant 0 : i32
    %c0_i32_0 = arith.constant 0 : i32
    %c0_i32_1 = arith.constant 0 : i32
    return %arg0, %c0_i32, %c0_i32_0 : i32, i32, i32
  }
  func.func @transform_1(%arg0: i32) -> (i32, i32, i32) {
    %c0_i32 = arith.constant 0 : i32
    %c0_i32_0 = arith.constant 0 : i32
    %c0_i32_1 = arith.constant 0 : i32
    return %arg0, %c0_i32, %c0_i32_0 : i32, i32, i32
  }
  func.func @transform_2(%arg0: i32) -> (i32, i32) {
    %c0_i32 = arith.constant 0 : i32
    %c0_i32_0 = arith.constant 0 : i32
    %c0_i32_1 = arith.constant 0 : i32
    return %c0_i32, %c0_i32_0 : i32, i32
  }
  func.func @transform_3(%arg0: i32) -> (i32, i32) {
    %c0_i32 = arith.constant 0 : i32
    %c0_i32_0 = arith.constant 0 : i32
    %c0_i32_1 = arith.constant 0 : i32
    return %c0_i32, %c0_i32_0 : i32, i32
  }
  func.func @transform_4(%arg0: i32) -> (i32, i32) {
    %c0_i32 = arith.constant 0 : i32
    %c0_i32_0 = arith.constant 0 : i32
    %c0_i32_1 = arith.constant 0 : i32
    return %c0_i32, %c0_i32_0 : i32, i32
  }
  func.func @transform_5(%arg0: i32) -> (i32, i32, i32) {
    %c0_i32 = arith.constant 0 : i32
    %c0_i32_0 = arith.constant 0 : i32
    %c0_i32_1 = arith.constant 0 : i32
    return %arg0, %c0_i32, %c0_i32_0 : i32, i32, i32
  }
}

</mosaic_0001>

<llo_original>
// kernel: tpu_custom_call.1
$region0: #{tpu_custom_call.1}
  #allocation0 [shape = 'u32[]', space=smem, size = 0x4, offset = 0x4, fixed_abs, tag = 'smem constant byte address 0x4 - core index']
  #allocation1 [shape = 'u32[72,128]{1,0:T(1,128)}', space=vmem, size = 0x9000, scoped, tag = 'internal scratch']
  #allocation2 [shape = 'f32[304,16]{1,0:T(8,128)}', space=vmem, size = 0x26000, scoped, tag = 'scratch operand']
  #allocation3 [shape = 'f32[304,8]{1,0:T(8,128)}', space=vmem, size = 0x26000, scoped, tag = 'scratch operand']
  #allocation4 [shape = 'f32[256,144]{1,0:T(8,128)}', space=vmem, size = 0x40000, scoped, tag = 'scratch operand']
  #allocation5 [shape = 'f32[256,72]{1,0:T(8,128)}', space=vmem, size = 0x20000, scoped, tag = 'scratch operand']
  %s0 = inlined_call_operand.vmem [shape: f32[2,256,16], index: 0, kind: input, shape index: {}]
  %s1 = inlined_call_operand.vmem [shape: f32[2,256,8], index: 1, kind: input, shape index: {}]
  %s2 = inlined_call_operand.vmem [shape: f32[16,32], index: 2, kind: input, shape index: {}]
  %s3 = inlined_call_operand.vmem [shape: f32[256,8], index: 3, kind: input, shape index: {}]
  %s4 = inlined_call_operand.vmem [shape: f32[16,8], index: 4, kind: input, shape index: {}]
  %s5 = inlined_call_operand.vmem [shape: f32[2,256,8], index: 5, kind: output, shape index: {}]
  %s6 = sld [smem:[#allocation0]]
  $region53: #{tpu_custom_call.1} parent=0
    _
  %s8 = ssub.s32 1, %s6
  %s9 = scalar_select 0, %s8, %s6
  loop: start=0, step=1, limit=4
  $region2: #{tpu_custom_call.1} parent=0 // loop_pre_header
    _
  $region3: #{tpu_custom_call.1} parent=0 // loop_header
    %s11 = sphi 0, %s15
    %p12 = scmp.ge.s32.totalorder %s11, 4
    %s21 = sphi 0, %s23
    %s24 = sphi 0, %s21
    %s25 = sphi 0, %s24
    %s41 = sphi 0, %s25
    %s47 = sphi 0, %s49
    %s50 = sphi 0, %s47
    %s51 = sphi 0, %s50
    %s67 = sphi 0, %s51
    %s71 = sphi 0, %s71
    %s73 = sphi 0, %s71
    %s74 = sphi 0, %s73
    %s88 = sphi 0, %s74
    %s92 = sphi 0, %s92
    %s94 = sphi 0, %s92
    %s95 = sphi 0, %s94
    %s109 = sphi 0, %s95
    %s113 = sphi 0, %s113
    %s115 = sphi 0, %s113
    %s116 = sphi 0, %s115
    %s130 = sphi 0, %s116
    %s136 = sphi 0, %s138
    %s139 = sphi 0, %s136
    %s140 = sphi 0, %s139
    %s156 = sphi 0, %s140
  $region4: #{tpu_custom_call.1} parent=0 // loop_header_branch
    %14 = sbr.rel (%p12) target = $region8
  $region5: #{tpu_custom_call.1} parent=0 // loop_body
    %s16 = ssub.s32 %s11, 1
    %s17 = ssub.s32 %s11, 2
    %s18 = sadd.s32 %s11, 1
    %s19 = ssub.s32 %s11, %s18
    %p20 = scmp.eq.s32.totalorder %s19, 0
    %s22 = sadd.s32 %s21, 1
    %s23 = scalar_select %p20, %s21, %s22
    %p26 = pneg %p20
    %p27 = scmp.eq.s32.totalorder %s11, 1
    %p28 = por %p26, %p27
    %p29 = scmp.ne.s32.totalorder %s21, %s24
    %p30 = scmp.eq.s32.totalorder %s11, 0
    %p31 = por %p29, %p30
    %p32 = scmp.ne.s32.totalorder %s21, %s24
    %p33 = scmp.eq.s32.totalorder %s16, 1
    %p34 = por %p32, %p33
    %p35 = scmp.ne.s32.totalorder %s24, %s25
    %p36 = scmp.eq.s32.totalorder %s16, 0
    %p37 = por %p35, %p36
    %p38 = scmp.ne.s32.totalorder %s24, %s25
    %p39 = scmp.eq.s32.totalorder %s17, 1
    %p40 = por %p38, %p39
    %p42 = scmp.ne.s32.totalorder %s25, %s41
    %p43 = scmp.eq.s32.totalorder %s17, 0
    %p44 = por %p42, %p43
    %s45 = ssub.s32 %s11, %s18
    %p46 = scmp.eq.s32.totalorder %s45, 0
    %s48 = sadd.s32 %s47, 1
    %s49 = scalar_select %p46, %s47, %s48
    %p52 = pneg %p46
    %p53 = scmp.eq.s32.totalorder %s11, 1
    %p54 = por %p52, %p53
    %p55 = scmp.ne.s32.totalorder %s47, %s50
    %p56 = scmp.eq.s32.totalorder %s11, 0
    %p57 = por %p55, %p56
    %p58 = scmp.ne.s32.totalorder %s47, %s50
    %p59 = scmp.eq.s32.totalorder %s16, 1
    %p60 = por %p58, %p59
    %p61 = scmp.ne.s32.totalorder %s50, %s51
    %p62 = scmp.eq.s32.totalorder %s16, 0
    %p63 = por %p61, %p62
    %p64 = scmp.ne.s32.totalorder %s50, %s51
    %p65 = scmp.eq.s32.totalorder %s17, 1
    %p66 = por %p64, %p65
    %p68 = scmp.ne.s32.totalorder %s51, %s67
    %p69 = scmp.eq.s32.totalorder %s17, 0
    %p70 = por %p68, %p69
    %s72 = sadd.s32 %s71, 1
    %p75 = scmp.eq.s32.totalorder %s11, 1
    %p76 = scmp.ne.s32.totalorder %s71, %s73
    %p77 = scmp.eq.s32.totalorder %s11, 0
    %p78 = por %p76, %p77
    %p79 = scmp.ne.s32.totalorder %s71, %s73
    %p80 = scmp.eq.s32.totalorder %s16, 1
    %p81 = por %p79, %p80
    %p82 = scmp.ne.s32.totalorder %s73, %s74
    %p83 = scmp.eq.s32.totalorder %s16, 0
    %p84 = por %p82, %p83
    %p85 = scmp.ne.s32.totalorder %s73, %s74
    %p86 = scmp.eq.s32.totalorder %s17, 1
    %p87 = por %p85, %p86
    %p89 = scmp.ne.s32.totalorder %s74, %s88
    %p90 = scmp.eq.s32.totalorder %s17, 0
    %p91 = por %p89, %p90
    %s93 = sadd.s32 %s92, 1
    %p96 = scmp.eq.s32.totalorder %s11, 1
    %p97 = scmp.ne.s32.totalorder %s92, %s94
    %p98 = scmp.eq.s32.totalorder %s11, 0
    %p99 = por %p97, %p98
    %p100 = scmp.ne.s32.totalorder %s92, %s94
    %p101 = scmp.eq.s32.totalorder %s16, 1
    %p102 = por %p100, %p101
    %p103 = scmp.ne.s32.totalorder %s94, %s95
    %p104 = scmp.eq.s32.totalorder %s16, 0
    %p105 = por %p103, %p104
    %p106 = scmp.ne.s32.totalorder %s94, %s95
    %p107 = scmp.eq.s32.totalorder %s17, 1
    %p108 = por %p106, %p107
    %p110 = scmp.ne.s32.totalorder %s95, %s109
    %p111 = scmp.eq.s32.totalorder %s17, 0
    %p112 = por %p110, %p111
    %s114 = sadd.s32 %s113, 1
    %p117 = scmp.eq.s32.totalorder %s11, 1
    %p118 = scmp.ne.s32.totalorder %s113, %s115
    %p119 = scmp.eq.s32.totalorder %s11, 0
    %p120 = por %p118, %p119
    %p121 = scmp.ne.s32.totalorder %s113, %s115
    %p122 = scmp.eq.s32.totalorder %s16, 1
    %p123 = por %p121, %p122
    %p124 = scmp.ne.s32.totalorder %s115, %s116
    %p125 = scmp.eq.s32.totalorder %s16, 0
    %p126 = por %p124, %p125
    %p127 = scmp.ne.s32.totalorder %s115, %s116
    %p128 = scmp.eq.s32.totalorder %s17, 1
    %p129 = por %p127, %p128
    %p131 = scmp.ne.s32.totalorder %s116, %s130
    %p132 = scmp.eq.s32.totalorder %s17, 0
    %p133 = por %p131, %p132
    %s134 = ssub.s32 %s11, %s18
    %p135 = scmp.eq.s32.totalorder %s134, 0
    %s137 = sadd.s32 %s136, 1
    %s138 = scalar_select %p135, %s136, %s137
    %p141 = pneg %p135
    %p142 = scmp.eq.s32.totalorder %s11, 1
    %p143 = por %p141, %p142
    %p144 = scmp.ne.s32.totalorder %s136, %s139
    %p145 = scmp.eq.s32.totalorder %s11, 0
    %p146 = por %p144, %p145
    %p147 = scmp.ne.s32.totalorder %s136, %s139
    %p148 = scmp.eq.s32.totalorder %s16, 1
    %p149 = por %p147, %p148
    %p150 = scmp.ne.s32.totalorder %s139, %s140
    %p151 = scmp.eq.s32.totalorder %s16, 0
    %p152 = por %p150, %p151
    %p153 = scmp.ne.s32.totalorder %s139, %s140
    %p154 = scmp.eq.s32.totalorder %s17, 1
    %p155 = por %p153, %p154
    %p157 = scmp.ne.s32.totalorder %s140, %s156
    %p158 = scmp.eq.s32.totalorder %s17, 0
    %p159 = por %p157, %p158
    %p160 = scmp.le.s32.totalorder 1, %s11
    %p161 = scmp.lt.s32.totalorder %s11, 3
    %p162 = pnand %p160, %p161
    %p163 = pneg %p162
    // Predicated region
    $region9: #{tpu_custom_call.1} parent=5 // pred_check
      _
    $region10: #{tpu_custom_call.1} parent=5 // pred_check_branch
      %165 = sbr.rel (%p162) target = $region12
    $region11: #{tpu_custom_call.1} parent=5 // pred_region
      %s166 = ssub.s32 %s11, 1
      // Predicated region
      $region13: #{tpu_custom_call.1} parent=11 // pred_check
        %p167 = pneg %p84
      $region14: #{tpu_custom_call.1} parent=11 // pred_check_branch
        %169 = sbr.rel (%p167) target = $region16
      $region15: #{tpu_custom_call.1} parent=11 // pred_region
        _
      $region16: #{tpu_custom_call.1} parent=11 // pred_fallthru
        _
      // Predicated region
      $region17: #{tpu_custom_call.1} parent=11 // pred_check
        %p170 = pneg %p105
      $region18: #{tpu_custom_call.1} parent=11 // pred_check_branch
        %172 = sbr.rel (%p170) target = $region20
      $region19: #{tpu_custom_call.1} parent=11 // pred_region
        _
      $region20: #{tpu_custom_call.1} parent=11 // pred_fallthru
        _
      // Predicated region
      $region21: #{tpu_custom_call.1} parent=11 // pred_check
        %p173 = pneg %p126
      $region22: #{tpu_custom_call.1} parent=11 // pred_check_branch
        %175 = sbr.rel (%p173) target = $region24
      $region23: #{tpu_custom_call.1} parent=11 // pred_region
        _
      $region24: #{tpu_custom_call.1} parent=11 // pred_fallthru
        _
    $region12: #{tpu_custom_call.1} parent=5 // pred_fallthru
      _
    %p176 = scmp.lt.s32.totalorder %s11, 2
    // Predicated region
    $region25: #{tpu_custom_call.1} parent=5 // pred_check
      %p177 = pneg %p176
    $region26: #{tpu_custom_call.1} parent=5 // pred_check_branch
      %179 = sbr.rel (%p177) target = $region28
    $region27: #{tpu_custom_call.1} parent=5 // pred_region
      // Predicated region
      $region29: #{tpu_custom_call.1} parent=27 // pred_check
        %p180 = pneg %p31
      $region30: #{tpu_custom_call.1} parent=27 // pred_check_branch
        %182 = sbr.rel (%p180) target = $region32
      $region31: #{tpu_custom_call.1} parent=27 // pred_region
        %p183 = scmp.lt.s32.totalorder %s11, 1
        %s184 = scalar_select %p183, %s11, 1
        %s185 = smul.addr %s184, 32
        %s186 = smul.addr %s185, 8
        %s187 = scalar_lea.vmem %s0, %s186
      $region32: #{tpu_custom_call.1} parent=27 // pred_fallthru
        _
      // Predicated region
      $region33: #{tpu_custom_call.1} parent=27 // pred_check
        %p188 = pneg %p57
      $region34: #{tpu_custom_call.1} parent=27 // pred_check_branch
        %190 = sbr.rel (%p188) target = $region36
      $region35: #{tpu_custom_call.1} parent=27 // pred_region
        %p191 = scmp.lt.s32.totalorder %s11, 1
        %s192 = scalar_select %p191, %s11, 1
        %s193 = smul.addr %s192, 32
        %s194 = smul.addr %s193, 8
        %s195 = scalar_lea.vmem %s1, %s194
      $region36: #{tpu_custom_call.1} parent=27 // pred_fallthru
        _
    $region28: #{tpu_custom_call.1} parent=5 // pred_fallthru
      _
    %p196 = scmp.le.s32.totalorder 1, %s11
    %p197 = scmp.lt.s32.totalorder %s11, 3
    %p198 = pnand %p196, %p197
    %p199 = pneg %p198
    // Predicated region
    $region37: #{tpu_custom_call.1} parent=5 // pred_check
      _
    $region38: #{tpu_custom_call.1} parent=5 // pred_check_branch
      %201 = sbr.rel (%p198) target = $region40
    $region39: #{tpu_custom_call.1} parent=5 // pred_region
      %s202 = ssub.s32 %s11, 1
      %p203 = scmp.lt.s32.totalorder %s16, 1
      %s204 = scalar_select %p203, %s16, 1
      %s205 = smul.addr %s204, 32
      %s206 = smul.addr %s205, 8
      %s207 = scalar_lea.vmem %s0, %s206
      %p208 = pneg %p37
      %p209 = pneg %p34
      %p210 = scmp.lt.s32.totalorder %s16, 1
      %s211 = scalar_select %p210, %s16, 1
      %s212 = smul.addr %s211, 32
      %s213 = smul.addr %s212, 8
      %s214 = scalar_lea.vmem %s1, %s213
      %p215 = pneg %p63
      %p216 = pneg %p60
      %p217 = pneg %p84
      %p218 = pneg %p81
      %p219 = pneg %p105
      %p220 = pneg %p102
      %p221 = pneg %p126
      %p222 = pneg %p123
      %p223 = pneg %p152
      %p224 = pneg %p149
      %p225 = scmp.lt.s32.totalorder %s16, 1
      %s226 = scalar_select %p225, %s16, 1
      %s227 = smul.addr %s226, 32
      %s228 = smul.addr %s227, 8
      %s229 = scalar_lea.vmem %s5, %s228
      %p230 = scmp.lt.s32.totalorder %s16, 1
      %s231 = scalar_select %p230, %s16, 1
      %s232 = smul.addr %s231, 32
      %s233 = smul.addr %s232, 8
      %s234 = scalar_lea.vmem %s0, %s233
      %p235 = scmp.lt.s32.totalorder %s16, 1
      %s236 = scalar_select %p235, %s16, 1
      %s237 = smul.addr %s236, 32
      %s238 = smul.addr %s237, 8
      %s239 = scalar_lea.vmem %s1, %s238
      %p240 = scmp.lt.s32.totalorder %s16, 1
      %s241 = scalar_select %p240, %s16, 1
      %s242 = smul.addr %s241, 32
      %s243 = smul.addr %s242, 8
      %s244 = scalar_lea.vmem %s5, %s243
      %vm245 = vcmask 130048
      %246 = vst.msk [vmem:[#allocation2] sm:$0xff] %vm245, 0.0
      %247 = vst.msk [vmem:[#allocation2 + $0x8] sm:$0xff] %vm245, 0.0
      %248 = vst.msk [vmem:[#allocation2 + $0x10] sm:$0xff] %vm245, 0.0
      %249 = vst.msk [vmem:[#allocation2 + $0x118] sm:$0xff] %vm245, 0.0
      %250 = vst.msk [vmem:[#allocation2 + $0x120] sm:$0xff] %vm245, 0.0
      %251 = vst.msk [vmem:[#allocation2 + $0x128] sm:$0xff] %vm245, 0.0
      %vm252 = vcmask 64512
      %253 = vst.msk [vmem:[#allocation3] sm:$0xff] %vm252, 0.0
      %254 = vst.msk [vmem:[#allocation3 + $0x8] sm:$0xff] %vm252, 0.0
      %255 = vst.msk [vmem:[#allocation3 + $0x10] sm:$0xff] %vm252, 0.0
      %256 = vst.msk [vmem:[#allocation3 + $0x118] sm:$0xff] %vm252, 0.0
      %257 = vst.msk [vmem:[#allocation3 + $0x120] sm:$0xff] %vm252, 0.0
      %258 = vst.msk [vmem:[#allocation3 + $0x128] sm:$0xff] %vm252, 0.0
      %v259 = vld [vmem:[%s234] sm:$0xff]
      %v260 = vld [vmem:[%s234 + $0x8] sm:$0xff]
      %v261 = vld [vmem:[%s234 + $0x10] sm:$0xff]
      %v262 = vld [vmem:[%s234 + $0x18] sm:$0xff]
      %v263 = vld [vmem:[%s234 + $0x20] sm:$0xff]
      %v264 = vld [vmem:[%s234 + $0x28] sm:$0xff]
      %v265 = vld [vmem:[%s234 + $0x30] sm:$0xff]
      %v266 = vld [vmem:[%s234 + $0x38] sm:$0xff]
      %v267 = vld [vmem:[%s234 + $0x40] sm:$0xff]
      %v268 = vld [vmem:[%s234 + $0x48] sm:$0xff]
      %v269 = vld [vmem:[%s234 + $0x50] sm:$0xff]
      %v270 = vld [vmem:[%s234 + $0x58] sm:$0xff]
      %v271 = vld [vmem:[%s234 + $0x60] sm:$0xff]
      %v272 = vld [vmem:[%s234 + $0x68] sm:$0xff]
      %v273 = vld [vmem:[%s234 + $0x70] sm:$0xff]
      %v274 = vld [vmem:[%s234 + $0x78] sm:$0xff]
      %v275 = vld [vmem:[%s234 + $0x80] sm:$0xff]
      %v276 = vld [vmem:[%s234 + $0x88] sm:$0xff]
      %v277 = vld [vmem:[%s234 + $0x90] sm:$0xff]
      %v278 = vld [vmem:[%s234 + $0x98] sm:$0xff]
      %v279 = vld [vmem:[%s234 + $0xa0] sm:$0xff]
      %v280 = vld [vmem:[%s234 + $0xa8] sm:$0xff]
      %v281 = vld [vmem:[%s234 + $0xb0] sm:$0xff]
      %v282 = vld [vmem:[%s234 + $0xb8] sm:$0xff]
      %v283 = vld [vmem:[%s234 + $0xc0] sm:$0xff]
      %v284 = vld [vmem:[%s234 + $0xc8] sm:$0xff]
      %v285 = vld [vmem:[%s234 + $0xd0] sm:$0xff]
      %v286 = vld [vmem:[%s234 + $0xd8] sm:$0xff]
      %v287 = vld [vmem:[%s234 + $0xe0] sm:$0xff]
      %v288 = vld [vmem:[%s234 + $0xe8] sm:$0xff]
      %v289 = vld [vmem:[%s234 + $0xf0] sm:$0xff]
      %v290 = vld [vmem:[%s234 + $0xf8] sm:$0xff]
      %v291 = vld [vmem:[%s239] sm:$0xff]
      %v292 = vld [vmem:[%s239 + $0x8] sm:$0xff]
      %v293 = vld [vmem:[%s239 + $0x10] sm:$0xff]
      %v294 = vld [vmem:[%s239 + $0x18] sm:$0xff]
      %v295 = vld [vmem:[%s239 + $0x20] sm:$0xff]
      %v296 = vld [vmem:[%s239 + $0x28] sm:$0xff]
      %v297 = vld [vmem:[%s239 + $0x30] sm:$0xff]
      %v298 = vld [vmem:[%s239 + $0x38] sm:$0xff]
      %v299 = vld [vmem:[%s239 + $0x40] sm:$0xff]
      %v300 = vld [vmem:[%s239 + $0x48] sm:$0xff]
      %v301 = vld [vmem:[%s239 + $0x50] sm:$0xff]
      %v302 = vld [vmem:[%s239 + $0x58] sm:$0xff]
      %v303 = vld [vmem:[%s239 + $0x60] sm:$0xff]
      %v304 = vld [vmem:[%s239 + $0x68] sm:$0xff]
      %v305 = vld [vmem:[%s239 + $0x70] sm:$0xff]
      %v306 = vld [vmem:[%s239 + $0x78] sm:$0xff]
      %v307 = vld [vmem:[%s239 + $0x80] sm:$0xff]
      %v308 = vld [vmem:[%s239 + $0x88] sm:$0xff]
      %v309 = vld [vmem:[%s239 + $0x90] sm:$0xff]
      %v310 = vld [vmem:[%s239 + $0x98] sm:$0xff]
      %v311 = vld [vmem:[%s239 + $0xa0] sm:$0xff]
      %v312 = vld [vmem:[%s239 + $0xa8] sm:$0xff]
      %v313 = vld [vmem:[%s239 + $0xb0] sm:$0xff]
      %v314 = vld [vmem:[%s239 + $0xb8] sm:$0xff]
      %v315 = vld [vmem:[%s239 + $0xc0] sm:$0xff]
      %v316 = vld [vmem:[%s239 + $0xc8] sm:$0xff]
      %v317 = vld [vmem:[%s239 + $0xd0] sm:$0xff]
      %v318 = vld [vmem:[%s239 + $0xd8] sm:$0xff]
      %v319 = vld [vmem:[%s239 + $0xe0] sm:$0xff]
      %v320 = vld [vmem:[%s239 + $0xe8] sm:$0xff]
      %v321 = vld [vmem:[%s239 + $0xf0] sm:$0xff]
      %v322 = vld [vmem:[%s239 + $0xf8] sm:$0xff]
      %v323 = vlaneseq
      %v324 = vshrl.u32 %v323, 7
      %v325 = vadd.s32 %v324, 8
      %v326 = vadd.s32 %v324, 16
      %v327 = vadd.s32 %v324, 24
      %v328 = vadd.s32 %v324, 32
      %v329 = vadd.s32 %v324, 40
      %v330 = vadd.s32 %v324, 48
      %v331 = vadd.s32 %v324, 56
      %v332 = vadd.s32 %v324, 64
      %v333 = vadd.s32 %v324, 72
      %v334 = vadd.s32 %v324, 80
      %v335 = vadd.s32 %v324, 88
      %v336 = vadd.s32 %v324, 96
      %v337 = vadd.s32 %v324, 104
      %v338 = vadd.s32 %v324, 112
      %v339 = vadd.s32 %v324, 120
      %v340 = vadd.s32 %v324, 128
      %v341 = vadd.s32 %v324, 136
      %v342 = vadd.s32 %v324, 144
      %v343 = vadd.s32 %v324, 152
      %v344 = vadd.s32 %v324, 160
      %v345 = vadd.s32 %v324, 168
      %v346 = vadd.s32 %v324, 176
      %v347 = vadd.s32 %v324, 184
      %v348 = vadd.s32 %v324, 192
      %v349 = vadd.s32 %v324, 200
      %v350 = vadd.s32 %v324, 208
      %v351 = vadd.s32 %v324, 216
      %v352 = vadd.s32 %v324, 224
      %v353 = vadd.s32 %v324, 232
      %v354 = vadd.s32 %v324, 240
      %v355 = vadd.s32 %v324, 248
      %v356 = vand.u32 %v324, 15
      %v357 = vand.u32 %v325, 15
      %v358 = vand.u32 %v326, 15
      %v359 = vand.u32 %v327, 15
      %v360 = vand.u32 %v328, 15
      %v361 = vand.u32 %v329, 15
      %v362 = vand.u32 %v330, 15
      %v363 = vand.u32 %v331, 15
      %v364 = vand.u32 %v332, 15
      %v365 = vand.u32 %v333, 15
      %v366 = vand.u32 %v334, 15
      %v367 = vand.u32 %v335, 15
      %v368 = vand.u32 %v336, 15
      %v369 = vand.u32 %v337, 15
      %v370 = vand.u32 %v338, 15
      %v371 = vand.u32 %v339, 15
      %v372 = vand.u32 %v340, 15
      %v373 = vand.u32 %v341, 15
      %v374 = vand.u32 %v342, 15
      %v375 = vand.u32 %v343, 15
      %v376 = vand.u32 %v344, 15
      %v377 = vand.u32 %v345, 15
      %v378 = vand.u32 %v346, 15
      %v379 = vand.u32 %v347, 15
      %v380 = vand.u32 %v348, 15
      %v381 = vand.u32 %v349, 15
      %v382 = vand.u32 %v350, 15
      %v383 = vand.u32 %v351, 15
      %v384 = vand.u32 %v352, 15
      %v385 = vand.u32 %v353, 15
      %v386 = vand.u32 %v354, 15
      %v387 = vand.u32 %v355, 15
      %v388 = vshra.s32 %v324, 4
      %v389 = vshra.s32 %v325, 4
      %v390 = vshra.s32 %v326, 4
      %v391 = vshra.s32 %v327, 4
      %v392 = vshra.s32 %v328, 4
      %v393 = vshra.s32 %v329, 4
      %v394 = vshra.s32 %v330, 4
      %v395 = vshra.s32 %v331, 4
      %v396 = vshra.s32 %v332, 4
      %v397 = vshra.s32 %v333, 4
      %v398 = vshra.s32 %v334, 4
      %v399 = vshra.s32 %v335, 4
      %v400 = vshra.s32 %v336, 4
      %v401 = vshra.s32 %v337, 4
      %v402 = vshra.s32 %v338, 4
      %v403 = vshra.s32 %v339, 4
      %v404 = vshra.s32 %v340, 4
      %v405 = vshra.s32 %v341, 4
      %v406 = vshra.s32 %v342, 4
      %v407 = vshra.s32 %v343, 4
      %v408 = vshra.s32 %v344, 4
      %v409 = vshra.s32 %v345, 4
      %v410 = vshra.s32 %v346, 4
      %v411 = vshra.s32 %v347, 4
      %v412 = vshra.s32 %v348, 4
      %v413 = vshra.s32 %v349, 4
      %v414 = vshra.s32 %v350, 4
      %v415 = vshra.s32 %v351, 4
      %v416 = vshra.s32 %v352, 4
      %v417 = vshra.s32 %v353, 4
      %v418 = vshra.s32 %v354, 4
      %v419 = vshra.s32 %v355, 4
      %v420 = vand.u32 %v388, 1
      %v421 = vand.u32 %v389, 1
      %v422 = vand.u32 %v390, 1
      %v423 = vand.u32 %v391, 1
      %v424 = vand.u32 %v392, 1
      %v425 = vand.u32 %v393, 1
      %v426 = vand.u32 %v394, 1
      %v427 = vand.u32 %v395, 1
      %v428 = vand.u32 %v396, 1
      %v429 = vand.u32 %v397, 1
      %v430 = vand.u32 %v398, 1
      %v431 = vand.u32 %v399, 1
      %v432 = vand.u32 %v400, 1
      %v433 = vand.u32 %v401, 1
      %v434 = vand.u32 %v402, 1
      %v435 = vand.u32 %v403, 1
      %v436 = vand.u32 %v404, 1
      %v437 = vand.u32 %v405, 1
      %v438 = vand.u32 %v406, 1
      %v439 = vand.u32 %v407, 1
      %v440 = vand.u32 %v408, 1
      %v441 = vand.u32 %v409, 1
      %v442 = vand.u32 %v410, 1
      %v443 = vand.u32 %v411, 1
      %v444 = vand.u32 %v412, 1
      %v445 = vand.u32 %v413, 1
      %v446 = vand.u32 %v414, 1
      %v447 = vand.u32 %v415, 1
      %v448 = vand.u32 %v416, 1
      %v449 = vand.u32 %v417, 1
      %v450 = vand.u32 %v418, 1
      %v451 = vand.u32 %v419, 1
      %v452 = vand.u32 %v324, 1
      %v453 = vand.u32 %v325, 1
      %v454 = vand.u32 %v326, 1
      %v455 = vand.u32 %v327, 1
      %v456 = vand.u32 %v328, 1
      %v457 = vand.u32 %v329, 1
      %v458 = vand.u32 %v330, 1
      %v459 = vand.u32 %v331, 1
      %v460 = vand.u32 %v332, 1
      %v461 = vand.u32 %v333, 1
      %v462 = vand.u32 %v334, 1
      %v463 = vand.u32 %v335, 1
      %v464 = vand.u32 %v336, 1
      %v465 = vand.u32 %v337, 1
      %v466 = vand.u32 %v338, 1
      %v467 = vand.u32 %v339, 1
      %v468 = vand.u32 %v340, 1
      %v469 = vand.u32 %v341, 1
      %v470 = vand.u32 %v342, 1
      %v471 = vand.u32 %v343, 1
      %v472 = vand.u32 %v344, 1
      %v473 = vand.u32 %v345, 1
      %v474 = vand.u32 %v346, 1
      %v475 = vand.u32 %v347, 1
      %v476 = vand.u32 %v348, 1
      %v477 = vand.u32 %v349, 1
      %v478 = vand.u32 %v350, 1
      %v479 = vand.u32 %v351, 1
      %v480 = vand.u32 %v352, 1
      %v481 = vand.u32 %v353, 1
      %v482 = vand.u32 %v354, 1
      %v483 = vand.u32 %v355, 1
      %vm484 = vcmp.gt.s32.totalorder %v356, 0
      %vm485 = vcmp.gt.s32.totalorder %v357, 0
      %vm486 = vcmp.gt.s32.totalorder %v358, 0
      %vm487 = vcmp.gt.s32.totalorder %v359, 0
      %vm488 = vcmp.gt.s32.totalorder %v360, 0
      %vm489 = vcmp.gt.s32.totalorder %v361, 0
      %vm490 = vcmp.gt.s32.totalorder %v362, 0
      %vm491 = vcmp.gt.s32.totalorder %v363, 0
      %vm492 = vcmp.gt.s32.totalorder %v364, 0
      %vm493 = vcmp.gt.s32.totalorder %v365, 0
      %vm494 = vcmp.gt.s32.totalorder %v366, 0
      %vm495 = vcmp.gt.s32.totalorder %v367, 0
      %vm496 = vcmp.gt.s32.totalorder %v368, 0
      %vm497 = vcmp.gt.s32.totalorder %v369, 0
      %vm498 = vcmp.gt.s32.totalorder %v370, 0
      %vm499 = vcmp.gt.s32.totalorder %v371, 0
      %vm500 = vcmp.gt.s32.totalorder %v372, 0
      %vm501 = vcmp.gt.s32.totalorder %v373, 0
      %vm502 = vcmp.gt.s32.totalorder %v374, 0
      %vm503 = vcmp.gt.s32.totalorder %v375, 0
      %vm504 = vcmp.gt.s32.totalorder %v376, 0
      %vm505 = vcmp.gt.s32.totalorder %v377, 0
      %vm506 = vcmp.gt.s32.totalorder %v378, 0
      %vm507 = vcmp.gt.s32.totalorder %v379, 0
      %vm508 = vcmp.gt.s32.totalorder %v380, 0
      %vm509 = vcmp.gt.s32.totalorder %v381, 0
      %vm510 = vcmp.gt.s32.totalorder %v382, 0
      %vm511 = vcmp.gt.s32.totalorder %v383, 0
      %vm512 = vcmp.gt.s32.totalorder %v384, 0
      %vm513 = vcmp.gt.s32.totalorder %v385, 0
      %vm514 = vcmp.gt.s32.totalorder %v386, 0
      %vm515 = vcmp.gt.s32.totalorder %v387, 0
      %v516 = vsel %vm484, 1.0, 0.0
      %v517 = vsel %vm485, 1.0, 0.0
      %v518 = vsel %vm486, 1.0, 0.0
      %v519 = vsel %vm487, 1.0, 0.0
      %v520 = vsel %vm488, 1.0, 0.0
      %v521 = vsel %vm489, 1.0, 0.0
      %v522 = vsel %vm490, 1.0, 0.0
      %v523 = vsel %vm491, 1.0, 0.0
      %v524 = vsel %vm492, 1.0, 0.0
      %v525 = vsel %vm493, 1.0, 0.0
      %v526 = vsel %vm494, 1.0, 0.0
      %v527 = vsel %vm495, 1.0, 0.0
      %v528 = vsel %vm496, 1.0, 0.0
      %v529 = vsel %vm497, 1.0, 0.0
      %v530 = vsel %vm498, 1.0, 0.0
      %v531 = vsel %vm499, 1.0, 0.0
      %v532 = vsel %vm500, 1.0, 0.0
      %v533 = vsel %vm501, 1.0, 0.0
      %v534 = vsel %vm502, 1.0, 0.0
      %v535 = vsel %vm503, 1.0, 0.0
      %v536 = vsel %vm504, 1.0, 0.0
      %v537 = vsel %vm505, 1.0, 0.0
      %v538 = vsel %vm506, 1.0, 0.0
      %v539 = vsel %vm507, 1.0, 0.0
      %v540 = vsel %vm508, 1.0, 0.0
      %v541 = vsel %vm509, 1.0, 0.0
      %v542 = vsel %vm510, 1.0, 0.0
      %v543 = vsel %vm511, 1.0, 0.0
      %v544 = vsel %vm512, 1.0, 0.0
      %v545 = vsel %vm513, 1.0, 0.0
      %v546 = vsel %vm514, 1.0, 0.0
      %v547 = vsel %vm515, 1.0, 0.0
      %vm548 = vcmp.lt.s32.totalorder %v356, 15
      %vm549 = vcmp.lt.s32.totalorder %v357, 15
      %vm550 = vcmp.lt.s32.totalorder %v358, 15
      %vm551 = vcmp.lt.s32.totalorder %v359, 15
      %vm552 = vcmp.lt.s32.totalorder %v360, 15
      %vm553 = vcmp.lt.s32.totalorder %v361, 15
      %vm554 = vcmp.lt.s32.totalorder %v362, 15
      %vm555 = vcmp.lt.s32.totalorder %v363, 15
      %vm556 = vcmp.lt.s32.totalorder %v364, 15
      %vm557 = vcmp.lt.s32.totalorder %v365, 15
      %vm558 = vcmp.lt.s32.totalorder %v366, 15
      %vm559 = vcmp.lt.s32.totalorder %v367, 15
      %vm560 = vcmp.lt.s32.totalorder %v368, 15
      %vm561 = vcmp.lt.s32.totalorder %v369, 15
      %vm562 = vcmp.lt.s32.totalorder %v370, 15
      %vm563 = vcmp.lt.s32.totalorder %v371, 15
      %vm564 = vcmp.lt.s32.totalorder %v372, 15
      %vm565 = vcmp.lt.s32.totalorder %v373, 15
      %vm566 = vcmp.lt.s32.totalorder %v374, 15
      %vm567 = vcmp.lt.s32.totalorder %v375, 15
      %vm568 = vcmp.lt.s32.totalorder %v376, 15
      %vm569 = vcmp.lt.s32.totalorder %v377, 15
      %vm570 = vcmp.lt.s32.totalorder %v378, 15
      %vm571 = vcmp.lt.s32.totalorder %v379, 15
      %vm572 = vcmp.lt.s32.totalorder %v380, 15
      %vm573 = vcmp.lt.s32.totalorder %v381, 15
      %vm574 = vcmp.lt.s32.totalorder %v382, 15
      %vm575 = vcmp.lt.s32.totalorder %v383, 15
      %vm576 = vcmp.lt.s32.totalorder %v384, 15
      %vm577 = vcmp.lt.s32.totalorder %v385, 15
      %vm578 = vcmp.lt.s32.totalorder %v386, 15
      %vm579 = vcmp.lt.s32.totalorder %v387, 15
      %v580 = vsel %vm548, 1.0, 0.0
      %v581 = vsel %vm549, 1.0, 0.0
      %v582 = vsel %vm550, 1.0, 0.0
      %v583 = vsel %vm551, 1.0, 0.0
      %v584 = vsel %vm552, 1.0, 0.0
      %v585 = vsel %vm553, 1.0, 0.0
      %v586 = vsel %vm554, 1.0, 0.0
      %v587 = vsel %vm555, 1.0, 0.0
      %v588 = vsel %vm556, 1.0, 0.0
      %v589 = vsel %vm557, 1.0, 0.0
      %v590 = vsel %vm558, 1.0, 0.0
      %v591 = vsel %vm559, 1.0, 0.0
      %v592 = vsel %vm560, 1.0, 0.0
      %v593 = vsel %vm561, 1.0, 0.0
      %v594 = vsel %vm562, 1.0, 0.0
      %v595 = vsel %vm563, 1.0, 0.0
      %v596 = vsel %vm564, 1.0, 0.0
      %v597 = vsel %vm565, 1.0, 0.0
      %v598 = vsel %vm566, 1.0, 0.0
      %v599 = vsel %vm567, 1.0, 0.0
      %v600 = vsel %vm568, 1.0, 0.0
      %v601 = vsel %vm569, 1.0, 0.0
      %v602 = vsel %vm570, 1.0, 0.0
      %v603 = vsel %vm571, 1.0, 0.0
      %v604 = vsel %vm572, 1.0, 0.0
      %v605 = vsel %vm573, 1.0, 0.0
      %v606 = vsel %vm574, 1.0, 0.0
      %v607 = vsel %vm575, 1.0, 0.0
      %v608 = vsel %vm576, 1.0, 0.0
      %v609 = vsel %vm577, 1.0, 0.0
      %v610 = vsel %vm578, 1.0, 0.0
      %v611 = vsel %vm579, 1.0, 0.0
      %v612 = vld [vmem:[%s2] sm:$0xff]
      %v613 = vld [vmem:[%s2 + $0x8] sm:$0xff]
      %v615 = vsel %vm245, %v259, 0
      %v618 = vsel %vm245, %v260, 0
      %v621 = vsel %vm245, %v261, 0
      %v624 = vsel %vm245, %v262, 0
      %v627 = vsel %vm245, %v263, 0
      %v630 = vsel %vm245, %v264, 0
      %v633 = vsel %vm245, %v265, 0
      %v636 = vsel %vm245, %v266, 0
      %v639 = vsel %vm245, %v267, 0
      %v642 = vsel %vm245, %v268, 0
      %v645 = vsel %vm245, %v269, 0
      %v648 = vsel %vm245, %v270, 0
      %v651 = vsel %vm245, %v271, 0
      %v654 = vsel %vm245, %v272, 0
      %v657 = vsel %vm245, %v273, 0
      %v660 = vsel %vm245, %v274, 0
      %v663 = vsel %vm245, %v275, 0
      %v666 = vsel %vm245, %v276, 0
      %v669 = vsel %vm245, %v277, 0
      %v672 = vsel %vm245, %v278, 0
      %v675 = vsel %vm245, %v279, 0
      %v678 = vsel %vm245, %v280, 0
      %v681 = vsel %vm245, %v281, 0
      %v684 = vsel %vm245, %v282, 0
      %v687 = vsel %vm245, %v283, 0
      %v690 = vsel %vm245, %v284, 0
      %v693 = vsel %vm245, %v285, 0
      %v696 = vsel %vm245, %v286, 0
      %v699 = vsel %vm245, %v287, 0
      %v702 = vsel %vm245, %v288, 0
      %v705 = vsel %vm245, %v289, 0
      %v708 = vsel %vm245, %v290, 0
      %710 = vmatpush.msra.mxu0 0.0
      %711 = vmatpush.msra.mxu0 0.0
      %712 = vmatpush.msra.mxu0 0.0
      %713 = vmatpush.msra.mxu0 0.0
      %714 = vmatpush.msra.mxu0 0.0
      %715 = vmatpush.msra.mxu0 0.0
      %716 = vmatpush.msra.mxu0 0.0
      %717 = vmatpush.msra.mxu0 0.0
      %718 = vmatpush.msra.mxu0 0.0
      %719 = vmatpush.msra.mxu0 0.0
      %720 = vmatpush.msra.mxu0 0.0
      %721 = vmatpush.msra.mxu0 0.0
      %722 = vmatpush.msra.mxu0 0.0
      %723 = vmatpush.msra.mxu0 0.0
      %724 = vmatpush.msra.mxu0 %v613
      %725 = vmatpush.msra.mxu0 %v612
      %726 = vmatmul.f32.gmra.mxu0 %v615
      %v727 = vpop.f32.mrf.mxu0
      %v728 = vadd.f32 0.0, %v727
      %729 = vmatmul.f32.gmra.mxu0 %v618
      %v730 = vpop.f32.mrf.mxu0
      %v731 = vadd.f32 0.0, %v730
      %732 = vmatmul.f32.gmra.mxu0 %v621
      %v733 = vpop.f32.mrf.mxu0
      %v734 = vadd.f32 0.0, %v733
      %735 = vmatmul.f32.gmra.mxu0 %v624
      %v736 = vpop.f32.mrf.mxu0
      %v737 = vadd.f32 0.0, %v736
      %738 = vmatmul.f32.gmra.mxu0 %v627
      %v739 = vpop.f32.mrf.mxu0
      %v740 = vadd.f32 0.0, %v739
      %741 = vmatmul.f32.gmra.mxu0 %v630
      %v742 = vpop.f32.mrf.mxu0
      %v743 = vadd.f32 0.0, %v742
      %744 = vmatmul.f32.gmra.mxu0 %v633
      %v745 = vpop.f32.mrf.mxu0
      %v746 = vadd.f32 0.0, %v745
      %747 = vmatmul.f32.gmra.mxu0 %v636
      %v748 = vpop.f32.mrf.mxu0
      %v749 = vadd.f32 0.0, %v748
      %750 = vmatmul.f32.gmra.mxu0 %v639
      %v751 = vpop.f32.mrf.mxu0
      %v752 = vadd.f32 0.0, %v751
      %753 = vmatmul.f32.gmra.mxu0 %v642
      %v754 = vpop.f32.mrf.mxu0
      %v755 = vadd.f32 0.0, %v754
      %756 = vmatmul.f32.gmra.mxu0 %v645
      %v757 = vpop.f32.mrf.mxu0
      %v758 = vadd.f32 0.0, %v757
      %759 = vmatmul.f32.gmra.mxu0 %v648
      %v760 = vpop.f32.mrf.mxu0
      %v761 = vadd.f32 0.0, %v760
      %762 = vmatmul.f32.gmra.mxu0 %v651
      %v763 = vpop.f32.mrf.mxu0
      %v764 = vadd.f32 0.0, %v763
      %765 = vmatmul.f32.gmra.mxu0 %v654
      %v766 = vpop.f32.mrf.mxu0
      %v767 = vadd.f32 0.0, %v766
      %768 = vmatmul.f32.gmra.mxu0 %v657
      %v769 = vpop.f32.mrf.mxu0
      %v770 = vadd.f32 0.0, %v769
      %771 = vmatmul.f32.gmra.mxu0 %v660
      %v772 = vpop.f32.mrf.mxu0
      %v773 = vadd.f32 0.0, %v772
      %774 = vmatmul.f32.gmra.mxu0 %v663
      %v775 = vpop.f32.mrf.mxu0
      %v776 = vadd.f32 0.0, %v775
      %777 = vmatmul.f32.gmra.mxu0 %v666
      %v778 = vpop.f32.mrf.mxu0
      %v779 = vadd.f32 0.0, %v778
      %780 = vmatmul.f32.gmra.mxu0 %v669
      %v781 = vpop.f32.mrf.mxu0
      %v782 = vadd.f32 0.0, %v781
      %783 = vmatmul.f32.gmra.mxu0 %v672
      %v784 = vpop.f32.mrf.mxu0
      %v785 = vadd.f32 0.0, %v784
      %786 = vmatmul.f32.gmra.mxu0 %v675
      %v787 = vpop.f32.mrf.mxu0
      %v788 = vadd.f32 0.0, %v787
      %789 = vmatmul.f32.gmra.mxu0 %v678
      %v790 = vpop.f32.mrf.mxu0
      %v791 = vadd.f32 0.0, %v790
      %792 = vmatmul.f32.gmra.mxu0 %v681
      %v793 = vpop.f32.mrf.mxu0
      %v794 = vadd.f32 0.0, %v793
      %795 = vmatmul.f32.gmra.mxu0 %v684
      %v796 = vpop.f32.mrf.mxu0
      %v797 = vadd.f32 0.0, %v796
      %798 = vmatmul.f32.gmra.mxu0 %v687
      %v799 = vpop.f32.mrf.mxu0
      %v800 = vadd.f32 0.0, %v799
      %801 = vmatmul.f32.gmra.mxu0 %v690
      %v802 = vpop.f32.mrf.mxu0
      %v803 = vadd.f32 0.0, %v802
      %804 = vmatmul.f32.gmra.mxu0 %v693
      %v805 = vpop.f32.mrf.mxu0
      %v806 = vadd.f32 0.0, %v805
      %807 = vmatmul.f32.gmra.mxu0 %v696
      %v808 = vpop.f32.mrf.mxu0
      %v809 = vadd.f32 0.0, %v808
      %810 = vmatmul.f32.gmra.mxu0 %v699
      %v811 = vpop.f32.mrf.mxu0
      %v812 = vadd.f32 0.0, %v811
      %813 = vmatmul.f32.gmra.mxu0 %v702
      %v814 = vpop.f32.mrf.mxu0
      %v815 = vadd.f32 0.0, %v814
      %816 = vmatmul.f32.gmra.mxu0 %v705
      %v817 = vpop.f32.mrf.mxu0
      %v818 = vadd.f32 0.0, %v817
      %819 = vmatmul.f32.gmra.mxu0 %v708
      %v820 = vpop.f32.mrf.mxu0
      %v821 = vadd.f32 0.0, %v820
      %822 = vdwg.mxu0
      %vm823 = vcmp.eq.s32.totalorder %v420, 0
      %vm824 = vcmp.eq.s32.totalorder %v421, 0
      %vm825 = vcmp.eq.s32.totalorder %v422, 0
      %vm826 = vcmp.eq.s32.totalorder %v423, 0
      %vm827 = vcmp.eq.s32.totalorder %v424, 0
      %vm828 = vcmp.eq.s32.totalorder %v425, 0
      %vm829 = vcmp.eq.s32.totalorder %v426, 0
      %vm830 = vcmp.eq.s32.totalorder %v427, 0
      %vm831 = vcmp.eq.s32.totalorder %v428, 0
      %vm832 = vcmp.eq.s32.totalorder %v429, 0
      %vm833 = vcmp.eq.s32.totalorder %v430, 0
      %vm834 = vcmp.eq.s32.totalorder %v431, 0
      %vm835 = vcmp.eq.s32.totalorder %v432, 0
      %vm836 = vcmp.eq.s32.totalorder %v433, 0
      %vm837 = vcmp.eq.s32.totalorder %v434, 0
      %vm838 = vcmp.eq.s32.totalorder %v435, 0
      %vm839 = vcmp.eq.s32.totalorder %v436, 0
      %vm840 = vcmp.eq.s32.totalorder %v437, 0
      %vm841 = vcmp.eq.s32.totalorder %v438, 0
      %vm842 = vcmp.eq.s32.totalorder %v439, 0
      %vm843 = vcmp.eq.s32.totalorder %v440, 0
      %vm844 = vcmp.eq.s32.totalorder %v441, 0
      %vm845 = vcmp.eq.s32.totalorder %v442, 0
      %vm846 = vcmp.eq.s32.totalorder %v443, 0
      %vm847 = vcmp.eq.s32.totalorder %v444, 0
      %vm848 = vcmp.eq.s32.totalorder %v445, 0
      %vm849 = vcmp.eq.s32.totalorder %v446, 0
      %vm850 = vcmp.eq.s32.totalorder %v447, 0
      %vm851 = vcmp.eq.s32.totalorder %v448, 0
      %vm852 = vcmp.eq.s32.totalorder %v449, 0
      %vm853 = vcmp.eq.s32.totalorder %v450, 0
      %vm854 = vcmp.eq.s32.totalorder %v451, 0
      %vm855 = vcmp.eq.s32.totalorder %v452, 0
      %vm856 = vcmp.eq.s32.totalorder %v453, 0
      %vm857 = vcmp.eq.s32.totalorder %v454, 0
      %vm858 = vcmp.eq.s32.totalorder %v455, 0
      %vm859 = vcmp.eq.s32.totalorder %v456, 0
      %vm860 = vcmp.eq.s32.totalorder %v457, 0
      %vm861 = vcmp.eq.s32.totalorder %v458, 0
      %vm862 = vcmp.eq.s32.totalorder %v459, 0
      %vm863 = vcmp.eq.s32.totalorder %v460, 0
      %vm864 = vcmp.eq.s32.totalorder %v461, 0
      %vm865 = vcmp.eq.s32.totalorder %v462, 0
      %vm866 = vcmp.eq.s32.totalorder %v463, 0
      %vm867 = vcmp.eq.s32.totalorder %v464, 0
      %vm868 = vcmp.eq.s32.totalorder %v465, 0
      %vm869 = vcmp.eq.s32.totalorder %v466, 0
      %vm870 = vcmp.eq.s32.totalorder %v467, 0
      %vm871 = vcmp.eq.s32.totalorder %v468, 0
      %vm872 = vcmp.eq.s32.totalorder %v469, 0
      %vm873 = vcmp.eq.s32.totalorder %v470, 0
      %vm874 = vcmp.eq.s32.totalorder %v471, 0
      %vm875 = vcmp.eq.s32.totalorder %v472, 0
      %vm876 = vcmp.eq.s32.totalorder %v473, 0
      %vm877 = vcmp.eq.s32.totalorder %v474, 0
      %vm878 = vcmp.eq.s32.totalorder %v475, 0
      %vm879 = vcmp.eq.s32.totalorder %v476, 0
      %vm880 = vcmp.eq.s32.totalorder %v477, 0
      %vm881 = vcmp.eq.s32.totalorder %v478, 0
      %vm882 = vcmp.eq.s32.totalorder %v479, 0
      %vm883 = vcmp.eq.s32.totalorder %v480, 0
      %vm884 = vcmp.eq.s32.totalorder %v481, 0
      %vm885 = vcmp.eq.s32.totalorder %v482, 0
      %vm886 = vcmp.eq.s32.totalorder %v483, 0
      %vm887 = vmand %vm823, %vm855
      %vm888 = vmand %vm824, %vm856
      %vm889 = vmand %vm825, %vm857
      %vm890 = vmand %vm826, %vm858
      %vm891 = vmand %vm827, %vm859
      %vm892 = vmand %vm828, %vm860
      %vm893 = vmand %vm829, %vm861
      %vm894 = vmand %vm830, %vm862
      %vm895 = vmand %vm831, %vm863
      %vm896 = vmand %vm832, %vm864
      %vm897 = vmand %vm833, %vm865
      %vm898 = vmand %vm834, %vm866
      %vm899 = vmand %vm835, %vm867
      %vm900 = vmand %vm836, %vm868
      %vm901 = vmand %vm837, %vm869
      %vm902 = vmand %vm838, %vm870
      %vm903 = vmand %vm839, %vm871
      %vm904 = vmand %vm840, %vm872
      %vm905 = vmand %vm841, %vm873
      %vm906 = vmand %vm842, %vm874
      %vm907 = vmand %vm843, %vm875
      %vm908 = vmand %vm844, %vm876
      %vm909 = vmand %vm845, %vm877
      %vm910 = vmand %vm846, %vm878
      %vm911 = vmand %vm847, %vm879
      %vm912 = vmand %vm848, %vm880
      %vm913 = vmand %vm849, %vm881
      %vm914 = vmand %vm850, %vm882
      %vm915 = vmand %vm851, %vm883
      %vm916 = vmand %vm852, %vm884
      %vm917 = vmand %vm853, %vm885
      %vm918 = vmand %vm854, %vm886
      %v919 = vsel %vm887, 1.0, 0.0
      %v920 = vsel %vm888, 1.0, 0.0
      %v921 = vsel %vm889, 1.0, 0.0
      %v922 = vsel %vm890, 1.0, 0.0
      %v923 = vsel %vm891, 1.0, 0.0
      %v924 = vsel %vm892, 1.0, 0.0
      %v925 = vsel %vm893, 1.0, 0.0
      %v926 = vsel %vm894, 1.0, 0.0
      %v927 = vsel %vm895, 1.0, 0.0
      %v928 = vsel %vm896, 1.0, 0.0
      %v929 = vsel %vm897, 1.0, 0.0
      %v930 = vsel %vm898, 1.0, 0.0
      %v931 = vsel %vm899, 1.0, 0.0
      %v932 = vsel %vm900, 1.0, 0.0
      %v933 = vsel %vm901, 1.0, 0.0
      %v934 = vsel %vm902, 1.0, 0.0
      %v935 = vsel %vm903, 1.0, 0.0
      %v936 = vsel %vm904, 1.0, 0.0
      %v937 = vsel %vm905, 1.0, 0.0
      %v938 = vsel %vm906, 1.0, 0.0
      %v939 = vsel %vm907, 1.0, 0.0
      %v940 = vsel %vm908, 1.0, 0.0
      %v941 = vsel %vm909, 1.0, 0.0
      %v942 = vsel %vm910, 1.0, 0.0
      %v943 = vsel %vm911, 1.0, 0.0
      %v944 = vsel %vm912, 1.0, 0.0
      %v945 = vsel %vm913, 1.0, 0.0
      %v946 = vsel %vm914, 1.0, 0.0
      %v947 = vsel %vm915, 1.0, 0.0
      %v948 = vsel %vm916, 1.0, 0.0
      %v949 = vsel %vm917, 1.0, 0.0
      %v950 = vsel %vm918, 1.0, 0.0
      %v951 = vmul.f32 %v919, %v728
      %v952 = vmul.f32 %v920, %v731
      %v953 = vmul.f32 %v921, %v734
      %v954 = vmul.f32 %v922, %v737
      %v955 = vmul.f32 %v923, %v740
      %v956 = vmul.f32 %v924, %v743
      %v957 = vmul.f32 %v925, %v746
      %v958 = vmul.f32 %v926, %v749
      %v959 = vmul.f32 %v927, %v752
      %v960 = vmul.f32 %v928, %v755
      %v961 = vmul.f32 %v929, %v758
      %v962 = vmul.f32 %v930, %v761
      %v963 = vmul.f32 %v931, %v764
      %v964 = vmul.f32 %v932, %v767
      %v965 = vmul.f32 %v933, %v770
      %v966 = vmul.f32 %v934, %v773
      %v967 = vmul.f32 %v935, %v776
      %v968 = vmul.f32 %v936, %v779
      %v969 = vmul.f32 %v937, %v782
      %v970 = vmul.f32 %v938, %v785
      %v971 = vmul.f32 %v939, %v788
      %v972 = vmul.f32 %v940, %v791
      %v973 = vmul.f32 %v941, %v794
      %v974 = vmul.f32 %v942, %v797
      %v975 = vmul.f32 %v943, %v800
      %v976 = vmul.f32 %v944, %v803
      %v977 = vmul.f32 %v945, %v806
      %v978 = vmul.f32 %v946, %v809
      %v979 = vmul.f32 %v947, %v812
      %v980 = vmul.f32 %v948, %v815
      %v981 = vmul.f32 %v949, %v818
      %v982 = vmul.f32 %v950, %v821
      %v983 = vadd.f32 %v951, 0.0
      %v984 = vadd.f32 %v952, 0.0
      %v985 = vadd.f32 %v953, 0.0
      %v986 = vadd.f32 %v954, 0.0
      %v987 = vadd.f32 %v955, 0.0
      %v988 = vadd.f32 %v956, 0.0
      %v989 = vadd.f32 %v957, 0.0
      %v990 = vadd.f32 %v958, 0.0
      %v991 = vadd.f32 %v959, 0.0
      %v992 = vadd.f32 %v960, 0.0
      %v993 = vadd.f32 %v961, 0.0
      %v994 = vadd.f32 %v962, 0.0
      %v995 = vadd.f32 %v963, 0.0
      %v996 = vadd.f32 %v964, 0.0
      %v997 = vadd.f32 %v965, 0.0
      %v998 = vadd.f32 %v966, 0.0
      %v999 = vadd.f32 %v967, 0.0
      %v1000 = vadd.f32 %v968, 0.0
      %v1001 = vadd.f32 %v969, 0.0
      %v1002 = vadd.f32 %v970, 0.0
      %v1003 = vadd.f32 %v971, 0.0
      %v1004 = vadd.f32 %v972, 0.0
      %v1005 = vadd.f32 %v973, 0.0
      %v1006 = vadd.f32 %v974, 0.0
      %v1007 = vadd.f32 %v975, 0.0
      %v1008 = vadd.f32 %v976, 0.0
      %v1009 = vadd.f32 %v977, 0.0
      %v1010 = vadd.f32 %v978, 0.0
      %v1011 = vadd.f32 %v979, 0.0
      %v1012 = vadd.f32 %v980, 0.0
      %v1013 = vadd.f32 %v981, 0.0
      %v1014 = vadd.f32 %v982, 0.0
      %vm1015 = vcmp.eq.s32.totalorder %v452, 1
      %vm1016 = vcmp.eq.s32.totalorder %v453, 1
      %vm1017 = vcmp.eq.s32.totalorder %v454, 1
      %vm1018 = vcmp.eq.s32.totalorder %v455, 1
      %vm1019 = vcmp.eq.s32.totalorder %v456, 1
      %vm1020 = vcmp.eq.s32.totalorder %v457, 1
      %vm1021 = vcmp.eq.s32.totalorder %v458, 1
      %vm1022 = vcmp.eq.s32.totalorder %v459, 1
      %vm1023 = vcmp.eq.s32.totalorder %v460, 1
      %vm1024 = vcmp.eq.s32.totalorder %v461, 1
      %vm1025 = vcmp.eq.s32.totalorder %v462, 1
      %vm1026 = vcmp.eq.s32.totalorder %v463, 1
      %vm1027 = vcmp.eq.s32.totalorder %v464, 1
      %vm1028 = vcmp.eq.s32.totalorder %v465, 1
      %vm1029 = vcmp.eq.s32.totalorder %v466, 1
      %vm1030 = vcmp.eq.s32.totalorder %v467, 1
      %vm1031 = vcmp.eq.s32.totalorder %v468, 1
      %vm1032 = vcmp.eq.s32.totalorder %v469, 1
      %vm1033 = vcmp.eq.s32.totalorder %v470, 1
      %vm1034 = vcmp.eq.s32.totalorder %v471, 1
      %vm1035 = vcmp.eq.s32.totalorder %v472, 1
      %vm1036 = vcmp.eq.s32.totalorder %v473, 1
      %vm1037 = vcmp.eq.s32.totalorder %v474, 1
      %vm1038 = vcmp.eq.s32.totalorder %v475, 1
      %vm1039 = vcmp.eq.s32.totalorder %v476, 1
      %vm1040 = vcmp.eq.s32.totalorder %v477, 1
      %vm1041 = vcmp.eq.s32.totalorder %v478, 1
      %vm1042 = vcmp.eq.s32.totalorder %v479, 1
      %vm1043 = vcmp.eq.s32.totalorder %v480, 1
      %vm1044 = vcmp.eq.s32.totalorder %v481, 1
      %vm1045 = vcmp.eq.s32.totalorder %v482, 1
      %vm1046 = vcmp.eq.s32.totalorder %v483, 1
      %vm1047 = vmand %vm823, %vm1015
      %vm1048 = vmand %vm824, %vm1016
      %vm1049 = vmand %vm825, %vm1017
      %vm1050 = vmand %vm826, %vm1018
      %vm1051 = vmand %vm827, %vm1019
      %vm1052 = vmand %vm828, %vm1020
      %vm1053 = vmand %vm829, %vm1021
      %vm1054 = vmand %vm830, %vm1022
      %vm1055 = vmand %vm831, %vm1023
      %vm1056 = vmand %vm832, %vm1024
      %vm1057 = vmand %vm833, %vm1025
      %vm1058 = vmand %vm834, %vm1026
      %vm1059 = vmand %vm835, %vm1027
      %vm1060 = vmand %vm836, %vm1028
      %vm1061 = vmand %vm837, %vm1029
      %vm1062 = vmand %vm838, %vm1030
      %vm1063 = vmand %vm839, %vm1031
      %vm1064 = vmand %vm840, %vm1032
      %vm1065 = vmand %vm841, %vm1033
      %vm1066 = vmand %vm842, %vm1034
      %vm1067 = vmand %vm843, %vm1035
      %vm1068 = vmand %vm844, %vm1036
      %vm1069 = vmand %vm845, %vm1037
      %vm1070 = vmand %vm846, %vm1038
      %vm1071 = vmand %vm847, %vm1039
      %vm1072 = vmand %vm848, %vm1040
      %vm1073 = vmand %vm849, %vm1041
      %vm1074 = vmand %vm850, %vm1042
      %vm1075 = vmand %vm851, %vm1043
      %vm1076 = vmand %vm852, %vm1044
      %vm1077 = vmand %vm853, %vm1045
      %vm1078 = vmand %vm854, %vm1046
      %v1079 = vsel %vm1047, 1.0, 0.0
      %v1080 = vsel %vm1048, 1.0, 0.0
      %v1081 = vsel %vm1049, 1.0, 0.0
      %v1082 = vsel %vm1050, 1.0, 0.0
      %v1083 = vsel %vm1051, 1.0, 0.0
      %v1084 = vsel %vm1052, 1.0, 0.0
      %v1085 = vsel %vm1053, 1.0, 0.0
      %v1086 = vsel %vm1054, 1.0, 0.0
      %v1087 = vsel %vm1055, 1.0, 0.0
      %v1088 = vsel %vm1056, 1.0, 0.0
      %v1089 = vsel %vm1057, 1.0, 0.0
      %v1090 = vsel %vm1058, 1.0, 0.0
      %v1091 = vsel %vm1059, 1.0, 0.0
      %v1092 = vsel %vm1060, 1.0, 0.0
      %v1093 = vsel %vm1061, 1.0, 0.0
      %v1094 = vsel %vm1062, 1.0, 0.0
      %v1095 = vsel %vm1063, 1.0, 0.0
      %v1096 = vsel %vm1064, 1.0, 0.0
      %v1097 = vsel %vm1065, 1.0, 0.0
      %v1098 = vsel %vm1066, 1.0, 0.0
      %v1099 = vsel %vm1067, 1.0, 0.0
      %v1100 = vsel %vm1068, 1.0, 0.0
      %v1101 = vsel %vm1069, 1.0, 0.0
      %v1102 = vsel %vm1070, 1.0, 0.0
      %v1103 = vsel %vm1071, 1.0, 0.0
      %v1104 = vsel %vm1072, 1.0, 0.0
      %v1105 = vsel %vm1073, 1.0, 0.0
      %v1106 = vsel %vm1074, 1.0, 0.0
      %v1107 = vsel %vm1075, 1.0, 0.0
      %v1108 = vsel %vm1076, 1.0, 0.0
      %v1109 = vsel %vm1077, 1.0, 0.0
      %v1110 = vsel %vm1078, 1.0, 0.0
      %v1111 = vmul.f32 %v1079, %v728
      %v1112 = vmul.f32 %v1080, %v731
      %v1113 = vmul.f32 %v1081, %v734
      %v1114 = vmul.f32 %v1082, %v737
      %v1115 = vmul.f32 %v1083, %v740
      %v1116 = vmul.f32 %v1084, %v743
      %v1117 = vmul.f32 %v1085, %v746
      %v1118 = vmul.f32 %v1086, %v749
      %v1119 = vmul.f32 %v1087, %v752
      %v1120 = vmul.f32 %v1088, %v755
      %v1121 = vmul.f32 %v1089, %v758
      %v1122 = vmul.f32 %v1090, %v761
      %v1123 = vmul.f32 %v1091, %v764
      %v1124 = vmul.f32 %v1092, %v767
      %v1125 = vmul.f32 %v1093, %v770
      %v1126 = vmul.f32 %v1094, %v773
      %v1127 = vmul.f32 %v1095, %v776
      %v1128 = vmul.f32 %v1096, %v779
      %v1129 = vmul.f32 %v1097, %v782
      %v1130 = vmul.f32 %v1098, %v785
      %v1131 = vmul.f32 %v1099, %v788
      %v1132 = vmul.f32 %v1100, %v791
      %v1133 = vmul.f32 %v1101, %v794
      %v1134 = vmul.f32 %v1102, %v797
      %v1135 = vmul.f32 %v1103, %v800
      %v1136 = vmul.f32 %v1104, %v803
      %v1137 = vmul.f32 %v1105, %v806
      %v1138 = vmul.f32 %v1106, %v809
      %v1139 = vmul.f32 %v1107, %v812
      %v1140 = vmul.f32 %v1108, %v815
      %v1141 = vmul.f32 %v1109, %v818
      %v1142 = vmul.f32 %v1110, %v821
      %1175 = vrot.lane.b32.xlu0 %v1111, 120
      %v1176 = vpop.permute.xlu0 %1175
      %1177 = vrot.lane.b32.xlu0 %v1112, 120
      %v1178 = vpop.permute.xlu0 %1177
      %1179 = vrot.lane.b32.xlu0 %v1113, 120
      %v1180 = vpop.permute.xlu0 %1179
      %1181 = vrot.lane.b32.xlu0 %v1114, 120
      %v1182 = vpop.permute.xlu0 %1181
      %1183 = vrot.lane.b32.xlu0 %v1115, 120
      %v1184 = vpop.permute.xlu0 %1183
      %1185 = vrot.lane.b32.xlu0 %v1116, 120
      %v1186 = vpop.permute.xlu0 %1185
      %1187 = vrot.lane.b32.xlu0 %v1117, 120
      %v1188 = vpop.permute.xlu0 %1187
      %1189 = vrot.lane.b32.xlu0 %v1118, 120
      %v1190 = vpop.permute.xlu0 %1189
      %1191 = vrot.lane.b32.xlu0 %v1119, 120
      %v1192 = vpop.permute.xlu0 %1191
      %1193 = vrot.lane.b32.xlu0 %v1120, 120
      %v1194 = vpop.permute.xlu0 %1193
      %1195 = vrot.lane.b32.xlu0 %v1121, 120
      %v1196 = vpop.permute.xlu0 %1195
      %1197 = vrot.lane.b32.xlu0 %v1122, 120
      %v1198 = vpop.permute.xlu0 %1197
      %1199 = vrot.lane.b32.xlu0 %v1123, 120
      %v1200 = vpop.permute.xlu0 %1199
      %1201 = vrot.lane.b32.xlu0 %v1124, 120
      %v1202 = vpop.permute.xlu0 %1201
      %1203 = vrot.lane.b32.xlu0 %v1125, 120
      %v1204 = vpop.permute.xlu0 %1203
      %1205 = vrot.lane.b32.xlu0 %v1126, 120
      %v1206 = vpop.permute.xlu0 %1205
      %1207 = vrot.lane.b32.xlu0 %v1127, 120
      %v1208 = vpop.permute.xlu0 %1207
      %1209 = vrot.lane.b32.xlu0 %v1128, 120
      %v1210 = vpop.permute.xlu0 %1209
      %1211 = vrot.lane.b32.xlu0 %v1129, 120
      %v1212 = vpop.permute.xlu0 %1211
      %1213 = vrot.lane.b32.xlu0 %v1130, 120
      %v1214 = vpop.permute.xlu0 %1213
      %1215 = vrot.lane.b32.xlu0 %v1131, 120
      %v1216 = vpop.permute.xlu0 %1215
      %1217 = vrot.lane.b32.xlu0 %v1132, 120
      %v1218 = vpop.permute.xlu0 %1217
      %1219 = vrot.lane.b32.xlu0 %v1133, 120
      %v1220 = vpop.permute.xlu0 %1219
      %1221 = vrot.lane.b32.xlu0 %v1134, 120
      %v1222 = vpop.permute.xlu0 %1221
      %1223 = vrot.lane.b32.xlu0 %v1135, 120
      %v1224 = vpop.permute.xlu0 %1223
      %1225 = vrot.lane.b32.xlu0 %v1136, 120
      %v1226 = vpop.permute.xlu0 %1225
      %1227 = vrot.lane.b32.xlu0 %v1137, 120
      %v1228 = vpop.permute.xlu0 %1227
      %1229 = vrot.lane.b32.xlu0 %v1138, 120
      %v1230 = vpop.permute.xlu0 %1229
      %1231 = vrot.lane.b32.xlu0 %v1139, 120
      %v1232 = vpop.permute.xlu0 %1231
      %1233 = vrot.lane.b32.xlu0 %v1140, 120
      %v1234 = vpop.permute.xlu0 %1233
      %1235 = vrot.lane.b32.xlu0 %v1141, 120
      %v1236 = vpop.permute.xlu0 %1235
      %1237 = vrot.lane.b32.xlu0 %v1142, 120
      %v1238 = vpop.permute.xlu0 %1237
      %v1271 = vadd.f32 %v983, %v1176
      %v1272 = vadd.f32 %v984, %v1178
      %v1273 = vadd.f32 %v985, %v1180
      %v1274 = vadd.f32 %v986, %v1182
      %v1275 = vadd.f32 %v987, %v1184
      %v1276 = vadd.f32 %v988, %v1186
      %v1277 = vadd.f32 %v989, %v1188
      %v1278 = vadd.f32 %v990, %v1190
      %v1279 = vadd.f32 %v991, %v1192
      %v1280 = vadd.f32 %v992, %v1194
      %v1281 = vadd.f32 %v993, %v1196
      %v1282 = vadd.f32 %v994, %v1198
      %v1283 = vadd.f32 %v995, %v1200
      %v1284 = vadd.f32 %v996, %v1202
      %v1285 = vadd.f32 %v997, %v1204
      %v1286 = vadd.f32 %v998, %v1206
      %v1287 = vadd.f32 %v999, %v1208
      %v1288 = vadd.f32 %v1000, %v1210
      %v1289 = vadd.f32 %v1001, %v1212
      %v1290 = vadd.f32 %v1002, %v1214
      %v1291 = vadd.f32 %v1003, %v1216
      %v1292 = vadd.f32 %v1004, %v1218
      %v1293 = vadd.f32 %v1005, %v1220
      %v1294 = vadd.f32 %v1006, %v1222
      %v1295 = vadd.f32 %v1007, %v1224
      %v1296 = vadd.f32 %v1008, %v1226
      %v1297 = vadd.f32 %v1009, %v1228
      %v1298 = vadd.f32 %v1010, %v1230
      %v1299 = vadd.f32 %v1011, %v1232
      %v1300 = vadd.f32 %v1012, %v1234
      %v1301 = vadd.f32 %v1013, %v1236
      %v1302 = vadd.f32 %v1014, %v1238
      %vm1303 = vcmp.eq.s32.totalorder %v420, 1
      %vm1304 = vcmp.eq.s32.totalorder %v421, 1
      %vm1305 = vcmp.eq.s32.totalorder %v422, 1
      %vm1306 = vcmp.eq.s32.totalorder %v423, 1
      %vm1307 = vcmp.eq.s32.totalorder %v424, 1
      %vm1308 = vcmp.eq.s32.totalorder %v425, 1
      %vm1309 = vcmp.eq.s32.totalorder %v426, 1
      %vm1310 = vcmp.eq.s32.totalorder %v427, 1
      %vm1311 = vcmp.eq.s32.totalorder %v428, 1
      %vm1312 = vcmp.eq.s32.totalorder %v429, 1
      %vm1313 = vcmp.eq.s32.totalorder %v430, 1
      %vm1314 = vcmp.eq.s32.totalorder %v431, 1
      %vm1315 = vcmp.eq.s32.totalorder %v432, 1
      %vm1316 = vcmp.eq.s32.totalorder %v433, 1
      %vm1317 = vcmp.eq.s32.totalorder %v434, 1
      %vm1318 = vcmp.eq.s32.totalorder %v435, 1
      %vm1319 = vcmp.eq.s32.totalorder %v436, 1
      %vm1320 = vcmp.eq.s32.totalorder %v437, 1
      %vm1321 = vcmp.eq.s32.totalorder %v438, 1
      %vm1322 = vcmp.eq.s32.totalorder %v439, 1
      %vm1323 = vcmp.eq.s32.totalorder %v440, 1
      %vm1324 = vcmp.eq.s32.totalorder %v441, 1
      %vm1325 = vcmp.eq.s32.totalorder %v442, 1
      %vm1326 = vcmp.eq.s32.totalorder %v443, 1
      %vm1327 = vcmp.eq.s32.totalorder %v444, 1
      %vm1328 = vcmp.eq.s32.totalorder %v445, 1
      %vm1329 = vcmp.eq.s32.totalorder %v446, 1
      %vm1330 = vcmp.eq.s32.totalorder %v447, 1
      %vm1331 = vcmp.eq.s32.totalorder %v448, 1
      %vm1332 = vcmp.eq.s32.totalorder %v449, 1
      %vm1333 = vcmp.eq.s32.totalorder %v450, 1
      %vm1334 = vcmp.eq.s32.totalorder %v451, 1
      %vm1335 = vmand %vm1303, %vm855
      %vm1336 = vmand %vm1304, %vm856
      %vm1337 = vmand %vm1305, %vm857
      %vm1338 = vmand %vm1306, %vm858
      %vm1339 = vmand %vm1307, %vm859
      %vm1340 = vmand %vm1308, %vm860
      %vm1341 = vmand %vm1309, %vm861
      %vm1342 = vmand %vm1310, %vm862
      %vm1343 = vmand %vm1311, %vm863
      %vm1344 = vmand %vm1312, %vm864
      %vm1345 = vmand %vm1313, %vm865
      %vm1346 = vmand %vm1314, %vm866
      %vm1347 = vmand %vm1315, %vm867
      %vm1348 = vmand %vm1316, %vm868
      %vm1349 = vmand %vm1317, %vm869
      %vm1350 = vmand %vm1318, %vm870
      %vm1351 = vmand %vm1319, %vm871
      %vm1352 = vmand %vm1320, %vm872
      %vm1353 = vmand %vm1321, %vm873
      %vm1354 = vmand %vm1322, %vm874
      %vm1355 = vmand %vm1323, %vm875
      %vm1356 = vmand %vm1324, %vm876
      %vm1357 = vmand %vm1325, %vm877
      %vm1358 = vmand %vm1326, %vm878
      %vm1359 = vmand %vm1327, %vm879
      %vm1360 = vmand %vm1328, %vm880
      %vm1361 = vmand %vm1329, %vm881
      %vm1362 = vmand %vm1330, %vm882
      %vm1363 = vmand %vm1331, %vm883
      %vm1364 = vmand %vm1332, %vm884
      %vm1365 = vmand %vm1333, %vm885
      %vm1366 = vmand %vm1334, %vm886
      %v1367 = vsel %vm1335, 1.0, 0.0
      %v1368 = vsel %vm1336, 1.0, 0.0
      %v1369 = vsel %vm1337, 1.0, 0.0
      %v1370 = vsel %vm1338, 1.0, 0.0
      %v1371 = vsel %vm1339, 1.0, 0.0
      %v1372 = vsel %vm1340, 1.0, 0.0
      %v1373 = vsel %vm1341, 1.0, 0.0
      %v1374 = vsel %vm1342, 1.0, 0.0
      %v1375 = vsel %vm1343, 1.0, 0.0
      %v1376 = vsel %vm1344, 1.0, 0.0
      %v1377 = vsel %vm1345, 1.0, 0.0
      %v1378 = vsel %vm1346, 1.0, 0.0
      %v1379 = vsel %vm1347, 1.0, 0.0
      %v1380 = vsel %vm1348, 1.0, 0.0
      %v1381 = vsel %vm1349, 1.0, 0.0
      %v1382 = vsel %vm1350, 1.0, 0.0
      %v1383 = vsel %vm1351, 1.0, 0.0
      %v1384 = vsel %vm1352, 1.0, 0.0
      %v1385 = vsel %vm1353, 1.0, 0.0
      %v1386 = vsel %vm1354, 1.0, 0.0
      %v1387 = vsel %vm1355, 1.0, 0.0
      %v1388 = vsel %vm1356, 1.0, 0.0
      %v1389 = vsel %vm1357, 1.0, 0.0
      %v1390 = vsel %vm1358, 1.0, 0.0
      %v1391 = vsel %vm1359, 1.0, 0.0
      %v1392 = vsel %vm1360, 1.0, 0.0
      %v1393 = vsel %vm1361, 1.0, 0.0
      %v1394 = vsel %vm1362, 1.0, 0.0
      %v1395 = vsel %vm1363, 1.0, 0.0
      %v1396 = vsel %vm1364, 1.0, 0.0
      %v1397 = vsel %vm1365, 1.0, 0.0
      %v1398 = vsel %vm1366, 1.0, 0.0
      %v1399 = vmul.f32 %v1367, %v728
      %v1400 = vmul.f32 %v1368, %v731
      %v1401 = vmul.f32 %v1369, %v734
      %v1402 = vmul.f32 %v1370, %v737
      %v1403 = vmul.f32 %v1371, %v740
      %v1404 = vmul.f32 %v1372, %v743
      %v1405 = vmul.f32 %v1373, %v746
      %v1406 = vmul.f32 %v1374, %v749
      %v1407 = vmul.f32 %v1375, %v752
      %v1408 = vmul.f32 %v1376, %v755
      %v1409 = vmul.f32 %v1377, %v758
      %v1410 = vmul.f32 %v1378, %v761
      %v1411 = vmul.f32 %v1379, %v764
      %v1412 = vmul.f32 %v1380, %v767
      %v1413 = vmul.f32 %v1381, %v770
      %v1414 = vmul.f32 %v1382, %v773
      %v1415 = vmul.f32 %v1383, %v776
      %v1416 = vmul.f32 %v1384, %v779
      %v1417 = vmul.f32 %v1385, %v782
      %v1418 = vmul.f32 %v1386, %v785
      %v1419 = vmul.f32 %v1387, %v788
      %v1420 = vmul.f32 %v1388, %v791
      %v1421 = vmul.f32 %v1389, %v794
      %v1422 = vmul.f32 %v1390, %v797
      %v1423 = vmul.f32 %v1391, %v800
      %v1424 = vmul.f32 %v1392, %v803
      %v1425 = vmul.f32 %v1393, %v806
      %v1426 = vmul.f32 %v1394, %v809
      %v1427 = vmul.f32 %v1395, %v812
      %v1428 = vmul.f32 %v1396, %v815
      %v1429 = vmul.f32 %v1397, %v818
      %v1430 = vmul.f32 %v1398, %v821
      %1463 = vrot.lane.b32.xlu0 %v1399, 112
      %v1464 = vpop.permute.xlu0 %1463
      %1465 = vrot.lane.b32.xlu0 %v1400, 112
      %v1466 = vpop.permute.xlu0 %1465
      %1467 = vrot.lane.b32.xlu0 %v1401, 112
      %v1468 = vpop.permute.xlu0 %1467
      %1469 = vrot.lane.b32.xlu0 %v1402, 112
      %v1470 = vpop.permute.xlu0 %1469
      %1471 = vrot.lane.b32.xlu0 %v1403, 112
      %v1472 = vpop.permute.xlu0 %1471
      %1473 = vrot.lane.b32.xlu0 %v1404, 112
      %v1474 = vpop.permute.xlu0 %1473
      %1475 = vrot.lane.b32.xlu0 %v1405, 112
      %v1476 = vpop.permute.xlu0 %1475
      %1477 = vrot.lane.b32.xlu0 %v1406, 112
      %v1478 = vpop.permute.xlu0 %1477
      %1479 = vrot.lane.b32.xlu0 %v1407, 112
      %v1480 = vpop.permute.xlu0 %1479
      %1481 = vrot.lane.b32.xlu0 %v1408, 112
      %v1482 = vpop.permute.xlu0 %1481
      %1483 = vrot.lane.b32.xlu0 %v1409, 112
      %v1484 = vpop.permute.xlu0 %1483
      %1485 = vrot.lane.b32.xlu0 %v1410, 112
      %v1486 = vpop.permute.xlu0 %1485
      %1487 = vrot.lane.b32.xlu0 %v1411, 112
      %v1488 = vpop.permute.xlu0 %1487
      %1489 = vrot.lane.b32.xlu0 %v1412, 112
      %v1490 = vpop.permute.xlu0 %1489
      %1491 = vrot.lane.b32.xlu0 %v1413, 112
      %v1492 = vpop.permute.xlu0 %1491
      %1493 = vrot.lane.b32.xlu0 %v1414, 112
      %v1494 = vpop.permute.xlu0 %1493
      %1495 = vrot.lane.b32.xlu0 %v1415, 112
      %v1496 = vpop.permute.xlu0 %1495
      %1497 = vrot.lane.b32.xlu0 %v1416, 112
      %v1498 = vpop.permute.xlu0 %1497
      %1499 = vrot.lane.b32.xlu0 %v1417, 112
      %v1500 = vpop.permute.xlu0 %1499
      %1501 = vrot.lane.b32.xlu0 %v1418, 112
      %v1502 = vpop.permute.xlu0 %1501
      %1503 = vrot.lane.b32.xlu0 %v1419, 112
      %v1504 = vpop.permute.xlu0 %1503
      %1505 = vrot.lane.b32.xlu0 %v1420, 112
      %v1506 = vpop.permute.xlu0 %1505
      %1507 = vrot.lane.b32.xlu0 %v1421, 112
      %v1508 = vpop.permute.xlu0 %1507
      %1509 = vrot.lane.b32.xlu0 %v1422, 112
      %v1510 = vpop.permute.xlu0 %1509
      %1511 = vrot.lane.b32.xlu0 %v1423, 112
      %v1512 = vpop.permute.xlu0 %1511
      %1513 = vrot.lane.b32.xlu0 %v1424, 112
      %v1514 = vpop.permute.xlu0 %1513
      %1515 = vrot.lane.b32.xlu0 %v1425, 112
      %v1516 = vpop.permute.xlu0 %1515
      %1517 = vrot.lane.b32.xlu0 %v1426, 112
      %v1518 = vpop.permute.xlu0 %1517
      %1519 = vrot.lane.b32.xlu0 %v1427, 112
      %v1520 = vpop.permute.xlu0 %1519
      %1521 = vrot.lane.b32.xlu0 %v1428, 112
      %v1522 = vpop.permute.xlu0 %1521
      %1523 = vrot.lane.b32.xlu0 %v1429, 112
      %v1524 = vpop.permute.xlu0 %1523
      %1525 = vrot.lane.b32.xlu0 %v1430, 112
      %v1526 = vpop.permute.xlu0 %1525
      %v1559 = vadd.f32 %v1271, %v1464
      %v1560 = vadd.f32 %v1272, %v1466
      %v1561 = vadd.f32 %v1273, %v1468
      %v1562 = vadd.f32 %v1274, %v1470
      %v1563 = vadd.f32 %v1275, %v1472
      %v1564 = vadd.f32 %v1276, %v1474
      %v1565 = vadd.f32 %v1277, %v1476
      %v1566 = vadd.f32 %v1278, %v1478
      %v1567 = vadd.f32 %v1279, %v1480
      %v1568 = vadd.f32 %v1280, %v1482
      %v1569 = vadd.f32 %v1281, %v1484
      %v1570 = vadd.f32 %v1282, %v1486
      %v1571 = vadd.f32 %v1283, %v1488
      %v1572 = vadd.f32 %v1284, %v1490
      %v1573 = vadd.f32 %v1285, %v1492
      %v1574 = vadd.f32 %v1286, %v1494
      %v1575 = vadd.f32 %v1287, %v1496
      %v1576 = vadd.f32 %v1288, %v1498
      %v1577 = vadd.f32 %v1289, %v1500
      %v1578 = vadd.f32 %v1290, %v1502
      %v1579 = vadd.f32 %v1291, %v1504
      %v1580 = vadd.f32 %v1292, %v1506
      %v1581 = vadd.f32 %v1293, %v1508
      %v1582 = vadd.f32 %v1294, %v1510
      %v1583 = vadd.f32 %v1295, %v1512
      %v1584 = vadd.f32 %v1296, %v1514
      %v1585 = vadd.f32 %v1297, %v1516
      %v1586 = vadd.f32 %v1298, %v1518
      %v1587 = vadd.f32 %v1299, %v1520
      %v1588 = vadd.f32 %v1300, %v1522
      %v1589 = vadd.f32 %v1301, %v1524
      %v1590 = vadd.f32 %v1302, %v1526
      %vm1591 = vmand %vm1303, %vm1015
      %vm1592 = vmand %vm1304, %vm1016
      %vm1593 = vmand %vm1305, %vm1017
      %vm1594 = vmand %vm1306, %vm1018
      %vm1595 = vmand %vm1307, %vm1019
      %vm1596 = vmand %vm1308, %vm1020
      %vm1597 = vmand %vm1309, %vm1021
      %vm1598 = vmand %vm1310, %vm1022
      %vm1599 = vmand %vm1311, %vm1023
      %vm1600 = vmand %vm1312, %vm1024
      %vm1601 = vmand %vm1313, %vm1025
      %vm1602 = vmand %vm1314, %vm1026
      %vm1603 = vmand %vm1315, %vm1027
      %vm1604 = vmand %vm1316, %vm1028
      %vm1605 = vmand %vm1317, %vm1029
      %vm1606 = vmand %vm1318, %vm1030
      %vm1607 = vmand %vm1319, %vm1031
      %vm1608 = vmand %vm1320, %vm1032
      %vm1609 = vmand %vm1321, %vm1033
      %vm1610 = vmand %vm1322, %vm1034
      %vm1611 = vmand %vm1323, %vm1035
      %vm1612 = vmand %vm1324, %vm1036
      %vm1613 = vmand %vm1325, %vm1037
      %vm1614 = vmand %vm1326, %vm1038
      %vm1615 = vmand %vm1327, %vm1039
      %vm1616 = vmand %vm1328, %vm1040
      %vm1617 = vmand %vm1329, %vm1041
      %vm1618 = vmand %vm1330, %vm1042
      %vm1619 = vmand %vm1331, %vm1043
      %vm1620 = vmand %vm1332, %vm1044
      %vm1621 = vmand %vm1333, %vm1045
      %vm1622 = vmand %vm1334, %vm1046
      %v1623 = vsel %vm1591, 1.0, 0.0
      %v1624 = vsel %vm1592, 1.0, 0.0
      %v1625 = vsel %vm1593, 1.0, 0.0
      %v1626 = vsel %vm1594, 1.0, 0.0
      %v1627 = vsel %vm1595, 1.0, 0.0
      %v1628 = vsel %vm1596, 1.0, 0.0
      %v1629 = vsel %vm1597, 1.0, 0.0
      %v1630 = vsel %vm1598, 1.0, 0.0
      %v1631 = vsel %vm1599, 1.0, 0.0
      %v1632 = vsel %vm1600, 1.0, 0.0
      %v1633 = vsel %vm1601, 1.0, 0.0
      %v1634 = vsel %vm1602, 1.0, 0.0
      %v1635 = vsel %vm1603, 1.0, 0.0
      %v1636 = vsel %vm1604, 1.0, 0.0
      %v1637 = vsel %vm1605, 1.0, 0.0
      %v1638 = vsel %vm1606, 1.0, 0.0
      %v1639 = vsel %vm1607, 1.0, 0.0
      %v1640 = vsel %vm1608, 1.0, 0.0
      %v1641 = vsel %vm1609, 1.0, 0.0
      %v1642 = vsel %vm1610, 1.0, 0.0
      %v1643 = vsel %vm1611, 1.0, 0.0
      %v1644 = vsel %vm1612, 1.0, 0.0
      %v1645 = vsel %vm1613, 1.0, 0.0
      %v1646 = vsel %vm1614, 1.0, 0.0
      %v1647 = vsel %vm1615, 1.0, 0.0
      %v1648 = vsel %vm1616, 1.0, 0.0
      %v1649 = vsel %vm1617, 1.0, 0.0
      %v1650 = vsel %vm1618, 1.0, 0.0
      %v1651 = vsel %vm1619, 1.0, 0.0
      %v1652 = vsel %vm1620, 1.0, 0.0
      %v1653 = vsel %vm1621, 1.0, 0.0
      %v1654 = vsel %vm1622, 1.0, 0.0
      %v1655 = vmul.f32 %v1623, %v728
      %v1656 = vmul.f32 %v1624, %v731
      %v1657 = vmul.f32 %v1625, %v734
      %v1658 = vmul.f32 %v1626, %v737
      %v1659 = vmul.f32 %v1627, %v740
      %v1660 = vmul.f32 %v1628, %v743
      %v1661 = vmul.f32 %v1629, %v746
      %v1662 = vmul.f32 %v1630, %v749
      %v1663 = vmul.f32 %v1631, %v752
      %v1664 = vmul.f32 %v1632, %v755
      %v1665 = vmul.f32 %v1633, %v758
      %v1666 = vmul.f32 %v1634, %v761
      %v1667 = vmul.f32 %v1635, %v764
      %v1668 = vmul.f32 %v1636, %v767
      %v1669 = vmul.f32 %v1637, %v770
      %v1670 = vmul.f32 %v1638, %v773
      %v1671 = vmul.f32 %v1639, %v776
      %v1672 = vmul.f32 %v1640, %v779
      %v1673 = vmul.f32 %v1641, %v782
      %v1674 = vmul.f32 %v1642, %v785
      %v1675 = vmul.f32 %v1643, %v788
      %v1676 = vmul.f32 %v1644, %v791
      %v1677 = vmul.f32 %v1645, %v794
      %v1678 = vmul.f32 %v1646, %v797
      %v1679 = vmul.f32 %v1647, %v800
      %v1680 = vmul.f32 %v1648, %v803
      %v1681 = vmul.f32 %v1649, %v806
      %v1682 = vmul.f32 %v1650, %v809
      %v1683 = vmul.f32 %v1651, %v812
      %v1684 = vmul.f32 %v1652, %v815
      %v1685 = vmul.f32 %v1653, %v818
      %v1686 = vmul.f32 %v1654, %v821
      %1719 = vrot.lane.b32.xlu0 %v1655, 104
      %v1720 = vpop.permute.xlu0 %1719
      %1721 = vrot.lane.b32.xlu0 %v1656, 104
      %v1722 = vpop.permute.xlu0 %1721
      %1723 = vrot.lane.b32.xlu0 %v1657, 104
      %v1724 = vpop.permute.xlu0 %1723
      %1725 = vrot.lane.b32.xlu0 %v1658, 104
      %v1726 = vpop.permute.xlu0 %1725
      %1727 = vrot.lane.b32.xlu0 %v1659, 104
      %v1728 = vpop.permute.xlu0 %1727
      %1729 = vrot.lane.b32.xlu0 %v1660, 104
      %v1730 = vpop.permute.xlu0 %1729
      %1731 = vrot.lane.b32.xlu0 %v1661, 104
      %v1732 = vpop.permute.xlu0 %1731
      %1733 = vrot.lane.b32.xlu0 %v1662, 104
      %v1734 = vpop.permute.xlu0 %1733
      %1735 = vrot.lane.b32.xlu0 %v1663, 104
      %v1736 = vpop.permute.xlu0 %1735
      %1737 = vrot.lane.b32.xlu0 %v1664, 104
      %v1738 = vpop.permute.xlu0 %1737
      %1739 = vrot.lane.b32.xlu0 %v1665, 104
      %v1740 = vpop.permute.xlu0 %1739
      %1741 = vrot.lane.b32.xlu0 %v1666, 104
      %v1742 = vpop.permute.xlu0 %1741
      %1743 = vrot.lane.b32.xlu0 %v1667, 104
      %v1744 = vpop.permute.xlu0 %1743
      %1745 = vrot.lane.b32.xlu0 %v1668, 104
      %v1746 = vpop.permute.xlu0 %1745
      %1747 = vrot.lane.b32.xlu0 %v1669, 104
      %v1748 = vpop.permute.xlu0 %1747
      %1749 = vrot.lane.b32.xlu0 %v1670, 104
      %v1750 = vpop.permute.xlu0 %1749
      %1751 = vrot.lane.b32.xlu0 %v1671, 104
      %v1752 = vpop.permute.xlu0 %1751
      %1753 = vrot.lane.b32.xlu0 %v1672, 104
      %v1754 = vpop.permute.xlu0 %1753
      %1755 = vrot.lane.b32.xlu0 %v1673, 104
      %v1756 = vpop.permute.xlu0 %1755
      %1757 = vrot.lane.b32.xlu0 %v1674, 104
      %v1758 = vpop.permute.xlu0 %1757
      %1759 = vrot.lane.b32.xlu0 %v1675, 104
      %v1760 = vpop.permute.xlu0 %1759
      %1761 = vrot.lane.b32.xlu0 %v1676, 104
      %v1762 = vpop.permute.xlu0 %1761
      %1763 = vrot.lane.b32.xlu0 %v1677, 104
      %v1764 = vpop.permute.xlu0 %1763
      %1765 = vrot.lane.b32.xlu0 %v1678, 104
      %v1766 = vpop.permute.xlu0 %1765
      %1767 = vrot.lane.b32.xlu0 %v1679, 104
      %v1768 = vpop.permute.xlu0 %1767
      %1769 = vrot.lane.b32.xlu0 %v1680, 104
      %v1770 = vpop.permute.xlu0 %1769
      %1771 = vrot.lane.b32.xlu0 %v1681, 104
      %v1772 = vpop.permute.xlu0 %1771
      %1773 = vrot.lane.b32.xlu0 %v1682, 104
      %v1774 = vpop.permute.xlu0 %1773
      %1775 = vrot.lane.b32.xlu0 %v1683, 104
      %v1776 = vpop.permute.xlu0 %1775
      %1777 = vrot.lane.b32.xlu0 %v1684, 104
      %v1778 = vpop.permute.xlu0 %1777
      %1779 = vrot.lane.b32.xlu0 %v1685, 104
      %v1780 = vpop.permute.xlu0 %1779
      %1781 = vrot.lane.b32.xlu0 %v1686, 104
      %v1782 = vpop.permute.xlu0 %1781
      %v1815 = vadd.f32 %v1559, %v1720
      %v1816 = vadd.f32 %v1560, %v1722
      %v1817 = vadd.f32 %v1561, %v1724
      %v1818 = vadd.f32 %v1562, %v1726
      %v1819 = vadd.f32 %v1563, %v1728
      %v1820 = vadd.f32 %v1564, %v1730
      %v1821 = vadd.f32 %v1565, %v1732
      %v1822 = vadd.f32 %v1566, %v1734
      %v1823 = vadd.f32 %v1567, %v1736
      %v1824 = vadd.f32 %v1568, %v1738
      %v1825 = vadd.f32 %v1569, %v1740
      %v1826 = vadd.f32 %v1570, %v1742
      %v1827 = vadd.f32 %v1571, %v1744
      %v1828 = vadd.f32 %v1572, %v1746
      %v1829 = vadd.f32 %v1573, %v1748
      %v1830 = vadd.f32 %v1574, %v1750
      %v1831 = vadd.f32 %v1575, %v1752
      %v1832 = vadd.f32 %v1576, %v1754
      %v1833 = vadd.f32 %v1577, %v1756
      %v1834 = vadd.f32 %v1578, %v1758
      %v1835 = vadd.f32 %v1579, %v1760
      %v1836 = vadd.f32 %v1580, %v1762
      %v1837 = vadd.f32 %v1581, %v1764
      %v1838 = vadd.f32 %v1582, %v1766
      %v1839 = vadd.f32 %v1583, %v1768
      %v1840 = vadd.f32 %v1584, %v1770
      %v1841 = vadd.f32 %v1585, %v1772
      %v1842 = vadd.f32 %v1586, %v1774
      %v1843 = vadd.f32 %v1587, %v1776
      %v1844 = vadd.f32 %v1588, %v1778
      %v1845 = vadd.f32 %v1589, %v1780
      %v1846 = vadd.f32 %v1590, %v1782
      %v1847 = vld [vmem:[%s4] sm:$0x1]
      %v1848 = vperm.slane %v1847, 0
      %v1849 = vadd.f32 %v1815, %v1848
      %v1850 = vadd.f32 %v1816, %v1848
      %v1851 = vadd.f32 %v1817, %v1848
      %v1852 = vadd.f32 %v1818, %v1848
      %v1853 = vadd.f32 %v1819, %v1848
      %v1854 = vadd.f32 %v1820, %v1848
      %v1855 = vadd.f32 %v1821, %v1848
      %v1856 = vadd.f32 %v1822, %v1848
      %v1857 = vadd.f32 %v1823, %v1848
      %v1858 = vadd.f32 %v1824, %v1848
      %v1859 = vadd.f32 %v1825, %v1848
      %v1860 = vadd.f32 %v1826, %v1848
      %v1861 = vadd.f32 %v1827, %v1848
      %v1862 = vadd.f32 %v1828, %v1848
      %v1863 = vadd.f32 %v1829, %v1848
      %v1864 = vadd.f32 %v1830, %v1848
      %v1865 = vadd.f32 %v1831, %v1848
      %v1866 = vadd.f32 %v1832, %v1848
      %v1867 = vadd.f32 %v1833, %v1848
      %v1868 = vadd.f32 %v1834, %v1848
      %v1869 = vadd.f32 %v1835, %v1848
      %v1870 = vadd.f32 %v1836, %v1848
      %v1871 = vadd.f32 %v1837, %v1848
      %v1872 = vadd.f32 %v1838, %v1848
      %v1873 = vadd.f32 %v1839, %v1848
      %v1874 = vadd.f32 %v1840, %v1848
      %v1875 = vadd.f32 %v1841, %v1848
      %v1876 = vadd.f32 %v1842, %v1848
      %v1877 = vadd.f32 %v1843, %v1848
      %v1878 = vadd.f32 %v1844, %v1848
      %v1879 = vadd.f32 %v1845, %v1848
      %v1880 = vadd.f32 %v1846, %v1848
      %1881 = vst.msk [vmem:[#allocation2 + $0x18] sm:$0xff] %vm252, %v1849
      %1882 = vst.msk [vmem:[#allocation2 + $0x20] sm:$0xff] %vm252, %v1850
      %1883 = vst.msk [vmem:[#allocation2 + $0x28] sm:$0xff] %vm252, %v1851
      %1884 = vst.msk [vmem:[#allocation2 + $0x30] sm:$0xff] %vm252, %v1852
      %1885 = vst.msk [vmem:[#allocation2 + $0x38] sm:$0xff] %vm252, %v1853
      %1886 = vst.msk [vmem:[#allocation2 + $0x40] sm:$0xff] %vm252, %v1854
      %1887 = vst.msk [vmem:[#allocation2 + $0x48] sm:$0xff] %vm252, %v1855
      %1888 = vst.msk [vmem:[#allocation2 + $0x50] sm:$0xff] %vm252, %v1856
      %1889 = vst.msk [vmem:[#allocation2 + $0x58] sm:$0xff] %vm252, %v1857
      %1890 = vst.msk [vmem:[#allocation2 + $0x60] sm:$0xff] %vm252, %v1858
      %1891 = vst.msk [vmem:[#allocation2 + $0x68] sm:$0xff] %vm252, %v1859
      %1892 = vst.msk [vmem:[#allocation2 + $0x70] sm:$0xff] %vm252, %v1860
      %1893 = vst.msk [vmem:[#allocation2 + $0x78] sm:$0xff] %vm252, %v1861
      %1894 = vst.msk [vmem:[#allocation2 + $0x80] sm:$0xff] %vm252, %v1862
      %1895 = vst.msk [vmem:[#allocation2 + $0x88] sm:$0xff] %vm252, %v1863
      %1896 = vst.msk [vmem:[#allocation2 + $0x90] sm:$0xff] %vm252, %v1864
      %1897 = vst.msk [vmem:[#allocation2 + $0x98] sm:$0xff] %vm252, %v1865
      %1898 = vst.msk [vmem:[#allocation2 + $0xa0] sm:$0xff] %vm252, %v1866
      %1899 = vst.msk [vmem:[#allocation2 + $0xa8] sm:$0xff] %vm252, %v1867
      %1900 = vst.msk [vmem:[#allocation2 + $0xb0] sm:$0xff] %vm252, %v1868
      %1901 = vst.msk [vmem:[#allocation2 + $0xb8] sm:$0xff] %vm252, %v1869
      %1902 = vst.msk [vmem:[#allocation2 + $0xc0] sm:$0xff] %vm252, %v1870
      %1903 = vst.msk [vmem:[#allocation2 + $0xc8] sm:$0xff] %vm252, %v1871
      %1904 = vst.msk [vmem:[#allocation2 + $0xd0] sm:$0xff] %vm252, %v1872
      %1905 = vst.msk [vmem:[#allocation2 + $0xd8] sm:$0xff] %vm252, %v1873
      %1906 = vst.msk [vmem:[#allocation2 + $0xe0] sm:$0xff] %vm252, %v1874
      %1907 = vst.msk [vmem:[#allocation2 + $0xe8] sm:$0xff] %vm252, %v1875
      %1908 = vst.msk [vmem:[#allocation2 + $0xf0] sm:$0xff] %vm252, %v1876
      %1909 = vst.msk [vmem:[#allocation2 + $0xf8] sm:$0xff] %vm252, %v1877
      %1910 = vst.msk [vmem:[#allocation2 + $0x100] sm:$0xff] %vm252, %v1878
      %1911 = vst.msk [vmem:[#allocation2 + $0x108] sm:$0xff] %vm252, %v1879
      %1912 = vst.msk [vmem:[#allocation2 + $0x110] sm:$0xff] %vm252, %v1880
      %1945 = vrot.lane.b32.xlu0 %v291, 8
      %v1946 = vpop.permute.xlu0 %1945
      %1947 = vrot.lane.b32.xlu0 %v292, 8
      %v1948 = vpop.permute.xlu0 %1947
      %1949 = vrot.lane.b32.xlu0 %v293, 8
      %v1950 = vpop.permute.xlu0 %1949
      %1951 = vrot.lane.b32.xlu0 %v294, 8
      %v1952 = vpop.permute.xlu0 %1951
      %1953 = vrot.lane.b32.xlu0 %v295, 8
      %v1954 = vpop.permute.xlu0 %1953
      %1955 = vrot.lane.b32.xlu0 %v296, 8
      %v1956 = vpop.permute.xlu0 %1955
      %1957 = vrot.lane.b32.xlu0 %v297, 8
      %v1958 = vpop.permute.xlu0 %1957
      %1959 = vrot.lane.b32.xlu0 %v298, 8
      %v1960 = vpop.permute.xlu0 %1959
      %1961 = vrot.lane.b32.xlu0 %v299, 8
      %v1962 = vpop.permute.xlu0 %1961
      %1963 = vrot.lane.b32.xlu0 %v300, 8
      %v1964 = vpop.permute.xlu0 %1963
      %1965 = vrot.lane.b32.xlu0 %v301, 8
      %v1966 = vpop.permute.xlu0 %1965
      %1967 = vrot.lane.b32.xlu0 %v302, 8
      %v1968 = vpop.permute.xlu0 %1967
      %1969 = vrot.lane.b32.xlu0 %v303, 8
      %v1970 = vpop.permute.xlu0 %1969
      %1971 = vrot.lane.b32.xlu0 %v304, 8
      %v1972 = vpop.permute.xlu0 %1971
      %1973 = vrot.lane.b32.xlu0 %v305, 8
      %v1974 = vpop.permute.xlu0 %1973
      %1975 = vrot.lane.b32.xlu0 %v306, 8
      %v1976 = vpop.permute.xlu0 %1975
      %1977 = vrot.lane.b32.xlu0 %v307, 8
      %v1978 = vpop.permute.xlu0 %1977
      %1979 = vrot.lane.b32.xlu0 %v308, 8
      %v1980 = vpop.permute.xlu0 %1979
      %1981 = vrot.lane.b32.xlu0 %v309, 8
      %v1982 = vpop.permute.xlu0 %1981
      %1983 = vrot.lane.b32.xlu0 %v310, 8
      %v1984 = vpop.permute.xlu0 %1983
      %1985 = vrot.lane.b32.xlu0 %v311, 8
      %v1986 = vpop.permute.xlu0 %1985
      %1987 = vrot.lane.b32.xlu0 %v312, 8
      %v1988 = vpop.permute.xlu0 %1987
      %1989 = vrot.lane.b32.xlu0 %v313, 8
      %v1990 = vpop.permute.xlu0 %1989
      %1991 = vrot.lane.b32.xlu0 %v314, 8
      %v1992 = vpop.permute.xlu0 %1991
      %1993 = vrot.lane.b32.xlu0 %v315, 8
      %v1994 = vpop.permute.xlu0 %1993
      %1995 = vrot.lane.b32.xlu0 %v316, 8
      %v1996 = vpop.permute.xlu0 %1995
      %1997 = vrot.lane.b32.xlu0 %v317, 8
      %v1998 = vpop.permute.xlu0 %1997
      %1999 = vrot.lane.b32.xlu0 %v318, 8
      %v2000 = vpop.permute.xlu0 %1999
      %2001 = vrot.lane.b32.xlu0 %v319, 8
      %v2002 = vpop.permute.xlu0 %2001
      %2003 = vrot.lane.b32.xlu0 %v320, 8
      %v2004 = vpop.permute.xlu0 %2003
      %2005 = vrot.lane.b32.xlu0 %v321, 8
      %v2006 = vpop.permute.xlu0 %2005
      %2007 = vrot.lane.b32.xlu0 %v322, 8
      %v2008 = vpop.permute.xlu0 %2007
      %vm2041 = vcmask 130112
      %2042 = vst.msk [vmem:[#allocation2 + $0x18] sm:$0xff] %vm2041, %v1946
      %2043 = vst.msk [vmem:[#allocation2 + $0x20] sm:$0xff] %vm2041, %v1948
      %2044 = vst.msk [vmem:[#allocation2 + $0x28] sm:$0xff] %vm2041, %v1950
      %2045 = vst.msk [vmem:[#allocation2 + $0x30] sm:$0xff] %vm2041, %v1952
      %2046 = vst.msk [vmem:[#allocation2 + $0x38] sm:$0xff] %vm2041, %v1954
      %2047 = vst.msk [vmem:[#allocation2 + $0x40] sm:$0xff] %vm2041, %v1956
      %2048 = vst.msk [vmem:[#allocation2 + $0x48] sm:$0xff] %vm2041, %v1958
      %2049 = vst.msk [vmem:[#allocation2 + $0x50] sm:$0xff] %vm2041, %v1960
      %2050 = vst.msk [vmem:[#allocation2 + $0x58] sm:$0xff] %vm2041, %v1962
      %2051 = vst.msk [vmem:[#allocation2 + $0x60] sm:$0xff] %vm2041, %v1964
      %2052 = vst.msk [vmem:[#allocation2 + $0x68] sm:$0xff] %vm2041, %v1966
      %2053 = vst.msk [vmem:[#allocation2 + $0x70] sm:$0xff] %vm2041, %v1968
      %2054 = vst.msk [vmem:[#allocation2 + $0x78] sm:$0xff] %vm2041, %v1970
      %2055 = vst.msk [vmem:[#allocation2 + $0x80] sm:$0xff] %vm2041, %v1972
      %2056 = vst.msk [vmem:[#allocation2 + $0x88] sm:$0xff] %vm2041, %v1974
      %2057 = vst.msk [vmem:[#allocation2 + $0x90] sm:$0xff] %vm2041, %v1976
      %2058 = vst.msk [vmem:[#allocation2 + $0x98] sm:$0xff] %vm2041, %v1978
      %2059 = vst.msk [vmem:[#allocation2 + $0xa0] sm:$0xff] %vm2041, %v1980
      %2060 = vst.msk [vmem:[#allocation2 + $0xa8] sm:$0xff] %vm2041, %v1982
      %2061 = vst.msk [vmem:[#allocation2 + $0xb0] sm:$0xff] %vm2041, %v1984
      %2062 = vst.msk [vmem:[#allocation2 + $0xb8] sm:$0xff] %vm2041, %v1986
      %2063 = vst.msk [vmem:[#allocation2 + $0xc0] sm:$0xff] %vm2041, %v1988
      %2064 = vst.msk [vmem:[#allocation2 + $0xc8] sm:$0xff] %vm2041, %v1990
      %2065 = vst.msk [vmem:[#allocation2 + $0xd0] sm:$0xff] %vm2041, %v1992
      %2066 = vst.msk [vmem:[#allocation2 + $0xd8] sm:$0xff] %vm2041, %v1994
      %2067 = vst.msk [vmem:[#allocation2 + $0xe0] sm:$0xff] %vm2041, %v1996
      %2068 = vst.msk [vmem:[#allocation2 + $0xe8] sm:$0xff] %vm2041, %v1998
      %2069 = vst.msk [vmem:[#allocation2 + $0xf0] sm:$0xff] %vm2041, %v2000
      %2070 = vst.msk [vmem:[#allocation2 + $0xf8] sm:$0xff] %vm2041, %v2002
      %2071 = vst.msk [vmem:[#allocation2 + $0x100] sm:$0xff] %vm2041, %v2004
      %2072 = vst.msk [vmem:[#allocation2 + $0x108] sm:$0xff] %vm2041, %v2006
      %2073 = vst.msk [vmem:[#allocation2 + $0x110] sm:$0xff] %vm2041, %v2008
      %v2074 = vld [vmem:[#allocation2 + $0x18] sm:$0xff]
      %v2075 = vld [vmem:[#allocation2 + $0x20] sm:$0xff]
      %v2076 = vld [vmem:[#allocation2 + $0x28] sm:$0xff]
      %v2077 = vld [vmem:[#allocation2 + $0x30] sm:$0xff]
      %v2078 = vld [vmem:[#allocation2 + $0x38] sm:$0xff]
      %v2079 = vld [vmem:[#allocation2 + $0x40] sm:$0xff]
      %v2080 = vld [vmem:[#allocation2 + $0x48] sm:$0xff]
      %v2081 = vld [vmem:[#allocation2 + $0x50] sm:$0xff]
      %v2082 = vld [vmem:[#allocation2 + $0x58] sm:$0xff]
      %v2083 = vld [vmem:[#allocation2 + $0x60] sm:$0xff]
      %v2084 = vld [vmem:[#allocation2 + $0x68] sm:$0xff]
      %v2085 = vld [vmem:[#allocation2 + $0x70] sm:$0xff]
      %v2086 = vld [vmem:[#allocation2 + $0x78] sm:$0xff]
      %v2087 = vld [vmem:[#allocation2 + $0x80] sm:$0xff]
      %v2088 = vld [vmem:[#allocation2 + $0x88] sm:$0xff]
      %v2089 = vld [vmem:[#allocation2 + $0x90] sm:$0xff]
      %v2090 = vld [vmem:[#allocation2 + $0x98] sm:$0xff]
      %v2091 = vld [vmem:[#allocation2 + $0xa0] sm:$0xff]
      %v2092 = vld [vmem:[#allocation2 + $0xa8] sm:$0xff]
      %v2093 = vld [vmem:[#allocation2 + $0xb0] sm:$0xff]
      %v2094 = vld [vmem:[#allocation2 + $0xb8] sm:$0xff]
      %v2095 = vld [vmem:[#allocation2 + $0xc0] sm:$0xff]
      %v2096 = vld [vmem:[#allocation2 + $0xc8] sm:$0xff]
      %v2097 = vld [vmem:[#allocation2 + $0xd0] sm:$0xff]
      %v2098 = vld [vmem:[#allocation2 + $0xd8] sm:$0xff]
      %v2099 = vld [vmem:[#allocation2 + $0xe0] sm:$0xff]
      %v2100 = vld [vmem:[#allocation2 + $0xe8] sm:$0xff]
      %v2101 = vld [vmem:[#allocation2 + $0xf0] sm:$0xff]
      %v2102 = vld [vmem:[#allocation2 + $0xf8] sm:$0xff]
      %v2103 = vld [vmem:[#allocation2 + $0x100] sm:$0xff]
      %v2104 = vld [vmem:[#allocation2 + $0x108] sm:$0xff]
      %v2105 = vld [vmem:[#allocation2 + $0x110] sm:$0xff]
      %v2106 = vld [vmem:[%s3] sm:$0xff]
      %v2107 = vld [vmem:[%s3 + $0x8] sm:$0xff]
      %v2108 = vld [vmem:[%s4 + $0x1] sm:$0x1]
      %v2109 = vperm.slane %v2108, 0
      %v2111 = vsel %vm245, %v2074, 0
      %v2114 = vsel %vm245, %v2075, 0
      %v2117 = vsel %vm245, %v2076, 0
      %v2120 = vsel %vm245, %v2077, 0
      %v2123 = vsel %vm245, %v2078, 0
      %v2126 = vsel %vm245, %v2079, 0
      %v2129 = vsel %vm245, %v2080, 0
      %v2132 = vsel %vm245, %v2081, 0
      %v2135 = vsel %vm245, %v2082, 0
      %v2138 = vsel %vm245, %v2083, 0
      %v2141 = vsel %vm245, %v2084, 0
      %v2144 = vsel %vm245, %v2085, 0
      %v2147 = vsel %vm245, %v2086, 0
      %v2150 = vsel %vm245, %v2087, 0
      %v2153 = vsel %vm245, %v2088, 0
      %v2156 = vsel %vm245, %v2089, 0
      %v2159 = vsel %vm245, %v2090, 0
      %v2162 = vsel %vm245, %v2091, 0
      %v2165 = vsel %vm245, %v2092, 0
      %v2168 = vsel %vm245, %v2093, 0
      %v2171 = vsel %vm245, %v2094, 0
      %v2174 = vsel %vm245, %v2095, 0
      %v2177 = vsel %vm245, %v2096, 0
      %v2180 = vsel %vm245, %v2097, 0
      %v2183 = vsel %vm245, %v2098, 0
      %v2186 = vsel %vm245, %v2099, 0
      %v2189 = vsel %vm245, %v2100, 0
      %v2192 = vsel %vm245, %v2101, 0
      %v2195 = vsel %vm245, %v2102, 0
      %v2198 = vsel %vm245, %v2103, 0
      %v2201 = vsel %vm245, %v2104, 0
      %v2204 = vsel %vm245, %v2105, 0
      %2206 = vmatpush.msra.mxu0 0.0
      %2207 = vmatpush.msra.mxu0 0.0
      %2208 = vmatpush.msra.mxu0 0.0
      %2209 = vmatpush.msra.mxu0 0.0
      %2210 = vmatpush.msra.mxu0 0.0
      %2211 = vmatpush.msra.mxu0 0.0
      %2212 = vmatpush.msra.mxu0 0.0
      %2213 = vmatpush.msra.mxu0 0.0
      %2214 = vmatpush.msra.mxu0 0.0
      %2215 = vmatpush.msra.mxu0 0.0
      %2216 = vmatpush.msra.mxu0 0.0
      %2217 = vmatpush.msra.mxu0 0.0
      %2218 = vmatpush.msra.mxu0 0.0
      %2219 = vmatpush.msra.mxu0 0.0
      %2220 = vmatpush.msra.mxu0 %v2107
      %2221 = vmatpush.msra.mxu0 %v2106
      %2222 = vmatmul.f32.gmra.mxu0 %v2111
      %v2223 = vpop.f32.mrf.mxu0
      %v2224 = vadd.f32 %v2109, %v2223
      %2225 = vmatmul.f32.gmra.mxu0 %v2114
      %v2226 = vpop.f32.mrf.mxu0
      %v2227 = vadd.f32 %v2109, %v2226
      %2228 = vmatmul.f32.gmra.mxu0 %v2117
      %v2229 = vpop.f32.mrf.mxu0
      %v2230 = vadd.f32 %v2109, %v2229
      %2231 = vmatmul.f32.gmra.mxu0 %v2120
      %v2232 = vpop.f32.mrf.mxu0
      %v2233 = vadd.f32 %v2109, %v2232
      %2234 = vmatmul.f32.gmra.mxu0 %v2123
      %v2235 = vpop.f32.mrf.mxu0
      %v2236 = vadd.f32 %v2109, %v2235
      %2237 = vmatmul.f32.gmra.mxu0 %v2126
      %v2238 = vpop.f32.mrf.mxu0
      %v2239 = vadd.f32 %v2109, %v2238
      %2240 = vmatmul.f32.gmra.mxu0 %v2129
      %v2241 = vpop.f32.mrf.mxu0
      %v2242 = vadd.f32 %v2109, %v2241
      %2243 = vmatmul.f32.gmra.mxu0 %v2132
      %v2244 = vpop.f32.mrf.mxu0
      %v2245 = vadd.f32 %v2109, %v2244
      %2246 = vmatmul.f32.gmra.mxu0 %v2135
      %v2247 = vpop.f32.mrf.mxu0
      %v2248 = vadd.f32 %v2109, %v2247
      %2249 = vmatmul.f32.gmra.mxu0 %v2138
      %v2250 = vpop.f32.mrf.mxu0
      %v2251 = vadd.f32 %v2109, %v2250
      %2252 = vmatmul.f32.gmra.mxu0 %v2141
      %v2253 = vpop.f32.mrf.mxu0
      %v2254 = vadd.f32 %v2109, %v2253
      %2255 = vmatmul.f32.gmra.mxu0 %v2144
      %v2256 = vpop.f32.mrf.mxu0
      %v2257 = vadd.f32 %v2109, %v2256
      %2258 = vmatmul.f32.gmra.mxu0 %v2147
      %v2259 = vpop.f32.mrf.mxu0
      %v2260 = vadd.f32 %v2109, %v2259
      %2261 = vmatmul.f32.gmra.mxu0 %v2150
      %v2262 = vpop.f32.mrf.mxu0
      %v2263 = vadd.f32 %v2109, %v2262
      %2264 = vmatmul.f32.gmra.mxu0 %v2153
      %v2265 = vpop.f32.mrf.mxu0
      %v2266 = vadd.f32 %v2109, %v2265
      %2267 = vmatmul.f32.gmra.mxu0 %v2156
      %v2268 = vpop.f32.mrf.mxu0
      %v2269 = vadd.f32 %v2109, %v2268
      %2270 = vmatmul.f32.gmra.mxu0 %v2159
      %v2271 = vpop.f32.mrf.mxu0
      %v2272 = vadd.f32 %v2109, %v2271
      %2273 = vmatmul.f32.gmra.mxu0 %v2162
      %v2274 = vpop.f32.mrf.mxu0
      %v2275 = vadd.f32 %v2109, %v2274
      %2276 = vmatmul.f32.gmra.mxu0 %v2165
      %v2277 = vpop.f32.mrf.mxu0
      %v2278 = vadd.f32 %v2109, %v2277
      %2279 = vmatmul.f32.gmra.mxu0 %v2168
      %v2280 = vpop.f32.mrf.mxu0
      %v2281 = vadd.f32 %v2109, %v2280
      %2282 = vmatmul.f32.gmra.mxu0 %v2171
      %v2283 = vpop.f32.mrf.mxu0
      %v2284 = vadd.f32 %v2109, %v2283
      %2285 = vmatmul.f32.gmra.mxu0 %v2174
      %v2286 = vpop.f32.mrf.mxu0
      %v2287 = vadd.f32 %v2109, %v2286
      %2288 = vmatmul.f32.gmra.mxu0 %v2177
      %v2289 = vpop.f32.mrf.mxu0
      %v2290 = vadd.f32 %v2109, %v2289
      %2291 = vmatmul.f32.gmra.mxu0 %v2180
      %v2292 = vpop.f32.mrf.mxu0
      %v2293 = vadd.f32 %v2109, %v2292
      %2294 = vmatmul.f32.gmra.mxu0 %v2183
      %v2295 = vpop.f32.mrf.mxu0
      %v2296 = vadd.f32 %v2109, %v2295
      %2297 = vmatmul.f32.gmra.mxu0 %v2186
      %v2298 = vpop.f32.mrf.mxu0
      %v2299 = vadd.f32 %v2109, %v2298
      %2300 = vmatmul.f32.gmra.mxu0 %v2189
      %v2301 = vpop.f32.mrf.mxu0
      %v2302 = vadd.f32 %v2109, %v2301
      %2303 = vmatmul.f32.gmra.mxu0 %v2192
      %v2304 = vpop.f32.mrf.mxu0
      %v2305 = vadd.f32 %v2109, %v2304
      %2306 = vmatmul.f32.gmra.mxu0 %v2195
      %v2307 = vpop.f32.mrf.mxu0
      %v2308 = vadd.f32 %v2109, %v2307
      %2309 = vmatmul.f32.gmra.mxu0 %v2198
      %v2310 = vpop.f32.mrf.mxu0
      %v2311 = vadd.f32 %v2109, %v2310
      %2312 = vmatmul.f32.gmra.mxu0 %v2201
      %v2313 = vpop.f32.mrf.mxu0
      %v2314 = vadd.f32 %v2109, %v2313
      %2315 = vmatmul.f32.gmra.mxu0 %v2204
      %v2316 = vpop.f32.mrf.mxu0
      %v2317 = vadd.f32 %v2109, %v2316
      %2318 = vdwg.mxu0
      %v2319 = vmax.f32 %v2224, 0.0
      %v2320 = vmax.f32 %v2227, 0.0
      %v2321 = vmax.f32 %v2230, 0.0
      %v2322 = vmax.f32 %v2233, 0.0
      %v2323 = vmax.f32 %v2236, 0.0
      %v2324 = vmax.f32 %v2239, 0.0
      %v2325 = vmax.f32 %v2242, 0.0
      %v2326 = vmax.f32 %v2245, 0.0
      %v2327 = vmax.f32 %v2248, 0.0
      %v2328 = vmax.f32 %v2251, 0.0
      %v2329 = vmax.f32 %v2254, 0.0
      %v2330 = vmax.f32 %v2257, 0.0
      %v2331 = vmax.f32 %v2260, 0.0
      %v2332 = vmax.f32 %v2263, 0.0
      %v2333 = vmax.f32 %v2266, 0.0
      %v2334 = vmax.f32 %v2269, 0.0
      %v2335 = vmax.f32 %v2272, 0.0
      %v2336 = vmax.f32 %v2275, 0.0
      %v2337 = vmax.f32 %v2278, 0.0
      %v2338 = vmax.f32 %v2281, 0.0
      %v2339 = vmax.f32 %v2284, 0.0
      %v2340 = vmax.f32 %v2287, 0.0
      %v2341 = vmax.f32 %v2290, 0.0
      %v2342 = vmax.f32 %v2293, 0.0
      %v2343 = vmax.f32 %v2296, 0.0
      %v2344 = vmax.f32 %v2299, 0.0
      %v2345 = vmax.f32 %v2302, 0.0
      %v2346 = vmax.f32 %v2305, 0.0
      %v2347 = vmax.f32 %v2308, 0.0
      %v2348 = vmax.f32 %v2311, 0.0
      %v2349 = vmax.f32 %v2314, 0.0
      %v2350 = vmax.f32 %v2317, 0.0
      %v2351 = vld [vmem:[%s3 + $0x10] sm:$0xff]
      %v2353 = vsel %vm252, %v2319, 0
      %v2356 = vsel %vm252, %v2320, 0
      %v2359 = vsel %vm252, %v2321, 0
      %v2362 = vsel %vm252, %v2322, 0
      %v2365 = vsel %vm252, %v2323, 0
      %v2368 = vsel %vm252, %v2324, 0
      %v2371 = vsel %vm252, %v2325, 0
      %v2374 = vsel %vm252, %v2326, 0
      %v2377 = vsel %vm252, %v2327, 0
      %v2380 = vsel %vm252, %v2328, 0
      %v2383 = vsel %vm252, %v2329, 0
      %v2386 = vsel %vm252, %v2330, 0
      %v2389 = vsel %vm252, %v2331, 0
      %v2392 = vsel %vm252, %v2332, 0
      %v2395 = vsel %vm252, %v2333, 0
      %v2398 = vsel %vm252, %v2334, 0
      %v2401 = vsel %vm252, %v2335, 0
      %v2404 = vsel %vm252, %v2336, 0
      %v2407 = vsel %vm252, %v2337, 0
      %v2410 = vsel %vm252, %v2338, 0
      %v2413 = vsel %vm252, %v2339, 0
      %v2416 = vsel %vm252, %v2340, 0
      %v2419 = vsel %vm252, %v2341, 0
      %v2422 = vsel %vm252, %v2342, 0
      %v2425 = vsel %vm252, %v2343, 0
      %v2428 = vsel %vm252, %v2344, 0
      %v2431 = vsel %vm252, %v2345, 0
      %v2434 = vsel %vm252, %v2346, 0
      %v2437 = vsel %vm252, %v2347, 0
      %v2440 = vsel %vm252, %v2348, 0
      %v2443 = vsel %vm252, %v2349, 0
      %v2446 = vsel %vm252, %v2350, 0
      %2448 = vmatpush.msra.mxu0 0.0
      %2449 = vmatpush.msra.mxu0 0.0
      %2450 = vmatpush.msra.mxu0 0.0
      %2451 = vmatpush.msra.mxu0 0.0
      %2452 = vmatpush.msra.mxu0 0.0
      %2453 = vmatpush.msra.mxu0 0.0
      %2454 = vmatpush.msra.mxu0 0.0
      %2455 = vmatpush.msra.mxu0 0.0
      %2456 = vmatpush.msra.mxu0 0.0
      %2457 = vmatpush.msra.mxu0 0.0
      %2458 = vmatpush.msra.mxu0 0.0
      %2459 = vmatpush.msra.mxu0 0.0
      %2460 = vmatpush.msra.mxu0 0.0
      %2461 = vmatpush.msra.mxu0 0.0
      %2462 = vmatpush.msra.mxu0 0.0
      %2463 = vmatpush.msra.mxu0 %v2351
      %2464 = vmatmul.f32.gmra.mxu0 %v2353
      %v2465 = vpop.f32.mrf.mxu0
      %v2466 = vadd.f32 0.0, %v2465
      %2467 = vmatmul.f32.gmra.mxu0 %v2356
      %v2468 = vpop.f32.mrf.mxu0
      %v2469 = vadd.f32 0.0, %v2468
      %2470 = vmatmul.f32.gmra.mxu0 %v2359
      %v2471 = vpop.f32.mrf.mxu0
      %v2472 = vadd.f32 0.0, %v2471
      %2473 = vmatmul.f32.gmra.mxu0 %v2362
      %v2474 = vpop.f32.mrf.mxu0
      %v2475 = vadd.f32 0.0, %v2474
      %2476 = vmatmul.f32.gmra.mxu0 %v2365
      %v2477 = vpop.f32.mrf.mxu0
      %v2478 = vadd.f32 0.0, %v2477
      %2479 = vmatmul.f32.gmra.mxu0 %v2368
      %v2480 = vpop.f32.mrf.mxu0
      %v2481 = vadd.f32 0.0, %v2480
      %2482 = vmatmul.f32.gmra.mxu0 %v2371
      %v2483 = vpop.f32.mrf.mxu0
      %v2484 = vadd.f32 0.0, %v2483
      %2485 = vmatmul.f32.gmra.mxu0 %v2374
      %v2486 = vpop.f32.mrf.mxu0
      %v2487 = vadd.f32 0.0, %v2486
      %2488 = vmatmul.f32.gmra.mxu0 %v2377
      %v2489 = vpop.f32.mrf.mxu0
      %v2490 = vadd.f32 0.0, %v2489
      %2491 = vmatmul.f32.gmra.mxu0 %v2380
      %v2492 = vpop.f32.mrf.mxu0
      %v2493 = vadd.f32 0.0, %v2492
      %2494 = vmatmul.f32.gmra.mxu0 %v2383
      %v2495 = vpop.f32.mrf.mxu0
      %v2496 = vadd.f32 0.0, %v2495
      %2497 = vmatmul.f32.gmra.mxu0 %v2386
      %v2498 = vpop.f32.mrf.mxu0
      %v2499 = vadd.f32 0.0, %v2498
      %2500 = vmatmul.f32.gmra.mxu0 %v2389
      %v2501 = vpop.f32.mrf.mxu0
      %v2502 = vadd.f32 0.0, %v2501
      %2503 = vmatmul.f32.gmra.mxu0 %v2392
      %v2504 = vpop.f32.mrf.mxu0
      %v2505 = vadd.f32 0.0, %v2504
      %2506 = vmatmul.f32.gmra.mxu0 %v2395
      %v2507 = vpop.f32.mrf.mxu0
      %v2508 = vadd.f32 0.0, %v2507
      %2509 = vmatmul.f32.gmra.mxu0 %v2398
      %v2510 = vpop.f32.mrf.mxu0
      %v2511 = vadd.f32 0.0, %v2510
      %2512 = vmatmul.f32.gmra.mxu0 %v2401
      %v2513 = vpop.f32.mrf.mxu0
      %v2514 = vadd.f32 0.0, %v2513
      %2515 = vmatmul.f32.gmra.mxu0 %v2404
      %v2516 = vpop.f32.mrf.mxu0
      %v2517 = vadd.f32 0.0, %v2516
      %2518 = vmatmul.f32.gmra.mxu0 %v2407
      %v2519 = vpop.f32.mrf.mxu0
      %v2520 = vadd.f32 0.0, %v2519
      %2521 = vmatmul.f32.gmra.mxu0 %v2410
      %v2522 = vpop.f32.mrf.mxu0
      %v2523 = vadd.f32 0.0, %v2522
      %2524 = vmatmul.f32.gmra.mxu0 %v2413
      %v2525 = vpop.f32.mrf.mxu0
      %v2526 = vadd.f32 0.0, %v2525
      %2527 = vmatmul.f32.gmra.mxu0 %v2416
      %v2528 = vpop.f32.mrf.mxu0
      %v2529 = vadd.f32 0.0, %v2528
      %2530 = vmatmul.f32.gmra.mxu0 %v2419
      %v2531 = vpop.f32.mrf.mxu0
      %v2532 = vadd.f32 0.0, %v2531
      %2533 = vmatmul.f32.gmra.mxu0 %v2422
      %v2534 = vpop.f32.mrf.mxu0
      %v2535 = vadd.f32 0.0, %v2534
      %2536 = vmatmul.f32.gmra.mxu0 %v2425
      %v2537 = vpop.f32.mrf.mxu0
      %v2538 = vadd.f32 0.0, %v2537
      %2539 = vmatmul.f32.gmra.mxu0 %v2428
      %v2540 = vpop.f32.mrf.mxu0
      %v2541 = vadd.f32 0.0, %v2540
      %2542 = vmatmul.f32.gmra.mxu0 %v2431
      %v2543 = vpop.f32.mrf.mxu0
      %v2544 = vadd.f32 0.0, %v2543
      %2545 = vmatmul.f32.gmra.mxu0 %v2434
      %v2546 = vpop.f32.mrf.mxu0
      %v2547 = vadd.f32 0.0, %v2546
      %2548 = vmatmul.f32.gmra.mxu0 %v2437
      %v2549 = vpop.f32.mrf.mxu0
      %v2550 = vadd.f32 0.0, %v2549
      %2551 = vmatmul.f32.gmra.mxu0 %v2440
      %v2552 = vpop.f32.mrf.mxu0
      %v2553 = vadd.f32 0.0, %v2552
      %2554 = vmatmul.f32.gmra.mxu0 %v2443
      %v2555 = vpop.f32.mrf.mxu0
      %v2556 = vadd.f32 0.0, %v2555
      %2557 = vmatmul.f32.gmra.mxu0 %v2446
      %v2558 = vpop.f32.mrf.mxu0
      %v2559 = vadd.f32 0.0, %v2558
      %2560 = vdwg.mxu0
      %v2561 = vld [vmem:[%s4 + $0x2] sm:$0x1]
      %v2562 = vperm.slane %v2561, 0
      %v2563 = vadd.f32 %v2466, %v2562
      %v2564 = vadd.f32 %v2469, %v2562
      %v2565 = vadd.f32 %v2472, %v2562
      %v2566 = vadd.f32 %v2475, %v2562
      %v2567 = vadd.f32 %v2478, %v2562
      %v2568 = vadd.f32 %v2481, %v2562
      %v2569 = vadd.f32 %v2484, %v2562
      %v2570 = vadd.f32 %v2487, %v2562
      %v2571 = vadd.f32 %v2490, %v2562
      %v2572 = vadd.f32 %v2493, %v2562
      %v2573 = vadd.f32 %v2496, %v2562
      %v2574 = vadd.f32 %v2499, %v2562
      %v2575 = vadd.f32 %v2502, %v2562
      %v2576 = vadd.f32 %v2505, %v2562
      %v2577 = vadd.f32 %v2508, %v2562
      %v2578 = vadd.f32 %v2511, %v2562
      %v2579 = vadd.f32 %v2514, %v2562
      %v2580 = vadd.f32 %v2517, %v2562
      %v2581 = vadd.f32 %v2520, %v2562
      %v2582 = vadd.f32 %v2523, %v2562
      %v2583 = vadd.f32 %v2526, %v2562
      %v2584 = vadd.f32 %v2529, %v2562
      %v2585 = vadd.f32 %v2532, %v2562
      %v2586 = vadd.f32 %v2535, %v2562
      %v2587 = vadd.f32 %v2538, %v2562
      %v2588 = vadd.f32 %v2541, %v2562
      %v2589 = vadd.f32 %v2544, %v2562
      %v2590 = vadd.f32 %v2547, %v2562
      %v2591 = vadd.f32 %v2550, %v2562
      %v2592 = vadd.f32 %v2553, %v2562
      %v2593 = vadd.f32 %v2556, %v2562
      %v2594 = vadd.f32 %v2559, %v2562
      %v2595 = vand.u32 2147483647, %v2563
      %v2596 = vand.u32 2147483647, %v2564
      %v2597 = vand.u32 2147483647, %v2565
      %v2598 = vand.u32 2147483647, %v2566
      %v2599 = vand.u32 2147483647, %v2567
      %v2600 = vand.u32 2147483647, %v2568
      %v2601 = vand.u32 2147483647, %v2569
      %v2602 = vand.u32 2147483647, %v2570
      %v2603 = vand.u32 2147483647, %v2571
      %v2604 = vand.u32 2147483647, %v2572
      %v2605 = vand.u32 2147483647, %v2573
      %v2606 = vand.u32 2147483647, %v2574
      %v2607 = vand.u32 2147483647, %v2575
      %v2608 = vand.u32 2147483647, %v2576
      %v2609 = vand.u32 2147483647, %v2577
      %v2610 = vand.u32 2147483647, %v2578
      %v2611 = vand.u32 2147483647, %v2579
      %v2612 = vand.u32 2147483647, %v2580
      %v2613 = vand.u32 2147483647, %v2581
      %v2614 = vand.u32 2147483647, %v2582
      %v2615 = vand.u32 2147483647, %v2583
      %v2616 = vand.u32 2147483647, %v2584
      %v2617 = vand.u32 2147483647, %v2585
      %v2618 = vand.u32 2147483647, %v2586
      %v2619 = vand.u32 2147483647, %v2587
      %v2620 = vand.u32 2147483647, %v2588
      %v2621 = vand.u32 2147483647, %v2589
      %v2622 = vand.u32 2147483647, %v2590
      %v2623 = vand.u32 2147483647, %v2591
      %v2624 = vand.u32 2147483647, %v2592
      %v2625 = vand.u32 2147483647, %v2593
      %v2626 = vand.u32 2147483647, %v2594
      %v2627 = vsub.f32 0.0, %v2595
      %v2628 = vsub.f32 0.0, %v2596
      %v2629 = vsub.f32 0.0, %v2597
      %v2630 = vsub.f32 0.0, %v2598
      %v2631 = vsub.f32 0.0, %v2599
      %v2632 = vsub.f32 0.0, %v2600
      %v2633 = vsub.f32 0.0, %v2601
      %v2634 = vsub.f32 0.0, %v2602
      %v2635 = vsub.f32 0.0, %v2603
      %v2636 = vsub.f32 0.0, %v2604
      %v2637 = vsub.f32 0.0, %v2605
      %v2638 = vsub.f32 0.0, %v2606
      %v2639 = vsub.f32 0.0, %v2607
      %v2640 = vsub.f32 0.0, %v2608
      %v2641 = vsub.f32 0.0, %v2609
      %v2642 = vsub.f32 0.0, %v2610
      %v2643 = vsub.f32 0.0, %v2611
      %v2644 = vsub.f32 0.0, %v2612
      %v2645 = vsub.f32 0.0, %v2613
      %v2646 = vsub.f32 0.0, %v2614
      %v2647 = vsub.f32 0.0, %v2615
      %v2648 = vsub.f32 0.0, %v2616
      %v2649 = vsub.f32 0.0, %v2617
      %v2650 = vsub.f32 0.0, %v2618
      %v2651 = vsub.f32 0.0, %v2619
      %v2652 = vsub.f32 0.0, %v2620
      %v2653 = vsub.f32 0.0, %v2621
      %v2654 = vsub.f32 0.0, %v2622
      %v2655 = vsub.f32 0.0, %v2623
      %v2656 = vsub.f32 0.0, %v2624
      %v2657 = vsub.f32 0.0, %v2625
      %v2658 = vsub.f32 0.0, %v2626
      %v2659 = vmul.f32 %v2627, 1.442695
      %v2660 = vpow.pop %v2659
      %v2661 = vmul.f32 %v2628, 1.442695
      %v2662 = vpow.pop %v2661
      %v2663 = vmul.f32 %v2629, 1.442695
      %v2664 = vpow.pop %v2663
      %v2665 = vmul.f32 %v2630, 1.442695
      %v2666 = vpow.pop %v2665
      %v2667 = vmul.f32 %v2631, 1.442695
      %v2668 = vpow.pop %v2667
      %v2669 = vmul.f32 %v2632, 1.442695
      %v2670 = vpow.pop %v2669
      %v2671 = vmul.f32 %v2633, 1.442695
      %v2672 = vpow.pop %v2671
      %v2673 = vmul.f32 %v2634, 1.442695
      %v2674 = vpow.pop %v2673
      %v2675 = vmul.f32 %v2635, 1.442695
      %v2676 = vpow.pop %v2675
      %v2677 = vmul.f32 %v2636, 1.442695
      %v2678 = vpow.pop %v2677
      %v2679 = vmul.f32 %v2637, 1.442695
      %v2680 = vpow.pop %v2679
      %v2681 = vmul.f32 %v2638, 1.442695
      %v2682 = vpow.pop %v2681
      %v2683 = vmul.f32 %v2639, 1.442695
      %v2684 = vpow.pop %v2683
      %v2685 = vmul.f32 %v2640, 1.442695
      %v2686 = vpow.pop %v2685
      %v2687 = vmul.f32 %v2641, 1.442695
      %v2688 = vpow.pop %v2687
      %v2689 = vmul.f32 %v2642, 1.442695
      %v2690 = vpow.pop %v2689
      %v2691 = vmul.f32 %v2643, 1.442695
      %v2692 = vpow.pop %v2691
      %v2693 = vmul.f32 %v2644, 1.442695
      %v2694 = vpow.pop %v2693
      %v2695 = vmul.f32 %v2645, 1.442695
      %v2696 = vpow.pop %v2695
      %v2697 = vmul.f32 %v2646, 1.442695
      %v2698 = vpow.pop %v2697
      %v2699 = vmul.f32 %v2647, 1.442695
      %v2700 = vpow.pop %v2699
      %v2701 = vmul.f32 %v2648, 1.442695
      %v2702 = vpow.pop %v2701
      %v2703 = vmul.f32 %v2649, 1.442695
      %v2704 = vpow.pop %v2703
      %v2705 = vmul.f32 %v2650, 1.442695
      %v2706 = vpow.pop %v2705
      %v2707 = vmul.f32 %v2651, 1.442695
      %v2708 = vpow.pop %v2707
      %v2709 = vmul.f32 %v2652, 1.442695
      %v2710 = vpow.pop %v2709
      %v2711 = vmul.f32 %v2653, 1.442695
      %v2712 = vpow.pop %v2711
      %v2713 = vmul.f32 %v2654, 1.442695
      %v2714 = vpow.pop %v2713
      %v2715 = vmul.f32 %v2655, 1.442695
      %v2716 = vpow.pop %v2715
      %v2717 = vmul.f32 %v2656, 1.442695
      %v2718 = vpow.pop %v2717
      %v2719 = vmul.f32 %v2657, 1.442695
      %v2720 = vpow.pop %v2719
      %v2721 = vmul.f32 %v2658, 1.442695
      %v2722 = vpow.pop %v2721
      %vm2723 = vcmp.ge.f32.partialorder %v2563, 0.0
      %vm2724 = vcmp.ge.f32.partialorder %v2564, 0.0
      %vm2725 = vcmp.ge.f32.partialorder %v2565, 0.0
      %vm2726 = vcmp.ge.f32.partialorder %v2566, 0.0
      %vm2727 = vcmp.ge.f32.partialorder %v2567, 0.0
      %vm2728 = vcmp.ge.f32.partialorder %v2568, 0.0
      %vm2729 = vcmp.ge.f32.partialorder %v2569, 0.0
      %vm2730 = vcmp.ge.f32.partialorder %v2570, 0.0
      %vm2731 = vcmp.ge.f32.partialorder %v2571, 0.0
      %vm2732 = vcmp.ge.f32.partialorder %v2572, 0.0
      %vm2733 = vcmp.ge.f32.partialorder %v2573, 0.0
      %vm2734 = vcmp.ge.f32.partialorder %v2574, 0.0
      %vm2735 = vcmp.ge.f32.partialorder %v2575, 0.0
      %vm2736 = vcmp.ge.f32.partialorder %v2576, 0.0
      %vm2737 = vcmp.ge.f32.partialorder %v2577, 0.0
      %vm2738 = vcmp.ge.f32.partialorder %v2578, 0.0
      %vm2739 = vcmp.ge.f32.partialorder %v2579, 0.0
      %vm2740 = vcmp.ge.f32.partialorder %v2580, 0.0
      %vm2741 = vcmp.ge.f32.partialorder %v2581, 0.0
      %vm2742 = vcmp.ge.f32.partialorder %v2582, 0.0
      %vm2743 = vcmp.ge.f32.partialorder %v2583, 0.0
      %vm2744 = vcmp.ge.f32.partialorder %v2584, 0.0
      %vm2745 = vcmp.ge.f32.partialorder %v2585, 0.0
      %vm2746 = vcmp.ge.f32.partialorder %v2586, 0.0
      %vm2747 = vcmp.ge.f32.partialorder %v2587, 0.0
      %vm2748 = vcmp.ge.f32.partialorder %v2588, 0.0
      %vm2749 = vcmp.ge.f32.partialorder %v2589, 0.0
      %vm2750 = vcmp.ge.f32.partialorder %v2590, 0.0
      %vm2751 = vcmp.ge.f32.partialorder %v2591, 0.0
      %vm2752 = vcmp.ge.f32.partialorder %v2592, 0.0
      %vm2753 = vcmp.ge.f32.partialorder %v2593, 0.0
      %vm2754 = vcmp.ge.f32.partialorder %v2594, 0.0
      %v2755 = vsel %vm2723, 1.0, %v2660
      %v2756 = vsel %vm2724, 1.0, %v2662
      %v2757 = vsel %vm2725, 1.0, %v2664
      %v2758 = vsel %vm2726, 1.0, %v2666
      %v2759 = vsel %vm2727, 1.0, %v2668
      %v2760 = vsel %vm2728, 1.0, %v2670
      %v2761 = vsel %vm2729, 1.0, %v2672
      %v2762 = vsel %vm2730, 1.0, %v2674
      %v2763 = vsel %vm2731, 1.0, %v2676
      %v2764 = vsel %vm2732, 1.0, %v2678
      %v2765 = vsel %vm2733, 1.0, %v2680
      %v2766 = vsel %vm2734, 1.0, %v2682
      %v2767 = vsel %vm2735, 1.0, %v2684
      %v2768 = vsel %vm2736, 1.0, %v2686
      %v2769 = vsel %vm2737, 1.0, %v2688
      %v2770 = vsel %vm2738, 1.0, %v2690
      %v2771 = vsel %vm2739, 1.0, %v2692
      %v2772 = vsel %vm2740, 1.0, %v2694
      %v2773 = vsel %vm2741, 1.0, %v2696
      %v2774 = vsel %vm2742, 1.0, %v2698
      %v2775 = vsel %vm2743, 1.0, %v2700
      %v2776 = vsel %vm2744, 1.0, %v2702
      %v2777 = vsel %vm2745, 1.0, %v2704
      %v2778 = vsel %vm2746, 1.0, %v2706
      %v2779 = vsel %vm2747, 1.0, %v2708
      %v2780 = vsel %vm2748, 1.0, %v2710
      %v2781 = vsel %vm2749, 1.0, %v2712
      %v2782 = vsel %vm2750, 1.0, %v2714
      %v2783 = vsel %vm2751, 1.0, %v2716
      %v2784 = vsel %vm2752, 1.0, %v2718
      %v2785 = vsel %vm2753, 1.0, %v2720
      %v2786 = vsel %vm2754, 1.0, %v2722
      %v2787 = vadd.f32 %v2660, 1.0
      %v2788 = vadd.f32 %v2662, 1.0
      %v2789 = vadd.f32 %v2664, 1.0
      %v2790 = vadd.f32 %v2666, 1.0
      %v2791 = vadd.f32 %v2668, 1.0
      %v2792 = vadd.f32 %v2670, 1.0
      %v2793 = vadd.f32 %v2672, 1.0
      %v2794 = vadd.f32 %v2674, 1.0
      %v2795 = vadd.f32 %v2676, 1.0
      %v2796 = vadd.f32 %v2678, 1.0
      %v2797 = vadd.f32 %v2680, 1.0
      %v2798 = vadd.f32 %v2682, 1.0
      %v2799 = vadd.f32 %v2684, 1.0
      %v2800 = vadd.f32 %v2686, 1.0
      %v2801 = vadd.f32 %v2688, 1.0
      %v2802 = vadd.f32 %v2690, 1.0
      %v2803 = vadd.f32 %v2692, 1.0
      %v2804 = vadd.f32 %v2694, 1.0
      %v2805 = vadd.f32 %v2696, 1.0
      %v2806 = vadd.f32 %v2698, 1.0
      %v2807 = vadd.f32 %v2700, 1.0
      %v2808 = vadd.f32 %v2702, 1.0
      %v2809 = vadd.f32 %v2704, 1.0
      %v2810 = vadd.f32 %v2706, 1.0
      %v2811 = vadd.f32 %v2708, 1.0
      %v2812 = vadd.f32 %v2710, 1.0
      %v2813 = vadd.f32 %v2712, 1.0
      %v2814 = vadd.f32 %v2714, 1.0
      %v2815 = vadd.f32 %v2716, 1.0
      %v2816 = vadd.f32 %v2718, 1.0
      %v2817 = vadd.f32 %v2720, 1.0
      %v2818 = vadd.f32 %v2722, 1.0
      %v2819 = vrcp.pop %v2787
      %v2820 = vmul.f32 %v2787, %v2819
      %v2821 = vsub.f32 1.0, %v2820
      %v2822 = vmul.f32 %v2819, %v2821
      %v2823 = vadd.f32 %v2819, %v2822
      %vm2824 = vweird.f32 %v2787
      %vm2825 = vweird.f32 %v2819
      %vm2826 = vmor %vm2824, %vm2825
      %v2827 = vsel %vm2826, %v2819, %v2823
      %v2828 = vand.u32 2147483647, %v2787
      %vm2829 = vcmp.eq.f32.partialorder %v2828, 8.507059e+37
      %v2830 = vand.u32 %v2787, 2147483648
      %v2831 = vor.u32 1.1754944e-38, %v2830
      %v2832 = vsel %vm2829, %v2831, %v2827
      %v2833 = vmul.f32 %v2755, %v2832
      %v2834 = vrcp.pop %v2788
      %v2835 = vmul.f32 %v2788, %v2834
      %v2836 = vsub.f32 1.0, %v2835
      %v2837 = vmul.f32 %v2834, %v2836
      %v2838 = vadd.f32 %v2834, %v2837
      %vm2839 = vweird.f32 %v2788
      %vm2840 = vweird.f32 %v2834
      %vm2841 = vmor %vm2839, %vm2840
      %v2842 = vsel %vm2841, %v2834, %v2838
      %v2843 = vand.u32 2147483647, %v2788
      %vm2844 = vcmp.eq.f32.partialorder %v2843, 8.507059e+37
      %v2845 = vand.u32 %v2788, 2147483648
      %v2846 = vor.u32 1.1754944e-38, %v2845
      %v2847 = vsel %vm2844, %v2846, %v2842
      %v2848 = vmul.f32 %v2756, %v2847
      %v2849 = vrcp.pop %v2789
      %v2850 = vmul.f32 %v2789, %v2849
      %v2851 = vsub.f32 1.0, %v2850
      %v2852 = vmul.f32 %v2849, %v2851
      %v2853 = vadd.f32 %v2849, %v2852
      %vm2854 = vweird.f32 %v2789
      %vm2855 = vweird.f32 %v2849
      %vm2856 = vmor %vm2854, %vm2855
      %v2857 = vsel %vm2856, %v2849, %v2853
      %v2858 = vand.u32 2147483647, %v2789
      %vm2859 = vcmp.eq.f32.partialorder %v2858, 8.507059e+37
      %v2860 = vand.u32 %v2789, 2147483648
      %v2861 = vor.u32 1.1754944e-38, %v2860
      %v2862 = vsel %vm2859, %v2861, %v2857
      %v2863 = vmul.f32 %v2757, %v2862
      %v2864 = vrcp.pop %v2790
      %v2865 = vmul.f32 %v2790, %v2864
      %v2866 = vsub.f32 1.0, %v2865
      %v2867 = vmul.f32 %v2864, %v2866
      %v2868 = vadd.f32 %v2864, %v2867
      %vm2869 = vweird.f32 %v2790
      %vm2870 = vweird.f32 %v2864
      %vm2871 = vmor %vm2869, %vm2870
      %v2872 = vsel %vm2871, %v2864, %v2868
      %v2873 = vand.u32 2147483647, %v2790
      %vm2874 = vcmp.eq.f32.partialorder %v2873, 8.507059e+37
      %v2875 = vand.u32 %v2790, 2147483648
      %v2876 = vor.u32 1.1754944e-38, %v2875
      %v2877 = vsel %vm2874, %v2876, %v2872
      %v2878 = vmul.f32 %v2758, %v2877
      %v2879 = vrcp.pop %v2791
      %v2880 = vmul.f32 %v2791, %v2879
      %v2881 = vsub.f32 1.0, %v2880
      %v2882 = vmul.f32 %v2879, %v2881
      %v2883 = vadd.f32 %v2879, %v2882
      %vm2884 = vweird.f32 %v2791
      %vm2885 = vweird.f32 %v2879
      %vm2886 = vmor %vm2884, %vm2885
      %v2887 = vsel %vm2886, %v2879, %v2883
      %v2888 = vand.u32 2147483647, %v2791
      %vm2889 = vcmp.eq.f32.partialorder %v2888, 8.507059e+37
      %v2890 = vand.u32 %v2791, 2147483648
      %v2891 = vor.u32 1.1754944e-38, %v2890
      %v2892 = vsel %vm2889, %v2891, %v2887
      %v2893 = vmul.f32 %v2759, %v2892
      %v2894 = vrcp.pop %v2792
      %v2895 = vmul.f32 %v2792, %v2894
      %v2896 = vsub.f32 1.0, %v2895
      %v2897 = vmul.f32 %v2894, %v2896
      %v2898 = vadd.f32 %v2894, %v2897
      %vm2899 = vweird.f32 %v2792
      %vm2900 = vweird.f32 %v2894
      %vm2901 = vmor %vm2899, %vm2900
      %v2902 = vsel %vm2901, %v2894, %v2898
      %v2903 = vand.u32 2147483647, %v2792
      %vm2904 = vcmp.eq.f32.partialorder %v2903, 8.507059e+37
      %v2905 = vand.u32 %v2792, 2147483648
      %v2906 = vor.u32 1.1754944e-38, %v2905
      %v2907 = vsel %vm2904, %v2906, %v2902
      %v2908 = vmul.f32 %v2760, %v2907
      %v2909 = vrcp.pop %v2793
      %v2910 = vmul.f32 %v2793, %v2909
      %v2911 = vsub.f32 1.0, %v2910
      %v2912 = vmul.f32 %v2909, %v2911
      %v2913 = vadd.f32 %v2909, %v2912
      %vm2914 = vweird.f32 %v2793
      %vm2915 = vweird.f32 %v2909
      %vm2916 = vmor %vm2914, %vm2915
      %v2917 = vsel %vm2916, %v2909, %v2913
      %v2918 = vand.u32 2147483647, %v2793
      %vm2919 = vcmp.eq.f32.partialorder %v2918, 8.507059e+37
      %v2920 = vand.u32 %v2793, 2147483648
      %v2921 = vor.u32 1.1754944e-38, %v2920
      %v2922 = vsel %vm2919, %v2921, %v2917
      %v2923 = vmul.f32 %v2761, %v2922
      %v2924 = vrcp.pop %v2794
      %v2925 = vmul.f32 %v2794, %v2924
      %v2926 = vsub.f32 1.0, %v2925
      %v2927 = vmul.f32 %v2924, %v2926
      %v2928 = vadd.f32 %v2924, %v2927
      %vm2929 = vweird.f32 %v2794
      %vm2930 = vweird.f32 %v2924
      %vm2931 = vmor %vm2929, %vm2930
      %v2932 = vsel %vm2931, %v2924, %v2928
      %v2933 = vand.u32 2147483647, %v2794
      %vm2934 = vcmp.eq.f32.partialorder %v2933, 8.507059e+37
      %v2935 = vand.u32 %v2794, 2147483648
      %v2936 = vor.u32 1.1754944e-38, %v2935
      %v2937 = vsel %vm2934, %v2936, %v2932
      %v2938 = vmul.f32 %v2762, %v2937
      %v2939 = vrcp.pop %v2795
      %v2940 = vmul.f32 %v2795, %v2939
      %v2941 = vsub.f32 1.0, %v2940
      %v2942 = vmul.f32 %v2939, %v2941
      %v2943 = vadd.f32 %v2939, %v2942
      %vm2944 = vweird.f32 %v2795
      %vm2945 = vweird.f32 %v2939
      %vm2946 = vmor %vm2944, %vm2945
      %v2947 = vsel %vm2946, %v2939, %v2943
      %v2948 = vand.u32 2147483647, %v2795
      %vm2949 = vcmp.eq.f32.partialorder %v2948, 8.507059e+37
      %v2950 = vand.u32 %v2795, 2147483648
      %v2951 = vor.u32 1.1754944e-38, %v2950
      %v2952 = vsel %vm2949, %v2951, %v2947
      %v2953 = vmul.f32 %v2763, %v2952
      %v2954 = vrcp.pop %v2796
      %v2955 = vmul.f32 %v2796, %v2954
      %v2956 = vsub.f32 1.0, %v2955
      %v2957 = vmul.f32 %v2954, %v2956
      %v2958 = vadd.f32 %v2954, %v2957
      %vm2959 = vweird.f32 %v2796
      %vm2960 = vweird.f32 %v2954
      %vm2961 = vmor %vm2959, %vm2960
      %v2962 = vsel %vm2961, %v2954, %v2958
      %v2963 = vand.u32 2147483647, %v2796
      %vm2964 = vcmp.eq.f32.partialorder %v2963, 8.507059e+37
      %v2965 = vand.u32 %v2796, 2147483648
      %v2966 = vor.u32 1.1754944e-38, %v2965
      %v2967 = vsel %vm2964, %v2966, %v2962
      %v2968 = vmul.f32 %v2764, %v2967
      %v2969 = vrcp.pop %v2797
      %v2970 = vmul.f32 %v2797, %v2969
      %v2971 = vsub.f32 1.0, %v2970
      %v2972 = vmul.f32 %v2969, %v2971
      %v2973 = vadd.f32 %v2969, %v2972
      %vm2974 = vweird.f32 %v2797
      %vm2975 = vweird.f32 %v2969
      %vm2976 = vmor %vm2974, %vm2975
      %v2977 = vsel %vm2976, %v2969, %v2973
      %v2978 = vand.u32 2147483647, %v2797
      %vm2979 = vcmp.eq.f32.partialorder %v2978, 8.507059e+37
      %v2980 = vand.u32 %v2797, 2147483648
      %v2981 = vor.u32 1.1754944e-38, %v2980
      %v2982 = vsel %vm2979, %v2981, %v2977
      %v2983 = vmul.f32 %v2765, %v2982
      %v2984 = vrcp.pop %v2798
      %v2985 = vmul.f32 %v2798, %v2984
      %v2986 = vsub.f32 1.0, %v2985
      %v2987 = vmul.f32 %v2984, %v2986
      %v2988 = vadd.f32 %v2984, %v2987
      %vm2989 = vweird.f32 %v2798
      %vm2990 = vweird.f32 %v2984
      %vm2991 = vmor %vm2989, %vm2990
      %v2992 = vsel %vm2991, %v2984, %v2988
      %v2993 = vand.u32 2147483647, %v2798
      %vm2994 = vcmp.eq.f32.partialorder %v2993, 8.507059e+37
      %v2995 = vand.u32 %v2798, 2147483648
      %v2996 = vor.u32 1.1754944e-38, %v2995
      %v2997 = vsel %vm2994, %v2996, %v2992
      %v2998 = vmul.f32 %v2766, %v2997
      %v2999 = vrcp.pop %v2799
      %v3000 = vmul.f32 %v2799, %v2999
      %v3001 = vsub.f32 1.0, %v3000
      %v3002 = vmul.f32 %v2999, %v3001
      %v3003 = vadd.f32 %v2999, %v3002
      %vm3004 = vweird.f32 %v2799
      %vm3005 = vweird.f32 %v2999
      %vm3006 = vmor %vm3004, %vm3005
      %v3007 = vsel %vm3006, %v2999, %v3003
      %v3008 = vand.u32 2147483647, %v2799
      %vm3009 = vcmp.eq.f32.partialorder %v3008, 8.507059e+37
      %v3010 = vand.u32 %v2799, 2147483648
      %v3011 = vor.u32 1.1754944e-38, %v3010
      %v3012 = vsel %vm3009, %v3011, %v3007
      %v3013 = vmul.f32 %v2767, %v3012
      %v3014 = vrcp.pop %v2800
      %v3015 = vmul.f32 %v2800, %v3014
      %v3016 = vsub.f32 1.0, %v3015
      %v3017 = vmul.f32 %v3014, %v3016
      %v3018 = vadd.f32 %v3014, %v3017
      %vm3019 = vweird.f32 %v2800
      %vm3020 = vweird.f32 %v3014
      %vm3021 = vmor %vm3019, %vm3020
      %v3022 = vsel %vm3021, %v3014, %v3018
      %v3023 = vand.u32 2147483647, %v2800
      %vm3024 = vcmp.eq.f32.partialorder %v3023, 8.507059e+37
      %v3025 = vand.u32 %v2800, 2147483648
      %v3026 = vor.u32 1.1754944e-38, %v3025
      %v3027 = vsel %vm3024, %v3026, %v3022
      %v3028 = vmul.f32 %v2768, %v3027
      %v3029 = vrcp.pop %v2801
      %v3030 = vmul.f32 %v2801, %v3029
      %v3031 = vsub.f32 1.0, %v3030
      %v3032 = vmul.f32 %v3029, %v3031
      %v3033 = vadd.f32 %v3029, %v3032
      %vm3034 = vweird.f32 %v2801
      %vm3035 = vweird.f32 %v3029
      %vm3036 = vmor %vm3034, %vm3035
      %v3037 = vsel %vm3036, %v3029, %v3033
      %v3038 = vand.u32 2147483647, %v2801
      %vm3039 = vcmp.eq.f32.partialorder %v3038, 8.507059e+37
      %v3040 = vand.u32 %v2801, 2147483648
      %v3041 = vor.u32 1.1754944e-38, %v3040
      %v3042 = vsel %vm3039, %v3041, %v3037
      %v3043 = vmul.f32 %v2769, %v3042
      %v3044 = vrcp.pop %v2802
      %v3045 = vmul.f32 %v2802, %v3044
      %v3046 = vsub.f32 1.0, %v3045
      %v3047 = vmul.f32 %v3044, %v3046
      %v3048 = vadd.f32 %v3044, %v3047
      %vm3049 = vweird.f32 %v2802
      %vm3050 = vweird.f32 %v3044
      %vm3051 = vmor %vm3049, %vm3050
      %v3052 = vsel %vm3051, %v3044, %v3048
      %v3053 = vand.u32 2147483647, %v2802
      %vm3054 = vcmp.eq.f32.partialorder %v3053, 8.507059e+37
      %v3055 = vand.u32 %v2802, 2147483648
      %v3056 = vor.u32 1.1754944e-38, %v3055
      %v3057 = vsel %vm3054, %v3056, %v3052
      %v3058 = vmul.f32 %v2770, %v3057
      %v3059 = vrcp.pop %v2803
      %v3060 = vmul.f32 %v2803, %v3059
      %v3061 = vsub.f32 1.0, %v3060
      %v3062 = vmul.f32 %v3059, %v3061
      %v3063 = vadd.f32 %v3059, %v3062
      %vm3064 = vweird.f32 %v2803
      %vm3065 = vweird.f32 %v3059
      %vm3066 = vmor %vm3064, %vm3065
      %v3067 = vsel %vm3066, %v3059, %v3063
      %v3068 = vand.u32 2147483647, %v2803
      %vm3069 = vcmp.eq.f32.partialorder %v3068, 8.507059e+37
      %v3070 = vand.u32 %v2803, 2147483648
      %v3071 = vor.u32 1.1754944e-38, %v3070
      %v3072 = vsel %vm3069, %v3071, %v3067
      %v3073 = vmul.f32 %v2771, %v3072
      %v3074 = vrcp.pop %v2804
      %v3075 = vmul.f32 %v2804, %v3074
      %v3076 = vsub.f32 1.0, %v3075
      %v3077 = vmul.f32 %v3074, %v3076
      %v3078 = vadd.f32 %v3074, %v3077
      %vm3079 = vweird.f32 %v2804
      %vm3080 = vweird.f32 %v3074
      %vm3081 = vmor %vm3079, %vm3080
      %v3082 = vsel %vm3081, %v3074, %v3078
      %v3083 = vand.u32 2147483647, %v2804
      %vm3084 = vcmp.eq.f32.partialorder %v3083, 8.507059e+37
      %v3085 = vand.u32 %v2804, 2147483648
      %v3086 = vor.u32 1.1754944e-38, %v3085
      %v3087 = vsel %vm3084, %v3086, %v3082
      %v3088 = vmul.f32 %v2772, %v3087
      %v3089 = vrcp.pop %v2805
      %v3090 = vmul.f32 %v2805, %v3089
      %v3091 = vsub.f32 1.0, %v3090
      %v3092 = vmul.f32 %v3089, %v3091
      %v3093 = vadd.f32 %v3089, %v3092
      %vm3094 = vweird.f32 %v2805
      %vm3095 = vweird.f32 %v3089
      %vm3096 = vmor %vm3094, %vm3095
      %v3097 = vsel %vm3096, %v3089, %v3093
      %v3098 = vand.u32 2147483647, %v2805
      %vm3099 = vcmp.eq.f32.partialorder %v3098, 8.507059e+37
      %v3100 = vand.u32 %v2805, 2147483648
      %v3101 = vor.u32 1.1754944e-38, %v3100
      %v3102 = vsel %vm3099, %v3101, %v3097
      %v3103 = vmul.f32 %v2773, %v3102
      %v3104 = vrcp.pop %v2806
      %v3105 = vmul.f32 %v2806, %v3104
      %v3106 = vsub.f32 1.0, %v3105
      %v3107 = vmul.f32 %v3104, %v3106
      %v3108 = vadd.f32 %v3104, %v3107
      %vm3109 = vweird.f32 %v2806
      %vm3110 = vweird.f32 %v3104
      %vm3111 = vmor %vm3109, %vm3110
      %v3112 = vsel %vm3111, %v3104, %v3108
      %v3113 = vand.u32 2147483647, %v2806
      %vm3114 = vcmp.eq.f32.partialorder %v3113, 8.507059e+37
      %v3115 = vand.u32 %v2806, 2147483648
      %v3116 = vor.u32 1.1754944e-38, %v3115
      %v3117 = vsel %vm3114, %v3116, %v3112
      %v3118 = vmul.f32 %v2774, %v3117
      %v3119 = vrcp.pop %v2807
      %v3120 = vmul.f32 %v2807, %v3119
      %v3121 = vsub.f32 1.0, %v3120
      %v3122 = vmul.f32 %v3119, %v3121
      %v3123 = vadd.f32 %v3119, %v3122
      %vm3124 = vweird.f32 %v2807
      %vm3125 = vweird.f32 %v3119
      %vm3126 = vmor %vm3124, %vm3125
      %v3127 = vsel %vm3126, %v3119, %v3123
      %v3128 = vand.u32 2147483647, %v2807
      %vm3129 = vcmp.eq.f32.partialorder %v3128, 8.507059e+37
      %v3130 = vand.u32 %v2807, 2147483648
      %v3131 = vor.u32 1.1754944e-38, %v3130
      %v3132 = vsel %vm3129, %v3131, %v3127
      %v3133 = vmul.f32 %v2775, %v3132
      %v3134 = vrcp.pop %v2808
      %v3135 = vmul.f32 %v2808, %v3134
      %v3136 = vsub.f32 1.0, %v3135
      %v3137 = vmul.f32 %v3134, %v3136
      %v3138 = vadd.f32 %v3134, %v3137
      %vm3139 = vweird.f32 %v2808
      %vm3140 = vweird.f32 %v3134
      %vm3141 = vmor %vm3139, %vm3140
      %v3142 = vsel %vm3141, %v3134, %v3138
      %v3143 = vand.u32 2147483647, %v2808
      %vm3144 = vcmp.eq.f32.partialorder %v3143, 8.507059e+37
      %v3145 = vand.u32 %v2808, 2147483648
      %v3146 = vor.u32 1.1754944e-38, %v3145
      %v3147 = vsel %vm3144, %v3146, %v3142
      %v3148 = vmul.f32 %v2776, %v3147
      %v3149 = vrcp.pop %v2809
      %v3150 = vmul.f32 %v2809, %v3149
      %v3151 = vsub.f32 1.0, %v3150
      %v3152 = vmul.f32 %v3149, %v3151
      %v3153 = vadd.f32 %v3149, %v3152
      %vm3154 = vweird.f32 %v2809
      %vm3155 = vweird.f32 %v3149
      %vm3156 = vmor %vm3154, %vm3155
      %v3157 = vsel %vm3156, %v3149, %v3153
      %v3158 = vand.u32 2147483647, %v2809
      %vm3159 = vcmp.eq.f32.partialorder %v3158, 8.507059e+37
      %v3160 = vand.u32 %v2809, 2147483648
      %v3161 = vor.u32 1.1754944e-38, %v3160
      %v3162 = vsel %vm3159, %v3161, %v3157
      %v3163 = vmul.f32 %v2777, %v3162
      %v3164 = vrcp.pop %v2810
      %v3165 = vmul.f32 %v2810, %v3164
      %v3166 = vsub.f32 1.0, %v3165
      %v3167 = vmul.f32 %v3164, %v3166
      %v3168 = vadd.f32 %v3164, %v3167
      %vm3169 = vweird.f32 %v2810
      %vm3170 = vweird.f32 %v3164
      %vm3171 = vmor %vm3169, %vm3170
      %v3172 = vsel %vm3171, %v3164, %v3168
      %v3173 = vand.u32 2147483647, %v2810
      %vm3174 = vcmp.eq.f32.partialorder %v3173, 8.507059e+37
      %v3175 = vand.u32 %v2810, 2147483648
      %v3176 = vor.u32 1.1754944e-38, %v3175
      %v3177 = vsel %vm3174, %v3176, %v3172
      %v3178 = vmul.f32 %v2778, %v3177
      %v3179 = vrcp.pop %v2811
      %v3180 = vmul.f32 %v2811, %v3179
      %v3181 = vsub.f32 1.0, %v3180
      %v3182 = vmul.f32 %v3179, %v3181
      %v3183 = vadd.f32 %v3179, %v3182
      %vm3184 = vweird.f32 %v2811
      %vm3185 = vweird.f32 %v3179
      %vm3186 = vmor %vm3184, %vm3185
      %v3187 = vsel %vm3186, %v3179, %v3183
      %v3188 = vand.u32 2147483647, %v2811
      %vm3189 = vcmp.eq.f32.partialorder %v3188, 8.507059e+37
      %v3190 = vand.u32 %v2811, 2147483648
      %v3191 = vor.u32 1.1754944e-38, %v3190
      %v3192 = vsel %vm3189, %v3191, %v3187
      %v3193 = vmul.f32 %v2779, %v3192
      %v3194 = vrcp.pop %v2812
      %v3195 = vmul.f32 %v2812, %v3194
      %v3196 = vsub.f32 1.0, %v3195
      %v3197 = vmul.f32 %v3194, %v3196
      %v3198 = vadd.f32 %v3194, %v3197
      %vm3199 = vweird.f32 %v2812
      %vm3200 = vweird.f32 %v3194
      %vm3201 = vmor %vm3199, %vm3200
      %v3202 = vsel %vm3201, %v3194, %v3198
      %v3203 = vand.u32 2147483647, %v2812
      %vm3204 = vcmp.eq.f32.partialorder %v3203, 8.507059e+37
      %v3205 = vand.u32 %v2812, 2147483648
      %v3206 = vor.u32 1.1754944e-38, %v3205
      %v3207 = vsel %vm3204, %v3206, %v3202
      %v3208 = vmul.f32 %v2780, %v3207
      %v3209 = vrcp.pop %v2813
      %v3210 = vmul.f32 %v2813, %v3209
      %v3211 = vsub.f32 1.0, %v3210
      %v3212 = vmul.f32 %v3209, %v3211
      %v3213 = vadd.f32 %v3209, %v3212
      %vm3214 = vweird.f32 %v2813
      %vm3215 = vweird.f32 %v3209
      %vm3216 = vmor %vm3214, %vm3215
      %v3217 = vsel %vm3216, %v3209, %v3213
      %v3218 = vand.u32 2147483647, %v2813
      %vm3219 = vcmp.eq.f32.partialorder %v3218, 8.507059e+37
      %v3220 = vand.u32 %v2813, 2147483648
      %v3221 = vor.u32 1.1754944e-38, %v3220
      %v3222 = vsel %vm3219, %v3221, %v3217
      %v3223 = vmul.f32 %v2781, %v3222
      %v3224 = vrcp.pop %v2814
      %v3225 = vmul.f32 %v2814, %v3224
      %v3226 = vsub.f32 1.0, %v3225
      %v3227 = vmul.f32 %v3224, %v3226
      %v3228 = vadd.f32 %v3224, %v3227
      %vm3229 = vweird.f32 %v2814
      %vm3230 = vweird.f32 %v3224
      %vm3231 = vmor %vm3229, %vm3230
      %v3232 = vsel %vm3231, %v3224, %v3228
      %v3233 = vand.u32 2147483647, %v2814
      %vm3234 = vcmp.eq.f32.partialorder %v3233, 8.507059e+37
      %v3235 = vand.u32 %v2814, 2147483648
      %v3236 = vor.u32 1.1754944e-38, %v3235
      %v3237 = vsel %vm3234, %v3236, %v3232
      %v3238 = vmul.f32 %v2782, %v3237
      %v3239 = vrcp.pop %v2815
      %v3240 = vmul.f32 %v2815, %v3239
      %v3241 = vsub.f32 1.0, %v3240
      %v3242 = vmul.f32 %v3239, %v3241
      %v3243 = vadd.f32 %v3239, %v3242
      %vm3244 = vweird.f32 %v2815
      %vm3245 = vweird.f32 %v3239
      %vm3246 = vmor %vm3244, %vm3245
      %v3247 = vsel %vm3246, %v3239, %v3243
      %v3248 = vand.u32 2147483647, %v2815
      %vm3249 = vcmp.eq.f32.partialorder %v3248, 8.507059e+37
      %v3250 = vand.u32 %v2815, 2147483648
      %v3251 = vor.u32 1.1754944e-38, %v3250
      %v3252 = vsel %vm3249, %v3251, %v3247
      %v3253 = vmul.f32 %v2783, %v3252
      %v3254 = vrcp.pop %v2816
      %v3255 = vmul.f32 %v2816, %v3254
      %v3256 = vsub.f32 1.0, %v3255
      %v3257 = vmul.f32 %v3254, %v3256
      %v3258 = vadd.f32 %v3254, %v3257
      %vm3259 = vweird.f32 %v2816
      %vm3260 = vweird.f32 %v3254
      %vm3261 = vmor %vm3259, %vm3260
      %v3262 = vsel %vm3261, %v3254, %v3258
      %v3263 = vand.u32 2147483647, %v2816
      %vm3264 = vcmp.eq.f32.partialorder %v3263, 8.507059e+37
      %v3265 = vand.u32 %v2816, 2147483648
      %v3266 = vor.u32 1.1754944e-38, %v3265
      %v3267 = vsel %vm3264, %v3266, %v3262
      %v3268 = vmul.f32 %v2784, %v3267
      %v3269 = vrcp.pop %v2817
      %v3270 = vmul.f32 %v2817, %v3269
      %v3271 = vsub.f32 1.0, %v3270
      %v3272 = vmul.f32 %v3269, %v3271
      %v3273 = vadd.f32 %v3269, %v3272
      %vm3274 = vweird.f32 %v2817
      %vm3275 = vweird.f32 %v3269
      %vm3276 = vmor %vm3274, %vm3275
      %v3277 = vsel %vm3276, %v3269, %v3273
      %v3278 = vand.u32 2147483647, %v2817
      %vm3279 = vcmp.eq.f32.partialorder %v3278, 8.507059e+37
      %v3280 = vand.u32 %v2817, 2147483648
      %v3281 = vor.u32 1.1754944e-38, %v3280
      %v3282 = vsel %vm3279, %v3281, %v3277
      %v3283 = vmul.f32 %v2785, %v3282
      %v3284 = vrcp.pop %v2818
      %v3285 = vmul.f32 %v2818, %v3284
      %v3286 = vsub.f32 1.0, %v3285
      %v3287 = vmul.f32 %v3284, %v3286
      %v3288 = vadd.f32 %v3284, %v3287
      %vm3289 = vweird.f32 %v2818
      %vm3290 = vweird.f32 %v3284
      %vm3291 = vmor %vm3289, %vm3290
      %v3292 = vsel %vm3291, %v3284, %v3288
      %v3293 = vand.u32 2147483647, %v2818
      %vm3294 = vcmp.eq.f32.partialorder %v3293, 8.507059e+37
      %v3295 = vand.u32 %v2818, 2147483648
      %v3296 = vor.u32 1.1754944e-38, %v3295
      %v3297 = vsel %vm3294, %v3296, %v3292
      %v3298 = vmul.f32 %v2786, %v3297
      %3300 = vset.pattern.permute.xlu0 0
      %3301 = vperm.xlu0 %3300, %v2833
      %v3302 = vpop.permute.xlu0 %3301
      %3305 = vset.pattern.permute.xlu0 0
      %3306 = vperm.xlu0 %3305, %v2848
      %v3307 = vpop.permute.xlu0 %3306
      %3310 = vset.pattern.permute.xlu0 0
      %3311 = vperm.xlu0 %3310, %v2863
      %v3312 = vpop.permute.xlu0 %3311
      %3315 = vset.pattern.permute.xlu0 0
      %3316 = vperm.xlu0 %3315, %v2878
      %v3317 = vpop.permute.xlu0 %3316
      %3320 = vset.pattern.permute.xlu0 0
      %3321 = vperm.xlu0 %3320, %v2893
      %v3322 = vpop.permute.xlu0 %3321
      %3325 = vset.pattern.permute.xlu0 0
      %3326 = vperm.xlu0 %3325, %v2908
      %v3327 = vpop.permute.xlu0 %3326
      %3330 = vset.pattern.permute.xlu0 0
      %3331 = vperm.xlu0 %3330, %v2923
      %v3332 = vpop.permute.xlu0 %3331
      %3335 = vset.pattern.permute.xlu0 0
      %3336 = vperm.xlu0 %3335, %v2938
      %v3337 = vpop.permute.xlu0 %3336
      %3340 = vset.pattern.permute.xlu0 0
      %3341 = vperm.xlu0 %3340, %v2953
      %v3342 = vpop.permute.xlu0 %3341
      %3345 = vset.pattern.permute.xlu0 0
      %3346 = vperm.xlu0 %3345, %v2968
      %v3347 = vpop.permute.xlu0 %3346
      %3350 = vset.pattern.permute.xlu0 0
      %3351 = vperm.xlu0 %3350, %v2983
      %v3352 = vpop.permute.xlu0 %3351
      %3355 = vset.pattern.permute.xlu0 0
      %3356 = vperm.xlu0 %3355, %v2998
      %v3357 = vpop.permute.xlu0 %3356
      %3360 = vset.pattern.permute.xlu0 0
      %3361 = vperm.xlu0 %3360, %v3013
      %v3362 = vpop.permute.xlu0 %3361
      %3365 = vset.pattern.permute.xlu0 0
      %3366 = vperm.xlu0 %3365, %v3028
      %v3367 = vpop.permute.xlu0 %3366
      %3370 = vset.pattern.permute.xlu0 0
      %3371 = vperm.xlu0 %3370, %v3043
      %v3372 = vpop.permute.xlu0 %3371
      %3375 = vset.pattern.permute.xlu0 0
      %3376 = vperm.xlu0 %3375, %v3058
      %v3377 = vpop.permute.xlu0 %3376
      %3380 = vset.pattern.permute.xlu0 0
      %3381 = vperm.xlu0 %3380, %v3073
      %v3382 = vpop.permute.xlu0 %3381
      %3385 = vset.pattern.permute.xlu0 0
      %3386 = vperm.xlu0 %3385, %v3088
      %v3387 = vpop.permute.xlu0 %3386
      %3390 = vset.pattern.permute.xlu0 0
      %3391 = vperm.xlu0 %3390, %v3103
      %v3392 = vpop.permute.xlu0 %3391
      %3395 = vset.pattern.permute.xlu0 0
      %3396 = vperm.xlu0 %3395, %v3118
      %v3397 = vpop.permute.xlu0 %3396
      %3400 = vset.pattern.permute.xlu0 0
      %3401 = vperm.xlu0 %3400, %v3133
      %v3402 = vpop.permute.xlu0 %3401
      %3405 = vset.pattern.permute.xlu0 0
      %3406 = vperm.xlu0 %3405, %v3148
      %v3407 = vpop.permute.xlu0 %3406
      %3410 = vset.pattern.permute.xlu0 0
      %3411 = vperm.xlu0 %3410, %v3163
      %v3412 = vpop.permute.xlu0 %3411
      %3415 = vset.pattern.permute.xlu0 0
      %3416 = vperm.xlu0 %3415, %v3178
      %v3417 = vpop.permute.xlu0 %3416
      %3420 = vset.pattern.permute.xlu0 0
      %3421 = vperm.xlu0 %3420, %v3193
      %v3422 = vpop.permute.xlu0 %3421
      %3425 = vset.pattern.permute.xlu0 0
      %3426 = vperm.xlu0 %3425, %v3208
      %v3427 = vpop.permute.xlu0 %3426
      %3430 = vset.pattern.permute.xlu0 0
      %3431 = vperm.xlu0 %3430, %v3223
      %v3432 = vpop.permute.xlu0 %3431
      %3435 = vset.pattern.permute.xlu0 0
      %3436 = vperm.xlu0 %3435, %v3238
      %v3437 = vpop.permute.xlu0 %3436
      %3440 = vset.pattern.permute.xlu0 0
      %3441 = vperm.xlu0 %3440, %v3253
      %v3442 = vpop.permute.xlu0 %3441
      %3445 = vset.pattern.permute.xlu0 0
      %3446 = vperm.xlu0 %3445, %v3268
      %v3447 = vpop.permute.xlu0 %3446
      %3450 = vset.pattern.permute.xlu0 0
      %3451 = vperm.xlu0 %3450, %v3283
      %v3452 = vpop.permute.xlu0 %3451
      %3455 = vset.pattern.permute.xlu0 0
      %3456 = vperm.xlu0 %3455, %v3298
      %v3457 = vpop.permute.xlu0 %3456
      %v3459 = vmul.f32 %v291, %v3302
      %v3460 = vmul.f32 %v292, %v3307
      %v3461 = vmul.f32 %v293, %v3312
      %v3462 = vmul.f32 %v294, %v3317
      %v3463 = vmul.f32 %v295, %v3322
      %v3464 = vmul.f32 %v296, %v3327
      %v3465 = vmul.f32 %v297, %v3332
      %v3466 = vmul.f32 %v298, %v3337
      %v3467 = vmul.f32 %v299, %v3342
      %v3468 = vmul.f32 %v300, %v3347
      %v3469 = vmul.f32 %v301, %v3352
      %v3470 = vmul.f32 %v302, %v3357
      %v3471 = vmul.f32 %v303, %v3362
      %v3472 = vmul.f32 %v304, %v3367
      %v3473 = vmul.f32 %v305, %v3372
      %v3474 = vmul.f32 %v306, %v3377
      %v3475 = vmul.f32 %v307, %v3382
      %v3476 = vmul.f32 %v308, %v3387
      %v3477 = vmul.f32 %v309, %v3392
      %v3478 = vmul.f32 %v310, %v3397
      %v3479 = vmul.f32 %v311, %v3402
      %v3480 = vmul.f32 %v312, %v3407
      %v3481 = vmul.f32 %v313, %v3412
      %v3482 = vmul.f32 %v314, %v3417
      %v3483 = vmul.f32 %v315, %v3422
      %v3484 = vmul.f32 %v316, %v3427
      %v3485 = vmul.f32 %v317, %v3432
      %v3486 = vmul.f32 %v318, %v3437
      %v3487 = vmul.f32 %v319, %v3442
      %v3488 = vmul.f32 %v320, %v3447
      %v3489 = vmul.f32 %v321, %v3452
      %v3490 = vmul.f32 %v322, %v3457
      %3523 = vrot.lane.b32.xlu0 %v3459, 8
      %v3524 = vpop.permute.xlu0 %3523
      %3525 = vrot.lane.b32.xlu0 %v3460, 8
      %v3526 = vpop.permute.xlu0 %3525
      %3527 = vrot.lane.b32.xlu0 %v3461, 8
      %v3528 = vpop.permute.xlu0 %3527
      %3529 = vrot.lane.b32.xlu0 %v3462, 8
      %v3530 = vpop.permute.xlu0 %3529
      %3531 = vrot.lane.b32.xlu0 %v3463, 8
      %v3532 = vpop.permute.xlu0 %3531
      %3533 = vrot.lane.b32.xlu0 %v3464, 8
      %v3534 = vpop.permute.xlu0 %3533
      %3535 = vrot.lane.b32.xlu0 %v3465, 8
      %v3536 = vpop.permute.xlu0 %3535
      %3537 = vrot.lane.b32.xlu0 %v3466, 8
      %v3538 = vpop.permute.xlu0 %3537
      %3539 = vrot.lane.b32.xlu0 %v3467, 8
      %v3540 = vpop.permute.xlu0 %3539
      %3541 = vrot.lane.b32.xlu0 %v3468, 8
      %v3542 = vpop.permute.xlu0 %3541
      %3543 = vrot.lane.b32.xlu0 %v3469, 8
      %v3544 = vpop.permute.xlu0 %3543
      %3545 = vrot.lane.b32.xlu0 %v3470, 8
      %v3546 = vpop.permute.xlu0 %3545
      %3547 = vrot.lane.b32.xlu0 %v3471, 8
      %v3548 = vpop.permute.xlu0 %3547
      %3549 = vrot.lane.b32.xlu0 %v3472, 8
      %v3550 = vpop.permute.xlu0 %3549
      %3551 = vrot.lane.b32.xlu0 %v3473, 8
      %v3552 = vpop.permute.xlu0 %3551
      %3553 = vrot.lane.b32.xlu0 %v3474, 8
      %v3554 = vpop.permute.xlu0 %3553
      %3555 = vrot.lane.b32.xlu0 %v3475, 8
      %v3556 = vpop.permute.xlu0 %3555
      %3557 = vrot.lane.b32.xlu0 %v3476, 8
      %v3558 = vpop.permute.xlu0 %3557
      %3559 = vrot.lane.b32.xlu0 %v3477, 8
      %v3560 = vpop.permute.xlu0 %3559
      %3561 = vrot.lane.b32.xlu0 %v3478, 8
      %v3562 = vpop.permute.xlu0 %3561
      %3563 = vrot.lane.b32.xlu0 %v3479, 8
      %v3564 = vpop.permute.xlu0 %3563
      %3565 = vrot.lane.b32.xlu0 %v3480, 8
      %v3566 = vpop.permute.xlu0 %3565
      %3567 = vrot.lane.b32.xlu0 %v3481, 8
      %v3568 = vpop.permute.xlu0 %3567
      %3569 = vrot.lane.b32.xlu0 %v3482, 8
      %v3570 = vpop.permute.xlu0 %3569
      %3571 = vrot.lane.b32.xlu0 %v3483, 8
      %v3572 = vpop.permute.xlu0 %3571
      %3573 = vrot.lane.b32.xlu0 %v3484, 8
      %v3574 = vpop.permute.xlu0 %3573
      %3575 = vrot.lane.b32.xlu0 %v3485, 8
      %v3576 = vpop.permute.xlu0 %3575
      %3577 = vrot.lane.b32.xlu0 %v3486, 8
      %v3578 = vpop.permute.xlu0 %3577
      %3579 = vrot.lane.b32.xlu0 %v3487, 8
      %v3580 = vpop.permute.xlu0 %3579
      %3581 = vrot.lane.b32.xlu0 %v3488, 8
      %v3582 = vpop.permute.xlu0 %3581
      %3583 = vrot.lane.b32.xlu0 %v3489, 8
      %v3584 = vpop.permute.xlu0 %3583
      %3585 = vrot.lane.b32.xlu0 %v3490, 8
      %v3586 = vpop.permute.xlu0 %3585
      %3619 = vst.msk [vmem:[#allocation2 + $0x18] sm:$0xff] %vm2041, %v3524
      %3620 = vst.msk [vmem:[#allocation2 + $0x20] sm:$0xff] %vm2041, %v3526
      %3621 = vst.msk [vmem:[#allocation2 + $0x28] sm:$0xff] %vm2041, %v3528
      %3622 = vst.msk [vmem:[#allocation2 + $0x30] sm:$0xff] %vm2041, %v3530
      %3623 = vst.msk [vmem:[#allocation2 + $0x38] sm:$0xff] %vm2041, %v3532
      %3624 = vst.msk [vmem:[#allocation2 + $0x40] sm:$0xff] %vm2041, %v3534
      %3625 = vst.msk [vmem:[#allocation2 + $0x48] sm:$0xff] %vm2041, %v3536
      %3626 = vst.msk [vmem:[#allocation2 + $0x50] sm:$0xff] %vm2041, %v3538
      %3627 = vst.msk [vmem:[#allocation2 + $0x58] sm:$0xff] %vm2041, %v3540
      %3628 = vst.msk [vmem:[#allocation2 + $0x60] sm:$0xff] %vm2041, %v3542
      %3629 = vst.msk [vmem:[#allocation2 + $0x68] sm:$0xff] %vm2041, %v3544
      %3630 = vst.msk [vmem:[#allocation2 + $0x70] sm:$0xff] %vm2041, %v3546
      %3631 = vst.msk [vmem:[#allocation2 + $0x78] sm:$0xff] %vm2041, %v3548
      %3632 = vst.msk [vmem:[#allocation2 + $0x80] sm:$0xff] %vm2041, %v3550
      %3633 = vst.msk [vmem:[#allocation2 + $0x88] sm:$0xff] %vm2041, %v3552
      %3634 = vst.msk [vmem:[#allocation2 + $0x90] sm:$0xff] %vm2041, %v3554
      %3635 = vst.msk [vmem:[#allocation2 + $0x98] sm:$0xff] %vm2041, %v3556
      %3636 = vst.msk [vmem:[#allocation2 + $0xa0] sm:$0xff] %vm2041, %v3558
      %3637 = vst.msk [vmem:[#allocation2 + $0xa8] sm:$0xff] %vm2041, %v3560
      %3638 = vst.msk [vmem:[#allocation2 + $0xb0] sm:$0xff] %vm2041, %v3562
      %3639 = vst.msk [vmem:[#allocation2 + $0xb8] sm:$0xff] %vm2041, %v3564
      %3640 = vst.msk [vmem:[#allocation2 + $0xc0] sm:$0xff] %vm2041, %v3566
      %3641 = vst.msk [vmem:[#allocation2 + $0xc8] sm:$0xff] %vm2041, %v3568
      %3642 = vst.msk [vmem:[#allocation2 + $0xd0] sm:$0xff] %vm2041, %v3570
      %3643 = vst.msk [vmem:[#allocation2 + $0xd8] sm:$0xff] %vm2041, %v3572
      %3644 = vst.msk [vmem:[#allocation2 + $0xe0] sm:$0xff] %vm2041, %v3574
      %3645 = vst.msk [vmem:[#allocation2 + $0xe8] sm:$0xff] %vm2041, %v3576
      %3646 = vst.msk [vmem:[#allocation2 + $0xf0] sm:$0xff] %vm2041, %v3578
      %3647 = vst.msk [vmem:[#allocation2 + $0xf8] sm:$0xff] %vm2041, %v3580
      %3648 = vst.msk [vmem:[#allocation2 + $0x100] sm:$0xff] %vm2041, %v3582
      %3649 = vst.msk [vmem:[#allocation2 + $0x108] sm:$0xff] %vm2041, %v3584
      %3650 = vst.msk [vmem:[#allocation2 + $0x110] sm:$0xff] %vm2041, %v3586
      %v3651 = vld [vmem:[%s4 + $0x3] sm:$0x1]
      %v3652 = vld [vmem:[#allocation2 + $0x7] sm:$0xff]
      %v3653 = vld [vmem:[#allocation2 + $0xf] sm:$0xff]
      %v3654 = vld [vmem:[#allocation2 + $0x17] sm:$0xff]
      %v3655 = vld [vmem:[#allocation2 + $0x1f] sm:$0xff]
      %v3656 = vld [vmem:[#allocation2 + $0x27] sm:$0xff]
      %v3657 = vld [vmem:[#allocation2 + $0x2f] sm:$0xff]
      %v3658 = vld [vmem:[#allocation2 + $0x37] sm:$0xff]
      %v3659 = vld [vmem:[#allocation2 + $0x3f] sm:$0xff]
      %v3660 = vld [vmem:[#allocation2 + $0x47] sm:$0xff]
      %v3661 = vld [vmem:[#allocation2 + $0x4f] sm:$0xff]
      %v3662 = vld [vmem:[#allocation2 + $0x57] sm:$0xff]
      %v3663 = vld [vmem:[#allocation2 + $0x5f] sm:$0xff]
      %v3664 = vld [vmem:[#allocation2 + $0x67] sm:$0xff]
      %v3665 = vld [vmem:[#allocation2 + $0x6f] sm:$0xff]
      %v3666 = vld [vmem:[#allocation2 + $0x77] sm:$0xff]
      %v3667 = vld [vmem:[#allocation2 + $0x7f] sm:$0xff]
      %v3668 = vld [vmem:[#allocation2 + $0x87] sm:$0xff]
      %v3669 = vld [vmem:[#allocation2 + $0x8f] sm:$0xff]
      %v3670 = vld [vmem:[#allocation2 + $0x97] sm:$0xff]
      %v3671 = vld [vmem:[#allocation2 + $0x9f] sm:$0xff]
      %v3672 = vld [vmem:[#allocation2 + $0xa7] sm:$0xff]
      %v3673 = vld [vmem:[#allocation2 + $0xaf] sm:$0xff]
      %v3674 = vld [vmem:[#allocation2 + $0xb7] sm:$0xff]
      %v3675 = vld [vmem:[#allocation2 + $0xbf] sm:$0xff]
      %v3676 = vld [vmem:[#allocation2 + $0xc7] sm:$0xff]
      %v3677 = vld [vmem:[#allocation2 + $0xcf] sm:$0xff]
      %v3678 = vld [vmem:[#allocation2 + $0xd7] sm:$0xff]
      %v3679 = vld [vmem:[#allocation2 + $0xdf] sm:$0xff]
      %v3680 = vld [vmem:[#allocation2 + $0xe7] sm:$0xff]
      %v3681 = vld [vmem:[#allocation2 + $0xef] sm:$0xff]
      %v3682 = vld [vmem:[#allocation2 + $0xf7] sm:$0xff]
      %v3683 = vld [vmem:[#allocation2 + $0xff] sm:$0xff]
      %v3684 = vmul.f32 %v3652, %v516
      %v3685 = vmul.f32 %v3653, %v517
      %v3686 = vmul.f32 %v3654, %v518
      %v3687 = vmul.f32 %v3655, %v519
      %v3688 = vmul.f32 %v3656, %v520
      %v3689 = vmul.f32 %v3657, %v521
      %v3690 = vmul.f32 %v3658, %v522
      %v3691 = vmul.f32 %v3659, %v523
      %v3692 = vmul.f32 %v3660, %v524
      %v3693 = vmul.f32 %v3661, %v525
      %v3694 = vmul.f32 %v3662, %v526
      %v3695 = vmul.f32 %v3663, %v527
      %v3696 = vmul.f32 %v3664, %v528
      %v3697 = vmul.f32 %v3665, %v529
      %v3698 = vmul.f32 %v3666, %v530
      %v3699 = vmul.f32 %v3667, %v531
      %v3700 = vmul.f32 %v3668, %v532
      %v3701 = vmul.f32 %v3669, %v533
      %v3702 = vmul.f32 %v3670, %v534
      %v3703 = vmul.f32 %v3671, %v535
      %v3704 = vmul.f32 %v3672, %v536
      %v3705 = vmul.f32 %v3673, %v537
      %v3706 = vmul.f32 %v3674, %v538
      %v3707 = vmul.f32 %v3675, %v539
      %v3708 = vmul.f32 %v3676, %v540
      %v3709 = vmul.f32 %v3677, %v541
      %v3710 = vmul.f32 %v3678, %v542
      %v3711 = vmul.f32 %v3679, %v543
      %v3712 = vmul.f32 %v3680, %v544
      %v3713 = vmul.f32 %v3681, %v545
      %v3714 = vmul.f32 %v3682, %v546
      %v3715 = vmul.f32 %v3683, %v547
      %3716 = vst.msk [vmem:[#allocation4] sm:$0xff] %vm245, %v3684
      %3717 = vst.msk [vmem:[#allocation4 + $0x10] sm:$0xff] %vm245, %v3685
      %3718 = vst.msk [vmem:[#allocation4 + $0x20] sm:$0xff] %vm245, %v3686
      %3719 = vst.msk [vmem:[#allocation4 + $0x30] sm:$0xff] %vm245, %v3687
      %3720 = vst.msk [vmem:[#allocation4 + $0x40] sm:$0xff] %vm245, %v3688
      %3721 = vst.msk [vmem:[#allocation4 + $0x50] sm:$0xff] %vm245, %v3689
      %3722 = vst.msk [vmem:[#allocation4 + $0x60] sm:$0xff] %vm245, %v3690
      %3723 = vst.msk [vmem:[#allocation4 + $0x70] sm:$0xff] %vm245, %v3691
      %3724 = vst.msk [vmem:[#allocation4 + $0x80] sm:$0xff] %vm245, %v3692
      %3725 = vst.msk [vmem:[#allocation4 + $0x90] sm:$0xff] %vm245, %v3693
      %3726 = vst.msk [vmem:[#allocation4 + $0xa0] sm:$0xff] %vm245, %v3694
      %3727 = vst.msk [vmem:[#allocation4 + $0xb0] sm:$0xff] %vm245, %v3695
      %3728 = vst.msk [vmem:[#allocation4 + $0xc0] sm:$0xff] %vm245, %v3696
      %3729 = vst.msk [vmem:[#allocation4 + $0xd0] sm:$0xff] %vm245, %v3697
      %3730 = vst.msk [vmem:[#allocation4 + $0xe0] sm:$0xff] %vm245, %v3698
      %3731 = vst.msk [vmem:[#allocation4 + $0xf0] sm:$0xff] %vm245, %v3699
      %3732 = vst.msk [vmem:[#allocation4 + $0x100] sm:$0xff] %vm245, %v3700
      %3733 = vst.msk [vmem:[#allocation4 + $0x110] sm:$0xff] %vm245, %v3701
      %3734 = vst.msk [vmem:[#allocation4 + $0x120] sm:$0xff] %vm245, %v3702
      %3735 = vst.msk [vmem:[#allocation4 + $0x130] sm:$0xff] %vm245, %v3703
      %3736 = vst.msk [vmem:[#allocation4 + $0x140] sm:$0xff] %vm245, %v3704
      %3737 = vst.msk [vmem:[#allocation4 + $0x150] sm:$0xff] %vm245, %v3705
      %3738 = vst.msk [vmem:[#allocation4 + $0x160] sm:$0xff] %vm245, %v3706
      %3739 = vst.msk [vmem:[#allocation4 + $0x170] sm:$0xff] %vm245, %v3707
      %3740 = vst.msk [vmem:[#allocation4 + $0x180] sm:$0xff] %vm245, %v3708
      %3741 = vst.msk [vmem:[#allocation4 + $0x190] sm:$0xff] %vm245, %v3709
      %3742 = vst.msk [vmem:[#allocation4 + $0x1a0] sm:$0xff] %vm245, %v3710
      %3743 = vst.msk [vmem:[#allocation4 + $0x1b0] sm:$0xff] %vm245, %v3711
      %3744 = vst.msk [vmem:[#allocation4 + $0x1c0] sm:$0xff] %vm245, %v3712
      %3745 = vst.msk [vmem:[#allocation4 + $0x1d0] sm:$0xff] %vm245, %v3713
      %3746 = vst.msk [vmem:[#allocation4 + $0x1e0] sm:$0xff] %vm245, %v3714
      %3747 = vst.msk [vmem:[#allocation4 + $0x1f0] sm:$0xff] %vm245, %v3715
      %v3748 = vld [vmem:[#allocation2 + $0x8] sm:$0xff]
      %v3749 = vld [vmem:[#allocation2 + $0x10] sm:$0xff]
      %v3750 = vld [vmem:[#allocation2 + $0x18] sm:$0xff]
      %v3751 = vld [vmem:[#allocation2 + $0x20] sm:$0xff]
      %v3752 = vld [vmem:[#allocation2 + $0x28] sm:$0xff]
      %v3753 = vld [vmem:[#allocation2 + $0x30] sm:$0xff]
      %v3754 = vld [vmem:[#allocation2 + $0x38] sm:$0xff]
      %v3755 = vld [vmem:[#allocation2 + $0x40] sm:$0xff]
      %v3756 = vld [vmem:[#allocation2 + $0x48] sm:$0xff]
      %v3757 = vld [vmem:[#allocation2 + $0x50] sm:$0xff]
      %v3758 = vld [vmem:[#allocation2 + $0x58] sm:$0xff]
      %v3759 = vld [vmem:[#allocation2 + $0x60] sm:$0xff]
      %v3760 = vld [vmem:[#allocation2 + $0x68] sm:$0xff]
      %v3761 = vld [vmem:[#allocation2 + $0x70] sm:$0xff]
      %v3762 = vld [vmem:[#allocation2 + $0x78] sm:$0xff]
      %v3763 = vld [vmem:[#allocation2 + $0x80] sm:$0xff]
      %v3764 = vld [vmem:[#allocation2 + $0x88] sm:$0xff]
      %v3765 = vld [vmem:[#allocation2 + $0x90] sm:$0xff]
      %v3766 = vld [vmem:[#allocation2 + $0x98] sm:$0xff]
      %v3767 = vld [vmem:[#allocation2 + $0xa0] sm:$0xff]
      %v3768 = vld [vmem:[#allocation2 + $0xa8] sm:$0xff]
      %v3769 = vld [vmem:[#allocation2 + $0xb0] sm:$0xff]
      %v3770 = vld [vmem:[#allocation2 + $0xb8] sm:$0xff]
      %v3771 = vld [vmem:[#allocation2 + $0xc0] sm:$0xff]
      %v3772 = vld [vmem:[#allocation2 + $0xc8] sm:$0xff]
      %v3773 = vld [vmem:[#allocation2 + $0xd0] sm:$0xff]
      %v3774 = vld [vmem:[#allocation2 + $0xd8] sm:$0xff]
      %v3775 = vld [vmem:[#allocation2 + $0xe0] sm:$0xff]
      %v3776 = vld [vmem:[#allocation2 + $0xe8] sm:$0xff]
      %v3777 = vld [vmem:[#allocation2 + $0xf0] sm:$0xff]
      %v3778 = vld [vmem:[#allocation2 + $0xf8] sm:$0xff]
      %v3779 = vld [vmem:[#allocation2 + $0x100] sm:$0xff]
      %3812 = vrot.lane.b32.xlu0 %v3748, 16
      %v3813 = vpop.permute.xlu0 %3812
      %3814 = vrot.lane.b32.xlu0 %v3749, 16
      %v3815 = vpop.permute.xlu0 %3814
      %3816 = vrot.lane.b32.xlu0 %v3750, 16
      %v3817 = vpop.permute.xlu0 %3816
      %3818 = vrot.lane.b32.xlu0 %v3751, 16
      %v3819 = vpop.permute.xlu0 %3818
      %3820 = vrot.lane.b32.xlu0 %v3752, 16
      %v3821 = vpop.permute.xlu0 %3820
      %3822 = vrot.lane.b32.xlu0 %v3753, 16
      %v3823 = vpop.permute.xlu0 %3822
      %3824 = vrot.lane.b32.xlu0 %v3754, 16
      %v3825 = vpop.permute.xlu0 %3824
      %3826 = vrot.lane.b32.xlu0 %v3755, 16
      %v3827 = vpop.permute.xlu0 %3826
      %3828 = vrot.lane.b32.xlu0 %v3756, 16
      %v3829 = vpop.permute.xlu0 %3828
      %3830 = vrot.lane.b32.xlu0 %v3757, 16
      %v3831 = vpop.permute.xlu0 %3830
      %3832 = vrot.lane.b32.xlu0 %v3758, 16
      %v3833 = vpop.permute.xlu0 %3832
      %3834 = vrot.lane.b32.xlu0 %v3759, 16
      %v3835 = vpop.permute.xlu0 %3834
      %3836 = vrot.lane.b32.xlu0 %v3760, 16
      %v3837 = vpop.permute.xlu0 %3836
      %3838 = vrot.lane.b32.xlu0 %v3761, 16
      %v3839 = vpop.permute.xlu0 %3838
      %3840 = vrot.lane.b32.xlu0 %v3762, 16
      %v3841 = vpop.permute.xlu0 %3840
      %3842 = vrot.lane.b32.xlu0 %v3763, 16
      %v3843 = vpop.permute.xlu0 %3842
      %3844 = vrot.lane.b32.xlu0 %v3764, 16
      %v3845 = vpop.permute.xlu0 %3844
      %3846 = vrot.lane.b32.xlu0 %v3765, 16
      %v3847 = vpop.permute.xlu0 %3846
      %3848 = vrot.lane.b32.xlu0 %v3766, 16
      %v3849 = vpop.permute.xlu0 %3848
      %3850 = vrot.lane.b32.xlu0 %v3767, 16
      %v3851 = vpop.permute.xlu0 %3850
      %3852 = vrot.lane.b32.xlu0 %v3768, 16
      %v3853 = vpop.permute.xlu0 %3852
      %3854 = vrot.lane.b32.xlu0 %v3769, 16
      %v3855 = vpop.permute.xlu0 %3854
      %3856 = vrot.lane.b32.xlu0 %v3770, 16
      %v3857 = vpop.permute.xlu0 %3856
      %3858 = vrot.lane.b32.xlu0 %v3771, 16
      %v3859 = vpop.permute.xlu0 %3858
      %3860 = vrot.lane.b32.xlu0 %v3772, 16
      %v3861 = vpop.permute.xlu0 %3860
      %3862 = vrot.lane.b32.xlu0 %v3773, 16
      %v3863 = vpop.permute.xlu0 %3862
      %3864 = vrot.lane.b32.xlu0 %v3774, 16
      %v3865 = vpop.permute.xlu0 %3864
      %3866 = vrot.lane.b32.xlu0 %v3775, 16
      %v3867 = vpop.permute.xlu0 %3866
      %3868 = vrot.lane.b32.xlu0 %v3776, 16
      %v3869 = vpop.permute.xlu0 %3868
      %3870 = vrot.lane.b32.xlu0 %v3777, 16
      %v3871 = vpop.permute.xlu0 %3870
      %3872 = vrot.lane.b32.xlu0 %v3778, 16
      %v3873 = vpop.permute.xlu0 %3872
      %3874 = vrot.lane.b32.xlu0 %v3779, 16
      %v3875 = vpop.permute.xlu0 %3874
      %vm3908 = vcmask 261248
      %3909 = vst.msk [vmem:[#allocation4] sm:$0xff] %vm3908, %v3813
      %3910 = vst.msk [vmem:[#allocation4 + $0x10] sm:$0xff] %vm3908, %v3815
      %3911 = vst.msk [vmem:[#allocation4 + $0x20] sm:$0xff] %vm3908, %v3817
      %3912 = vst.msk [vmem:[#allocation4 + $0x30] sm:$0xff] %vm3908, %v3819
      %3913 = vst.msk [vmem:[#allocation4 + $0x40] sm:$0xff] %vm3908, %v3821
      %3914 = vst.msk [vmem:[#allocation4 + $0x50] sm:$0xff] %vm3908, %v3823
      %3915 = vst.msk [vmem:[#allocation4 + $0x60] sm:$0xff] %vm3908, %v3825
      %3916 = vst.msk [vmem:[#allocation4 + $0x70] sm:$0xff] %vm3908, %v3827
      %3917 = vst.msk [vmem:[#allocation4 + $0x80] sm:$0xff] %vm3908, %v3829
      %3918 = vst.msk [vmem:[#allocation4 + $0x90] sm:$0xff] %vm3908, %v3831
      %3919 = vst.msk [vmem:[#allocation4 + $0xa0] sm:$0xff] %vm3908, %v3833
      %3920 = vst.msk [vmem:[#allocation4 + $0xb0] sm:$0xff] %vm3908, %v3835
      %3921 = vst.msk [vmem:[#allocation4 + $0xc0] sm:$0xff] %vm3908, %v3837
      %3922 = vst.msk [vmem:[#allocation4 + $0xd0] sm:$0xff] %vm3908, %v3839
      %3923 = vst.msk [vmem:[#allocation4 + $0xe0] sm:$0xff] %vm3908, %v3841
      %3924 = vst.msk [vmem:[#allocation4 + $0xf0] sm:$0xff] %vm3908, %v3843
      %3925 = vst.msk [vmem:[#allocation4 + $0x100] sm:$0xff] %vm3908, %v3845
      %3926 = vst.msk [vmem:[#allocation4 + $0x110] sm:$0xff] %vm3908, %v3847
      %3927 = vst.msk [vmem:[#allocation4 + $0x120] sm:$0xff] %vm3908, %v3849
      %3928 = vst.msk [vmem:[#allocation4 + $0x130] sm:$0xff] %vm3908, %v3851
      %3929 = vst.msk [vmem:[#allocation4 + $0x140] sm:$0xff] %vm3908, %v3853
      %3930 = vst.msk [vmem:[#allocation4 + $0x150] sm:$0xff] %vm3908, %v3855
      %3931 = vst.msk [vmem:[#allocation4 + $0x160] sm:$0xff] %vm3908, %v3857
      %3932 = vst.msk [vmem:[#allocation4 + $0x170] sm:$0xff] %vm3908, %v3859
      %3933 = vst.msk [vmem:[#allocation4 + $0x180] sm:$0xff] %vm3908, %v3861
      %3934 = vst.msk [vmem:[#allocation4 + $0x190] sm:$0xff] %vm3908, %v3863
      %3935 = vst.msk [vmem:[#allocation4 + $0x1a0] sm:$0xff] %vm3908, %v3865
      %3936 = vst.msk [vmem:[#allocation4 + $0x1b0] sm:$0xff] %vm3908, %v3867
      %3937 = vst.msk [vmem:[#allocation4 + $0x1c0] sm:$0xff] %vm3908, %v3869
      %3938 = vst.msk [vmem:[#allocation4 + $0x1d0] sm:$0xff] %vm3908, %v3871
      %3939 = vst.msk [vmem:[#allocation4 + $0x1e0] sm:$0xff] %vm3908, %v3873
      %3940 = vst.msk [vmem:[#allocation4 + $0x1f0] sm:$0xff] %vm3908, %v3875
      %v3941 = vld [vmem:[#allocation2 + $0x9] sm:$0xff]
      %v3942 = vld [vmem:[#allocation2 + $0x11] sm:$0xff]
      %v3943 = vld [vmem:[#allocation2 + $0x19] sm:$0xff]
      %v3944 = vld [vmem:[#allocation2 + $0x21] sm:$0xff]
      %v3945 = vld [vmem:[#allocation2 + $0x29] sm:$0xff]
      %v3946 = vld [vmem:[#allocation2 + $0x31] sm:$0xff]
      %v3947 = vld [vmem:[#allocation2 + $0x39] sm:$0xff]
      %v3948 = vld [vmem:[#allocation2 + $0x41] sm:$0xff]
      %v3949 = vld [vmem:[#allocation2 + $0x49] sm:$0xff]
      %v3950 = vld [vmem:[#allocation2 + $0x51] sm:$0xff]
      %v3951 = vld [vmem:[#allocation2 + $0x59] sm:$0xff]
      %v3952 = vld [vmem:[#allocation2 + $0x61] sm:$0xff]
      %v3953 = vld [vmem:[#allocation2 + $0x69] sm:$0xff]
      %v3954 = vld [vmem:[#allocation2 + $0x71] sm:$0xff]
      %v3955 = vld [vmem:[#allocation2 + $0x79] sm:$0xff]
      %v3956 = vld [vmem:[#allocation2 + $0x81] sm:$0xff]
      %v3957 = vld [vmem:[#allocation2 + $0x89] sm:$0xff]
      %v3958 = vld [vmem:[#allocation2 + $0x91] sm:$0xff]
      %v3959 = vld [vmem:[#allocation2 + $0x99] sm:$0xff]
      %v3960 = vld [vmem:[#allocation2 + $0xa1] sm:$0xff]
      %v3961 = vld [vmem:[#allocation2 + $0xa9] sm:$0xff]
      %v3962 = vld [vmem:[#allocation2 + $0xb1] sm:$0xff]
      %v3963 = vld [vmem:[#allocation2 + $0xb9] sm:$0xff]
      %v3964 = vld [vmem:[#allocation2 + $0xc1] sm:$0xff]
      %v3965 = vld [vmem:[#allocation2 + $0xc9] sm:$0xff]
      %v3966 = vld [vmem:[#allocation2 + $0xd1] sm:$0xff]
      %v3967 = vld [vmem:[#allocation2 + $0xd9] sm:$0xff]
      %v3968 = vld [vmem:[#allocation2 + $0xe1] sm:$0xff]
      %v3969 = vld [vmem:[#allocation2 + $0xe9] sm:$0xff]
      %v3970 = vld [vmem:[#allocation2 + $0xf1] sm:$0xff]
      %v3971 = vld [vmem:[#allocation2 + $0xf9] sm:$0xff]
      %v3972 = vld [vmem:[#allocation2 + $0x101] sm:$0xff]
      %v3973 = vmul.f32 %v3941, %v580
      %v3974 = vmul.f32 %v3942, %v581
      %v3975 = vmul.f32 %v3943, %v582
      %v3976 = vmul.f32 %v3944, %v583
      %v3977 = vmul.f32 %v3945, %v584
      %v3978 = vmul.f32 %v3946, %v585
      %v3979 = vmul.f32 %v3947, %v586
      %v3980 = vmul.f32 %v3948, %v587
      %v3981 = vmul.f32 %v3949, %v588
      %v3982 = vmul.f32 %v3950, %v589
      %v3983 = vmul.f32 %v3951, %v590
      %v3984 = vmul.f32 %v3952, %v591
      %v3985 = vmul.f32 %v3953, %v592
      %v3986 = vmul.f32 %v3954, %v593
      %v3987 = vmul.f32 %v3955, %v594
      %v3988 = vmul.f32 %v3956, %v595
      %v3989 = vmul.f32 %v3957, %v596
      %v3990 = vmul.f32 %v3958, %v597
      %v3991 = vmul.f32 %v3959, %v598
      %v3992 = vmul.f32 %v3960, %v599
      %v3993 = vmul.f32 %v3961, %v600
      %v3994 = vmul.f32 %v3962, %v601
      %v3995 = vmul.f32 %v3963, %v602
      %v3996 = vmul.f32 %v3964, %v603
      %v3997 = vmul.f32 %v3965, %v604
      %v3998 = vmul.f32 %v3966, %v605
      %v3999 = vmul.f32 %v3967, %v606
      %v4000 = vmul.f32 %v3968, %v607
      %v4001 = vmul.f32 %v3969, %v608
      %v4002 = vmul.f32 %v3970, %v609
      %v4003 = vmul.f32 %v3971, %v610
      %v4004 = vmul.f32 %v3972, %v611
      %4037 = vrot.lane.b32.xlu0 %v3973, 32
      %v4038 = vpop.permute.xlu0 %4037
      %4039 = vrot.lane.b32.xlu0 %v3974, 32
      %v4040 = vpop.permute.xlu0 %4039
      %4041 = vrot.lane.b32.xlu0 %v3975, 32
      %v4042 = vpop.permute.xlu0 %4041
      %4043 = vrot.lane.b32.xlu0 %v3976, 32
      %v4044 = vpop.permute.xlu0 %4043
      %4045 = vrot.lane.b32.xlu0 %v3977, 32
      %v4046 = vpop.permute.xlu0 %4045
      %4047 = vrot.lane.b32.xlu0 %v3978, 32
      %v4048 = vpop.permute.xlu0 %4047
      %4049 = vrot.lane.b32.xlu0 %v3979, 32
      %v4050 = vpop.permute.xlu0 %4049
      %4051 = vrot.lane.b32.xlu0 %v3980, 32
      %v4052 = vpop.permute.xlu0 %4051
      %4053 = vrot.lane.b32.xlu0 %v3981, 32
      %v4054 = vpop.permute.xlu0 %4053
      %4055 = vrot.lane.b32.xlu0 %v3982, 32
      %v4056 = vpop.permute.xlu0 %4055
      %4057 = vrot.lane.b32.xlu0 %v3983, 32
      %v4058 = vpop.permute.xlu0 %4057
      %4059 = vrot.lane.b32.xlu0 %v3984, 32
      %v4060 = vpop.permute.xlu0 %4059
      %4061 = vrot.lane.b32.xlu0 %v3985, 32
      %v4062 = vpop.permute.xlu0 %4061
      %4063 = vrot.lane.b32.xlu0 %v3986, 32
      %v4064 = vpop.permute.xlu0 %4063
      %4065 = vrot.lane.b32.xlu0 %v3987, 32
      %v4066 = vpop.permute.xlu0 %4065
      %4067 = vrot.lane.b32.xlu0 %v3988, 32
      %v4068 = vpop.permute.xlu0 %4067
      %4069 = vrot.lane.b32.xlu0 %v3989, 32
      %v4070 = vpop.permute.xlu0 %4069
      %4071 = vrot.lane.b32.xlu0 %v3990, 32
      %v4072 = vpop.permute.xlu0 %4071
      %4073 = vrot.lane.b32.xlu0 %v3991, 32
      %v4074 = vpop.permute.xlu0 %4073
      %4075 = vrot.lane.b32.xlu0 %v3992, 32
      %v4076 = vpop.permute.xlu0 %4075
      %4077 = vrot.lane.b32.xlu0 %v3993, 32
      %v4078 = vpop.permute.xlu0 %4077
      %4079 = vrot.lane.b32.xlu0 %v3994, 32
      %v4080 = vpop.permute.xlu0 %4079
      %4081 = vrot.lane.b32.xlu0 %v3995, 32
      %v4082 = vpop.permute.xlu0 %4081
      %4083 = vrot.lane.b32.xlu0 %v3996, 32
      %v4084 = vpop.permute.xlu0 %4083
      %4085 = vrot.lane.b32.xlu0 %v3997, 32
      %v4086 = vpop.permute.xlu0 %4085
      %4087 = vrot.lane.b32.xlu0 %v3998, 32
      %v4088 = vpop.permute.xlu0 %4087
      %4089 = vrot.lane.b32.xlu0 %v3999, 32
      %v4090 = vpop.permute.xlu0 %4089
      %4091 = vrot.lane.b32.xlu0 %v4000, 32
      %v4092 = vpop.permute.xlu0 %4091
      %4093 = vrot.lane.b32.xlu0 %v4001, 32
      %v4094 = vpop.permute.xlu0 %4093
      %4095 = vrot.lane.b32.xlu0 %v4002, 32
      %v4096 = vpop.permute.xlu0 %4095
      %4097 = vrot.lane.b32.xlu0 %v4003, 32
      %v4098 = vpop.permute.xlu0 %4097
      %4099 = vrot.lane.b32.xlu0 %v4004, 32
      %v4100 = vpop.permute.xlu0 %4099
      %vm4133 = vcmask 392448
      %4134 = vst.msk [vmem:[#allocation4] sm:$0xff] %vm4133, %v4038
      %4135 = vst.msk [vmem:[#allocation4 + $0x10] sm:$0xff] %vm4133, %v4040
      %4136 = vst.msk [vmem:[#allocation4 + $0x20] sm:$0xff] %vm4133, %v4042
      %4137 = vst.msk [vmem:[#allocation4 + $0x30] sm:$0xff] %vm4133, %v4044
      %4138 = vst.msk [vmem:[#allocation4 + $0x40] sm:$0xff] %vm4133, %v4046
      %4139 = vst.msk [vmem:[#allocation4 + $0x50] sm:$0xff] %vm4133, %v4048
      %4140 = vst.msk [vmem:[#allocation4 + $0x60] sm:$0xff] %vm4133, %v4050
      %4141 = vst.msk [vmem:[#allocation4 + $0x70] sm:$0xff] %vm4133, %v4052
      %4142 = vst.msk [vmem:[#allocation4 + $0x80] sm:$0xff] %vm4133, %v4054
      %4143 = vst.msk [vmem:[#allocation4 + $0x90] sm:$0xff] %vm4133, %v4056
      %4144 = vst.msk [vmem:[#allocation4 + $0xa0] sm:$0xff] %vm4133, %v4058
      %4145 = vst.msk [vmem:[#allocation4 + $0xb0] sm:$0xff] %vm4133, %v4060
      %4146 = vst.msk [vmem:[#allocation4 + $0xc0] sm:$0xff] %vm4133, %v4062
      %4147 = vst.msk [vmem:[#allocation4 + $0xd0] sm:$0xff] %vm4133, %v4064
      %4148 = vst.msk [vmem:[#allocation4 + $0xe0] sm:$0xff] %vm4133, %v4066
      %4149 = vst.msk [vmem:[#allocation4 + $0xf0] sm:$0xff] %vm4133, %v4068
      %4150 = vst.msk [vmem:[#allocation4 + $0x100] sm:$0xff] %vm4133, %v4070
      %4151 = vst.msk [vmem:[#allocation4 + $0x110] sm:$0xff] %vm4133, %v4072
      %4152 = vst.msk [vmem:[#allocation4 + $0x120] sm:$0xff] %vm4133, %v4074
      %4153 = vst.msk [vmem:[#allocation4 + $0x130] sm:$0xff] %vm4133, %v4076
      %4154 = vst.msk [vmem:[#allocation4 + $0x140] sm:$0xff] %vm4133, %v4078
      %4155 = vst.msk [vmem:[#allocation4 + $0x150] sm:$0xff] %vm4133, %v4080
      %4156 = vst.msk [vmem:[#allocation4 + $0x160] sm:$0xff] %vm4133, %v4082
      %4157 = vst.msk [vmem:[#allocation4 + $0x170] sm:$0xff] %vm4133, %v4084
      %4158 = vst.msk [vmem:[#allocation4 + $0x180] sm:$0xff] %vm4133, %v4086
      %4159 = vst.msk [vmem:[#allocation4 + $0x190] sm:$0xff] %vm4133, %v4088
      %4160 = vst.msk [vmem:[#allocation4 + $0x1a0] sm:$0xff] %vm4133, %v4090
      %4161 = vst.msk [vmem:[#allocation4 + $0x1b0] sm:$0xff] %vm4133, %v4092
      %4162 = vst.msk [vmem:[#allocation4 + $0x1c0] sm:$0xff] %vm4133, %v4094
      %4163 = vst.msk [vmem:[#allocation4 + $0x1d0] sm:$0xff] %vm4133, %v4096
      %4164 = vst.msk [vmem:[#allocation4 + $0x1e0] sm:$0xff] %vm4133, %v4098
      %4165 = vst.msk [vmem:[#allocation4 + $0x1f0] sm:$0xff] %vm4133, %v4100
      %v4166 = vld [vmem:[#allocation2 + $0x17] sm:$0xff]
      %v4167 = vld [vmem:[#allocation2 + $0x1f] sm:$0xff]
      %v4168 = vld [vmem:[#allocation2 + $0x27] sm:$0xff]
      %v4169 = vld [vmem:[#allocation2 + $0x2f] sm:$0xff]
      %v4170 = vld [vmem:[#allocation2 + $0x37] sm:$0xff]
      %v4171 = vld [vmem:[#allocation2 + $0x3f] sm:$0xff]
      %v4172 = vld [vmem:[#allocation2 + $0x47] sm:$0xff]
      %v4173 = vld [vmem:[#allocation2 + $0x4f] sm:$0xff]
      %v4174 = vld [vmem:[#allocation2 + $0x57] sm:$0xff]
      %v4175 = vld [vmem:[#allocation2 + $0x5f] sm:$0xff]
      %v4176 = vld [vmem:[#allocation2 + $0x67] sm:$0xff]
      %v4177 = vld [vmem:[#allocation2 + $0x6f] sm:$0xff]
      %v4178 = vld [vmem:[#allocation2 + $0x77] sm:$0xff]
      %v4179 = vld [vmem:[#allocation2 + $0x7f] sm:$0xff]
      %v4180 = vld [vmem:[#allocation2 + $0x87] sm:$0xff]
      %v4181 = vld [vmem:[#allocation2 + $0x8f] sm:$0xff]
      %v4182 = vld [vmem:[#allocation2 + $0x97] sm:$0xff]
      %v4183 = vld [vmem:[#allocation2 + $0x9f] sm:$0xff]
      %v4184 = vld [vmem:[#allocation2 + $0xa7] sm:$0xff]
      %v4185 = vld [vmem:[#allocation2 + $0xaf] sm:$0xff]
      %v4186 = vld [vmem:[#allocation2 + $0xb7] sm:$0xff]
      %v4187 = vld [vmem:[#allocation2 + $0xbf] sm:$0xff]
      %v4188 = vld [vmem:[#allocation2 + $0xc7] sm:$0xff]
      %v4189 = vld [vmem:[#allocation2 + $0xcf] sm:$0xff]
      %v4190 = vld [vmem:[#allocation2 + $0xd7] sm:$0xff]
      %v4191 = vld [vmem:[#allocation2 + $0xdf] sm:$0xff]
      %v4192 = vld [vmem:[#allocation2 + $0xe7] sm:$0xff]
      %v4193 = vld [vmem:[#allocation2 + $0xef] sm:$0xff]
      %v4194 = vld [vmem:[#allocation2 + $0xf7] sm:$0xff]
      %v4195 = vld [vmem:[#allocation2 + $0xff] sm:$0xff]
      %v4196 = vld [vmem:[#allocation2 + $0x107] sm:$0xff]
      %v4197 = vld [vmem:[#allocation2 + $0x10f] sm:$0xff]
      %v4198 = vmul.f32 %v4166, %v516
      %v4199 = vmul.f32 %v4167, %v517
      %v4200 = vmul.f32 %v4168, %v518
      %v4201 = vmul.f32 %v4169, %v519
      %v4202 = vmul.f32 %v4170, %v520
      %v4203 = vmul.f32 %v4171, %v521
      %v4204 = vmul.f32 %v4172, %v522
      %v4205 = vmul.f32 %v4173, %v523
      %v4206 = vmul.f32 %v4174, %v524
      %v4207 = vmul.f32 %v4175, %v525
      %v4208 = vmul.f32 %v4176, %v526
      %v4209 = vmul.f32 %v4177, %v527
      %v4210 = vmul.f32 %v4178, %v528
      %v4211 = vmul.f32 %v4179, %v529
      %v4212 = vmul.f32 %v4180, %v530
      %v4213 = vmul.f32 %v4181, %v531
      %v4214 = vmul.f32 %v4182, %v532
      %v4215 = vmul.f32 %v4183, %v533
      %v4216 = vmul.f32 %v4184, %v534
      %v4217 = vmul.f32 %v4185, %v535
      %v4218 = vmul.f32 %v4186, %v536
      %v4219 = vmul.f32 %v4187, %v537
      %v4220 = vmul.f32 %v4188, %v538
      %v4221 = vmul.f32 %v4189, %v539
      %v4222 = vmul.f32 %v4190, %v540
      %v4223 = vmul.f32 %v4191, %v541
      %v4224 = vmul.f32 %v4192, %v542
      %v4225 = vmul.f32 %v4193, %v543
      %v4226 = vmul.f32 %v4194, %v544
      %v4227 = vmul.f32 %v4195, %v545
      %v4228 = vmul.f32 %v4196, %v546
      %v4229 = vmul.f32 %v4197, %v547
      %4262 = vrot.lane.b32.xlu0 %v4198, 48
      %v4263 = vpop.permute.xlu0 %4262
      %4264 = vrot.lane.b32.xlu0 %v4199, 48
      %v4265 = vpop.permute.xlu0 %4264
      %4266 = vrot.lane.b32.xlu0 %v4200, 48
      %v4267 = vpop.permute.xlu0 %4266
      %4268 = vrot.lane.b32.xlu0 %v4201, 48
      %v4269 = vpop.permute.xlu0 %4268
      %4270 = vrot.lane.b32.xlu0 %v4202, 48
      %v4271 = vpop.permute.xlu0 %4270
      %4272 = vrot.lane.b32.xlu0 %v4203, 48
      %v4273 = vpop.permute.xlu0 %4272
      %4274 = vrot.lane.b32.xlu0 %v4204, 48
      %v4275 = vpop.permute.xlu0 %4274
      %4276 = vrot.lane.b32.xlu0 %v4205, 48
      %v4277 = vpop.permute.xlu0 %4276
      %4278 = vrot.lane.b32.xlu0 %v4206, 48
      %v4279 = vpop.permute.xlu0 %4278
      %4280 = vrot.lane.b32.xlu0 %v4207, 48
      %v4281 = vpop.permute.xlu0 %4280
      %4282 = vrot.lane.b32.xlu0 %v4208, 48
      %v4283 = vpop.permute.xlu0 %4282
      %4284 = vrot.lane.b32.xlu0 %v4209, 48
      %v4285 = vpop.permute.xlu0 %4284
      %4286 = vrot.lane.b32.xlu0 %v4210, 48
      %v4287 = vpop.permute.xlu0 %4286
      %4288 = vrot.lane.b32.xlu0 %v4211, 48
      %v4289 = vpop.permute.xlu0 %4288
      %4290 = vrot.lane.b32.xlu0 %v4212, 48
      %v4291 = vpop.permute.xlu0 %4290
      %4292 = vrot.lane.b32.xlu0 %v4213, 48
      %v4293 = vpop.permute.xlu0 %4292
      %4294 = vrot.lane.b32.xlu0 %v4214, 48
      %v4295 = vpop.permute.xlu0 %4294
      %4296 = vrot.lane.b32.xlu0 %v4215, 48
      %v4297 = vpop.permute.xlu0 %4296
      %4298 = vrot.lane.b32.xlu0 %v4216, 48
      %v4299 = vpop.permute.xlu0 %4298
      %4300 = vrot.lane.b32.xlu0 %v4217, 48
      %v4301 = vpop.permute.xlu0 %4300
      %4302 = vrot.lane.b32.xlu0 %v4218, 48
      %v4303 = vpop.permute.xlu0 %4302
      %4304 = vrot.lane.b32.xlu0 %v4219, 48
      %v4305 = vpop.permute.xlu0 %4304
      %4306 = vrot.lane.b32.xlu0 %v4220, 48
      %v4307 = vpop.permute.xlu0 %4306
      %4308 = vrot.lane.b32.xlu0 %v4221, 48
      %v4309 = vpop.permute.xlu0 %4308
      %4310 = vrot.lane.b32.xlu0 %v4222, 48
      %v4311 = vpop.permute.xlu0 %4310
      %4312 = vrot.lane.b32.xlu0 %v4223, 48
      %v4313 = vpop.permute.xlu0 %4312
      %4314 = vrot.lane.b32.xlu0 %v4224, 48
      %v4315 = vpop.permute.xlu0 %4314
      %4316 = vrot.lane.b32.xlu0 %v4225, 48
      %v4317 = vpop.permute.xlu0 %4316
      %4318 = vrot.lane.b32.xlu0 %v4226, 48
      %v4319 = vpop.permute.xlu0 %4318
      %4320 = vrot.lane.b32.xlu0 %v4227, 48
      %v4321 = vpop.permute.xlu0 %4320
      %4322 = vrot.lane.b32.xlu0 %v4228, 48
      %v4323 = vpop.permute.xlu0 %4322
      %4324 = vrot.lane.b32.xlu0 %v4229, 48
      %v4325 = vpop.permute.xlu0 %4324
      %vm4358 = vcmask 523648
      %4359 = vst.msk [vmem:[#allocation4] sm:$0xff] %vm4358, %v4263
      %4360 = vst.msk [vmem:[#allocation4 + $0x10] sm:$0xff] %vm4358, %v4265
      %4361 = vst.msk [vmem:[#allocation4 + $0x20] sm:$0xff] %vm4358, %v4267
      %4362 = vst.msk [vmem:[#allocation4 + $0x30] sm:$0xff] %vm4358, %v4269
      %4363 = vst.msk [vmem:[#allocation4 + $0x40] sm:$0xff] %vm4358, %v4271
      %4364 = vst.msk [vmem:[#allocation4 + $0x50] sm:$0xff] %vm4358, %v4273
      %4365 = vst.msk [vmem:[#allocation4 + $0x60] sm:$0xff] %vm4358, %v4275
      %4366 = vst.msk [vmem:[#allocation4 + $0x70] sm:$0xff] %vm4358, %v4277
      %4367 = vst.msk [vmem:[#allocation4 + $0x80] sm:$0xff] %vm4358, %v4279
      %4368 = vst.msk [vmem:[#allocation4 + $0x90] sm:$0xff] %vm4358, %v4281
      %4369 = vst.msk [vmem:[#allocation4 + $0xa0] sm:$0xff] %vm4358, %v4283
      %4370 = vst.msk [vmem:[#allocation4 + $0xb0] sm:$0xff] %vm4358, %v4285
      %4371 = vst.msk [vmem:[#allocation4 + $0xc0] sm:$0xff] %vm4358, %v4287
      %4372 = vst.msk [vmem:[#allocation4 + $0xd0] sm:$0xff] %vm4358, %v4289
      %4373 = vst.msk [vmem:[#allocation4 + $0xe0] sm:$0xff] %vm4358, %v4291
      %4374 = vst.msk [vmem:[#allocation4 + $0xf0] sm:$0xff] %vm4358, %v4293
      %4375 = vst.msk [vmem:[#allocation4 + $0x100] sm:$0xff] %vm4358, %v4295
      %4376 = vst.msk [vmem:[#allocation4 + $0x110] sm:$0xff] %vm4358, %v4297
      %4377 = vst.msk [vmem:[#allocation4 + $0x120] sm:$0xff] %vm4358, %v4299
      %4378 = vst.msk [vmem:[#allocation4 + $0x130] sm:$0xff] %vm4358, %v4301
      %4379 = vst.msk [vmem:[#allocation4 + $0x140] sm:$0xff] %vm4358, %v4303
      %4380 = vst.msk [vmem:[#allocation4 + $0x150] sm:$0xff] %vm4358, %v4305
      %4381 = vst.msk [vmem:[#allocation4 + $0x160] sm:$0xff] %vm4358, %v4307
      %4382 = vst.msk [vmem:[#allocation4 + $0x170] sm:$0xff] %vm4358, %v4309
      %4383 = vst.msk [vmem:[#allocation4 + $0x180] sm:$0xff] %vm4358, %v4311
      %4384 = vst.msk [vmem:[#allocation4 + $0x190] sm:$0xff] %vm4358, %v4313
      %4385 = vst.msk [vmem:[#allocation4 + $0x1a0] sm:$0xff] %vm4358, %v4315
      %4386 = vst.msk [vmem:[#allocation4 + $0x1b0] sm:$0xff] %vm4358, %v4317
      %4387 = vst.msk [vmem:[#allocation4 + $0x1c0] sm:$0xff] %vm4358, %v4319
      %4388 = vst.msk [vmem:[#allocation4 + $0x1d0] sm:$0xff] %vm4358, %v4321
      %4389 = vst.msk [vmem:[#allocation4 + $0x1e0] sm:$0xff] %vm4358, %v4323
      %4390 = vst.msk [vmem:[#allocation4 + $0x1f0] sm:$0xff] %vm4358, %v4325
      %v4391 = vld [vmem:[#allocation2 + $0x18] sm:$0xff]
      %v4392 = vld [vmem:[#allocation2 + $0x20] sm:$0xff]
      %v4393 = vld [vmem:[#allocation2 + $0x28] sm:$0xff]
      %v4394 = vld [vmem:[#allocation2 + $0x30] sm:$0xff]
      %v4395 = vld [vmem:[#allocation2 + $0x38] sm:$0xff]
      %v4396 = vld [vmem:[#allocation2 + $0x40] sm:$0xff]
      %v4397 = vld [vmem:[#allocation2 + $0x48] sm:$0xff]
      %v4398 = vld [vmem:[#allocation2 + $0x50] sm:$0xff]
      %v4399 = vld [vmem:[#allocation2 + $0x58] sm:$0xff]
      %v4400 = vld [vmem:[#allocation2 + $0x60] sm:$0xff]
      %v4401 = vld [vmem:[#allocation2 + $0x68] sm:$0xff]
      %v4402 = vld [vmem:[#allocation2 + $0x70] sm:$0xff]
      %v4403 = vld [vmem:[#allocation2 + $0x78] sm:$0xff]
      %v4404 = vld [vmem:[#allocation2 + $0x80] sm:$0xff]
      %v4405 = vld [vmem:[#allocation2 + $0x88] sm:$0xff]
      %v4406 = vld [vmem:[#allocation2 + $0x90] sm:$0xff]
      %v4407 = vld [vmem:[#allocation2 + $0x98] sm:$0xff]
      %v4408 = vld [vmem:[#allocation2 + $0xa0] sm:$0xff]
      %v4409 = vld [vmem:[#allocation2 + $0xa8] sm:$0xff]
      %v4410 = vld [vmem:[#allocation2 + $0xb0] sm:$0xff]
      %v4411 = vld [vmem:[#allocation2 + $0xb8] sm:$0xff]
      %v4412 = vld [vmem:[#allocation2 + $0xc0] sm:$0xff]
      %v4413 = vld [vmem:[#allocation2 + $0xc8] sm:$0xff]
      %v4414 = vld [vmem:[#allocation2 + $0xd0] sm:$0xff]
      %v4415 = vld [vmem:[#allocation2 + $0xd8] sm:$0xff]
      %v4416 = vld [vmem:[#allocation2 + $0xe0] sm:$0xff]
      %v4417 = vld [vmem:[#allocation2 + $0xe8] sm:$0xff]
      %v4418 = vld [vmem:[#allocation2 + $0xf0] sm:$0xff]
      %v4419 = vld [vmem:[#allocation2 + $0xf8] sm:$0xff]
      %v4420 = vld [vmem:[#allocation2 + $0x100] sm:$0xff]
      %v4421 = vld [vmem:[#allocation2 + $0x108] sm:$0xff]
      %v4422 = vld [vmem:[#allocation2 + $0x110] sm:$0xff]
      %4455 = vrot.lane.b32.xlu0 %v4391, 64
      %v4456 = vpop.permute.xlu0 %4455
      %4457 = vrot.lane.b32.xlu0 %v4392, 64
      %v4458 = vpop.permute.xlu0 %4457
      %4459 = vrot.lane.b32.xlu0 %v4393, 64
      %v4460 = vpop.permute.xlu0 %4459
      %4461 = vrot.lane.b32.xlu0 %v4394, 64
      %v4462 = vpop.permute.xlu0 %4461
      %4463 = vrot.lane.b32.xlu0 %v4395, 64
      %v4464 = vpop.permute.xlu0 %4463
      %4465 = vrot.lane.b32.xlu0 %v4396, 64
      %v4466 = vpop.permute.xlu0 %4465
      %4467 = vrot.lane.b32.xlu0 %v4397, 64
      %v4468 = vpop.permute.xlu0 %4467
      %4469 = vrot.lane.b32.xlu0 %v4398, 64
      %v4470 = vpop.permute.xlu0 %4469
      %4471 = vrot.lane.b32.xlu0 %v4399, 64
      %v4472 = vpop.permute.xlu0 %4471
      %4473 = vrot.lane.b32.xlu0 %v4400, 64
      %v4474 = vpop.permute.xlu0 %4473
      %4475 = vrot.lane.b32.xlu0 %v4401, 64
      %v4476 = vpop.permute.xlu0 %4475
      %4477 = vrot.lane.b32.xlu0 %v4402, 64
      %v4478 = vpop.permute.xlu0 %4477
      %4479 = vrot.lane.b32.xlu0 %v4403, 64
      %v4480 = vpop.permute.xlu0 %4479
      %4481 = vrot.lane.b32.xlu0 %v4404, 64
      %v4482 = vpop.permute.xlu0 %4481
      %4483 = vrot.lane.b32.xlu0 %v4405, 64
      %v4484 = vpop.permute.xlu0 %4483
      %4485 = vrot.lane.b32.xlu0 %v4406, 64
      %v4486 = vpop.permute.xlu0 %4485
      %4487 = vrot.lane.b32.xlu0 %v4407, 64
      %v4488 = vpop.permute.xlu0 %4487
      %4489 = vrot.lane.b32.xlu0 %v4408, 64
      %v4490 = vpop.permute.xlu0 %4489
      %4491 = vrot.lane.b32.xlu0 %v4409, 64
      %v4492 = vpop.permute.xlu0 %4491
      %4493 = vrot.lane.b32.xlu0 %v4410, 64
      %v4494 = vpop.permute.xlu0 %4493
      %4495 = vrot.lane.b32.xlu0 %v4411, 64
      %v4496 = vpop.permute.xlu0 %4495
      %4497 = vrot.lane.b32.xlu0 %v4412, 64
      %v4498 = vpop.permute.xlu0 %4497
      %4499 = vrot.lane.b32.xlu0 %v4413, 64
      %v4500 = vpop.permute.xlu0 %4499
      %4501 = vrot.lane.b32.xlu0 %v4414, 64
      %v4502 = vpop.permute.xlu0 %4501
      %4503 = vrot.lane.b32.xlu0 %v4415, 64
      %v4504 = vpop.permute.xlu0 %4503
      %4505 = vrot.lane.b32.xlu0 %v4416, 64
      %v4506 = vpop.permute.xlu0 %4505
      %4507 = vrot.lane.b32.xlu0 %v4417, 64
      %v4508 = vpop.permute.xlu0 %4507
      %4509 = vrot.lane.b32.xlu0 %v4418, 64
      %v4510 = vpop.permute.xlu0 %4509
      %4511 = vrot.lane.b32.xlu0 %v4419, 64
      %v4512 = vpop.permute.xlu0 %4511
      %4513 = vrot.lane.b32.xlu0 %v4420, 64
      %v4514 = vpop.permute.xlu0 %4513
      %4515 = vrot.lane.b32.xlu0 %v4421, 64
      %v4516 = vpop.permute.xlu0 %4515
      %4517 = vrot.lane.b32.xlu0 %v4422, 64
      %v4518 = vpop.permute.xlu0 %4517
      %vm4551 = vcmask 654848
      %4552 = vst.msk [vmem:[#allocation4] sm:$0xff] %vm4551, %v4456
      %4553 = vst.msk [vmem:[#allocation4 + $0x10] sm:$0xff] %vm4551, %v4458
      %4554 = vst.msk [vmem:[#allocation4 + $0x20] sm:$0xff] %vm4551, %v4460
      %4555 = vst.msk [vmem:[#allocation4 + $0x30] sm:$0xff] %vm4551, %v4462
      %4556 = vst.msk [vmem:[#allocation4 + $0x40] sm:$0xff] %vm4551, %v4464
      %4557 = vst.msk [vmem:[#allocation4 + $0x50] sm:$0xff] %vm4551, %v4466
      %4558 = vst.msk [vmem:[#allocation4 + $0x60] sm:$0xff] %vm4551, %v4468
      %4559 = vst.msk [vmem:[#allocation4 + $0x70] sm:$0xff] %vm4551, %v4470
      %4560 = vst.msk [vmem:[#allocation4 + $0x80] sm:$0xff] %vm4551, %v4472
      %4561 = vst.msk [vmem:[#allocation4 + $0x90] sm:$0xff] %vm4551, %v4474
      %4562 = vst.msk [vmem:[#allocation4 + $0xa0] sm:$0xff] %vm4551, %v4476
      %4563 = vst.msk [vmem:[#allocation4 + $0xb0] sm:$0xff] %vm4551, %v4478
      %4564 = vst.msk [vmem:[#allocation4 + $0xc0] sm:$0xff] %vm4551, %v4480
      %4565 = vst.msk [vmem:[#allocation4 + $0xd0] sm:$0xff] %vm4551, %v4482
      %4566 = vst.msk [vmem:[#allocation4 + $0xe0] sm:$0xff] %vm4551, %v4484
      %4567 = vst.msk [vmem:[#allocation4 + $0xf0] sm:$0xff] %vm4551, %v4486
      %4568 = vst.msk [vmem:[#allocation4 + $0x100] sm:$0xff] %vm4551, %v4488
      %4569 = vst.msk [vmem:[#allocation4 + $0x110] sm:$0xff] %vm4551, %v4490
      %4570 = vst.msk [vmem:[#allocation4 + $0x120] sm:$0xff] %vm4551, %v4492
      %4571 = vst.msk [vmem:[#allocation4 + $0x130] sm:$0xff] %vm4551, %v4494
      %4572 = vst.msk [vmem:[#allocation4 + $0x140] sm:$0xff] %vm4551, %v4496
      %4573 = vst.msk [vmem:[#allocation4 + $0x150] sm:$0xff] %vm4551, %v4498
      %4574 = vst.msk [vmem:[#allocation4 + $0x160] sm:$0xff] %vm4551, %v4500
      %4575 = vst.msk [vmem:[#allocation4 + $0x170] sm:$0xff] %vm4551, %v4502
      %4576 = vst.msk [vmem:[#allocation4 + $0x180] sm:$0xff] %vm4551, %v4504
      %4577 = vst.msk [vmem:[#allocation4 + $0x190] sm:$0xff] %vm4551, %v4506
      %4578 = vst.msk [vmem:[#allocation4 + $0x1a0] sm:$0xff] %vm4551, %v4508
      %4579 = vst.msk [vmem:[#allocation4 + $0x1b0] sm:$0xff] %vm4551, %v4510
      %4580 = vst.msk [vmem:[#allocation4 + $0x1c0] sm:$0xff] %vm4551, %v4512
      %4581 = vst.msk [vmem:[#allocation4 + $0x1d0] sm:$0xff] %vm4551, %v4514
      %4582 = vst.msk [vmem:[#allocation4 + $0x1e0] sm:$0xff] %vm4551, %v4516
      %4583 = vst.msk [vmem:[#allocation4 + $0x1f0] sm:$0xff] %vm4551, %v4518
      %v4584 = vld [vmem:[#allocation2 + $0x19] sm:$0xff]
      %v4585 = vld [vmem:[#allocation2 + $0x21] sm:$0xff]
      %v4586 = vld [vmem:[#allocation2 + $0x29] sm:$0xff]
      %v4587 = vld [vmem:[#allocation2 + $0x31] sm:$0xff]
      %v4588 = vld [vmem:[#allocation2 + $0x39] sm:$0xff]
      %v4589 = vld [vmem:[#allocation2 + $0x41] sm:$0xff]
      %v4590 = vld [vmem:[#allocation2 + $0x49] sm:$0xff]
      %v4591 = vld [vmem:[#allocation2 + $0x51] sm:$0xff]
      %v4592 = vld [vmem:[#allocation2 + $0x59] sm:$0xff]
      %v4593 = vld [vmem:[#allocation2 + $0x61] sm:$0xff]
      %v4594 = vld [vmem:[#allocation2 + $0x69] sm:$0xff]
      %v4595 = vld [vmem:[#allocation2 + $0x71] sm:$0xff]
      %v4596 = vld [vmem:[#allocation2 + $0x79] sm:$0xff]
      %v4597 = vld [vmem:[#allocation2 + $0x81] sm:$0xff]
      %v4598 = vld [vmem:[#allocation2 + $0x89] sm:$0xff]
      %v4599 = vld [vmem:[#allocation2 + $0x91] sm:$0xff]
      %v4600 = vld [vmem:[#allocation2 + $0x99] sm:$0xff]
      %v4601 = vld [vmem:[#allocation2 + $0xa1] sm:$0xff]
      %v4602 = vld [vmem:[#allocation2 + $0xa9] sm:$0xff]
      %v4603 = vld [vmem:[#allocation2 + $0xb1] sm:$0xff]
      %v4604 = vld [vmem:[#allocation2 + $0xb9] sm:$0xff]
      %v4605 = vld [vmem:[#allocation2 + $0xc1] sm:$0xff]
      %v4606 = vld [vmem:[#allocation2 + $0xc9] sm:$0xff]
      %v4607 = vld [vmem:[#allocation2 + $0xd1] sm:$0xff]
      %v4608 = vld [vmem:[#allocation2 + $0xd9] sm:$0xff]
      %v4609 = vld [vmem:[#allocation2 + $0xe1] sm:$0xff]
      %v4610 = vld [vmem:[#allocation2 + $0xe9] sm:$0xff]
      %v4611 = vld [vmem:[#allocation2 + $0xf1] sm:$0xff]
      %v4612 = vld [vmem:[#allocation2 + $0xf9] sm:$0xff]
      %v4613 = vld [vmem:[#allocation2 + $0x101] sm:$0xff]
      %v4614 = vld [vmem:[#allocation2 + $0x109] sm:$0xff]
      %v4615 = vld [vmem:[#allocation2 + $0x111] sm:$0xff]
      %v4616 = vmul.f32 %v4584, %v580
      %v4617 = vmul.f32 %v4585, %v581
      %v4618 = vmul.f32 %v4586, %v582
      %v4619 = vmul.f32 %v4587, %v583
      %v4620 = vmul.f32 %v4588, %v584
      %v4621 = vmul.f32 %v4589, %v585
      %v4622 = vmul.f32 %v4590, %v586
      %v4623 = vmul.f32 %v4591, %v587
      %v4624 = vmul.f32 %v4592, %v588
      %v4625 = vmul.f32 %v4593, %v589
      %v4626 = vmul.f32 %v4594, %v590
      %v4627 = vmul.f32 %v4595, %v591
      %v4628 = vmul.f32 %v4596, %v592
      %v4629 = vmul.f32 %v4597, %v593
      %v4630 = vmul.f32 %v4598, %v594
      %v4631 = vmul.f32 %v4599, %v595
      %v4632 = vmul.f32 %v4600, %v596
      %v4633 = vmul.f32 %v4601, %v597
      %v4634 = vmul.f32 %v4602, %v598
      %v4635 = vmul.f32 %v4603, %v599
      %v4636 = vmul.f32 %v4604, %v600
      %v4637 = vmul.f32 %v4605, %v601
      %v4638 = vmul.f32 %v4606, %v602
      %v4639 = vmul.f32 %v4607, %v603
      %v4640 = vmul.f32 %v4608, %v604
      %v4641 = vmul.f32 %v4609, %v605
      %v4642 = vmul.f32 %v4610, %v606
      %v4643 = vmul.f32 %v4611, %v607
      %v4644 = vmul.f32 %v4612, %v608
      %v4645 = vmul.f32 %v4613, %v609
      %v4646 = vmul.f32 %v4614, %v610
      %v4647 = vmul.f32 %v4615, %v611
      %4680 = vrot.lane.b32.xlu0 %v4616, 80
      %v4681 = vpop.permute.xlu0 %4680
      %4682 = vrot.lane.b32.xlu0 %v4617, 80
      %v4683 = vpop.permute.xlu0 %4682
      %4684 = vrot.lane.b32.xlu0 %v4618, 80
      %v4685 = vpop.permute.xlu0 %4684
      %4686 = vrot.lane.b32.xlu0 %v4619, 80
      %v4687 = vpop.permute.xlu0 %4686
      %4688 = vrot.lane.b32.xlu0 %v4620, 80
      %v4689 = vpop.permute.xlu0 %4688
      %4690 = vrot.lane.b32.xlu0 %v4621, 80
      %v4691 = vpop.permute.xlu0 %4690
      %4692 = vrot.lane.b32.xlu0 %v4622, 80
      %v4693 = vpop.permute.xlu0 %4692
      %4694 = vrot.lane.b32.xlu0 %v4623, 80
      %v4695 = vpop.permute.xlu0 %4694
      %4696 = vrot.lane.b32.xlu0 %v4624, 80
      %v4697 = vpop.permute.xlu0 %4696
      %4698 = vrot.lane.b32.xlu0 %v4625, 80
      %v4699 = vpop.permute.xlu0 %4698
      %4700 = vrot.lane.b32.xlu0 %v4626, 80
      %v4701 = vpop.permute.xlu0 %4700
      %4702 = vrot.lane.b32.xlu0 %v4627, 80
      %v4703 = vpop.permute.xlu0 %4702
      %4704 = vrot.lane.b32.xlu0 %v4628, 80
      %v4705 = vpop.permute.xlu0 %4704
      %4706 = vrot.lane.b32.xlu0 %v4629, 80
      %v4707 = vpop.permute.xlu0 %4706
      %4708 = vrot.lane.b32.xlu0 %v4630, 80
      %v4709 = vpop.permute.xlu0 %4708
      %4710 = vrot.lane.b32.xlu0 %v4631, 80
      %v4711 = vpop.permute.xlu0 %4710
      %4712 = vrot.lane.b32.xlu0 %v4632, 80
      %v4713 = vpop.permute.xlu0 %4712
      %4714 = vrot.lane.b32.xlu0 %v4633, 80
      %v4715 = vpop.permute.xlu0 %4714
      %4716 = vrot.lane.b32.xlu0 %v4634, 80
      %v4717 = vpop.permute.xlu0 %4716
      %4718 = vrot.lane.b32.xlu0 %v4635, 80
      %v4719 = vpop.permute.xlu0 %4718
      %4720 = vrot.lane.b32.xlu0 %v4636, 80
      %v4721 = vpop.permute.xlu0 %4720
      %4722 = vrot.lane.b32.xlu0 %v4637, 80
      %v4723 = vpop.permute.xlu0 %4722
      %4724 = vrot.lane.b32.xlu0 %v4638, 80
      %v4725 = vpop.permute.xlu0 %4724
      %4726 = vrot.lane.b32.xlu0 %v4639, 80
      %v4727 = vpop.permute.xlu0 %4726
      %4728 = vrot.lane.b32.xlu0 %v4640, 80
      %v4729 = vpop.permute.xlu0 %4728
      %4730 = vrot.lane.b32.xlu0 %v4641, 80
      %v4731 = vpop.permute.xlu0 %4730
      %4732 = vrot.lane.b32.xlu0 %v4642, 80
      %v4733 = vpop.permute.xlu0 %4732
      %4734 = vrot.lane.b32.xlu0 %v4643, 80
      %v4735 = vpop.permute.xlu0 %4734
      %4736 = vrot.lane.b32.xlu0 %v4644, 80
      %v4737 = vpop.permute.xlu0 %4736
      %4738 = vrot.lane.b32.xlu0 %v4645, 80
      %v4739 = vpop.permute.xlu0 %4738
      %4740 = vrot.lane.b32.xlu0 %v4646, 80
      %v4741 = vpop.permute.xlu0 %4740
      %4742 = vrot.lane.b32.xlu0 %v4647, 80
      %v4743 = vpop.permute.xlu0 %4742
      %vm4776 = vcmask 786048
      %4777 = vst.msk [vmem:[#allocation4] sm:$0xff] %vm4776, %v4681
      %4778 = vst.msk [vmem:[#allocation4 + $0x10] sm:$0xff] %vm4776, %v4683
      %4779 = vst.msk [vmem:[#allocation4 + $0x20] sm:$0xff] %vm4776, %v4685
      %4780 = vst.msk [vmem:[#allocation4 + $0x30] sm:$0xff] %vm4776, %v4687
      %4781 = vst.msk [vmem:[#allocation4 + $0x40] sm:$0xff] %vm4776, %v4689
      %4782 = vst.msk [vmem:[#allocation4 + $0x50] sm:$0xff] %vm4776, %v4691
      %4783 = vst.msk [vmem:[#allocation4 + $0x60] sm:$0xff] %vm4776, %v4693
      %4784 = vst.msk [vmem:[#allocation4 + $0x70] sm:$0xff] %vm4776, %v4695
      %4785 = vst.msk [vmem:[#allocation4 + $0x80] sm:$0xff] %vm4776, %v4697
      %4786 = vst.msk [vmem:[#allocation4 + $0x90] sm:$0xff] %vm4776, %v4699
      %4787 = vst.msk [vmem:[#allocation4 + $0xa0] sm:$0xff] %vm4776, %v4701
      %4788 = vst.msk [vmem:[#allocation4 + $0xb0] sm:$0xff] %vm4776, %v4703
      %4789 = vst.msk [vmem:[#allocation4 + $0xc0] sm:$0xff] %vm4776, %v4705
      %4790 = vst.msk [vmem:[#allocation4 + $0xd0] sm:$0xff] %vm4776, %v4707
      %4791 = vst.msk [vmem:[#allocation4 + $0xe0] sm:$0xff] %vm4776, %v4709
      %4792 = vst.msk [vmem:[#allocation4 + $0xf0] sm:$0xff] %vm4776, %v4711
      %4793 = vst.msk [vmem:[#allocation4 + $0x100] sm:$0xff] %vm4776, %v4713
      %4794 = vst.msk [vmem:[#allocation4 + $0x110] sm:$0xff] %vm4776, %v4715
      %4795 = vst.msk [vmem:[#allocation4 + $0x120] sm:$0xff] %vm4776, %v4717
      %4796 = vst.msk [vmem:[#allocation4 + $0x130] sm:$0xff] %vm4776, %v4719
      %4797 = vst.msk [vmem:[#allocation4 + $0x140] sm:$0xff] %vm4776, %v4721
      %4798 = vst.msk [vmem:[#allocation4 + $0x150] sm:$0xff] %vm4776, %v4723
      %4799 = vst.msk [vmem:[#allocation4 + $0x160] sm:$0xff] %vm4776, %v4725
      %4800 = vst.msk [vmem:[#allocation4 + $0x170] sm:$0xff] %vm4776, %v4727
      %4801 = vst.msk [vmem:[#allocation4 + $0x180] sm:$0xff] %vm4776, %v4729
      %4802 = vst.msk [vmem:[#allocation4 + $0x190] sm:$0xff] %vm4776, %v4731
      %4803 = vst.msk [vmem:[#allocation4 + $0x1a0] sm:$0xff] %vm4776, %v4733
      %4804 = vst.msk [vmem:[#allocation4 + $0x1b0] sm:$0xff] %vm4776, %v4735
      %4805 = vst.msk [vmem:[#allocation4 + $0x1c0] sm:$0xff] %vm4776, %v4737
      %4806 = vst.msk [vmem:[#allocation4 + $0x1d0] sm:$0xff] %vm4776, %v4739
      %4807 = vst.msk [vmem:[#allocation4 + $0x1e0] sm:$0xff] %vm4776, %v4741
      %4808 = vst.msk [vmem:[#allocation4 + $0x1f0] sm:$0xff] %vm4776, %v4743
      %v4809 = vld [vmem:[#allocation2 + $0x27] sm:$0xff]
      %v4810 = vld [vmem:[#allocation2 + $0x2f] sm:$0xff]
      %v4811 = vld [vmem:[#allocation2 + $0x37] sm:$0xff]
      %v4812 = vld [vmem:[#allocation2 + $0x3f] sm:$0xff]
      %v4813 = vld [vmem:[#allocation2 + $0x47] sm:$0xff]
      %v4814 = vld [vmem:[#allocation2 + $0x4f] sm:$0xff]
      %v4815 = vld [vmem:[#allocation2 + $0x57] sm:$0xff]
      %v4816 = vld [vmem:[#allocation2 + $0x5f] sm:$0xff]
      %v4817 = vld [vmem:[#allocation2 + $0x67] sm:$0xff]
      %v4818 = vld [vmem:[#allocation2 + $0x6f] sm:$0xff]
      %v4819 = vld [vmem:[#allocation2 + $0x77] sm:$0xff]
      %v4820 = vld [vmem:[#allocation2 + $0x7f] sm:$0xff]
      %v4821 = vld [vmem:[#allocation2 + $0x87] sm:$0xff]
      %v4822 = vld [vmem:[#allocation2 + $0x8f] sm:$0xff]
      %v4823 = vld [vmem:[#allocation2 + $0x97] sm:$0xff]
      %v4824 = vld [vmem:[#allocation2 + $0x9f] sm:$0xff]
      %v4825 = vld [vmem:[#allocation2 + $0xa7] sm:$0xff]
      %v4826 = vld [vmem:[#allocation2 + $0xaf] sm:$0xff]
      %v4827 = vld [vmem:[#allocation2 + $0xb7] sm:$0xff]
      %v4828 = vld [vmem:[#allocation2 + $0xbf] sm:$0xff]
      %v4829 = vld [vmem:[#allocation2 + $0xc7] sm:$0xff]
      %v4830 = vld [vmem:[#allocation2 + $0xcf] sm:$0xff]
      %v4831 = vld [vmem:[#allocation2 + $0xd7] sm:$0xff]
      %v4832 = vld [vmem:[#allocation2 + $0xdf] sm:$0xff]
      %v4833 = vld [vmem:[#allocation2 + $0xe7] sm:$0xff]
      %v4834 = vld [vmem:[#allocation2 + $0xef] sm:$0xff]
      %v4835 = vld [vmem:[#allocation2 + $0xf7] sm:$0xff]
      %v4836 = vld [vmem:[#allocation2 + $0xff] sm:$0xff]
      %v4837 = vld [vmem:[#allocation2 + $0x107] sm:$0xff]
      %v4838 = vld [vmem:[#allocation2 + $0x10f] sm:$0xff]
      %v4839 = vld [vmem:[#allocation2 + $0x117] sm:$0xff]
      %v4840 = vld [vmem:[#allocation2 + $0x11f] sm:$0xff]
      %v4841 = vmul.f32 %v4809, %v516
      %v4842 = vmul.f32 %v4810, %v517
      %v4843 = vmul.f32 %v4811, %v518
      %v4844 = vmul.f32 %v4812, %v519
      %v4845 = vmul.f32 %v4813, %v520
      %v4846 = vmul.f32 %v4814, %v521
      %v4847 = vmul.f32 %v4815, %v522
      %v4848 = vmul.f32 %v4816, %v523
      %v4849 = vmul.f32 %v4817, %v524
      %v4850 = vmul.f32 %v4818, %v525
      %v4851 = vmul.f32 %v4819, %v526
      %v4852 = vmul.f32 %v4820, %v527
      %v4853 = vmul.f32 %v4821, %v528
      %v4854 = vmul.f32 %v4822, %v529
      %v4855 = vmul.f32 %v4823, %v530
      %v4856 = vmul.f32 %v4824, %v531
      %v4857 = vmul.f32 %v4825, %v532
      %v4858 = vmul.f32 %v4826, %v533
      %v4859 = vmul.f32 %v4827, %v534
      %v4860 = vmul.f32 %v4828, %v535
      %v4861 = vmul.f32 %v4829, %v536
      %v4862 = vmul.f32 %v4830, %v537
      %v4863 = vmul.f32 %v4831, %v538
      %v4864 = vmul.f32 %v4832, %v539
      %v4865 = vmul.f32 %v4833, %v540
      %v4866 = vmul.f32 %v4834, %v541
      %v4867 = vmul.f32 %v4835, %v542
      %v4868 = vmul.f32 %v4836, %v543
      %v4869 = vmul.f32 %v4837, %v544
      %v4870 = vmul.f32 %v4838, %v545
      %v4871 = vmul.f32 %v4839, %v546
      %v4872 = vmul.f32 %v4840, %v547
      %4905 = vrot.lane.b32.xlu0 %v4841, 96
      %v4906 = vpop.permute.xlu0 %4905
      %4907 = vrot.lane.b32.xlu0 %v4842, 96
      %v4908 = vpop.permute.xlu0 %4907
      %4909 = vrot.lane.b32.xlu0 %v4843, 96
      %v4910 = vpop.permute.xlu0 %4909
      %4911 = vrot.lane.b32.xlu0 %v4844, 96
      %v4912 = vpop.permute.xlu0 %4911
      %4913 = vrot.lane.b32.xlu0 %v4845, 96
      %v4914 = vpop.permute.xlu0 %4913
      %4915 = vrot.lane.b32.xlu0 %v4846, 96
      %v4916 = vpop.permute.xlu0 %4915
      %4917 = vrot.lane.b32.xlu0 %v4847, 96
      %v4918 = vpop.permute.xlu0 %4917
      %4919 = vrot.lane.b32.xlu0 %v4848, 96
      %v4920 = vpop.permute.xlu0 %4919
      %4921 = vrot.lane.b32.xlu0 %v4849, 96
      %v4922 = vpop.permute.xlu0 %4921
      %4923 = vrot.lane.b32.xlu0 %v4850, 96
      %v4924 = vpop.permute.xlu0 %4923
      %4925 = vrot.lane.b32.xlu0 %v4851, 96
      %v4926 = vpop.permute.xlu0 %4925
      %4927 = vrot.lane.b32.xlu0 %v4852, 96
      %v4928 = vpop.permute.xlu0 %4927
      %4929 = vrot.lane.b32.xlu0 %v4853, 96
      %v4930 = vpop.permute.xlu0 %4929
      %4931 = vrot.lane.b32.xlu0 %v4854, 96
      %v4932 = vpop.permute.xlu0 %4931
      %4933 = vrot.lane.b32.xlu0 %v4855, 96
      %v4934 = vpop.permute.xlu0 %4933
      %4935 = vrot.lane.b32.xlu0 %v4856, 96
      %v4936 = vpop.permute.xlu0 %4935
      %4937 = vrot.lane.b32.xlu0 %v4857, 96
      %v4938 = vpop.permute.xlu0 %4937
      %4939 = vrot.lane.b32.xlu0 %v4858, 96
      %v4940 = vpop.permute.xlu0 %4939
      %4941 = vrot.lane.b32.xlu0 %v4859, 96
      %v4942 = vpop.permute.xlu0 %4941
      %4943 = vrot.lane.b32.xlu0 %v4860, 96
      %v4944 = vpop.permute.xlu0 %4943
      %4945 = vrot.lane.b32.xlu0 %v4861, 96
      %v4946 = vpop.permute.xlu0 %4945
      %4947 = vrot.lane.b32.xlu0 %v4862, 96
      %v4948 = vpop.permute.xlu0 %4947
      %4949 = vrot.lane.b32.xlu0 %v4863, 96
      %v4950 = vpop.permute.xlu0 %4949
      %4951 = vrot.lane.b32.xlu0 %v4864, 96
      %v4952 = vpop.permute.xlu0 %4951
      %4953 = vrot.lane.b32.xlu0 %v4865, 96
      %v4954 = vpop.permute.xlu0 %4953
      %4955 = vrot.lane.b32.xlu0 %v4866, 96
      %v4956 = vpop.permute.xlu0 %4955
      %4957 = vrot.lane.b32.xlu0 %v4867, 96
      %v4958 = vpop.permute.xlu0 %4957
      %4959 = vrot.lane.b32.xlu0 %v4868, 96
      %v4960 = vpop.permute.xlu0 %4959
      %4961 = vrot.lane.b32.xlu0 %v4869, 96
      %v4962 = vpop.permute.xlu0 %4961
      %4963 = vrot.lane.b32.xlu0 %v4870, 96
      %v4964 = vpop.permute.xlu0 %4963
      %4965 = vrot.lane.b32.xlu0 %v4871, 96
      %v4966 = vpop.permute.xlu0 %4965
      %4967 = vrot.lane.b32.xlu0 %v4872, 96
      %v4968 = vpop.permute.xlu0 %4967
      %vm5001 = vcmask 917248
      %5002 = vst.msk [vmem:[#allocation4] sm:$0xff] %vm5001, %v4906
      %5003 = vst.msk [vmem:[#allocation4 + $0x10] sm:$0xff] %vm5001, %v4908
      %5004 = vst.msk [vmem:[#allocation4 + $0x20] sm:$0xff] %vm5001, %v4910
      %5005 = vst.msk [vmem:[#allocation4 + $0x30] sm:$0xff] %vm5001, %v4912
      %5006 = vst.msk [vmem:[#allocation4 + $0x40] sm:$0xff] %vm5001, %v4914
      %5007 = vst.msk [vmem:[#allocation4 + $0x50] sm:$0xff] %vm5001, %v4916
      %5008 = vst.msk [vmem:[#allocation4 + $0x60] sm:$0xff] %vm5001, %v4918
      %5009 = vst.msk [vmem:[#allocation4 + $0x70] sm:$0xff] %vm5001, %v4920
      %5010 = vst.msk [vmem:[#allocation4 + $0x80] sm:$0xff] %vm5001, %v4922
      %5011 = vst.msk [vmem:[#allocation4 + $0x90] sm:$0xff] %vm5001, %v4924
      %5012 = vst.msk [vmem:[#allocation4 + $0xa0] sm:$0xff] %vm5001, %v4926
      %5013 = vst.msk [vmem:[#allocation4 + $0xb0] sm:$0xff] %vm5001, %v4928
      %5014 = vst.msk [vmem:[#allocation4 + $0xc0] sm:$0xff] %vm5001, %v4930
      %5015 = vst.msk [vmem:[#allocation4 + $0xd0] sm:$0xff] %vm5001, %v4932
      %5016 = vst.msk [vmem:[#allocation4 + $0xe0] sm:$0xff] %vm5001, %v4934
      %5017 = vst.msk [vmem:[#allocation4 + $0xf0] sm:$0xff] %vm5001, %v4936
      %5018 = vst.msk [vmem:[#allocation4 + $0x100] sm:$0xff] %vm5001, %v4938
      %5019 = vst.msk [vmem:[#allocation4 + $0x110] sm:$0xff] %vm5001, %v4940
      %5020 = vst.msk [vmem:[#allocation4 + $0x120] sm:$0xff] %vm5001, %v4942
      %5021 = vst.msk [vmem:[#allocation4 + $0x130] sm:$0xff] %vm5001, %v4944
      %5022 = vst.msk [vmem:[#allocation4 + $0x140] sm:$0xff] %vm5001, %v4946
      %5023 = vst.msk [vmem:[#allocation4 + $0x150] sm:$0xff] %vm5001, %v4948
      %5024 = vst.msk [vmem:[#allocation4 + $0x160] sm:$0xff] %vm5001, %v4950
      %5025 = vst.msk [vmem:[#allocation4 + $0x170] sm:$0xff] %vm5001, %v4952
      %5026 = vst.msk [vmem:[#allocation4 + $0x180] sm:$0xff] %vm5001, %v4954
      %5027 = vst.msk [vmem:[#allocation4 + $0x190] sm:$0xff] %vm5001, %v4956
      %5028 = vst.msk [vmem:[#allocation4 + $0x1a0] sm:$0xff] %vm5001, %v4958
      %5029 = vst.msk [vmem:[#allocation4 + $0x1b0] sm:$0xff] %vm5001, %v4960
      %5030 = vst.msk [vmem:[#allocation4 + $0x1c0] sm:$0xff] %vm5001, %v4962
      %5031 = vst.msk [vmem:[#allocation4 + $0x1d0] sm:$0xff] %vm5001, %v4964
      %5032 = vst.msk [vmem:[#allocation4 + $0x1e0] sm:$0xff] %vm5001, %v4966
      %5033 = vst.msk [vmem:[#allocation4 + $0x1f0] sm:$0xff] %vm5001, %v4968
      %v5034 = vld [vmem:[#allocation2 + $0x28] sm:$0xff]
      %v5035 = vld [vmem:[#allocation2 + $0x30] sm:$0xff]
      %v5036 = vld [vmem:[#allocation2 + $0x38] sm:$0xff]
      %v5037 = vld [vmem:[#allocation2 + $0x40] sm:$0xff]
      %v5038 = vld [vmem:[#allocation2 + $0x48] sm:$0xff]
      %v5039 = vld [vmem:[#allocation2 + $0x50] sm:$0xff]
      %v5040 = vld [vmem:[#allocation2 + $0x58] sm:$0xff]
      %v5041 = vld [vmem:[#allocation2 + $0x60] sm:$0xff]
      %v5042 = vld [vmem:[#allocation2 + $0x68] sm:$0xff]
      %v5043 = vld [vmem:[#allocation2 + $0x70] sm:$0xff]
      %v5044 = vld [vmem:[#allocation2 + $0x78] sm:$0xff]
      %v5045 = vld [vmem:[#allocation2 + $0x80] sm:$0xff]
      %v5046 = vld [vmem:[#allocation2 + $0x88] sm:$0xff]
      %v5047 = vld [vmem:[#allocation2 + $0x90] sm:$0xff]
      %v5048 = vld [vmem:[#allocation2 + $0x98] sm:$0xff]
      %v5049 = vld [vmem:[#allocation2 + $0xa0] sm:$0xff]
      %v5050 = vld [vmem:[#allocation2 + $0xa8] sm:$0xff]
      %v5051 = vld [vmem:[#allocation2 + $0xb0] sm:$0xff]
      %v5052 = vld [vmem:[#allocation2 + $0xb8] sm:$0xff]
      %v5053 = vld [vmem:[#allocation2 + $0xc0] sm:$0xff]
      %v5054 = vld [vmem:[#allocation2 + $0xc8] sm:$0xff]
      %v5055 = vld [vmem:[#allocation2 + $0xd0] sm:$0xff]
      %v5056 = vld [vmem:[#allocation2 + $0xd8] sm:$0xff]
      %v5057 = vld [vmem:[#allocation2 + $0xe0] sm:$0xff]
      %v5058 = vld [vmem:[#allocation2 + $0xe8] sm:$0xff]
      %v5059 = vld [vmem:[#allocation2 + $0xf0] sm:$0xff]
      %v5060 = vld [vmem:[#allocation2 + $0xf8] sm:$0xff]
      %v5061 = vld [vmem:[#allocation2 + $0x100] sm:$0xff]
      %v5062 = vld [vmem:[#allocation2 + $0x108] sm:$0xff]
      %v5063 = vld [vmem:[#allocation2 + $0x110] sm:$0xff]
      %v5064 = vld [vmem:[#allocation2 + $0x118] sm:$0xff]
      %v5065 = vld [vmem:[#allocation2 + $0x120] sm:$0xff]
      %5098 = vrot.lane.b32.xlu0 %v5034, 112
      %v5099 = vpop.permute.xlu0 %5098
      %5100 = vrot.lane.b32.xlu0 %v5035, 112
      %v5101 = vpop.permute.xlu0 %5100
      %5102 = vrot.lane.b32.xlu0 %v5036, 112
      %v5103 = vpop.permute.xlu0 %5102
      %5104 = vrot.lane.b32.xlu0 %v5037, 112
      %v5105 = vpop.permute.xlu0 %5104
      %5106 = vrot.lane.b32.xlu0 %v5038, 112
      %v5107 = vpop.permute.xlu0 %5106
      %5108 = vrot.lane.b32.xlu0 %v5039, 112
      %v5109 = vpop.permute.xlu0 %5108
      %5110 = vrot.lane.b32.xlu0 %v5040, 112
      %v5111 = vpop.permute.xlu0 %5110
      %5112 = vrot.lane.b32.xlu0 %v5041, 112
      %v5113 = vpop.permute.xlu0 %5112
      %5114 = vrot.lane.b32.xlu0 %v5042, 112
      %v5115 = vpop.permute.xlu0 %5114
      %5116 = vrot.lane.b32.xlu0 %v5043, 112
      %v5117 = vpop.permute.xlu0 %5116
      %5118 = vrot.lane.b32.xlu0 %v5044, 112
      %v5119 = vpop.permute.xlu0 %5118
      %5120 = vrot.lane.b32.xlu0 %v5045, 112
      %v5121 = vpop.permute.xlu0 %5120
      %5122 = vrot.lane.b32.xlu0 %v5046, 112
      %v5123 = vpop.permute.xlu0 %5122
      %5124 = vrot.lane.b32.xlu0 %v5047, 112
      %v5125 = vpop.permute.xlu0 %5124
      %5126 = vrot.lane.b32.xlu0 %v5048, 112
      %v5127 = vpop.permute.xlu0 %5126
      %5128 = vrot.lane.b32.xlu0 %v5049, 112
      %v5129 = vpop.permute.xlu0 %5128
      %5130 = vrot.lane.b32.xlu0 %v5050, 112
      %v5131 = vpop.permute.xlu0 %5130
      %5132 = vrot.lane.b32.xlu0 %v5051, 112
      %v5133 = vpop.permute.xlu0 %5132
      %5134 = vrot.lane.b32.xlu0 %v5052, 112
      %v5135 = vpop.permute.xlu0 %5134
      %5136 = vrot.lane.b32.xlu0 %v5053, 112
      %v5137 = vpop.permute.xlu0 %5136
      %5138 = vrot.lane.b32.xlu0 %v5054, 112
      %v5139 = vpop.permute.xlu0 %5138
      %5140 = vrot.lane.b32.xlu0 %v5055, 112
      %v5141 = vpop.permute.xlu0 %5140
      %5142 = vrot.lane.b32.xlu0 %v5056, 112
      %v5143 = vpop.permute.xlu0 %5142
      %5144 = vrot.lane.b32.xlu0 %v5057, 112
      %v5145 = vpop.permute.xlu0 %5144
      %5146 = vrot.lane.b32.xlu0 %v5058, 112
      %v5147 = vpop.permute.xlu0 %5146
      %5148 = vrot.lane.b32.xlu0 %v5059, 112
      %v5149 = vpop.permute.xlu0 %5148
      %5150 = vrot.lane.b32.xlu0 %v5060, 112
      %v5151 = vpop.permute.xlu0 %5150
      %5152 = vrot.lane.b32.xlu0 %v5061, 112
      %v5153 = vpop.permute.xlu0 %5152
      %5154 = vrot.lane.b32.xlu0 %v5062, 112
      %v5155 = vpop.permute.xlu0 %5154
      %5156 = vrot.lane.b32.xlu0 %v5063, 112
      %v5157 = vpop.permute.xlu0 %5156
      %5158 = vrot.lane.b32.xlu0 %v5064, 112
      %v5159 = vpop.permute.xlu0 %5158
      %5160 = vrot.lane.b32.xlu0 %v5065, 112
      %v5161 = vpop.permute.xlu0 %5160
      %vm5194 = vcmask 1048448
      %5195 = vst.msk [vmem:[#allocation4] sm:$0xff] %vm5194, %v5099
      %5196 = vst.msk [vmem:[#allocation4 + $0x10] sm:$0xff] %vm5194, %v5101
      %5197 = vst.msk [vmem:[#allocation4 + $0x20] sm:$0xff] %vm5194, %v5103
      %5198 = vst.msk [vmem:[#allocation4 + $0x30] sm:$0xff] %vm5194, %v5105
      %5199 = vst.msk [vmem:[#allocation4 + $0x40] sm:$0xff] %vm5194, %v5107
      %5200 = vst.msk [vmem:[#allocation4 + $0x50] sm:$0xff] %vm5194, %v5109
      %5201 = vst.msk [vmem:[#allocation4 + $0x60] sm:$0xff] %vm5194, %v5111
      %5202 = vst.msk [vmem:[#allocation4 + $0x70] sm:$0xff] %vm5194, %v5113
      %5203 = vst.msk [vmem:[#allocation4 + $0x80] sm:$0xff] %vm5194, %v5115
      %5204 = vst.msk [vmem:[#allocation4 + $0x90] sm:$0xff] %vm5194, %v5117
      %5205 = vst.msk [vmem:[#allocation4 + $0xa0] sm:$0xff] %vm5194, %v5119
      %5206 = vst.msk [vmem:[#allocation4 + $0xb0] sm:$0xff] %vm5194, %v5121
      %5207 = vst.msk [vmem:[#allocation4 + $0xc0] sm:$0xff] %vm5194, %v5123
      %5208 = vst.msk [vmem:[#allocation4 + $0xd0] sm:$0xff] %vm5194, %v5125
      %5209 = vst.msk [vmem:[#allocation4 + $0xe0] sm:$0xff] %vm5194, %v5127
      %5210 = vst.msk [vmem:[#allocation4 + $0xf0] sm:$0xff] %vm5194, %v5129
      %5211 = vst.msk [vmem:[#allocation4 + $0x100] sm:$0xff] %vm5194, %v5131
      %5212 = vst.msk [vmem:[#allocation4 + $0x110] sm:$0xff] %vm5194, %v5133
      %5213 = vst.msk [vmem:[#allocation4 + $0x120] sm:$0xff] %vm5194, %v5135
      %5214 = vst.msk [vmem:[#allocation4 + $0x130] sm:$0xff] %vm5194, %v5137
      %5215 = vst.msk [vmem:[#allocation4 + $0x140] sm:$0xff] %vm5194, %v5139
      %5216 = vst.msk [vmem:[#allocation4 + $0x150] sm:$0xff] %vm5194, %v5141
      %5217 = vst.msk [vmem:[#allocation4 + $0x160] sm:$0xff] %vm5194, %v5143
      %5218 = vst.msk [vmem:[#allocation4 + $0x170] sm:$0xff] %vm5194, %v5145
      %5219 = vst.msk [vmem:[#allocation4 + $0x180] sm:$0xff] %vm5194, %v5147
      %5220 = vst.msk [vmem:[#allocation4 + $0x190] sm:$0xff] %vm5194, %v5149
      %5221 = vst.msk [vmem:[#allocation4 + $0x1a0] sm:$0xff] %vm5194, %v5151
      %5222 = vst.msk [vmem:[#allocation4 + $0x1b0] sm:$0xff] %vm5194, %v5153
      %5223 = vst.msk [vmem:[#allocation4 + $0x1c0] sm:$0xff] %vm5194, %v5155
      %5224 = vst.msk [vmem:[#allocation4 + $0x1d0] sm:$0xff] %vm5194, %v5157
      %5225 = vst.msk [vmem:[#allocation4 + $0x1e0] sm:$0xff] %vm5194, %v5159
      %5226 = vst.msk [vmem:[#allocation4 + $0x1f0] sm:$0xff] %vm5194, %v5161
      %v5227 = vld [vmem:[#allocation2 + $0x29] sm:$0xff]
      %v5228 = vld [vmem:[#allocation2 + $0x31] sm:$0xff]
      %v5229 = vld [vmem:[#allocation2 + $0x39] sm:$0xff]
      %v5230 = vld [vmem:[#allocation2 + $0x41] sm:$0xff]
      %v5231 = vld [vmem:[#allocation2 + $0x49] sm:$0xff]
      %v5232 = vld [vmem:[#allocation2 + $0x51] sm:$0xff]
      %v5233 = vld [vmem:[#allocation2 + $0x59] sm:$0xff]
      %v5234 = vld [vmem:[#allocation2 + $0x61] sm:$0xff]
      %v5235 = vld [vmem:[#allocation2 + $0x69] sm:$0xff]
      %v5236 = vld [vmem:[#allocation2 + $0x71] sm:$0xff]
      %v5237 = vld [vmem:[#allocation2 + $0x79] sm:$0xff]
      %v5238 = vld [vmem:[#allocation2 + $0x81] sm:$0xff]
      %v5239 = vld [vmem:[#allocation2 + $0x89] sm:$0xff]
      %v5240 = vld [vmem:[#allocation2 + $0x91] sm:$0xff]
      %v5241 = vld [vmem:[#allocation2 + $0x99] sm:$0xff]
      %v5242 = vld [vmem:[#allocation2 + $0xa1] sm:$0xff]
      %v5243 = vld [vmem:[#allocation2 + $0xa9] sm:$0xff]
      %v5244 = vld [vmem:[#allocation2 + $0xb1] sm:$0xff]
      %v5245 = vld [vmem:[#allocation2 + $0xb9] sm:$0xff]
      %v5246 = vld [vmem:[#allocation2 + $0xc1] sm:$0xff]
      %v5247 = vld [vmem:[#allocation2 + $0xc9] sm:$0xff]
      %v5248 = vld [vmem:[#allocation2 + $0xd1] sm:$0xff]
      %v5249 = vld [vmem:[#allocation2 + $0xd9] sm:$0xff]
      %v5250 = vld [vmem:[#allocation2 + $0xe1] sm:$0xff]
      %v5251 = vld [vmem:[#allocation2 + $0xe9] sm:$0xff]
      %v5252 = vld [vmem:[#allocation2 + $0xf1] sm:$0xff]
      %v5253 = vld [vmem:[#allocation2 + $0xf9] sm:$0xff]
      %v5254 = vld [vmem:[#allocation2 + $0x101] sm:$0xff]
      %v5255 = vld [vmem:[#allocation2 + $0x109] sm:$0xff]
      %v5256 = vld [vmem:[#allocation2 + $0x111] sm:$0xff]
      %v5257 = vld [vmem:[#allocation2 + $0x119] sm:$0xff]
      %v5258 = vld [vmem:[#allocation2 + $0x121] sm:$0xff]
      %v5259 = vmul.f32 %v5227, %v580
      %v5260 = vmul.f32 %v5228, %v581
      %v5261 = vmul.f32 %v5229, %v582
      %v5262 = vmul.f32 %v5230, %v583
      %v5263 = vmul.f32 %v5231, %v584
      %v5264 = vmul.f32 %v5232, %v585
      %v5265 = vmul.f32 %v5233, %v586
      %v5266 = vmul.f32 %v5234, %v587
      %v5267 = vmul.f32 %v5235, %v588
      %v5268 = vmul.f32 %v5236, %v589
      %v5269 = vmul.f32 %v5237, %v590
      %v5270 = vmul.f32 %v5238, %v591
      %v5271 = vmul.f32 %v5239, %v592
      %v5272 = vmul.f32 %v5240, %v593
      %v5273 = vmul.f32 %v5241, %v594
      %v5274 = vmul.f32 %v5242, %v595
      %v5275 = vmul.f32 %v5243, %v596
      %v5276 = vmul.f32 %v5244, %v597
      %v5277 = vmul.f32 %v5245, %v598
      %v5278 = vmul.f32 %v5246, %v599
      %v5279 = vmul.f32 %v5247, %v600
      %v5280 = vmul.f32 %v5248, %v601
      %v5281 = vmul.f32 %v5249, %v602
      %v5282 = vmul.f32 %v5250, %v603
      %v5283 = vmul.f32 %v5251, %v604
      %v5284 = vmul.f32 %v5252, %v605
      %v5285 = vmul.f32 %v5253, %v606
      %v5286 = vmul.f32 %v5254, %v607
      %v5287 = vmul.f32 %v5255, %v608
      %v5288 = vmul.f32 %v5256, %v609
      %v5289 = vmul.f32 %v5257, %v610
      %v5290 = vmul.f32 %v5258, %v611
      %5291 = vst.msk [vmem:[#allocation4 + $0x8] sm:$0xff] %vm245, %v5259
      %5292 = vst.msk [vmem:[#allocation4 + $0x18] sm:$0xff] %vm245, %v5260
      %5293 = vst.msk [vmem:[#allocation4 + $0x28] sm:$0xff] %vm245, %v5261
      %5294 = vst.msk [vmem:[#allocation4 + $0x38] sm:$0xff] %vm245, %v5262
      %5295 = vst.msk [vmem:[#allocation4 + $0x48] sm:$0xff] %vm245, %v5263
      %5296 = vst.msk [vmem:[#allocation4 + $0x58] sm:$0xff] %vm245, %v5264
      %5297 = vst.msk [vmem:[#allocation4 + $0x68] sm:$0xff] %vm245, %v5265
      %5298 = vst.msk [vmem:[#allocation4 + $0x78] sm:$0xff] %vm245, %v5266
      %5299 = vst.msk [vmem:[#allocation4 + $0x88] sm:$0xff] %vm245, %v5267
      %5300 = vst.msk [vmem:[#allocation4 + $0x98] sm:$0xff] %vm245, %v5268
      %5301 = vst.msk [vmem:[#allocation4 + $0xa8] sm:$0xff] %vm245, %v5269
      %5302 = vst.msk [vmem:[#allocation4 + $0xb8] sm:$0xff] %vm245, %v5270
      %5303 = vst.msk [vmem:[#allocation4 + $0xc8] sm:$0xff] %vm245, %v5271
      %5304 = vst.msk [vmem:[#allocation4 + $0xd8] sm:$0xff] %vm245, %v5272
      %5305 = vst.msk [vmem:[#allocation4 + $0xe8] sm:$0xff] %vm245, %v5273
      %5306 = vst.msk [vmem:[#allocation4 + $0xf8] sm:$0xff] %vm245, %v5274
      %5307 = vst.msk [vmem:[#allocation4 + $0x108] sm:$0xff] %vm245, %v5275
      %5308 = vst.msk [vmem:[#allocation4 + $0x118] sm:$0xff] %vm245, %v5276
      %5309 = vst.msk [vmem:[#allocation4 + $0x128] sm:$0xff] %vm245, %v5277
      %5310 = vst.msk [vmem:[#allocation4 + $0x138] sm:$0xff] %vm245, %v5278
      %5311 = vst.msk [vmem:[#allocation4 + $0x148] sm:$0xff] %vm245, %v5279
      %5312 = vst.msk [vmem:[#allocation4 + $0x158] sm:$0xff] %vm245, %v5280
      %5313 = vst.msk [vmem:[#allocation4 + $0x168] sm:$0xff] %vm245, %v5281
      %5314 = vst.msk [vmem:[#allocation4 + $0x178] sm:$0xff] %vm245, %v5282
      %5315 = vst.msk [vmem:[#allocation4 + $0x188] sm:$0xff] %vm245, %v5283
      %5316 = vst.msk [vmem:[#allocation4 + $0x198] sm:$0xff] %vm245, %v5284
      %5317 = vst.msk [vmem:[#allocation4 + $0x1a8] sm:$0xff] %vm245, %v5285
      %5318 = vst.msk [vmem:[#allocation4 + $0x1b8] sm:$0xff] %vm245, %v5286
      %5319 = vst.msk [vmem:[#allocation4 + $0x1c8] sm:$0xff] %vm245, %v5287
      %5320 = vst.msk [vmem:[#allocation4 + $0x1d8] sm:$0xff] %vm245, %v5288
      %5321 = vst.msk [vmem:[#allocation4 + $0x1e8] sm:$0xff] %vm245, %v5289
      %5322 = vst.msk [vmem:[#allocation4 + $0x1f8] sm:$0xff] %vm245, %v5290
      %v5323 = vld [vmem:[#allocation4] sm:$0xff]
      %v5324 = vld [vmem:[#allocation4 + $0x8] sm:$0xff]
      %v5325 = vld [vmem:[#allocation4 + $0x10] sm:$0xff]
      %v5326 = vld [vmem:[#allocation4 + $0x18] sm:$0xff]
      %v5327 = vld [vmem:[#allocation4 + $0x20] sm:$0xff]
      %v5328 = vld [vmem:[#allocation4 + $0x28] sm:$0xff]
      %v5329 = vld [vmem:[#allocation4 + $0x30] sm:$0xff]
      %v5330 = vld [vmem:[#allocation4 + $0x38] sm:$0xff]
      %v5331 = vld [vmem:[#allocation4 + $0x40] sm:$0xff]
      %v5332 = vld [vmem:[#allocation4 + $0x48] sm:$0xff]
      %v5333 = vld [vmem:[#allocation4 + $0x50] sm:$0xff]
      %v5334 = vld [vmem:[#allocation4 + $0x58] sm:$0xff]
      %v5335 = vld [vmem:[#allocation4 + $0x60] sm:$0xff]
      %v5336 = vld [vmem:[#allocation4 + $0x68] sm:$0xff]
      %v5337 = vld [vmem:[#allocation4 + $0x70] sm:$0xff]
      %v5338 = vld [vmem:[#allocation4 + $0x78] sm:$0xff]
      %v5339 = vld [vmem:[#allocation4 + $0x80] sm:$0xff]
      %v5340 = vld [vmem:[#allocation4 + $0x88] sm:$0xff]
      %v5341 = vld [vmem:[#allocation4 + $0x90] sm:$0xff]
      %v5342 = vld [vmem:[#allocation4 + $0x98] sm:$0xff]
      %v5343 = vld [vmem:[#allocation4 + $0xa0] sm:$0xff]
      %v5344 = vld [vmem:[#allocation4 + $0xa8] sm:$0xff]
      %v5345 = vld [vmem:[#allocation4 + $0xb0] sm:$0xff]
      %v5346 = vld [vmem:[#allocation4 + $0xb8] sm:$0xff]
      %v5347 = vld [vmem:[#allocation4 + $0xc0] sm:$0xff]
      %v5348 = vld [vmem:[#allocation4 + $0xc8] sm:$0xff]
      %v5349 = vld [vmem:[#allocation4 + $0xd0] sm:$0xff]
      %v5350 = vld [vmem:[#allocation4 + $0xd8] sm:$0xff]
      %v5351 = vld [vmem:[#allocation4 + $0xe0] sm:$0xff]
      %v5352 = vld [vmem:[#allocation4 + $0xe8] sm:$0xff]
      %v5353 = vld [vmem:[#allocation4 + $0xf0] sm:$0xff]
      %v5354 = vld [vmem:[#allocation4 + $0xf8] sm:$0xff]
      %v5355 = vld [vmem:[#allocation4 + $0x100] sm:$0xff]
      %v5356 = vld [vmem:[#allocation4 + $0x108] sm:$0xff]
      %v5357 = vld [vmem:[#allocation4 + $0x110] sm:$0xff]
      %v5358 = vld [vmem:[#allocation4 + $0x118] sm:$0xff]
      %v5359 = vld [vmem:[#allocation4 + $0x120] sm:$0xff]
      %v5360 = vld [vmem:[#allocation4 + $0x128] sm:$0xff]
      %v5361 = vld [vmem:[#allocation4 + $0x130] sm:$0xff]
      %v5362 = vld [vmem:[#allocation4 + $0x138] sm:$0xff]
      %v5363 = vld [vmem:[#allocation4 + $0x140] sm:$0xff]
      %v5364 = vld [vmem:[#allocation4 + $0x148] sm:$0xff]
      %v5365 = vld [vmem:[#allocation4 + $0x150] sm:$0xff]
      %v5366 = vld [vmem:[#allocation4 + $0x158] sm:$0xff]
      %v5367 = vld [vmem:[#allocation4 + $0x160] sm:$0xff]
      %v5368 = vld [vmem:[#allocation4 + $0x168] sm:$0xff]
      %v5369 = vld [vmem:[#allocation4 + $0x170] sm:$0xff]
      %v5370 = vld [vmem:[#allocation4 + $0x178] sm:$0xff]
      %v5371 = vld [vmem:[#allocation4 + $0x180] sm:$0xff]
      %v5372 = vld [vmem:[#allocation4 + $0x188] sm:$0xff]
      %v5373 = vld [vmem:[#allocation4 + $0x190] sm:$0xff]
      %v5374 = vld [vmem:[#allocation4 + $0x198] sm:$0xff]
      %v5375 = vld [vmem:[#allocation4 + $0x1a0] sm:$0xff]
      %v5376 = vld [vmem:[#allocation4 + $0x1a8] sm:$0xff]
      %v5377 = vld [vmem:[#allocation4 + $0x1b0] sm:$0xff]
      %v5378 = vld [vmem:[#allocation4 + $0x1b8] sm:$0xff]
      %v5379 = vld [vmem:[#allocation4 + $0x1c0] sm:$0xff]
      %v5380 = vld [vmem:[#allocation4 + $0x1c8] sm:$0xff]
      %v5381 = vld [vmem:[#allocation4 + $0x1d0] sm:$0xff]
      %v5382 = vld [vmem:[#allocation4 + $0x1d8] sm:$0xff]
      %v5383 = vld [vmem:[#allocation4 + $0x1e0] sm:$0xff]
      %v5384 = vld [vmem:[#allocation4 + $0x1e8] sm:$0xff]
      %v5385 = vld [vmem:[#allocation4 + $0x1f0] sm:$0xff]
      %v5386 = vld [vmem:[#allocation4 + $0x1f8] sm:$0xff]
      %v5387 = vld [vmem:[%s3 + $0x18] sm:$0xff]
      %v5388 = vld [vmem:[%s3 + $0x20] sm:$0xff]
      %v5389 = vld [vmem:[%s3 + $0x28] sm:$0xff]
      %v5390 = vld [vmem:[%s3 + $0x30] sm:$0xff]
      %v5391 = vld [vmem:[%s3 + $0x38] sm:$0xff]
      %v5392 = vld [vmem:[%s3 + $0x40] sm:$0xff]
      %v5393 = vld [vmem:[%s3 + $0x48] sm:$0xff]
      %v5394 = vld [vmem:[%s3 + $0x50] sm:$0xff]
      %v5395 = vld [vmem:[%s3 + $0x58] sm:$0xff]
      %v5396 = vld [vmem:[%s3 + $0x60] sm:$0xff]
      %v5397 = vld [vmem:[%s3 + $0x68] sm:$0xff]
      %v5398 = vld [vmem:[%s3 + $0x70] sm:$0xff]
      %v5399 = vld [vmem:[%s3 + $0x78] sm:$0xff]
      %v5400 = vld [vmem:[%s3 + $0x80] sm:$0xff]
      %v5401 = vld [vmem:[%s3 + $0x88] sm:$0xff]
      %v5402 = vld [vmem:[%s3 + $0x90] sm:$0xff]
      %v5403 = vld [vmem:[%s3 + $0x98] sm:$0xff]
      %v5404 = vld [vmem:[%s3 + $0xa0] sm:$0xff]
      %v5405 = vperm.slane %v3651, 0
      %v5407 = vsel %vm245, %v5324, 0
      %v5410 = vsel %vm245, %v5326, 0
      %v5413 = vsel %vm245, %v5328, 0
      %v5416 = vsel %vm245, %v5330, 0
      %v5419 = vsel %vm245, %v5332, 0
      %v5422 = vsel %vm245, %v5334, 0
      %v5425 = vsel %vm245, %v5336, 0
      %v5428 = vsel %vm245, %v5338, 0
      %v5431 = vsel %vm245, %v5340, 0
      %v5434 = vsel %vm245, %v5342, 0
      %v5437 = vsel %vm245, %v5344, 0
      %v5440 = vsel %vm245, %v5346, 0
      %v5443 = vsel %vm245, %v5348, 0
      %v5446 = vsel %vm245, %v5350, 0
      %v5449 = vsel %vm245, %v5352, 0
      %v5452 = vsel %vm245, %v5354, 0
      %v5455 = vsel %vm245, %v5356, 0
      %v5458 = vsel %vm245, %v5358, 0
      %v5461 = vsel %vm245, %v5360, 0
      %v5464 = vsel %vm245, %v5362, 0
      %v5467 = vsel %vm245, %v5364, 0
      %v5470 = vsel %vm245, %v5366, 0
      %v5473 = vsel %vm245, %v5368, 0
      %v5476 = vsel %vm245, %v5370, 0
      %v5479 = vsel %vm245, %v5372, 0
      %v5482 = vsel %vm245, %v5374, 0
      %v5485 = vsel %vm245, %v5376, 0
      %v5488 = vsel %vm245, %v5378, 0
      %v5491 = vsel %vm245, %v5380, 0
      %v5494 = vsel %vm245, %v5382, 0
      %v5497 = vsel %vm245, %v5384, 0
      %v5500 = vsel %vm245, %v5386, 0
      %5502 = vmatpush.msra.mxu0 %v5402
      %5503 = vmatpush.msra.mxu0 %v5401
      %5504 = vmatpush.msra.mxu0 %v5400
      %5505 = vmatpush.msra.mxu0 %v5399
      %5506 = vmatpush.msra.mxu0 %v5398
      %5507 = vmatpush.msra.mxu0 %v5397
      %5508 = vmatpush.msra.mxu0 %v5396
      %5509 = vmatpush.msra.mxu0 %v5395
      %5510 = vmatpush.msra.mxu0 %v5394
      %5511 = vmatpush.msra.mxu0 %v5393
      %5512 = vmatpush.msra.mxu0 %v5392
      %5513 = vmatpush.msra.mxu0 %v5391
      %5514 = vmatpush.msra.mxu0 %v5390
      %5515 = vmatpush.msra.mxu0 %v5389
      %5516 = vmatpush.msra.mxu0 %v5388
      %5517 = vmatpush.msra.mxu0 %v5387
      %5518 = vmatmul.f32.gmra.mxu0 %v5323
      %v5519 = vpop.f32.mrf.mxu0
      %v5520 = vadd.f32 %v5405, %v5519
      %5521 = vmatmul.f32.gmra.mxu0 %v5325
      %v5522 = vpop.f32.mrf.mxu0
      %v5523 = vadd.f32 %v5405, %v5522
      %5524 = vmatmul.f32.gmra.mxu0 %v5327
      %v5525 = vpop.f32.mrf.mxu0
      %v5526 = vadd.f32 %v5405, %v5525
      %5527 = vmatmul.f32.gmra.mxu0 %v5329
      %v5528 = vpop.f32.mrf.mxu0
      %v5529 = vadd.f32 %v5405, %v5528
      %5530 = vmatmul.f32.gmra.mxu0 %v5331
      %v5531 = vpop.f32.mrf.mxu0
      %v5532 = vadd.f32 %v5405, %v5531
      %5533 = vmatmul.f32.gmra.mxu0 %v5333
      %v5534 = vpop.f32.mrf.mxu0
      %v5535 = vadd.f32 %v5405, %v5534
      %5536 = vmatmul.f32.gmra.mxu0 %v5335
      %v5537 = vpop.f32.mrf.mxu0
      %v5538 = vadd.f32 %v5405, %v5537
      %5539 = vmatmul.f32.gmra.mxu0 %v5337
      %v5540 = vpop.f32.mrf.mxu0
      %v5541 = vadd.f32 %v5405, %v5540
      %5542 = vmatmul.f32.gmra.mxu0 %v5339
      %v5543 = vpop.f32.mrf.mxu0
      %v5544 = vadd.f32 %v5405, %v5543
      %5545 = vmatmul.f32.gmra.mxu0 %v5341
      %v5546 = vpop.f32.mrf.mxu0
      %v5547 = vadd.f32 %v5405, %v5546
      %5548 = vmatmul.f32.gmra.mxu0 %v5343
      %v5549 = vpop.f32.mrf.mxu0
      %v5550 = vadd.f32 %v5405, %v5549
      %5551 = vmatmul.f32.gmra.mxu0 %v5345
      %v5552 = vpop.f32.mrf.mxu0
      %v5553 = vadd.f32 %v5405, %v5552
      %5554 = vmatmul.f32.gmra.mxu0 %v5347
      %v5555 = vpop.f32.mrf.mxu0
      %v5556 = vadd.f32 %v5405, %v5555
      %5557 = vmatmul.f32.gmra.mxu0 %v5349
      %v5558 = vpop.f32.mrf.mxu0
      %v5559 = vadd.f32 %v5405, %v5558
      %5560 = vmatmul.f32.gmra.mxu0 %v5351
      %v5561 = vpop.f32.mrf.mxu0
      %v5562 = vadd.f32 %v5405, %v5561
      %5563 = vmatmul.f32.gmra.mxu0 %v5353
      %v5564 = vpop.f32.mrf.mxu0
      %v5565 = vadd.f32 %v5405, %v5564
      %5566 = vmatmul.f32.gmra.mxu0 %v5355
      %v5567 = vpop.f32.mrf.mxu0
      %v5568 = vadd.f32 %v5405, %v5567
      %5569 = vmatmul.f32.gmra.mxu0 %v5357
      %v5570 = vpop.f32.mrf.mxu0
      %v5571 = vadd.f32 %v5405, %v5570
      %5572 = vmatmul.f32.gmra.mxu0 %v5359
      %v5573 = vpop.f32.mrf.mxu0
      %v5574 = vadd.f32 %v5405, %v5573
      %5575 = vmatmul.f32.gmra.mxu0 %v5361
      %v5576 = vpop.f32.mrf.mxu0
      %v5577 = vadd.f32 %v5405, %v5576
      %5578 = vmatmul.f32.gmra.mxu0 %v5363
      %v5579 = vpop.f32.mrf.mxu0
      %v5580 = vadd.f32 %v5405, %v5579
      %5581 = vmatmul.f32.gmra.mxu0 %v5365
      %v5582 = vpop.f32.mrf.mxu0
      %v5583 = vadd.f32 %v5405, %v5582
      %5584 = vmatmul.f32.gmra.mxu0 %v5367
      %v5585 = vpop.f32.mrf.mxu0
      %v5586 = vadd.f32 %v5405, %v5585
      %5587 = vmatmul.f32.gmra.mxu0 %v5369
      %v5588 = vpop.f32.mrf.mxu0
      %v5589 = vadd.f32 %v5405, %v5588
      %5590 = vmatmul.f32.gmra.mxu0 %v5371
      %v5591 = vpop.f32.mrf.mxu0
      %v5592 = vadd.f32 %v5405, %v5591
      %5593 = vmatmul.f32.gmra.mxu0 %v5373
      %v5594 = vpop.f32.mrf.mxu0
      %v5595 = vadd.f32 %v5405, %v5594
      %5596 = vmatmul.f32.gmra.mxu0 %v5375
      %v5597 = vpop.f32.mrf.mxu0
      %v5598 = vadd.f32 %v5405, %v5597
      %5599 = vmatmul.f32.gmra.mxu0 %v5377
      %v5600 = vpop.f32.mrf.mxu0
      %v5601 = vadd.f32 %v5405, %v5600
      %5602 = vmatmul.f32.gmra.mxu0 %v5379
      %v5603 = vpop.f32.mrf.mxu0
      %v5604 = vadd.f32 %v5405, %v5603
      %5605 = vmatmul.f32.gmra.mxu0 %v5381
      %v5606 = vpop.f32.mrf.mxu0
      %v5607 = vadd.f32 %v5405, %v5606
      %5608 = vmatmul.f32.gmra.mxu0 %v5383
      %v5609 = vpop.f32.mrf.mxu0
      %v5610 = vadd.f32 %v5405, %v5609
      %5611 = vmatmul.f32.gmra.mxu0 %v5385
      %v5612 = vpop.f32.mrf.mxu0
      %v5613 = vadd.f32 %v5405, %v5612
      %5614 = vdwg.mxu0
      %5615 = vmatpush.msra.mxu0 0.0
      %5616 = vmatpush.msra.mxu0 0.0
      %5617 = vmatpush.msra.mxu0 0.0
      %5618 = vmatpush.msra.mxu0 0.0
      %5619 = vmatpush.msra.mxu0 0.0
      %5620 = vmatpush.msra.mxu0 0.0
      %5621 = vmatpush.msra.mxu0 0.0
      %5622 = vmatpush.msra.mxu0 0.0
      %5623 = vmatpush.msra.mxu0 0.0
      %5624 = vmatpush.msra.mxu0 0.0
      %5625 = vmatpush.msra.mxu0 0.0
      %5626 = vmatpush.msra.mxu0 0.0
      %5627 = vmatpush.msra.mxu0 0.0
      %5628 = vmatpush.msra.mxu0 0.0
      %5629 = vmatpush.msra.mxu0 %v5404
      %5630 = vmatpush.msra.mxu0 %v5403
      %5631 = vmatmul.f32.gmra.mxu0 %v5407
      %v5632 = vpop.f32.mrf.mxu0
      %v5633 = vadd.f32 %v5520, %v5632
      %5634 = vmatmul.f32.gmra.mxu0 %v5410
      %v5635 = vpop.f32.mrf.mxu0
      %v5636 = vadd.f32 %v5523, %v5635
      %5637 = vmatmul.f32.gmra.mxu0 %v5413
      %v5638 = vpop.f32.mrf.mxu0
      %v5639 = vadd.f32 %v5526, %v5638
      %5640 = vmatmul.f32.gmra.mxu0 %v5416
      %v5641 = vpop.f32.mrf.mxu0
      %v5642 = vadd.f32 %v5529, %v5641
      %5643 = vmatmul.f32.gmra.mxu0 %v5419
      %v5644 = vpop.f32.mrf.mxu0
      %v5645 = vadd.f32 %v5532, %v5644
      %5646 = vmatmul.f32.gmra.mxu0 %v5422
      %v5647 = vpop.f32.mrf.mxu0
      %v5648 = vadd.f32 %v5535, %v5647
      %5649 = vmatmul.f32.gmra.mxu0 %v5425
      %v5650 = vpop.f32.mrf.mxu0
      %v5651 = vadd.f32 %v5538, %v5650
      %5652 = vmatmul.f32.gmra.mxu0 %v5428
      %v5653 = vpop.f32.mrf.mxu0
      %v5654 = vadd.f32 %v5541, %v5653
      %5655 = vmatmul.f32.gmra.mxu0 %v5431
      %v5656 = vpop.f32.mrf.mxu0
      %v5657 = vadd.f32 %v5544, %v5656
      %5658 = vmatmul.f32.gmra.mxu0 %v5434
      %v5659 = vpop.f32.mrf.mxu0
      %v5660 = vadd.f32 %v5547, %v5659
      %5661 = vmatmul.f32.gmra.mxu0 %v5437
      %v5662 = vpop.f32.mrf.mxu0
      %v5663 = vadd.f32 %v5550, %v5662
      %5664 = vmatmul.f32.gmra.mxu0 %v5440
      %v5665 = vpop.f32.mrf.mxu0
      %v5666 = vadd.f32 %v5553, %v5665
      %5667 = vmatmul.f32.gmra.mxu0 %v5443
      %v5668 = vpop.f32.mrf.mxu0
      %v5669 = vadd.f32 %v5556, %v5668
      %5670 = vmatmul.f32.gmra.mxu0 %v5446
      %v5671 = vpop.f32.mrf.mxu0
      %v5672 = vadd.f32 %v5559, %v5671
      %5673 = vmatmul.f32.gmra.mxu0 %v5449
      %v5674 = vpop.f32.mrf.mxu0
      %v5675 = vadd.f32 %v5562, %v5674
      %5676 = vmatmul.f32.gmra.mxu0 %v5452
      %v5677 = vpop.f32.mrf.mxu0
      %v5678 = vadd.f32 %v5565, %v5677
      %5679 = vmatmul.f32.gmra.mxu0 %v5455
      %v5680 = vpop.f32.mrf.mxu0
      %v5681 = vadd.f32 %v5568, %v5680
      %5682 = vmatmul.f32.gmra.mxu0 %v5458
      %v5683 = vpop.f32.mrf.mxu0
      %v5684 = vadd.f32 %v5571, %v5683
      %5685 = vmatmul.f32.gmra.mxu0 %v5461
      %v5686 = vpop.f32.mrf.mxu0
      %v5687 = vadd.f32 %v5574, %v5686
      %5688 = vmatmul.f32.gmra.mxu0 %v5464
      %v5689 = vpop.f32.mrf.mxu0
      %v5690 = vadd.f32 %v5577, %v5689
      %5691 = vmatmul.f32.gmra.mxu0 %v5467
      %v5692 = vpop.f32.mrf.mxu0
      %v5693 = vadd.f32 %v5580, %v5692
      %5694 = vmatmul.f32.gmra.mxu0 %v5470
      %v5695 = vpop.f32.mrf.mxu0
      %v5696 = vadd.f32 %v5583, %v5695
      %5697 = vmatmul.f32.gmra.mxu0 %v5473
      %v5698 = vpop.f32.mrf.mxu0
      %v5699 = vadd.f32 %v5586, %v5698
      %5700 = vmatmul.f32.gmra.mxu0 %v5476
      %v5701 = vpop.f32.mrf.mxu0
      %v5702 = vadd.f32 %v5589, %v5701
      %5703 = vmatmul.f32.gmra.mxu0 %v5479
      %v5704 = vpop.f32.mrf.mxu0
      %v5705 = vadd.f32 %v5592, %v5704
      %5706 = vmatmul.f32.gmra.mxu0 %v5482
      %v5707 = vpop.f32.mrf.mxu0
      %v5708 = vadd.f32 %v5595, %v5707
      %5709 = vmatmul.f32.gmra.mxu0 %v5485
      %v5710 = vpop.f32.mrf.mxu0
      %v5711 = vadd.f32 %v5598, %v5710
      %5712 = vmatmul.f32.gmra.mxu0 %v5488
      %v5713 = vpop.f32.mrf.mxu0
      %v5714 = vadd.f32 %v5601, %v5713
      %5715 = vmatmul.f32.gmra.mxu0 %v5491
      %v5716 = vpop.f32.mrf.mxu0
      %v5717 = vadd.f32 %v5604, %v5716
      %5718 = vmatmul.f32.gmra.mxu0 %v5494
      %v5719 = vpop.f32.mrf.mxu0
      %v5720 = vadd.f32 %v5607, %v5719
      %5721 = vmatmul.f32.gmra.mxu0 %v5497
      %v5722 = vpop.f32.mrf.mxu0
      %v5723 = vadd.f32 %v5610, %v5722
      %5724 = vmatmul.f32.gmra.mxu0 %v5500
      %v5725 = vpop.f32.mrf.mxu0
      %v5726 = vadd.f32 %v5613, %v5725
      %5727 = vdwg.mxu0
      %v5728 = vld [vmem:[%s4 + $0x4] sm:$0x1]
      %v5729 = vld [vmem:[%s4 + $0x5] sm:$0x1]
      %v5730 = vsel %vm252, %v5633, 0.0
      %v5731 = vsel %vm252, %v5636, 0.0
      %v5732 = vadd.f32 %v5730, %v5731
      %v5733 = vsel %vm252, %v5639, 0.0
      %v5734 = vadd.f32 %v5732, %v5733
      %v5735 = vsel %vm252, %v5642, 0.0
      %v5736 = vadd.f32 %v5734, %v5735
      %v5737 = vsel %vm252, %v5645, 0.0
      %v5738 = vadd.f32 %v5736, %v5737
      %v5739 = vsel %vm252, %v5648, 0.0
      %v5740 = vadd.f32 %v5738, %v5739
      %v5741 = vsel %vm252, %v5651, 0.0
      %v5742 = vadd.f32 %v5740, %v5741
      %v5743 = vsel %vm252, %v5654, 0.0
      %v5744 = vadd.f32 %v5742, %v5743
      %v5745 = vsel %vm252, %v5657, 0.0
      %v5746 = vadd.f32 %v5744, %v5745
      %v5747 = vsel %vm252, %v5660, 0.0
      %v5748 = vadd.f32 %v5746, %v5747
      %v5749 = vsel %vm252, %v5663, 0.0
      %v5750 = vadd.f32 %v5748, %v5749
      %v5751 = vsel %vm252, %v5666, 0.0
      %v5752 = vadd.f32 %v5750, %v5751
      %v5753 = vsel %vm252, %v5669, 0.0
      %v5754 = vadd.f32 %v5752, %v5753
      %v5755 = vsel %vm252, %v5672, 0.0
      %v5756 = vadd.f32 %v5754, %v5755
      %v5757 = vsel %vm252, %v5675, 0.0
      %v5758 = vadd.f32 %v5756, %v5757
      %v5759 = vsel %vm252, %v5678, 0.0
      %v5760 = vadd.f32 %v5758, %v5759
      %v5761 = vsel %vm252, %v5681, 0.0
      %v5762 = vadd.f32 %v5760, %v5761
      %v5763 = vsel %vm252, %v5684, 0.0
      %v5764 = vadd.f32 %v5762, %v5763
      %v5765 = vsel %vm252, %v5687, 0.0
      %v5766 = vadd.f32 %v5764, %v5765
      %v5767 = vsel %vm252, %v5690, 0.0
      %v5768 = vadd.f32 %v5766, %v5767
      %v5769 = vsel %vm252, %v5693, 0.0
      %v5770 = vadd.f32 %v5768, %v5769
      %v5771 = vsel %vm252, %v5696, 0.0
      %v5772 = vadd.f32 %v5770, %v5771
      %v5773 = vsel %vm252, %v5699, 0.0
      %v5774 = vadd.f32 %v5772, %v5773
      %v5775 = vsel %vm252, %v5702, 0.0
      %v5776 = vadd.f32 %v5774, %v5775
      %v5777 = vsel %vm252, %v5705, 0.0
      %v5778 = vadd.f32 %v5776, %v5777
      %v5779 = vsel %vm252, %v5708, 0.0
      %v5780 = vadd.f32 %v5778, %v5779
      %v5781 = vsel %vm252, %v5711, 0.0
      %v5782 = vadd.f32 %v5780, %v5781
      %v5783 = vsel %vm252, %v5714, 0.0
      %v5784 = vadd.f32 %v5782, %v5783
      %v5785 = vsel %vm252, %v5717, 0.0
      %v5786 = vadd.f32 %v5784, %v5785
      %v5787 = vsel %vm252, %v5720, 0.0
      %v5788 = vadd.f32 %v5786, %v5787
      %v5789 = vsel %vm252, %v5723, 0.0
      %v5790 = vadd.f32 %v5788, %v5789
      %v5791 = vsel %vm252, %v5726, 0.0
      %v5792 = vadd.f32 %v5790, %v5791
      %5793 = vadd.xlane.f32.xlu0 %v5792
      %v5794 = vpop.xlane.xlu0 %5793
      %v5795 = vrot.slane %v5794, 4
      %v5796 = vadd.f32 %v5794, %v5795
      %v5797 = vrot.slane %v5796, 2
      %v5798 = vadd.f32 %v5796, %v5797
      %v5799 = vrot.slane %v5798, 1
      %v5800 = vadd.f32 %v5798, %v5799
      %s5801 = vtos %v5800
      %v5802 = vrcp.pop 2048.0
      %v5803 = vmul.f32 2048.0, %v5802
      %v5804 = vsub.f32 1.0, %v5803
      %v5805 = vmul.f32 %v5802, %v5804
      %v5806 = vadd.f32 %v5802, %v5805
      %vm5807 = vweird.f32 %v5802
      %v5808 = vsel %vm5807, %v5802, %v5806
      %s5809 = vtos %v5808
      %s5810 = smul.f32 %s5801, %s5809
      %v5811 = vstv %s5810
      %v5812 = vsub.f32 %v5633, %v5811
      %v5813 = vsub.f32 %v5636, %v5811
      %v5814 = vsub.f32 %v5639, %v5811
      %v5815 = vsub.f32 %v5642, %v5811
      %v5816 = vsub.f32 %v5645, %v5811
      %v5817 = vsub.f32 %v5648, %v5811
      %v5818 = vsub.f32 %v5651, %v5811
      %v5819 = vsub.f32 %v5654, %v5811
      %v5820 = vsub.f32 %v5657, %v5811
      %v5821 = vsub.f32 %v5660, %v5811
      %v5822 = vsub.f32 %v5663, %v5811
      %v5823 = vsub.f32 %v5666, %v5811
      %v5824 = vsub.f32 %v5669, %v5811
      %v5825 = vsub.f32 %v5672, %v5811
      %v5826 = vsub.f32 %v5675, %v5811
      %v5827 = vsub.f32 %v5678, %v5811
      %v5828 = vsub.f32 %v5681, %v5811
      %v5829 = vsub.f32 %v5684, %v5811
      %v5830 = vsub.f32 %v5687, %v5811
      %v5831 = vsub.f32 %v5690, %v5811
      %v5832 = vsub.f32 %v5693, %v5811
      %v5833 = vsub.f32 %v5696, %v5811
      %v5834 = vsub.f32 %v5699, %v5811
      %v5835 = vsub.f32 %v5702, %v5811
      %v5836 = vsub.f32 %v5705, %v5811
      %v5837 = vsub.f32 %v5708, %v5811
      %v5838 = vsub.f32 %v5711, %v5811
      %v5839 = vsub.f32 %v5714, %v5811
      %v5840 = vsub.f32 %v5717, %v5811
      %v5841 = vsub.f32 %v5720, %v5811
      %v5842 = vsub.f32 %v5723, %v5811
      %v5843 = vsub.f32 %v5726, %v5811
      %v5844 = vmul.f32 %v5812, %v5812
      %v5845 = vmul.f32 %v5813, %v5813
      %v5846 = vmul.f32 %v5814, %v5814
      %v5847 = vmul.f32 %v5815, %v5815
      %v5848 = vmul.f32 %v5816, %v5816
      %v5849 = vmul.f32 %v5817, %v5817
      %v5850 = vmul.f32 %v5818, %v5818
      %v5851 = vmul.f32 %v5819, %v5819
      %v5852 = vmul.f32 %v5820, %v5820
      %v5853 = vmul.f32 %v5821, %v5821
      %v5854 = vmul.f32 %v5822, %v5822
      %v5855 = vmul.f32 %v5823, %v5823
      %v5856 = vmul.f32 %v5824, %v5824
      %v5857 = vmul.f32 %v5825, %v5825
      %v5858 = vmul.f32 %v5826, %v5826
      %v5859 = vmul.f32 %v5827, %v5827
      %v5860 = vmul.f32 %v5828, %v5828
      %v5861 = vmul.f32 %v5829, %v5829
      %v5862 = vmul.f32 %v5830, %v5830
      %v5863 = vmul.f32 %v5831, %v5831
      %v5864 = vmul.f32 %v5832, %v5832
      %v5865 = vmul.f32 %v5833, %v5833
      %v5866 = vmul.f32 %v5834, %v5834
      %v5867 = vmul.f32 %v5835, %v5835
      %v5868 = vmul.f32 %v5836, %v5836
      %v5869 = vmul.f32 %v5837, %v5837
      %v5870 = vmul.f32 %v5838, %v5838
      %v5871 = vmul.f32 %v5839, %v5839
      %v5872 = vmul.f32 %v5840, %v5840
      %v5873 = vmul.f32 %v5841, %v5841
      %v5874 = vmul.f32 %v5842, %v5842
      %v5875 = vmul.f32 %v5843, %v5843
      %v5876 = vsel %vm252, %v5844, 0.0
      %v5877 = vsel %vm252, %v5845, 0.0
      %v5878 = vadd.f32 %v5876, %v5877
      %v5879 = vsel %vm252, %v5846, 0.0
      %v5880 = vadd.f32 %v5878, %v5879
      %v5881 = vsel %vm252, %v5847, 0.0
      %v5882 = vadd.f32 %v5880, %v5881
      %v5883 = vsel %vm252, %v5848, 0.0
      %v5884 = vadd.f32 %v5882, %v5883
      %v5885 = vsel %vm252, %v5849, 0.0
      %v5886 = vadd.f32 %v5884, %v5885
      %v5887 = vsel %vm252, %v5850, 0.0
      %v5888 = vadd.f32 %v5886, %v5887
      %v5889 = vsel %vm252, %v5851, 0.0
      %v5890 = vadd.f32 %v5888, %v5889
      %v5891 = vsel %vm252, %v5852, 0.0
      %v5892 = vadd.f32 %v5890, %v5891
      %v5893 = vsel %vm252, %v5853, 0.0
      %v5894 = vadd.f32 %v5892, %v5893
      %v5895 = vsel %vm252, %v5854, 0.0
      %v5896 = vadd.f32 %v5894, %v5895
      %v5897 = vsel %vm252, %v5855, 0.0
      %v5898 = vadd.f32 %v5896, %v5897
      %v5899 = vsel %vm252, %v5856, 0.0
      %v5900 = vadd.f32 %v5898, %v5899
      %v5901 = vsel %vm252, %v5857, 0.0
      %v5902 = vadd.f32 %v5900, %v5901
      %v5903 = vsel %vm252, %v5858, 0.0
      %v5904 = vadd.f32 %v5902, %v5903
      %v5905 = vsel %vm252, %v5859, 0.0
      %v5906 = vadd.f32 %v5904, %v5905
      %v5907 = vsel %vm252, %v5860, 0.0
      %v5908 = vadd.f32 %v5906, %v5907
      %v5909 = vsel %vm252, %v5861, 0.0
      %v5910 = vadd.f32 %v5908, %v5909
      %v5911 = vsel %vm252, %v5862, 0.0
      %v5912 = vadd.f32 %v5910, %v5911
      %v5913 = vsel %vm252, %v5863, 0.0
      %v5914 = vadd.f32 %v5912, %v5913
      %v5915 = vsel %vm252, %v5864, 0.0
      %v5916 = vadd.f32 %v5914, %v5915
      %v5917 = vsel %vm252, %v5865, 0.0
      %v5918 = vadd.f32 %v5916, %v5917
      %v5919 = vsel %vm252, %v5866, 0.0
      %v5920 = vadd.f32 %v5918, %v5919
      %v5921 = vsel %vm252, %v5867, 0.0
      %v5922 = vadd.f32 %v5920, %v5921
      %v5923 = vsel %vm252, %v5868, 0.0
      %v5924 = vadd.f32 %v5922, %v5923
      %v5925 = vsel %vm252, %v5869, 0.0
      %v5926 = vadd.f32 %v5924, %v5925
      %v5927 = vsel %vm252, %v5870, 0.0
      %v5928 = vadd.f32 %v5926, %v5927
      %v5929 = vsel %vm252, %v5871, 0.0
      %v5930 = vadd.f32 %v5928, %v5929
      %v5931 = vsel %vm252, %v5872, 0.0
      %v5932 = vadd.f32 %v5930, %v5931
      %v5933 = vsel %vm252, %v5873, 0.0
      %v5934 = vadd.f32 %v5932, %v5933
      %v5935 = vsel %vm252, %v5874, 0.0
      %v5936 = vadd.f32 %v5934, %v5935
      %v5937 = vsel %vm252, %v5875, 0.0
      %v5938 = vadd.f32 %v5936, %v5937
      %5939 = vadd.xlane.f32.xlu0 %v5938
      %v5940 = vpop.xlane.xlu0 %5939
      %v5941 = vrot.slane %v5940, 4
      %v5942 = vadd.f32 %v5940, %v5941
      %v5943 = vrot.slane %v5942, 2
      %v5944 = vadd.f32 %v5942, %v5943
      %v5945 = vrot.slane %v5944, 1
      %v5946 = vadd.f32 %v5944, %v5945
      %s5947 = vtos %v5946
      %v5948 = vrcp.pop 2048.0
      %v5949 = vmul.f32 2048.0, %v5948
      %v5950 = vsub.f32 1.0, %v5949
      %v5951 = vmul.f32 %v5948, %v5950
      %v5952 = vadd.f32 %v5948, %v5951
      %vm5953 = vweird.f32 %v5948
      %v5954 = vsel %vm5953, %v5948, %v5952
      %s5955 = vtos %v5954
      %s5956 = smul.f32 %s5947, %s5955
      %s5957 = sadd.f32 %s5956, 1e-05
      %v5958 = vstv %s5957
      %v5959 = vrsqrt.pop %v5958
      %v5960 = vmul.f32 %v5959, %v5958
      %v5961 = vmul.f32 %v5960, %v5959
      %v5962 = vmul.f32 0.5, %v5961
      %v5963 = vsub.f32 1.5, %v5962
      %v5964 = vmul.f32 %v5959, %v5963
      %vm5965 = vweird.f32 %v5958
      %vm5966 = vweird.f32 %v5959
      %vm5967 = vmor %vm5965, %vm5966
      %v5968 = vsel %vm5967, %v5959, %v5964
      %s5969 = vtos %v5968
      %v5970 = vstv %s5969
      %v5971 = vmul.f32 %v5812, %v5970
      %v5972 = vmul.f32 %v5813, %v5970
      %v5973 = vmul.f32 %v5814, %v5970
      %v5974 = vmul.f32 %v5815, %v5970
      %v5975 = vmul.f32 %v5816, %v5970
      %v5976 = vmul.f32 %v5817, %v5970
      %v5977 = vmul.f32 %v5818, %v5970
      %v5978 = vmul.f32 %v5819, %v5970
      %v5979 = vmul.f32 %v5820, %v5970
      %v5980 = vmul.f32 %v5821, %v5970
      %v5981 = vmul.f32 %v5822, %v5970
      %v5982 = vmul.f32 %v5823, %v5970
      %v5983 = vmul.f32 %v5824, %v5970
      %v5984 = vmul.f32 %v5825, %v5970
      %v5985 = vmul.f32 %v5826, %v5970
      %v5986 = vmul.f32 %v5827, %v5970
      %v5987 = vmul.f32 %v5828, %v5970
      %v5988 = vmul.f32 %v5829, %v5970
      %v5989 = vmul.f32 %v5830, %v5970
      %v5990 = vmul.f32 %v5831, %v5970
      %v5991 = vmul.f32 %v5832, %v5970
      %v5992 = vmul.f32 %v5833, %v5970
      %v5993 = vmul.f32 %v5834, %v5970
      %v5994 = vmul.f32 %v5835, %v5970
      %v5995 = vmul.f32 %v5836, %v5970
      %v5996 = vmul.f32 %v5837, %v5970
      %v5997 = vmul.f32 %v5838, %v5970
      %v5998 = vmul.f32 %v5839, %v5970
      %v5999 = vmul.f32 %v5840, %v5970
      %v6000 = vmul.f32 %v5841, %v5970
      %v6001 = vmul.f32 %v5842, %v5970
      %v6002 = vmul.f32 %v5843, %v5970
      %v6003 = vperm.slane %v5728, 0
      %v6004 = vmul.f32 %v5971, %v6003
      %v6005 = vmul.f32 %v5972, %v6003
      %v6006 = vmul.f32 %v5973, %v6003
      %v6007 = vmul.f32 %v5974, %v6003
      %v6008 = vmul.f32 %v5975, %v6003
      %v6009 = vmul.f32 %v5976, %v6003
      %v6010 = vmul.f32 %v5977, %v6003
      %v6011 = vmul.f32 %v5978, %v6003
      %v6012 = vmul.f32 %v5979, %v6003
      %v6013 = vmul.f32 %v5980, %v6003
      %v6014 = vmul.f32 %v5981, %v6003
      %v6015 = vmul.f32 %v5982, %v6003
      %v6016 = vmul.f32 %v5983, %v6003
      %v6017 = vmul.f32 %v5984, %v6003
      %v6018 = vmul.f32 %v5985, %v6003
      %v6019 = vmul.f32 %v5986, %v6003
      %v6020 = vmul.f32 %v5987, %v6003
      %v6021 = vmul.f32 %v5988, %v6003
      %v6022 = vmul.f32 %v5989, %v6003
      %v6023 = vmul.f32 %v5990, %v6003
      %v6024 = vmul.f32 %v5991, %v6003
      %v6025 = vmul.f32 %v5992, %v6003
      %v6026 = vmul.f32 %v5993, %v6003
      %v6027 = vmul.f32 %v5994, %v6003
      %v6028 = vmul.f32 %v5995, %v6003
      %v6029 = vmul.f32 %v5996, %v6003
      %v6030 = vmul.f32 %v5997, %v6003
      %v6031 = vmul.f32 %v5998, %v6003
      %v6032 = vmul.f32 %v5999, %v6003
      %v6033 = vmul.f32 %v6000, %v6003
      %v6034 = vmul.f32 %v6001, %v6003
      %v6035 = vmul.f32 %v6002, %v6003
      %v6036 = vperm.slane %v5729, 0
      %v6037 = vadd.f32 %v6004, %v6036
      %v6038 = vadd.f32 %v6005, %v6036
      %v6039 = vadd.f32 %v6006, %v6036
      %v6040 = vadd.f32 %v6007, %v6036
      %v6041 = vadd.f32 %v6008, %v6036
      %v6042 = vadd.f32 %v6009, %v6036
      %v6043 = vadd.f32 %v6010, %v6036
      %v6044 = vadd.f32 %v6011, %v6036
      %v6045 = vadd.f32 %v6012, %v6036
      %v6046 = vadd.f32 %v6013, %v6036
      %v6047 = vadd.f32 %v6014, %v6036
      %v6048 = vadd.f32 %v6015, %v6036
      %v6049 = vadd.f32 %v6016, %v6036
      %v6050 = vadd.f32 %v6017, %v6036
      %v6051 = vadd.f32 %v6018, %v6036
      %v6052 = vadd.f32 %v6019, %v6036
      %v6053 = vadd.f32 %v6020, %v6036
      %v6054 = vadd.f32 %v6021, %v6036
      %v6055 = vadd.f32 %v6022, %v6036
      %v6056 = vadd.f32 %v6023, %v6036
      %v6057 = vadd.f32 %v6024, %v6036
      %v6058 = vadd.f32 %v6025, %v6036
      %v6059 = vadd.f32 %v6026, %v6036
      %v6060 = vadd.f32 %v6027, %v6036
      %v6061 = vadd.f32 %v6028, %v6036
      %v6062 = vadd.f32 %v6029, %v6036
      %v6063 = vadd.f32 %v6030, %v6036
      %v6064 = vadd.f32 %v6031, %v6036
      %v6065 = vadd.f32 %v6032, %v6036
      %v6066 = vadd.f32 %v6033, %v6036
      %v6067 = vadd.f32 %v6034, %v6036
      %v6068 = vadd.f32 %v6035, %v6036
      %v6069 = vmax.f32 %v6037, 0.0
      %v6070 = vmax.f32 %v6038, 0.0
      %v6071 = vmax.f32 %v6039, 0.0
      %v6072 = vmax.f32 %v6040, 0.0
      %v6073 = vmax.f32 %v6041, 0.0
      %v6074 = vmax.f32 %v6042, 0.0
      %v6075 = vmax.f32 %v6043, 0.0
      %v6076 = vmax.f32 %v6044, 0.0
      %v6077 = vmax.f32 %v6045, 0.0
      %v6078 = vmax.f32 %v6046, 0.0
      %v6079 = vmax.f32 %v6047, 0.0
      %v6080 = vmax.f32 %v6048, 0.0
      %v6081 = vmax.f32 %v6049, 0.0
      %v6082 = vmax.f32 %v6050, 0.0
      %v6083 = vmax.f32 %v6051, 0.0
      %v6084 = vmax.f32 %v6052, 0.0
      %v6085 = vmax.f32 %v6053, 0.0
      %v6086 = vmax.f32 %v6054, 0.0
      %v6087 = vmax.f32 %v6055, 0.0
      %v6088 = vmax.f32 %v6056, 0.0
      %v6089 = vmax.f32 %v6057, 0.0
      %v6090 = vmax.f32 %v6058, 0.0
      %v6091 = vmax.f32 %v6059, 0.0
      %v6092 = vmax.f32 %v6060, 0.0
      %v6093 = vmax.f32 %v6061, 0.0
      %v6094 = vmax.f32 %v6062, 0.0
      %v6095 = vmax.f32 %v6063, 0.0
      %v6096 = vmax.f32 %v6064, 0.0
      %v6097 = vmax.f32 %v6065, 0.0
      %v6098 = vmax.f32 %v6066, 0.0
      %v6099 = vmax.f32 %v6067, 0.0
      %v6100 = vmax.f32 %v6068, 0.0
      %6101 = vst.msk [vmem:[#allocation3 + $0x18] sm:$0xff] %vm252, %v6069
      %6102 = vst.msk [vmem:[#allocation3 + $0x20] sm:$0xff] %vm252, %v6070
      %6103 = vst.msk [vmem:[#allocation3 + $0x28] sm:$0xff] %vm252, %v6071
      %6104 = vst.msk [vmem:[#allocation3 + $0x30] sm:$0xff] %vm252, %v6072
      %6105 = vst.msk [vmem:[#allocation3 + $0x38] sm:$0xff] %vm252, %v6073
      %6106 = vst.msk [vmem:[#allocation3 + $0x40] sm:$0xff] %vm252, %v6074
      %6107 = vst.msk [vmem:[#allocation3 + $0x48] sm:$0xff] %vm252, %v6075
      %6108 = vst.msk [vmem:[#allocation3 + $0x50] sm:$0xff] %vm252, %v6076
      %6109 = vst.msk [vmem:[#allocation3 + $0x58] sm:$0xff] %vm252, %v6077
      %6110 = vst.msk [vmem:[#allocation3 + $0x60] sm:$0xff] %vm252, %v6078
      %6111 = vst.msk [vmem:[#allocation3 + $0x68] sm:$0xff] %vm252, %v6079
      %6112 = vst.msk [vmem:[#allocation3 + $0x70] sm:$0xff] %vm252, %v6080
      %6113 = vst.msk [vmem:[#allocation3 + $0x78] sm:$0xff] %vm252, %v6081
      %6114 = vst.msk [vmem:[#allocation3 + $0x80] sm:$0xff] %vm252, %v6082
      %6115 = vst.msk [vmem:[#allocation3 + $0x88] sm:$0xff] %vm252, %v6083
      %6116 = vst.msk [vmem:[#allocation3 + $0x90] sm:$0xff] %vm252, %v6084
      %6117 = vst.msk [vmem:[#allocation3 + $0x98] sm:$0xff] %vm252, %v6085
      %6118 = vst.msk [vmem:[#allocation3 + $0xa0] sm:$0xff] %vm252, %v6086
      %6119 = vst.msk [vmem:[#allocation3 + $0xa8] sm:$0xff] %vm252, %v6087
      %6120 = vst.msk [vmem:[#allocation3 + $0xb0] sm:$0xff] %vm252, %v6088
      %6121 = vst.msk [vmem:[#allocation3 + $0xb8] sm:$0xff] %vm252, %v6089
      %6122 = vst.msk [vmem:[#allocation3 + $0xc0] sm:$0xff] %vm252, %v6090
      %6123 = vst.msk [vmem:[#allocation3 + $0xc8] sm:$0xff] %vm252, %v6091
      %6124 = vst.msk [vmem:[#allocation3 + $0xd0] sm:$0xff] %vm252, %v6092
      %6125 = vst.msk [vmem:[#allocation3 + $0xd8] sm:$0xff] %vm252, %v6093
      %6126 = vst.msk [vmem:[#allocation3 + $0xe0] sm:$0xff] %vm252, %v6094
      %6127 = vst.msk [vmem:[#allocation3 + $0xe8] sm:$0xff] %vm252, %v6095
      %6128 = vst.msk [vmem:[#allocation3 + $0xf0] sm:$0xff] %vm252, %v6096
      %6129 = vst.msk [vmem:[#allocation3 + $0xf8] sm:$0xff] %vm252, %v6097
      %6130 = vst.msk [vmem:[#allocation3 + $0x100] sm:$0xff] %vm252, %v6098
      %6131 = vst.msk [vmem:[#allocation3 + $0x108] sm:$0xff] %vm252, %v6099
      %6132 = vst.msk [vmem:[#allocation3 + $0x110] sm:$0xff] %vm252, %v6100
      %v6133 = vld [vmem:[%s4 + $0x6] sm:$0x1]
      %v6134 = vld [vmem:[#allocation3 + $0x7] sm:$0xff]
      %v6135 = vld [vmem:[#allocation3 + $0xf] sm:$0xff]
      %v6136 = vld [vmem:[#allocation3 + $0x17] sm:$0xff]
      %v6137 = vld [vmem:[#allocation3 + $0x1f] sm:$0xff]
      %v6138 = vld [vmem:[#allocation3 + $0x27] sm:$0xff]
      %v6139 = vld [vmem:[#allocation3 + $0x2f] sm:$0xff]
      %v6140 = vld [vmem:[#allocation3 + $0x37] sm:$0xff]
      %v6141 = vld [vmem:[#allocation3 + $0x3f] sm:$0xff]
      %v6142 = vld [vmem:[#allocation3 + $0x47] sm:$0xff]
      %v6143 = vld [vmem:[#allocation3 + $0x4f] sm:$0xff]
      %v6144 = vld [vmem:[#allocation3 + $0x57] sm:$0xff]
      %v6145 = vld [vmem:[#allocation3 + $0x5f] sm:$0xff]
      %v6146 = vld [vmem:[#allocation3 + $0x67] sm:$0xff]
      %v6147 = vld [vmem:[#allocation3 + $0x6f] sm:$0xff]
      %v6148 = vld [vmem:[#allocation3 + $0x77] sm:$0xff]
      %v6149 = vld [vmem:[#allocation3 + $0x7f] sm:$0xff]
      %v6150 = vld [vmem:[#allocation3 + $0x87] sm:$0xff]
      %v6151 = vld [vmem:[#allocation3 + $0x8f] sm:$0xff]
      %v6152 = vld [vmem:[#allocation3 + $0x97] sm:$0xff]
      %v6153 = vld [vmem:[#allocation3 + $0x9f] sm:$0xff]
      %v6154 = vld [vmem:[#allocation3 + $0xa7] sm:$0xff]
      %v6155 = vld [vmem:[#allocation3 + $0xaf] sm:$0xff]
      %v6156 = vld [vmem:[#allocation3 + $0xb7] sm:$0xff]
      %v6157 = vld [vmem:[#allocation3 + $0xbf] sm:$0xff]
      %v6158 = vld [vmem:[#allocation3 + $0xc7] sm:$0xff]
      %v6159 = vld [vmem:[#allocation3 + $0xcf] sm:$0xff]
      %v6160 = vld [vmem:[#allocation3 + $0xd7] sm:$0xff]
      %v6161 = vld [vmem:[#allocation3 + $0xdf] sm:$0xff]
      %v6162 = vld [vmem:[#allocation3 + $0xe7] sm:$0xff]
      %v6163 = vld [vmem:[#allocation3 + $0xef] sm:$0xff]
      %v6164 = vld [vmem:[#allocation3 + $0xf7] sm:$0xff]
      %v6165 = vld [vmem:[#allocation3 + $0xff] sm:$0xff]
      %v6166 = vmul.f32 %v6134, %v516
      %v6167 = vmul.f32 %v6135, %v517
      %v6168 = vmul.f32 %v6136, %v518
      %v6169 = vmul.f32 %v6137, %v519
      %v6170 = vmul.f32 %v6138, %v520
      %v6171 = vmul.f32 %v6139, %v521
      %v6172 = vmul.f32 %v6140, %v522
      %v6173 = vmul.f32 %v6141, %v523
      %v6174 = vmul.f32 %v6142, %v524
      %v6175 = vmul.f32 %v6143, %v525
      %v6176 = vmul.f32 %v6144, %v526
      %v6177 = vmul.f32 %v6145, %v527
      %v6178 = vmul.f32 %v6146, %v528
      %v6179 = vmul.f32 %v6147, %v529
      %v6180 = vmul.f32 %v6148, %v530
      %v6181 = vmul.f32 %v6149, %v531
      %v6182 = vmul.f32 %v6150, %v532
      %v6183 = vmul.f32 %v6151, %v533
      %v6184 = vmul.f32 %v6152, %v534
      %v6185 = vmul.f32 %v6153, %v535
      %v6186 = vmul.f32 %v6154, %v536
      %v6187 = vmul.f32 %v6155, %v537
      %v6188 = vmul.f32 %v6156, %v538
      %v6189 = vmul.f32 %v6157, %v539
      %v6190 = vmul.f32 %v6158, %v540
      %v6191 = vmul.f32 %v6159, %v541
      %v6192 = vmul.f32 %v6160, %v542
      %v6193 = vmul.f32 %v6161, %v543
      %v6194 = vmul.f32 %v6162, %v544
      %v6195 = vmul.f32 %v6163, %v545
      %v6196 = vmul.f32 %v6164, %v546
      %v6197 = vmul.f32 %v6165, %v547
      %6198 = vst.msk [vmem:[#allocation5] sm:$0xff] %vm252, %v6166
      %6199 = vst.msk [vmem:[#allocation5 + $0x8] sm:$0xff] %vm252, %v6167
      %6200 = vst.msk [vmem:[#allocation5 + $0x10] sm:$0xff] %vm252, %v6168
      %6201 = vst.msk [vmem:[#allocation5 + $0x18] sm:$0xff] %vm252, %v6169
      %6202 = vst.msk [vmem:[#allocation5 + $0x20] sm:$0xff] %vm252, %v6170
      %6203 = vst.msk [vmem:[#allocation5 + $0x28] sm:$0xff] %vm252, %v6171
      %6204 = vst.msk [vmem:[#allocation5 + $0x30] sm:$0xff] %vm252, %v6172
      %6205 = vst.msk [vmem:[#allocation5 + $0x38] sm:$0xff] %vm252, %v6173
      %6206 = vst.msk [vmem:[#allocation5 + $0x40] sm:$0xff] %vm252, %v6174
      %6207 = vst.msk [vmem:[#allocation5 + $0x48] sm:$0xff] %vm252, %v6175
      %6208 = vst.msk [vmem:[#allocation5 + $0x50] sm:$0xff] %vm252, %v6176
      %6209 = vst.msk [vmem:[#allocation5 + $0x58] sm:$0xff] %vm252, %v6177
      %6210 = vst.msk [vmem:[#allocation5 + $0x60] sm:$0xff] %vm252, %v6178
      %6211 = vst.msk [vmem:[#allocation5 + $0x68] sm:$0xff] %vm252, %v6179
      %6212 = vst.msk [vmem:[#allocation5 + $0x70] sm:$0xff] %vm252, %v6180
      %6213 = vst.msk [vmem:[#allocation5 + $0x78] sm:$0xff] %vm252, %v6181
      %6214 = vst.msk [vmem:[#allocation5 + $0x80] sm:$0xff] %vm252, %v6182
      %6215 = vst.msk [vmem:[#allocation5 + $0x88] sm:$0xff] %vm252, %v6183
      %6216 = vst.msk [vmem:[#allocation5 + $0x90] sm:$0xff] %vm252, %v6184
      %6217 = vst.msk [vmem:[#allocation5 + $0x98] sm:$0xff] %vm252, %v6185
      %6218 = vst.msk [vmem:[#allocation5 + $0xa0] sm:$0xff] %vm252, %v6186
      %6219 = vst.msk [vmem:[#allocation5 + $0xa8] sm:$0xff] %vm252, %v6187
      %6220 = vst.msk [vmem:[#allocation5 + $0xb0] sm:$0xff] %vm252, %v6188
      %6221 = vst.msk [vmem:[#allocation5 + $0xb8] sm:$0xff] %vm252, %v6189
      %6222 = vst.msk [vmem:[#allocation5 + $0xc0] sm:$0xff] %vm252, %v6190
      %6223 = vst.msk [vmem:[#allocation5 + $0xc8] sm:$0xff] %vm252, %v6191
      %6224 = vst.msk [vmem:[#allocation5 + $0xd0] sm:$0xff] %vm252, %v6192
      %6225 = vst.msk [vmem:[#allocation5 + $0xd8] sm:$0xff] %vm252, %v6193
      %6226 = vst.msk [vmem:[#allocation5 + $0xe0] sm:$0xff] %vm252, %v6194
      %6227 = vst.msk [vmem:[#allocation5 + $0xe8] sm:$0xff] %vm252, %v6195
      %6228 = vst.msk [vmem:[#allocation5 + $0xf0] sm:$0xff] %vm252, %v6196
      %6229 = vst.msk [vmem:[#allocation5 + $0xf8] sm:$0xff] %vm252, %v6197
      %v6230 = vld [vmem:[#allocation3 + $0x8] sm:$0xff]
      %v6231 = vld [vmem:[#allocation3 + $0x10] sm:$0xff]
      %v6232 = vld [vmem:[#allocation3 + $0x18] sm:$0xff]
      %v6233 = vld [vmem:[#allocation3 + $0x20] sm:$0xff]
      %v6234 = vld [vmem:[#allocation3 + $0x28] sm:$0xff]
      %v6235 = vld [vmem:[#allocation3 + $0x30] sm:$0xff]
      %v6236 = vld [vmem:[#allocation3 + $0x38] sm:$0xff]
      %v6237 = vld [vmem:[#allocation3 + $0x40] sm:$0xff]
      %v6238 = vld [vmem:[#allocation3 + $0x48] sm:$0xff]
      %v6239 = vld [vmem:[#allocation3 + $0x50] sm:$0xff]
      %v6240 = vld [vmem:[#allocation3 + $0x58] sm:$0xff]
      %v6241 = vld [vmem:[#allocation3 + $0x60] sm:$0xff]
      %v6242 = vld [vmem:[#allocation3 + $0x68] sm:$0xff]
      %v6243 = vld [vmem:[#allocation3 + $0x70] sm:$0xff]
      %v6244 = vld [vmem:[#allocation3 + $0x78] sm:$0xff]
      %v6245 = vld [vmem:[#allocation3 + $0x80] sm:$0xff]
      %v6246 = vld [vmem:[#allocation3 + $0x88] sm:$0xff]
      %v6247 = vld [vmem:[#allocation3 + $0x90] sm:$0xff]
      %v6248 = vld [vmem:[#allocation3 + $0x98] sm:$0xff]
      %v6249 = vld [vmem:[#allocation3 + $0xa0] sm:$0xff]
      %v6250 = vld [vmem:[#allocation3 + $0xa8] sm:$0xff]
      %v6251 = vld [vmem:[#allocation3 + $0xb0] sm:$0xff]
      %v6252 = vld [vmem:[#allocation3 + $0xb8] sm:$0xff]
      %v6253 = vld [vmem:[#allocation3 + $0xc0] sm:$0xff]
      %v6254 = vld [vmem:[#allocation3 + $0xc8] sm:$0xff]
      %v6255 = vld [vmem:[#allocation3 + $0xd0] sm:$0xff]
      %v6256 = vld [vmem:[#allocation3 + $0xd8] sm:$0xff]
      %v6257 = vld [vmem:[#allocation3 + $0xe0] sm:$0xff]
      %v6258 = vld [vmem:[#allocation3 + $0xe8] sm:$0xff]
      %v6259 = vld [vmem:[#allocation3 + $0xf0] sm:$0xff]
      %v6260 = vld [vmem:[#allocation3 + $0xf8] sm:$0xff]
      %v6261 = vld [vmem:[#allocation3 + $0x100] sm:$0xff]
      %6294 = vrot.lane.b32.xlu0 %v6230, 8
      %v6295 = vpop.permute.xlu0 %6294
      %6296 = vrot.lane.b32.xlu0 %v6231, 8
      %v6297 = vpop.permute.xlu0 %6296
      %6298 = vrot.lane.b32.xlu0 %v6232, 8
      %v6299 = vpop.permute.xlu0 %6298
      %6300 = vrot.lane.b32.xlu0 %v6233, 8
      %v6301 = vpop.permute.xlu0 %6300
      %6302 = vrot.lane.b32.xlu0 %v6234, 8
      %v6303 = vpop.permute.xlu0 %6302
      %6304 = vrot.lane.b32.xlu0 %v6235, 8
      %v6305 = vpop.permute.xlu0 %6304
      %6306 = vrot.lane.b32.xlu0 %v6236, 8
      %v6307 = vpop.permute.xlu0 %6306
      %6308 = vrot.lane.b32.xlu0 %v6237, 8
      %v6309 = vpop.permute.xlu0 %6308
      %6310 = vrot.lane.b32.xlu0 %v6238, 8
      %v6311 = vpop.permute.xlu0 %6310
      %6312 = vrot.lane.b32.xlu0 %v6239, 8
      %v6313 = vpop.permute.xlu0 %6312
      %6314 = vrot.lane.b32.xlu0 %v6240, 8
      %v6315 = vpop.permute.xlu0 %6314
      %6316 = vrot.lane.b32.xlu0 %v6241, 8
      %v6317 = vpop.permute.xlu0 %6316
      %6318 = vrot.lane.b32.xlu0 %v6242, 8
      %v6319 = vpop.permute.xlu0 %6318
      %6320 = vrot.lane.b32.xlu0 %v6243, 8
      %v6321 = vpop.permute.xlu0 %6320
      %6322 = vrot.lane.b32.xlu0 %v6244, 8
      %v6323 = vpop.permute.xlu0 %6322
      %6324 = vrot.lane.b32.xlu0 %v6245, 8
      %v6325 = vpop.permute.xlu0 %6324
      %6326 = vrot.lane.b32.xlu0 %v6246, 8
      %v6327 = vpop.permute.xlu0 %6326
      %6328 = vrot.lane.b32.xlu0 %v6247, 8
      %v6329 = vpop.permute.xlu0 %6328
      %6330 = vrot.lane.b32.xlu0 %v6248, 8
      %v6331 = vpop.permute.xlu0 %6330
      %6332 = vrot.lane.b32.xlu0 %v6249, 8
      %v6333 = vpop.permute.xlu0 %6332
      %6334 = vrot.lane.b32.xlu0 %v6250, 8
      %v6335 = vpop.permute.xlu0 %6334
      %6336 = vrot.lane.b32.xlu0 %v6251, 8
      %v6337 = vpop.permute.xlu0 %6336
      %6338 = vrot.lane.b32.xlu0 %v6252, 8
      %v6339 = vpop.permute.xlu0 %6338
      %6340 = vrot.lane.b32.xlu0 %v6253, 8
      %v6341 = vpop.permute.xlu0 %6340
      %6342 = vrot.lane.b32.xlu0 %v6254, 8
      %v6343 = vpop.permute.xlu0 %6342
      %6344 = vrot.lane.b32.xlu0 %v6255, 8
      %v6345 = vpop.permute.xlu0 %6344
      %6346 = vrot.lane.b32.xlu0 %v6256, 8
      %v6347 = vpop.permute.xlu0 %6346
      %6348 = vrot.lane.b32.xlu0 %v6257, 8
      %v6349 = vpop.permute.xlu0 %6348
      %6350 = vrot.lane.b32.xlu0 %v6258, 8
      %v6351 = vpop.permute.xlu0 %6350
      %6352 = vrot.lane.b32.xlu0 %v6259, 8
      %v6353 = vpop.permute.xlu0 %6352
      %6354 = vrot.lane.b32.xlu0 %v6260, 8
      %v6355 = vpop.permute.xlu0 %6354
      %6356 = vrot.lane.b32.xlu0 %v6261, 8
      %v6357 = vpop.permute.xlu0 %6356
      %6390 = vst.msk [vmem:[#allocation5] sm:$0xff] %vm2041, %v6295
      %6391 = vst.msk [vmem:[#allocation5 + $0x8] sm:$0xff] %vm2041, %v6297
      %6392 = vst.msk [vmem:[#allocation5 + $0x10] sm:$0xff] %vm2041, %v6299
      %6393 = vst.msk [vmem:[#allocation5 + $0x18] sm:$0xff] %vm2041, %v6301
      %6394 = vst.msk [vmem:[#allocation5 + $0x20] sm:$0xff] %vm2041, %v6303
      %6395 = vst.msk [vmem:[#allocation5 + $0x28] sm:$0xff] %vm2041, %v6305
      %6396 = vst.msk [vmem:[#allocation5 + $0x30] sm:$0xff] %vm2041, %v6307
      %6397 = vst.msk [vmem:[#allocation5 + $0x38] sm:$0xff] %vm2041, %v6309
      %6398 = vst.msk [vmem:[#allocation5 + $0x40] sm:$0xff] %vm2041, %v6311
      %6399 = vst.msk [vmem:[#allocation5 + $0x48] sm:$0xff] %vm2041, %v6313
      %6400 = vst.msk [vmem:[#allocation5 + $0x50] sm:$0xff] %vm2041, %v6315
      %6401 = vst.msk [vmem:[#allocation5 + $0x58] sm:$0xff] %vm2041, %v6317
      %6402 = vst.msk [vmem:[#allocation5 + $0x60] sm:$0xff] %vm2041, %v6319
      %6403 = vst.msk [vmem:[#allocation5 + $0x68] sm:$0xff] %vm2041, %v6321
      %6404 = vst.msk [vmem:[#allocation5 + $0x70] sm:$0xff] %vm2041, %v6323
      %6405 = vst.msk [vmem:[#allocation5 + $0x78] sm:$0xff] %vm2041, %v6325
      %6406 = vst.msk [vmem:[#allocation5 + $0x80] sm:$0xff] %vm2041, %v6327
      %6407 = vst.msk [vmem:[#allocation5 + $0x88] sm:$0xff] %vm2041, %v6329
      %6408 = vst.msk [vmem:[#allocation5 + $0x90] sm:$0xff] %vm2041, %v6331
      %6409 = vst.msk [vmem:[#allocation5 + $0x98] sm:$0xff] %vm2041, %v6333
      %6410 = vst.msk [vmem:[#allocation5 + $0xa0] sm:$0xff] %vm2041, %v6335
      %6411 = vst.msk [vmem:[#allocation5 + $0xa8] sm:$0xff] %vm2041, %v6337
      %6412 = vst.msk [vmem:[#allocation5 + $0xb0] sm:$0xff] %vm2041, %v6339
      %6413 = vst.msk [vmem:[#allocation5 + $0xb8] sm:$0xff] %vm2041, %v6341
      %6414 = vst.msk [vmem:[#allocation5 + $0xc0] sm:$0xff] %vm2041, %v6343
      %6415 = vst.msk [vmem:[#allocation5 + $0xc8] sm:$0xff] %vm2041, %v6345
      %6416 = vst.msk [vmem:[#allocation5 + $0xd0] sm:$0xff] %vm2041, %v6347
      %6417 = vst.msk [vmem:[#allocation5 + $0xd8] sm:$0xff] %vm2041, %v6349
      %6418 = vst.msk [vmem:[#allocation5 + $0xe0] sm:$0xff] %vm2041, %v6351
      %6419 = vst.msk [vmem:[#allocation5 + $0xe8] sm:$0xff] %vm2041, %v6353
      %6420 = vst.msk [vmem:[#allocation5 + $0xf0] sm:$0xff] %vm2041, %v6355
      %6421 = vst.msk [vmem:[#allocation5 + $0xf8] sm:$0xff] %vm2041, %v6357
      %v6422 = vld [vmem:[#allocation3 + $0x9] sm:$0xff]
      %v6423 = vld [vmem:[#allocation3 + $0x11] sm:$0xff]
      %v6424 = vld [vmem:[#allocation3 + $0x19] sm:$0xff]
      %v6425 = vld [vmem:[#allocation3 + $0x21] sm:$0xff]
      %v6426 = vld [vmem:[#allocation3 + $0x29] sm:$0xff]
      %v6427 = vld [vmem:[#allocation3 + $0x31] sm:$0xff]
      %v6428 = vld [vmem:[#allocation3 + $0x39] sm:$0xff]
      %v6429 = vld [vmem:[#allocation3 + $0x41] sm:$0xff]
      %v6430 = vld [vmem:[#allocation3 + $0x49] sm:$0xff]
      %v6431 = vld [vmem:[#allocation3 + $0x51] sm:$0xff]
      %v6432 = vld [vmem:[#allocation3 + $0x59] sm:$0xff]
      %v6433 = vld [vmem:[#allocation3 + $0x61] sm:$0xff]
      %v6434 = vld [vmem:[#allocation3 + $0x69] sm:$0xff]
      %v6435 = vld [vmem:[#allocation3 + $0x71] sm:$0xff]
      %v6436 = vld [vmem:[#allocation3 + $0x79] sm:$0xff]
      %v6437 = vld [vmem:[#allocation3 + $0x81] sm:$0xff]
      %v6438 = vld [vmem:[#allocation3 + $0x89] sm:$0xff]
      %v6439 = vld [vmem:[#allocation3 + $0x91] sm:$0xff]
      %v6440 = vld [vmem:[#allocation3 + $0x99] sm:$0xff]
      %v6441 = vld [vmem:[#allocation3 + $0xa1] sm:$0xff]
      %v6442 = vld [vmem:[#allocation3 + $0xa9] sm:$0xff]
      %v6443 = vld [vmem:[#allocation3 + $0xb1] sm:$0xff]
      %v6444 = vld [vmem:[#allocation3 + $0xb9] sm:$0xff]
      %v6445 = vld [vmem:[#allocation3 + $0xc1] sm:$0xff]
      %v6446 = vld [vmem:[#allocation3 + $0xc9] sm:$0xff]
      %v6447 = vld [vmem:[#allocation3 + $0xd1] sm:$0xff]
      %v6448 = vld [vmem:[#allocation3 + $0xd9] sm:$0xff]
      %v6449 = vld [vmem:[#allocation3 + $0xe1] sm:$0xff]
      %v6450 = vld [vmem:[#allocation3 + $0xe9] sm:$0xff]
      %v6451 = vld [vmem:[#allocation3 + $0xf1] sm:$0xff]
      %v6452 = vld [vmem:[#allocation3 + $0xf9] sm:$0xff]
      %v6453 = vld [vmem:[#allocation3 + $0x101] sm:$0xff]
      %v6454 = vmul.f32 %v6422, %v580
      %v6455 = vmul.f32 %v6423, %v581
      %v6456 = vmul.f32 %v6424, %v582
      %v6457 = vmul.f32 %v6425, %v583
      %v6458 = vmul.f32 %v6426, %v584
      %v6459 = vmul.f32 %v6427, %v585
      %v6460 = vmul.f32 %v6428, %v586
      %v6461 = vmul.f32 %v6429, %v587
      %v6462 = vmul.f32 %v6430, %v588
      %v6463 = vmul.f32 %v6431, %v589
      %v6464 = vmul.f32 %v6432, %v590
      %v6465 = vmul.f32 %v6433, %v591
      %v6466 = vmul.f32 %v6434, %v592
      %v6467 = vmul.f32 %v6435, %v593
      %v6468 = vmul.f32 %v6436, %v594
      %v6469 = vmul.f32 %v6437, %v595
      %v6470 = vmul.f32 %v6438, %v596
      %v6471 = vmul.f32 %v6439, %v597
      %v6472 = vmul.f32 %v6440, %v598
      %v6473 = vmul.f32 %v6441, %v599
      %v6474 = vmul.f32 %v6442, %v600
      %v6475 = vmul.f32 %v6443, %v601
      %v6476 = vmul.f32 %v6444, %v602
      %v6477 = vmul.f32 %v6445, %v603
      %v6478 = vmul.f32 %v6446, %v604
      %v6479 = vmul.f32 %v6447, %v605
      %v6480 = vmul.f32 %v6448, %v606
      %v6481 = vmul.f32 %v6449, %v607
      %v6482 = vmul.f32 %v6450, %v608
      %v6483 = vmul.f32 %v6451, %v609
      %v6484 = vmul.f32 %v6452, %v610
      %v6485 = vmul.f32 %v6453, %v611
      %6518 = vrot.lane.b32.xlu0 %v6454, 16
      %v6519 = vpop.permute.xlu0 %6518
      %6520 = vrot.lane.b32.xlu0 %v6455, 16
      %v6521 = vpop.permute.xlu0 %6520
      %6522 = vrot.lane.b32.xlu0 %v6456, 16
      %v6523 = vpop.permute.xlu0 %6522
      %6524 = vrot.lane.b32.xlu0 %v6457, 16
      %v6525 = vpop.permute.xlu0 %6524
      %6526 = vrot.lane.b32.xlu0 %v6458, 16
      %v6527 = vpop.permute.xlu0 %6526
      %6528 = vrot.lane.b32.xlu0 %v6459, 16
      %v6529 = vpop.permute.xlu0 %6528
      %6530 = vrot.lane.b32.xlu0 %v6460, 16
      %v6531 = vpop.permute.xlu0 %6530
      %6532 = vrot.lane.b32.xlu0 %v6461, 16
      %v6533 = vpop.permute.xlu0 %6532
      %6534 = vrot.lane.b32.xlu0 %v6462, 16
      %v6535 = vpop.permute.xlu0 %6534
      %6536 = vrot.lane.b32.xlu0 %v6463, 16
      %v6537 = vpop.permute.xlu0 %6536
      %6538 = vrot.lane.b32.xlu0 %v6464, 16
      %v6539 = vpop.permute.xlu0 %6538
      %6540 = vrot.lane.b32.xlu0 %v6465, 16
      %v6541 = vpop.permute.xlu0 %6540
      %6542 = vrot.lane.b32.xlu0 %v6466, 16
      %v6543 = vpop.permute.xlu0 %6542
      %6544 = vrot.lane.b32.xlu0 %v6467, 16
      %v6545 = vpop.permute.xlu0 %6544
      %6546 = vrot.lane.b32.xlu0 %v6468, 16
      %v6547 = vpop.permute.xlu0 %6546
      %6548 = vrot.lane.b32.xlu0 %v6469, 16
      %v6549 = vpop.permute.xlu0 %6548
      %6550 = vrot.lane.b32.xlu0 %v6470, 16
      %v6551 = vpop.permute.xlu0 %6550
      %6552 = vrot.lane.b32.xlu0 %v6471, 16
      %v6553 = vpop.permute.xlu0 %6552
      %6554 = vrot.lane.b32.xlu0 %v6472, 16
      %v6555 = vpop.permute.xlu0 %6554
      %6556 = vrot.lane.b32.xlu0 %v6473, 16
      %v6557 = vpop.permute.xlu0 %6556
      %6558 = vrot.lane.b32.xlu0 %v6474, 16
      %v6559 = vpop.permute.xlu0 %6558
      %6560 = vrot.lane.b32.xlu0 %v6475, 16
      %v6561 = vpop.permute.xlu0 %6560
      %6562 = vrot.lane.b32.xlu0 %v6476, 16
      %v6563 = vpop.permute.xlu0 %6562
      %6564 = vrot.lane.b32.xlu0 %v6477, 16
      %v6565 = vpop.permute.xlu0 %6564
      %6566 = vrot.lane.b32.xlu0 %v6478, 16
      %v6567 = vpop.permute.xlu0 %6566
      %6568 = vrot.lane.b32.xlu0 %v6479, 16
      %v6569 = vpop.permute.xlu0 %6568
      %6570 = vrot.lane.b32.xlu0 %v6480, 16
      %v6571 = vpop.permute.xlu0 %6570
      %6572 = vrot.lane.b32.xlu0 %v6481, 16
      %v6573 = vpop.permute.xlu0 %6572
      %6574 = vrot.lane.b32.xlu0 %v6482, 16
      %v6575 = vpop.permute.xlu0 %6574
      %6576 = vrot.lane.b32.xlu0 %v6483, 16
      %v6577 = vpop.permute.xlu0 %6576
      %6578 = vrot.lane.b32.xlu0 %v6484, 16
      %v6579 = vpop.permute.xlu0 %6578
      %6580 = vrot.lane.b32.xlu0 %v6485, 16
      %v6581 = vpop.permute.xlu0 %6580
      %vm6614 = vcmask 195712
      %6615 = vst.msk [vmem:[#allocation5] sm:$0xff] %vm6614, %v6519
      %6616 = vst.msk [vmem:[#allocation5 + $0x8] sm:$0xff] %vm6614, %v6521
      %6617 = vst.msk [vmem:[#allocation5 + $0x10] sm:$0xff] %vm6614, %v6523
      %6618 = vst.msk [vmem:[#allocation5 + $0x18] sm:$0xff] %vm6614, %v6525
      %6619 = vst.msk [vmem:[#allocation5 + $0x20] sm:$0xff] %vm6614, %v6527
      %6620 = vst.msk [vmem:[#allocation5 + $0x28] sm:$0xff] %vm6614, %v6529
      %6621 = vst.msk [vmem:[#allocation5 + $0x30] sm:$0xff] %vm6614, %v6531
      %6622 = vst.msk [vmem:[#allocation5 + $0x38] sm:$0xff] %vm6614, %v6533
      %6623 = vst.msk [vmem:[#allocation5 + $0x40] sm:$0xff] %vm6614, %v6535
      %6624 = vst.msk [vmem:[#allocation5 + $0x48] sm:$0xff] %vm6614, %v6537
      %6625 = vst.msk [vmem:[#allocation5 + $0x50] sm:$0xff] %vm6614, %v6539
      %6626 = vst.msk [vmem:[#allocation5 + $0x58] sm:$0xff] %vm6614, %v6541
      %6627 = vst.msk [vmem:[#allocation5 + $0x60] sm:$0xff] %vm6614, %v6543
      %6628 = vst.msk [vmem:[#allocation5 + $0x68] sm:$0xff] %vm6614, %v6545
      %6629 = vst.msk [vmem:[#allocation5 + $0x70] sm:$0xff] %vm6614, %v6547
      %6630 = vst.msk [vmem:[#allocation5 + $0x78] sm:$0xff] %vm6614, %v6549
      %6631 = vst.msk [vmem:[#allocation5 + $0x80] sm:$0xff] %vm6614, %v6551
      %6632 = vst.msk [vmem:[#allocation5 + $0x88] sm:$0xff] %vm6614, %v6553
      %6633 = vst.msk [vmem:[#allocation5 + $0x90] sm:$0xff] %vm6614, %v6555
      %6634 = vst.msk [vmem:[#allocation5 + $0x98] sm:$0xff] %vm6614, %v6557
      %6635 = vst.msk [vmem:[#allocation5 + $0xa0] sm:$0xff] %vm6614, %v6559
      %6636 = vst.msk [vmem:[#allocation5 + $0xa8] sm:$0xff] %vm6614, %v6561
      %6637 = vst.msk [vmem:[#allocation5 + $0xb0] sm:$0xff] %vm6614, %v6563
      %6638 = vst.msk [vmem:[#allocation5 + $0xb8] sm:$0xff] %vm6614, %v6565
      %6639 = vst.msk [vmem:[#allocation5 + $0xc0] sm:$0xff] %vm6614, %v6567
      %6640 = vst.msk [vmem:[#allocation5 + $0xc8] sm:$0xff] %vm6614, %v6569
      %6641 = vst.msk [vmem:[#allocation5 + $0xd0] sm:$0xff] %vm6614, %v6571
      %6642 = vst.msk [vmem:[#allocation5 + $0xd8] sm:$0xff] %vm6614, %v6573
      %6643 = vst.msk [vmem:[#allocation5 + $0xe0] sm:$0xff] %vm6614, %v6575
      %6644 = vst.msk [vmem:[#allocation5 + $0xe8] sm:$0xff] %vm6614, %v6577
      %6645 = vst.msk [vmem:[#allocation5 + $0xf0] sm:$0xff] %vm6614, %v6579
      %6646 = vst.msk [vmem:[#allocation5 + $0xf8] sm:$0xff] %vm6614, %v6581
      %v6647 = vld [vmem:[#allocation3 + $0x17] sm:$0xff]
      %v6648 = vld [vmem:[#allocation3 + $0x1f] sm:$0xff]
      %v6649 = vld [vmem:[#allocation3 + $0x27] sm:$0xff]
      %v6650 = vld [vmem:[#allocation3 + $0x2f] sm:$0xff]
      %v6651 = vld [vmem:[#allocation3 + $0x37] sm:$0xff]
      %v6652 = vld [vmem:[#allocation3 + $0x3f] sm:$0xff]
      %v6653 = vld [vmem:[#allocation3 + $0x47] sm:$0xff]
      %v6654 = vld [vmem:[#allocation3 + $0x4f] sm:$0xff]
      %v6655 = vld [vmem:[#allocation3 + $0x57] sm:$0xff]
      %v6656 = vld [vmem:[#allocation3 + $0x5f] sm:$0xff]
      %v6657 = vld [vmem:[#allocation3 + $0x67] sm:$0xff]
      %v6658 = vld [vmem:[#allocation3 + $0x6f] sm:$0xff]
      %v6659 = vld [vmem:[#allocation3 + $0x77] sm:$0xff]
      %v6660 = vld [vmem:[#allocation3 + $0x7f] sm:$0xff]
      %v6661 = vld [vmem:[#allocation3 + $0x87] sm:$0xff]
      %v6662 = vld [vmem:[#allocation3 + $0x8f] sm:$0xff]
      %v6663 = vld [vmem:[#allocation3 + $0x97] sm:$0xff]
      %v6664 = vld [vmem:[#allocation3 + $0x9f] sm:$0xff]
      %v6665 = vld [vmem:[#allocation3 + $0xa7] sm:$0xff]
      %v6666 = vld [vmem:[#allocation3 + $0xaf] sm:$0xff]
      %v6667 = vld [vmem:[#allocation3 + $0xb7] sm:$0xff]
      %v6668 = vld [vmem:[#allocation3 + $0xbf] sm:$0xff]
      %v6669 = vld [vmem:[#allocation3 + $0xc7] sm:$0xff]
      %v6670 = vld [vmem:[#allocation3 + $0xcf] sm:$0xff]
      %v6671 = vld [vmem:[#allocation3 + $0xd7] sm:$0xff]
      %v6672 = vld [vmem:[#allocation3 + $0xdf] sm:$0xff]
      %v6673 = vld [vmem:[#allocation3 + $0xe7] sm:$0xff]
      %v6674 = vld [vmem:[#allocation3 + $0xef] sm:$0xff]
      %v6675 = vld [vmem:[#allocation3 + $0xf7] sm:$0xff]
      %v6676 = vld [vmem:[#allocation3 + $0xff] sm:$0xff]
      %v6677 = vld [vmem:[#allocation3 + $0x107] sm:$0xff]
      %v6678 = vld [vmem:[#allocation3 + $0x10f] sm:$0xff]
      %v6679 = vmul.f32 %v6647, %v516
      %v6680 = vmul.f32 %v6648, %v517
      %v6681 = vmul.f32 %v6649, %v518
      %v6682 = vmul.f32 %v6650, %v519
      %v6683 = vmul.f32 %v6651, %v520
      %v6684 = vmul.f32 %v6652, %v521
      %v6685 = vmul.f32 %v6653, %v522
      %v6686 = vmul.f32 %v6654, %v523
      %v6687 = vmul.f32 %v6655, %v524
      %v6688 = vmul.f32 %v6656, %v525
      %v6689 = vmul.f32 %v6657, %v526
      %v6690 = vmul.f32 %v6658, %v527
      %v6691 = vmul.f32 %v6659, %v528
      %v6692 = vmul.f32 %v6660, %v529
      %v6693 = vmul.f32 %v6661, %v530
      %v6694 = vmul.f32 %v6662, %v531
      %v6695 = vmul.f32 %v6663, %v532
      %v6696 = vmul.f32 %v6664, %v533
      %v6697 = vmul.f32 %v6665, %v534
      %v6698 = vmul.f32 %v6666, %v535
      %v6699 = vmul.f32 %v6667, %v536
      %v6700 = vmul.f32 %v6668, %v537
      %v6701 = vmul.f32 %v6669, %v538
      %v6702 = vmul.f32 %v6670, %v539
      %v6703 = vmul.f32 %v6671, %v540
      %v6704 = vmul.f32 %v6672, %v541
      %v6705 = vmul.f32 %v6673, %v542
      %v6706 = vmul.f32 %v6674, %v543
      %v6707 = vmul.f32 %v6675, %v544
      %v6708 = vmul.f32 %v6676, %v545
      %v6709 = vmul.f32 %v6677, %v546
      %v6710 = vmul.f32 %v6678, %v547
      %6743 = vrot.lane.b32.xlu0 %v6679, 24
      %v6744 = vpop.permute.xlu0 %6743
      %6745 = vrot.lane.b32.xlu0 %v6680, 24
      %v6746 = vpop.permute.xlu0 %6745
      %6747 = vrot.lane.b32.xlu0 %v6681, 24
      %v6748 = vpop.permute.xlu0 %6747
      %6749 = vrot.lane.b32.xlu0 %v6682, 24
      %v6750 = vpop.permute.xlu0 %6749
      %6751 = vrot.lane.b32.xlu0 %v6683, 24
      %v6752 = vpop.permute.xlu0 %6751
      %6753 = vrot.lane.b32.xlu0 %v6684, 24
      %v6754 = vpop.permute.xlu0 %6753
      %6755 = vrot.lane.b32.xlu0 %v6685, 24
      %v6756 = vpop.permute.xlu0 %6755
      %6757 = vrot.lane.b32.xlu0 %v6686, 24
      %v6758 = vpop.permute.xlu0 %6757
      %6759 = vrot.lane.b32.xlu0 %v6687, 24
      %v6760 = vpop.permute.xlu0 %6759
      %6761 = vrot.lane.b32.xlu0 %v6688, 24
      %v6762 = vpop.permute.xlu0 %6761
      %6763 = vrot.lane.b32.xlu0 %v6689, 24
      %v6764 = vpop.permute.xlu0 %6763
      %6765 = vrot.lane.b32.xlu0 %v6690, 24
      %v6766 = vpop.permute.xlu0 %6765
      %6767 = vrot.lane.b32.xlu0 %v6691, 24
      %v6768 = vpop.permute.xlu0 %6767
      %6769 = vrot.lane.b32.xlu0 %v6692, 24
      %v6770 = vpop.permute.xlu0 %6769
      %6771 = vrot.lane.b32.xlu0 %v6693, 24
      %v6772 = vpop.permute.xlu0 %6771
      %6773 = vrot.lane.b32.xlu0 %v6694, 24
      %v6774 = vpop.permute.xlu0 %6773
      %6775 = vrot.lane.b32.xlu0 %v6695, 24
      %v6776 = vpop.permute.xlu0 %6775
      %6777 = vrot.lane.b32.xlu0 %v6696, 24
      %v6778 = vpop.permute.xlu0 %6777
      %6779 = vrot.lane.b32.xlu0 %v6697, 24
      %v6780 = vpop.permute.xlu0 %6779
      %6781 = vrot.lane.b32.xlu0 %v6698, 24
      %v6782 = vpop.permute.xlu0 %6781
      %6783 = vrot.lane.b32.xlu0 %v6699, 24
      %v6784 = vpop.permute.xlu0 %6783
      %6785 = vrot.lane.b32.xlu0 %v6700, 24
      %v6786 = vpop.permute.xlu0 %6785
      %6787 = vrot.lane.b32.xlu0 %v6701, 24
      %v6788 = vpop.permute.xlu0 %6787
      %6789 = vrot.lane.b32.xlu0 %v6702, 24
      %v6790 = vpop.permute.xlu0 %6789
      %6791 = vrot.lane.b32.xlu0 %v6703, 24
      %v6792 = vpop.permute.xlu0 %6791
      %6793 = vrot.lane.b32.xlu0 %v6704, 24
      %v6794 = vpop.permute.xlu0 %6793
      %6795 = vrot.lane.b32.xlu0 %v6705, 24
      %v6796 = vpop.permute.xlu0 %6795
      %6797 = vrot.lane.b32.xlu0 %v6706, 24
      %v6798 = vpop.permute.xlu0 %6797
      %6799 = vrot.lane.b32.xlu0 %v6707, 24
      %v6800 = vpop.permute.xlu0 %6799
      %6801 = vrot.lane.b32.xlu0 %v6708, 24
      %v6802 = vpop.permute.xlu0 %6801
      %6803 = vrot.lane.b32.xlu0 %v6709, 24
      %v6804 = vpop.permute.xlu0 %6803
      %6805 = vrot.lane.b32.xlu0 %v6710, 24
      %v6806 = vpop.permute.xlu0 %6805
      %vm6839 = vcmask 261312
      %6840 = vst.msk [vmem:[#allocation5] sm:$0xff] %vm6839, %v6744
      %6841 = vst.msk [vmem:[#allocation5 + $0x8] sm:$0xff] %vm6839, %v6746
      %6842 = vst.msk [vmem:[#allocation5 + $0x10] sm:$0xff] %vm6839, %v6748
      %6843 = vst.msk [vmem:[#allocation5 + $0x18] sm:$0xff] %vm6839, %v6750
      %6844 = vst.msk [vmem:[#allocation5 + $0x20] sm:$0xff] %vm6839, %v6752
      %6845 = vst.msk [vmem:[#allocation5 + $0x28] sm:$0xff] %vm6839, %v6754
      %6846 = vst.msk [vmem:[#allocation5 + $0x30] sm:$0xff] %vm6839, %v6756
      %6847 = vst.msk [vmem:[#allocation5 + $0x38] sm:$0xff] %vm6839, %v6758
      %6848 = vst.msk [vmem:[#allocation5 + $0x40] sm:$0xff] %vm6839, %v6760
      %6849 = vst.msk [vmem:[#allocation5 + $0x48] sm:$0xff] %vm6839, %v6762
      %6850 = vst.msk [vmem:[#allocation5 + $0x50] sm:$0xff] %vm6839, %v6764
      %6851 = vst.msk [vmem:[#allocation5 + $0x58] sm:$0xff] %vm6839, %v6766
      %6852 = vst.msk [vmem:[#allocation5 + $0x60] sm:$0xff] %vm6839, %v6768
      %6853 = vst.msk [vmem:[#allocation5 + $0x68] sm:$0xff] %vm6839, %v6770
      %6854 = vst.msk [vmem:[#allocation5 + $0x70] sm:$0xff] %vm6839, %v6772
      %6855 = vst.msk [vmem:[#allocation5 + $0x78] sm:$0xff] %vm6839, %v6774
      %6856 = vst.msk [vmem:[#allocation5 + $0x80] sm:$0xff] %vm6839, %v6776
      %6857 = vst.msk [vmem:[#allocation5 + $0x88] sm:$0xff] %vm6839, %v6778
      %6858 = vst.msk [vmem:[#allocation5 + $0x90] sm:$0xff] %vm6839, %v6780
      %6859 = vst.msk [vmem:[#allocation5 + $0x98] sm:$0xff] %vm6839, %v6782
      %6860 = vst.msk [vmem:[#allocation5 + $0xa0] sm:$0xff] %vm6839, %v6784
      %6861 = vst.msk [vmem:[#allocation5 + $0xa8] sm:$0xff] %vm6839, %v6786
      %6862 = vst.msk [vmem:[#allocation5 + $0xb0] sm:$0xff] %vm6839, %v6788
      %6863 = vst.msk [vmem:[#allocation5 + $0xb8] sm:$0xff] %vm6839, %v6790
      %6864 = vst.msk [vmem:[#allocation5 + $0xc0] sm:$0xff] %vm6839, %v6792
      %6865 = vst.msk [vmem:[#allocation5 + $0xc8] sm:$0xff] %vm6839, %v6794
      %6866 = vst.msk [vmem:[#allocation5 + $0xd0] sm:$0xff] %vm6839, %v6796
      %6867 = vst.msk [vmem:[#allocation5 + $0xd8] sm:$0xff] %vm6839, %v6798
      %6868 = vst.msk [vmem:[#allocation5 + $0xe0] sm:$0xff] %vm6839, %v6800
      %6869 = vst.msk [vmem:[#allocation5 + $0xe8] sm:$0xff] %vm6839, %v6802
      %6870 = vst.msk [vmem:[#allocation5 + $0xf0] sm:$0xff] %vm6839, %v6804
      %6871 = vst.msk [vmem:[#allocation5 + $0xf8] sm:$0xff] %vm6839, %v6806
      %v6872 = vld [vmem:[#allocation3 + $0x18] sm:$0xff]
      %v6873 = vld [vmem:[#allocation3 + $0x20] sm:$0xff]
      %v6874 = vld [vmem:[#allocation3 + $0x28] sm:$0xff]
      %v6875 = vld [vmem:[#allocation3 + $0x30] sm:$0xff]
      %v6876 = vld [vmem:[#allocation3 + $0x38] sm:$0xff]
      %v6877 = vld [vmem:[#allocation3 + $0x40] sm:$0xff]
      %v6878 = vld [vmem:[#allocation3 + $0x48] sm:$0xff]
      %v6879 = vld [vmem:[#allocation3 + $0x50] sm:$0xff]
      %v6880 = vld [vmem:[#allocation3 + $0x58] sm:$0xff]
      %v6881 = vld [vmem:[#allocation3 + $0x60] sm:$0xff]
      %v6882 = vld [vmem:[#allocation3 + $0x68] sm:$0xff]
      %v6883 = vld [vmem:[#allocation3 + $0x70] sm:$0xff]
      %v6884 = vld [vmem:[#allocation3 + $0x78] sm:$0xff]
      %v6885 = vld [vmem:[#allocation3 + $0x80] sm:$0xff]
      %v6886 = vld [vmem:[#allocation3 + $0x88] sm:$0xff]
      %v6887 = vld [vmem:[#allocation3 + $0x90] sm:$0xff]
      %v6888 = vld [vmem:[#allocation3 + $0x98] sm:$0xff]
      %v6889 = vld [vmem:[#allocation3 + $0xa0] sm:$0xff]
      %v6890 = vld [vmem:[#allocation3 + $0xa8] sm:$0xff]
      %v6891 = vld [vmem:[#allocation3 + $0xb0] sm:$0xff]
      %v6892 = vld [vmem:[#allocation3 + $0xb8] sm:$0xff]
      %v6893 = vld [vmem:[#allocation3 + $0xc0] sm:$0xff]
      %v6894 = vld [vmem:[#allocation3 + $0xc8] sm:$0xff]
      %v6895 = vld [vmem:[#allocation3 + $0xd0] sm:$0xff]
      %v6896 = vld [vmem:[#allocation3 + $0xd8] sm:$0xff]
      %v6897 = vld [vmem:[#allocation3 + $0xe0] sm:$0xff]
      %v6898 = vld [vmem:[#allocation3 + $0xe8] sm:$0xff]
      %v6899 = vld [vmem:[#allocation3 + $0xf0] sm:$0xff]
      %v6900 = vld [vmem:[#allocation3 + $0xf8] sm:$0xff]
      %v6901 = vld [vmem:[#allocation3 + $0x100] sm:$0xff]
      %v6902 = vld [vmem:[#allocation3 + $0x108] sm:$0xff]
      %v6903 = vld [vmem:[#allocation3 + $0x110] sm:$0xff]
      %6936 = vrot.lane.b32.xlu0 %v6872, 32
      %v6937 = vpop.permute.xlu0 %6936
      %6938 = vrot.lane.b32.xlu0 %v6873, 32
      %v6939 = vpop.permute.xlu0 %6938
      %6940 = vrot.lane.b32.xlu0 %v6874, 32
      %v6941 = vpop.permute.xlu0 %6940
      %6942 = vrot.lane.b32.xlu0 %v6875, 32
      %v6943 = vpop.permute.xlu0 %6942
      %6944 = vrot.lane.b32.xlu0 %v6876, 32
      %v6945 = vpop.permute.xlu0 %6944
      %6946 = vrot.lane.b32.xlu0 %v6877, 32
      %v6947 = vpop.permute.xlu0 %6946
      %6948 = vrot.lane.b32.xlu0 %v6878, 32
      %v6949 = vpop.permute.xlu0 %6948
      %6950 = vrot.lane.b32.xlu0 %v6879, 32
      %v6951 = vpop.permute.xlu0 %6950
      %6952 = vrot.lane.b32.xlu0 %v6880, 32
      %v6953 = vpop.permute.xlu0 %6952
      %6954 = vrot.lane.b32.xlu0 %v6881, 32
      %v6955 = vpop.permute.xlu0 %6954
      %6956 = vrot.lane.b32.xlu0 %v6882, 32
      %v6957 = vpop.permute.xlu0 %6956
      %6958 = vrot.lane.b32.xlu0 %v6883, 32
      %v6959 = vpop.permute.xlu0 %6958
      %6960 = vrot.lane.b32.xlu0 %v6884, 32
      %v6961 = vpop.permute.xlu0 %6960
      %6962 = vrot.lane.b32.xlu0 %v6885, 32
      %v6963 = vpop.permute.xlu0 %6962
      %6964 = vrot.lane.b32.xlu0 %v6886, 32
      %v6965 = vpop.permute.xlu0 %6964
      %6966 = vrot.lane.b32.xlu0 %v6887, 32
      %v6967 = vpop.permute.xlu0 %6966
      %6968 = vrot.lane.b32.xlu0 %v6888, 32
      %v6969 = vpop.permute.xlu0 %6968
      %6970 = vrot.lane.b32.xlu0 %v6889, 32
      %v6971 = vpop.permute.xlu0 %6970
      %6972 = vrot.lane.b32.xlu0 %v6890, 32
      %v6973 = vpop.permute.xlu0 %6972
      %6974 = vrot.lane.b32.xlu0 %v6891, 32
      %v6975 = vpop.permute.xlu0 %6974
      %6976 = vrot.lane.b32.xlu0 %v6892, 32
      %v6977 = vpop.permute.xlu0 %6976
      %6978 = vrot.lane.b32.xlu0 %v6893, 32
      %v6979 = vpop.permute.xlu0 %6978
      %6980 = vrot.lane.b32.xlu0 %v6894, 32
      %v6981 = vpop.permute.xlu0 %6980
      %6982 = vrot.lane.b32.xlu0 %v6895, 32
      %v6983 = vpop.permute.xlu0 %6982
      %6984 = vrot.lane.b32.xlu0 %v6896, 32
      %v6985 = vpop.permute.xlu0 %6984
      %6986 = vrot.lane.b32.xlu0 %v6897, 32
      %v6987 = vpop.permute.xlu0 %6986
      %6988 = vrot.lane.b32.xlu0 %v6898, 32
      %v6989 = vpop.permute.xlu0 %6988
      %6990 = vrot.lane.b32.xlu0 %v6899, 32
      %v6991 = vpop.permute.xlu0 %6990
      %6992 = vrot.lane.b32.xlu0 %v6900, 32
      %v6993 = vpop.permute.xlu0 %6992
      %6994 = vrot.lane.b32.xlu0 %v6901, 32
      %v6995 = vpop.permute.xlu0 %6994
      %6996 = vrot.lane.b32.xlu0 %v6902, 32
      %v6997 = vpop.permute.xlu0 %6996
      %6998 = vrot.lane.b32.xlu0 %v6903, 32
      %v6999 = vpop.permute.xlu0 %6998
      %vm7032 = vcmask 326912
      %7033 = vst.msk [vmem:[#allocation5] sm:$0xff] %vm7032, %v6937
      %7034 = vst.msk [vmem:[#allocation5 + $0x8] sm:$0xff] %vm7032, %v6939
      %7035 = vst.msk [vmem:[#allocation5 + $0x10] sm:$0xff] %vm7032, %v6941
      %7036 = vst.msk [vmem:[#allocation5 + $0x18] sm:$0xff] %vm7032, %v6943
      %7037 = vst.msk [vmem:[#allocation5 + $0x20] sm:$0xff] %vm7032, %v6945
      %7038 = vst.msk [vmem:[#allocation5 + $0x28] sm:$0xff] %vm7032, %v6947
      %7039 = vst.msk [vmem:[#allocation5 + $0x30] sm:$0xff] %vm7032, %v6949
      %7040 = vst.msk [vmem:[#allocation5 + $0x38] sm:$0xff] %vm7032, %v6951
      %7041 = vst.msk [vmem:[#allocation5 + $0x40] sm:$0xff] %vm7032, %v6953
      %7042 = vst.msk [vmem:[#allocation5 + $0x48] sm:$0xff] %vm7032, %v6955
      %7043 = vst.msk [vmem:[#allocation5 + $0x50] sm:$0xff] %vm7032, %v6957
      %7044 = vst.msk [vmem:[#allocation5 + $0x58] sm:$0xff] %vm7032, %v6959
      %7045 = vst.msk [vmem:[#allocation5 + $0x60] sm:$0xff] %vm7032, %v6961
      %7046 = vst.msk [vmem:[#allocation5 + $0x68] sm:$0xff] %vm7032, %v6963
      %7047 = vst.msk [vmem:[#allocation5 + $0x70] sm:$0xff] %vm7032, %v6965
      %7048 = vst.msk [vmem:[#allocation5 + $0x78] sm:$0xff] %vm7032, %v6967
      %7049 = vst.msk [vmem:[#allocation5 + $0x80] sm:$0xff] %vm7032, %v6969
      %7050 = vst.msk [vmem:[#allocation5 + $0x88] sm:$0xff] %vm7032, %v6971
      %7051 = vst.msk [vmem:[#allocation5 + $0x90] sm:$0xff] %vm7032, %v6973
      %7052 = vst.msk [vmem:[#allocation5 + $0x98] sm:$0xff] %vm7032, %v6975
      %7053 = vst.msk [vmem:[#allocation5 + $0xa0] sm:$0xff] %vm7032, %v6977
      %7054 = vst.msk [vmem:[#allocation5 + $0xa8] sm:$0xff] %vm7032, %v6979
      %7055 = vst.msk [vmem:[#allocation5 + $0xb0] sm:$0xff] %vm7032, %v6981
      %7056 = vst.msk [vmem:[#allocation5 + $0xb8] sm:$0xff] %vm7032, %v6983
      %7057 = vst.msk [vmem:[#allocation5 + $0xc0] sm:$0xff] %vm7032, %v6985
      %7058 = vst.msk [vmem:[#allocation5 + $0xc8] sm:$0xff] %vm7032, %v6987
      %7059 = vst.msk [vmem:[#allocation5 + $0xd0] sm:$0xff] %vm7032, %v6989
      %7060 = vst.msk [vmem:[#allocation5 + $0xd8] sm:$0xff] %vm7032, %v6991
      %7061 = vst.msk [vmem:[#allocation5 + $0xe0] sm:$0xff] %vm7032, %v6993
      %7062 = vst.msk [vmem:[#allocation5 + $0xe8] sm:$0xff] %vm7032, %v6995
      %7063 = vst.msk [vmem:[#allocation5 + $0xf0] sm:$0xff] %vm7032, %v6997
      %7064 = vst.msk [vmem:[#allocation5 + $0xf8] sm:$0xff] %vm7032, %v6999
      %v7065 = vld [vmem:[#allocation3 + $0x19] sm:$0xff]
      %v7066 = vld [vmem:[#allocation3 + $0x21] sm:$0xff]
      %v7067 = vld [vmem:[#allocation3 + $0x29] sm:$0xff]
      %v7068 = vld [vmem:[#allocation3 + $0x31] sm:$0xff]
      %v7069 = vld [vmem:[#allocation3 + $0x39] sm:$0xff]
      %v7070 = vld [vmem:[#allocation3 + $0x41] sm:$0xff]
      %v7071 = vld [vmem:[#allocation3 + $0x49] sm:$0xff]
      %v7072 = vld [vmem:[#allocation3 + $0x51] sm:$0xff]
      %v7073 = vld [vmem:[#allocation3 + $0x59] sm:$0xff]
      %v7074 = vld [vmem:[#allocation3 + $0x61] sm:$0xff]
      %v7075 = vld [vmem:[#allocation3 + $0x69] sm:$0xff]
      %v7076 = vld [vmem:[#allocation3 + $0x71] sm:$0xff]
      %v7077 = vld [vmem:[#allocation3 + $0x79] sm:$0xff]
      %v7078 = vld [vmem:[#allocation3 + $0x81] sm:$0xff]
      %v7079 = vld [vmem:[#allocation3 + $0x89] sm:$0xff]
      %v7080 = vld [vmem:[#allocation3 + $0x91] sm:$0xff]
      %v7081 = vld [vmem:[#allocation3 + $0x99] sm:$0xff]
      %v7082 = vld [vmem:[#allocation3 + $0xa1] sm:$0xff]
      %v7083 = vld [vmem:[#allocation3 + $0xa9] sm:$0xff]
      %v7084 = vld [vmem:[#allocation3 + $0xb1] sm:$0xff]
      %v7085 = vld [vmem:[#allocation3 + $0xb9] sm:$0xff]
      %v7086 = vld [vmem:[#allocation3 + $0xc1] sm:$0xff]
      %v7087 = vld [vmem:[#allocation3 + $0xc9] sm:$0xff]
      %v7088 = vld [vmem:[#allocation3 + $0xd1] sm:$0xff]
      %v7089 = vld [vmem:[#allocation3 + $0xd9] sm:$0xff]
      %v7090 = vld [vmem:[#allocation3 + $0xe1] sm:$0xff]
      %v7091 = vld [vmem:[#allocation3 + $0xe9] sm:$0xff]
      %v7092 = vld [vmem:[#allocation3 + $0xf1] sm:$0xff]
      %v7093 = vld [vmem:[#allocation3 + $0xf9] sm:$0xff]
      %v7094 = vld [vmem:[#allocation3 + $0x101] sm:$0xff]
      %v7095 = vld [vmem:[#allocation3 + $0x109] sm:$0xff]
      %v7096 = vld [vmem:[#allocation3 + $0x111] sm:$0xff]
      %v7097 = vmul.f32 %v7065, %v580
      %v7098 = vmul.f32 %v7066, %v581
      %v7099 = vmul.f32 %v7067, %v582
      %v7100 = vmul.f32 %v7068, %v583
      %v7101 = vmul.f32 %v7069, %v584
      %v7102 = vmul.f32 %v7070, %v585
      %v7103 = vmul.f32 %v7071, %v586
      %v7104 = vmul.f32 %v7072, %v587
      %v7105 = vmul.f32 %v7073, %v588
      %v7106 = vmul.f32 %v7074, %v589
      %v7107 = vmul.f32 %v7075, %v590
      %v7108 = vmul.f32 %v7076, %v591
      %v7109 = vmul.f32 %v7077, %v592
      %v7110 = vmul.f32 %v7078, %v593
      %v7111 = vmul.f32 %v7079, %v594
      %v7112 = vmul.f32 %v7080, %v595
      %v7113 = vmul.f32 %v7081, %v596
      %v7114 = vmul.f32 %v7082, %v597
      %v7115 = vmul.f32 %v7083, %v598
      %v7116 = vmul.f32 %v7084, %v599
      %v7117 = vmul.f32 %v7085, %v600
      %v7118 = vmul.f32 %v7086, %v601
      %v7119 = vmul.f32 %v7087, %v602
      %v7120 = vmul.f32 %v7088, %v603
      %v7121 = vmul.f32 %v7089, %v604
      %v7122 = vmul.f32 %v7090, %v605
      %v7123 = vmul.f32 %v7091, %v606
      %v7124 = vmul.f32 %v7092, %v607
      %v7125 = vmul.f32 %v7093, %v608
      %v7126 = vmul.f32 %v7094, %v609
      %v7127 = vmul.f32 %v7095, %v610
      %v7128 = vmul.f32 %v7096, %v611
      %7161 = vrot.lane.b32.xlu0 %v7097, 40
      %v7162 = vpop.permute.xlu0 %7161
      %7163 = vrot.lane.b32.xlu0 %v7098, 40
      %v7164 = vpop.permute.xlu0 %7163
      %7165 = vrot.lane.b32.xlu0 %v7099, 40
      %v7166 = vpop.permute.xlu0 %7165
      %7167 = vrot.lane.b32.xlu0 %v7100, 40
      %v7168 = vpop.permute.xlu0 %7167
      %7169 = vrot.lane.b32.xlu0 %v7101, 40
      %v7170 = vpop.permute.xlu0 %7169
      %7171 = vrot.lane.b32.xlu0 %v7102, 40
      %v7172 = vpop.permute.xlu0 %7171
      %7173 = vrot.lane.b32.xlu0 %v7103, 40
      %v7174 = vpop.permute.xlu0 %7173
      %7175 = vrot.lane.b32.xlu0 %v7104, 40
      %v7176 = vpop.permute.xlu0 %7175
      %7177 = vrot.lane.b32.xlu0 %v7105, 40
      %v7178 = vpop.permute.xlu0 %7177
      %7179 = vrot.lane.b32.xlu0 %v7106, 40
      %v7180 = vpop.permute.xlu0 %7179
      %7181 = vrot.lane.b32.xlu0 %v7107, 40
      %v7182 = vpop.permute.xlu0 %7181
      %7183 = vrot.lane.b32.xlu0 %v7108, 40
      %v7184 = vpop.permute.xlu0 %7183
      %7185 = vrot.lane.b32.xlu0 %v7109, 40
      %v7186 = vpop.permute.xlu0 %7185
      %7187 = vrot.lane.b32.xlu0 %v7110, 40
      %v7188 = vpop.permute.xlu0 %7187
      %7189 = vrot.lane.b32.xlu0 %v7111, 40
      %v7190 = vpop.permute.xlu0 %7189
      %7191 = vrot.lane.b32.xlu0 %v7112, 40
      %v7192 = vpop.permute.xlu0 %7191
      %7193 = vrot.lane.b32.xlu0 %v7113, 40
      %v7194 = vpop.permute.xlu0 %7193
      %7195 = vrot.lane.b32.xlu0 %v7114, 40
      %v7196 = vpop.permute.xlu0 %7195
      %7197 = vrot.lane.b32.xlu0 %v7115, 40
      %v7198 = vpop.permute.xlu0 %7197
      %7199 = vrot.lane.b32.xlu0 %v7116, 40
      %v7200 = vpop.permute.xlu0 %7199
      %7201 = vrot.lane.b32.xlu0 %v7117, 40
      %v7202 = vpop.permute.xlu0 %7201
      %7203 = vrot.lane.b32.xlu0 %v7118, 40
      %v7204 = vpop.permute.xlu0 %7203
      %7205 = vrot.lane.b32.xlu0 %v7119, 40
      %v7206 = vpop.permute.xlu0 %7205
      %7207 = vrot.lane.b32.xlu0 %v7120, 40
      %v7208 = vpop.permute.xlu0 %7207
      %7209 = vrot.lane.b32.xlu0 %v7121, 40
      %v7210 = vpop.permute.xlu0 %7209
      %7211 = vrot.lane.b32.xlu0 %v7122, 40
      %v7212 = vpop.permute.xlu0 %7211
      %7213 = vrot.lane.b32.xlu0 %v7123, 40
      %v7214 = vpop.permute.xlu0 %7213
      %7215 = vrot.lane.b32.xlu0 %v7124, 40
      %v7216 = vpop.permute.xlu0 %7215
      %7217 = vrot.lane.b32.xlu0 %v7125, 40
      %v7218 = vpop.permute.xlu0 %7217
      %7219 = vrot.lane.b32.xlu0 %v7126, 40
      %v7220 = vpop.permute.xlu0 %7219
      %7221 = vrot.lane.b32.xlu0 %v7127, 40
      %v7222 = vpop.permute.xlu0 %7221
      %7223 = vrot.lane.b32.xlu0 %v7128, 40
      %v7224 = vpop.permute.xlu0 %7223
      %vm7257 = vcmask 392512
      %7258 = vst.msk [vmem:[#allocation5] sm:$0xff] %vm7257, %v7162
      %7259 = vst.msk [vmem:[#allocation5 + $0x8] sm:$0xff] %vm7257, %v7164
      %7260 = vst.msk [vmem:[#allocation5 + $0x10] sm:$0xff] %vm7257, %v7166
      %7261 = vst.msk [vmem:[#allocation5 + $0x18] sm:$0xff] %vm7257, %v7168
      %7262 = vst.msk [vmem:[#allocation5 + $0x20] sm:$0xff] %vm7257, %v7170
      %7263 = vst.msk [vmem:[#allocation5 + $0x28] sm:$0xff] %vm7257, %v7172
      %7264 = vst.msk [vmem:[#allocation5 + $0x30] sm:$0xff] %vm7257, %v7174
      %7265 = vst.msk [vmem:[#allocation5 + $0x38] sm:$0xff] %vm7257, %v7176
      %7266 = vst.msk [vmem:[#allocation5 + $0x40] sm:$0xff] %vm7257, %v7178
      %7267 = vst.msk [vmem:[#allocation5 + $0x48] sm:$0xff] %vm7257, %v7180
      %7268 = vst.msk [vmem:[#allocation5 + $0x50] sm:$0xff] %vm7257, %v7182
      %7269 = vst.msk [vmem:[#allocation5 + $0x58] sm:$0xff] %vm7257, %v7184
      %7270 = vst.msk [vmem:[#allocation5 + $0x60] sm:$0xff] %vm7257, %v7186
      %7271 = vst.msk [vmem:[#allocation5 + $0x68] sm:$0xff] %vm7257, %v7188
      %7272 = vst.msk [vmem:[#allocation5 + $0x70] sm:$0xff] %vm7257, %v7190
      %7273 = vst.msk [vmem:[#allocation5 + $0x78] sm:$0xff] %vm7257, %v7192
      %7274 = vst.msk [vmem:[#allocation5 + $0x80] sm:$0xff] %vm7257, %v7194
      %7275 = vst.msk [vmem:[#allocation5 + $0x88] sm:$0xff] %vm7257, %v7196
      %7276 = vst.msk [vmem:[#allocation5 + $0x90] sm:$0xff] %vm7257, %v7198
      %7277 = vst.msk [vmem:[#allocation5 + $0x98] sm:$0xff] %vm7257, %v7200
      %7278 = vst.msk [vmem:[#allocation5 + $0xa0] sm:$0xff] %vm7257, %v7202
      %7279 = vst.msk [vmem:[#allocation5 + $0xa8] sm:$0xff] %vm7257, %v7204
      %7280 = vst.msk [vmem:[#allocation5 + $0xb0] sm:$0xff] %vm7257, %v7206
      %7281 = vst.msk [vmem:[#allocation5 + $0xb8] sm:$0xff] %vm7257, %v7208
      %7282 = vst.msk [vmem:[#allocation5 + $0xc0] sm:$0xff] %vm7257, %v7210
      %7283 = vst.msk [vmem:[#allocation5 + $0xc8] sm:$0xff] %vm7257, %v7212
      %7284 = vst.msk [vmem:[#allocation5 + $0xd0] sm:$0xff] %vm7257, %v7214
      %7285 = vst.msk [vmem:[#allocation5 + $0xd8] sm:$0xff] %vm7257, %v7216
      %7286 = vst.msk [vmem:[#allocation5 + $0xe0] sm:$0xff] %vm7257, %v7218
      %7287 = vst.msk [vmem:[#allocation5 + $0xe8] sm:$0xff] %vm7257, %v7220
      %7288 = vst.msk [vmem:[#allocation5 + $0xf0] sm:$0xff] %vm7257, %v7222
      %7289 = vst.msk [vmem:[#allocation5 + $0xf8] sm:$0xff] %vm7257, %v7224
      %v7290 = vld [vmem:[#allocation3 + $0x27] sm:$0xff]
      %v7291 = vld [vmem:[#allocation3 + $0x2f] sm:$0xff]
      %v7292 = vld [vmem:[#allocation3 + $0x37] sm:$0xff]
      %v7293 = vld [vmem:[#allocation3 + $0x3f] sm:$0xff]
      %v7294 = vld [vmem:[#allocation3 + $0x47] sm:$0xff]
      %v7295 = vld [vmem:[#allocation3 + $0x4f] sm:$0xff]
      %v7296 = vld [vmem:[#allocation3 + $0x57] sm:$0xff]
      %v7297 = vld [vmem:[#allocation3 + $0x5f] sm:$0xff]
      %v7298 = vld [vmem:[#allocation3 + $0x67] sm:$0xff]
      %v7299 = vld [vmem:[#allocation3 + $0x6f] sm:$0xff]
      %v7300 = vld [vmem:[#allocation3 + $0x77] sm:$0xff]
      %v7301 = vld [vmem:[#allocation3 + $0x7f] sm:$0xff]
      %v7302 = vld [vmem:[#allocation3 + $0x87] sm:$0xff]
      %v7303 = vld [vmem:[#allocation3 + $0x8f] sm:$0xff]
      %v7304 = vld [vmem:[#allocation3 + $0x97] sm:$0xff]
      %v7305 = vld [vmem:[#allocation3 + $0x9f] sm:$0xff]
      %v7306 = vld [vmem:[#allocation3 + $0xa7] sm:$0xff]
      %v7307 = vld [vmem:[#allocation3 + $0xaf] sm:$0xff]
      %v7308 = vld [vmem:[#allocation3 + $0xb7] sm:$0xff]
      %v7309 = vld [vmem:[#allocation3 + $0xbf] sm:$0xff]
      %v7310 = vld [vmem:[#allocation3 + $0xc7] sm:$0xff]
      %v7311 = vld [vmem:[#allocation3 + $0xcf] sm:$0xff]
      %v7312 = vld [vmem:[#allocation3 + $0xd7] sm:$0xff]
      %v7313 = vld [vmem:[#allocation3 + $0xdf] sm:$0xff]
      %v7314 = vld [vmem:[#allocation3 + $0xe7] sm:$0xff]
      %v7315 = vld [vmem:[#allocation3 + $0xef] sm:$0xff]
      %v7316 = vld [vmem:[#allocation3 + $0xf7] sm:$0xff]
      %v7317 = vld [vmem:[#allocation3 + $0xff] sm:$0xff]
      %v7318 = vld [vmem:[#allocation3 + $0x107] sm:$0xff]
      %v7319 = vld [vmem:[#allocation3 + $0x10f] sm:$0xff]
      %v7320 = vld [vmem:[#allocation3 + $0x117] sm:$0xff]
      %v7321 = vld [vmem:[#allocation3 + $0x11f] sm:$0xff]
      %v7322 = vmul.f32 %v7290, %v516
      %v7323 = vmul.f32 %v7291, %v517
      %v7324 = vmul.f32 %v7292, %v518
      %v7325 = vmul.f32 %v7293, %v519
      %v7326 = vmul.f32 %v7294, %v520
      %v7327 = vmul.f32 %v7295, %v521
      %v7328 = vmul.f32 %v7296, %v522
      %v7329 = vmul.f32 %v7297, %v523
      %v7330 = vmul.f32 %v7298, %v524
      %v7331 = vmul.f32 %v7299, %v525
      %v7332 = vmul.f32 %v7300, %v526
      %v7333 = vmul.f32 %v7301, %v527
      %v7334 = vmul.f32 %v7302, %v528
      %v7335 = vmul.f32 %v7303, %v529
      %v7336 = vmul.f32 %v7304, %v530
      %v7337 = vmul.f32 %v7305, %v531
      %v7338 = vmul.f32 %v7306, %v532
      %v7339 = vmul.f32 %v7307, %v533
      %v7340 = vmul.f32 %v7308, %v534
      %v7341 = vmul.f32 %v7309, %v535
      %v7342 = vmul.f32 %v7310, %v536
      %v7343 = vmul.f32 %v7311, %v537
      %v7344 = vmul.f32 %v7312, %v538
      %v7345 = vmul.f32 %v7313, %v539
      %v7346 = vmul.f32 %v7314, %v540
      %v7347 = vmul.f32 %v7315, %v541
      %v7348 = vmul.f32 %v7316, %v542
      %v7349 = vmul.f32 %v7317, %v543
      %v7350 = vmul.f32 %v7318, %v544
      %v7351 = vmul.f32 %v7319, %v545
      %v7352 = vmul.f32 %v7320, %v546
      %v7353 = vmul.f32 %v7321, %v547
      %7386 = vrot.lane.b32.xlu0 %v7322, 48
      %v7387 = vpop.permute.xlu0 %7386
      %7388 = vrot.lane.b32.xlu0 %v7323, 48
      %v7389 = vpop.permute.xlu0 %7388
      %7390 = vrot.lane.b32.xlu0 %v7324, 48
      %v7391 = vpop.permute.xlu0 %7390
      %7392 = vrot.lane.b32.xlu0 %v7325, 48
      %v7393 = vpop.permute.xlu0 %7392
      %7394 = vrot.lane.b32.xlu0 %v7326, 48
      %v7395 = vpop.permute.xlu0 %7394
      %7396 = vrot.lane.b32.xlu0 %v7327, 48
      %v7397 = vpop.permute.xlu0 %7396
      %7398 = vrot.lane.b32.xlu0 %v7328, 48
      %v7399 = vpop.permute.xlu0 %7398
      %7400 = vrot.lane.b32.xlu0 %v7329, 48
      %v7401 = vpop.permute.xlu0 %7400
      %7402 = vrot.lane.b32.xlu0 %v7330, 48
      %v7403 = vpop.permute.xlu0 %7402
      %7404 = vrot.lane.b32.xlu0 %v7331, 48
      %v7405 = vpop.permute.xlu0 %7404
      %7406 = vrot.lane.b32.xlu0 %v7332, 48
      %v7407 = vpop.permute.xlu0 %7406
      %7408 = vrot.lane.b32.xlu0 %v7333, 48
      %v7409 = vpop.permute.xlu0 %7408
      %7410 = vrot.lane.b32.xlu0 %v7334, 48
      %v7411 = vpop.permute.xlu0 %7410
      %7412 = vrot.lane.b32.xlu0 %v7335, 48
      %v7413 = vpop.permute.xlu0 %7412
      %7414 = vrot.lane.b32.xlu0 %v7336, 48
      %v7415 = vpop.permute.xlu0 %7414
      %7416 = vrot.lane.b32.xlu0 %v7337, 48
      %v7417 = vpop.permute.xlu0 %7416
      %7418 = vrot.lane.b32.xlu0 %v7338, 48
      %v7419 = vpop.permute.xlu0 %7418
      %7420 = vrot.lane.b32.xlu0 %v7339, 48
      %v7421 = vpop.permute.xlu0 %7420
      %7422 = vrot.lane.b32.xlu0 %v7340, 48
      %v7423 = vpop.permute.xlu0 %7422
      %7424 = vrot.lane.b32.xlu0 %v7341, 48
      %v7425 = vpop.permute.xlu0 %7424
      %7426 = vrot.lane.b32.xlu0 %v7342, 48
      %v7427 = vpop.permute.xlu0 %7426
      %7428 = vrot.lane.b32.xlu0 %v7343, 48
      %v7429 = vpop.permute.xlu0 %7428
      %7430 = vrot.lane.b32.xlu0 %v7344, 48
      %v7431 = vpop.permute.xlu0 %7430
      %7432 = vrot.lane.b32.xlu0 %v7345, 48
      %v7433 = vpop.permute.xlu0 %7432
      %7434 = vrot.lane.b32.xlu0 %v7346, 48
      %v7435 = vpop.permute.xlu0 %7434
      %7436 = vrot.lane.b32.xlu0 %v7347, 48
      %v7437 = vpop.permute.xlu0 %7436
      %7438 = vrot.lane.b32.xlu0 %v7348, 48
      %v7439 = vpop.permute.xlu0 %7438
      %7440 = vrot.lane.b32.xlu0 %v7349, 48
      %v7441 = vpop.permute.xlu0 %7440
      %7442 = vrot.lane.b32.xlu0 %v7350, 48
      %v7443 = vpop.permute.xlu0 %7442
      %7444 = vrot.lane.b32.xlu0 %v7351, 48
      %v7445 = vpop.permute.xlu0 %7444
      %7446 = vrot.lane.b32.xlu0 %v7352, 48
      %v7447 = vpop.permute.xlu0 %7446
      %7448 = vrot.lane.b32.xlu0 %v7353, 48
      %v7449 = vpop.permute.xlu0 %7448
      %vm7482 = vcmask 458112
      %7483 = vst.msk [vmem:[#allocation5] sm:$0xff] %vm7482, %v7387
      %7484 = vst.msk [vmem:[#allocation5 + $0x8] sm:$0xff] %vm7482, %v7389
      %7485 = vst.msk [vmem:[#allocation5 + $0x10] sm:$0xff] %vm7482, %v7391
      %7486 = vst.msk [vmem:[#allocation5 + $0x18] sm:$0xff] %vm7482, %v7393
      %7487 = vst.msk [vmem:[#allocation5 + $0x20] sm:$0xff] %vm7482, %v7395
      %7488 = vst.msk [vmem:[#allocation5 + $0x28] sm:$0xff] %vm7482, %v7397
      %7489 = vst.msk [vmem:[#allocation5 + $0x30] sm:$0xff] %vm7482, %v7399
      %7490 = vst.msk [vmem:[#allocation5 + $0x38] sm:$0xff] %vm7482, %v7401
      %7491 = vst.msk [vmem:[#allocation5 + $0x40] sm:$0xff] %vm7482, %v7403
      %7492 = vst.msk [vmem:[#allocation5 + $0x48] sm:$0xff] %vm7482, %v7405
      %7493 = vst.msk [vmem:[#allocation5 + $0x50] sm:$0xff] %vm7482, %v7407
      %7494 = vst.msk [vmem:[#allocation5 + $0x58] sm:$0xff] %vm7482, %v7409
      %7495 = vst.msk [vmem:[#allocation5 + $0x60] sm:$0xff] %vm7482, %v7411
      %7496 = vst.msk [vmem:[#allocation5 + $0x68] sm:$0xff] %vm7482, %v7413
      %7497 = vst.msk [vmem:[#allocation5 + $0x70] sm:$0xff] %vm7482, %v7415
      %7498 = vst.msk [vmem:[#allocation5 + $0x78] sm:$0xff] %vm7482, %v7417
      %7499 = vst.msk [vmem:[#allocation5 + $0x80] sm:$0xff] %vm7482, %v7419
      %7500 = vst.msk [vmem:[#allocation5 + $0x88] sm:$0xff] %vm7482, %v7421
      %7501 = vst.msk [vmem:[#allocation5 + $0x90] sm:$0xff] %vm7482, %v7423
      %7502 = vst.msk [vmem:[#allocation5 + $0x98] sm:$0xff] %vm7482, %v7425
      %7503 = vst.msk [vmem:[#allocation5 + $0xa0] sm:$0xff] %vm7482, %v7427
      %7504 = vst.msk [vmem:[#allocation5 + $0xa8] sm:$0xff] %vm7482, %v7429
      %7505 = vst.msk [vmem:[#allocation5 + $0xb0] sm:$0xff] %vm7482, %v7431
      %7506 = vst.msk [vmem:[#allocation5 + $0xb8] sm:$0xff] %vm7482, %v7433
      %7507 = vst.msk [vmem:[#allocation5 + $0xc0] sm:$0xff] %vm7482, %v7435
      %7508 = vst.msk [vmem:[#allocation5 + $0xc8] sm:$0xff] %vm7482, %v7437
      %7509 = vst.msk [vmem:[#allocation5 + $0xd0] sm:$0xff] %vm7482, %v7439
      %7510 = vst.msk [vmem:[#allocation5 + $0xd8] sm:$0xff] %vm7482, %v7441
      %7511 = vst.msk [vmem:[#allocation5 + $0xe0] sm:$0xff] %vm7482, %v7443
      %7512 = vst.msk [vmem:[#allocation5 + $0xe8] sm:$0xff] %vm7482, %v7445
      %7513 = vst.msk [vmem:[#allocation5 + $0xf0] sm:$0xff] %vm7482, %v7447
      %7514 = vst.msk [vmem:[#allocation5 + $0xf8] sm:$0xff] %vm7482, %v7449
      %v7515 = vld [vmem:[#allocation3 + $0x28] sm:$0xff]
      %v7516 = vld [vmem:[#allocation3 + $0x30] sm:$0xff]
      %v7517 = vld [vmem:[#allocation3 + $0x38] sm:$0xff]
      %v7518 = vld [vmem:[#allocation3 + $0x40] sm:$0xff]
      %v7519 = vld [vmem:[#allocation3 + $0x48] sm:$0xff]
      %v7520 = vld [vmem:[#allocation3 + $0x50] sm:$0xff]
      %v7521 = vld [vmem:[#allocation3 + $0x58] sm:$0xff]
      %v7522 = vld [vmem:[#allocation3 + $0x60] sm:$0xff]
      %v7523 = vld [vmem:[#allocation3 + $0x68] sm:$0xff]
      %v7524 = vld [vmem:[#allocation3 + $0x70] sm:$0xff]
      %v7525 = vld [vmem:[#allocation3 + $0x78] sm:$0xff]
      %v7526 = vld [vmem:[#allocation3 + $0x80] sm:$0xff]
      %v7527 = vld [vmem:[#allocation3 + $0x88] sm:$0xff]
      %v7528 = vld [vmem:[#allocation3 + $0x90] sm:$0xff]
      %v7529 = vld [vmem:[#allocation3 + $0x98] sm:$0xff]
      %v7530 = vld [vmem:[#allocation3 + $0xa0] sm:$0xff]
      %v7531 = vld [vmem:[#allocation3 + $0xa8] sm:$0xff]
      %v7532 = vld [vmem:[#allocation3 + $0xb0] sm:$0xff]
      %v7533 = vld [vmem:[#allocation3 + $0xb8] sm:$0xff]
      %v7534 = vld [vmem:[#allocation3 + $0xc0] sm:$0xff]
      %v7535 = vld [vmem:[#allocation3 + $0xc8] sm:$0xff]
      %v7536 = vld [vmem:[#allocation3 + $0xd0] sm:$0xff]
      %v7537 = vld [vmem:[#allocation3 + $0xd8] sm:$0xff]
      %v7538 = vld [vmem:[#allocation3 + $0xe0] sm:$0xff]
      %v7539 = vld [vmem:[#allocation3 + $0xe8] sm:$0xff]
      %v7540 = vld [vmem:[#allocation3 + $0xf0] sm:$0xff]
      %v7541 = vld [vmem:[#allocation3 + $0xf8] sm:$0xff]
      %v7542 = vld [vmem:[#allocation3 + $0x100] sm:$0xff]
      %v7543 = vld [vmem:[#allocation3 + $0x108] sm:$0xff]
      %v7544 = vld [vmem:[#allocation3 + $0x110] sm:$0xff]
      %v7545 = vld [vmem:[#allocation3 + $0x118] sm:$0xff]
      %v7546 = vld [vmem:[#allocation3 + $0x120] sm:$0xff]
      %7579 = vrot.lane.b32.xlu0 %v7515, 56
      %v7580 = vpop.permute.xlu0 %7579
      %7581 = vrot.lane.b32.xlu0 %v7516, 56
      %v7582 = vpop.permute.xlu0 %7581
      %7583 = vrot.lane.b32.xlu0 %v7517, 56
      %v7584 = vpop.permute.xlu0 %7583
      %7585 = vrot.lane.b32.xlu0 %v7518, 56
      %v7586 = vpop.permute.xlu0 %7585
      %7587 = vrot.lane.b32.xlu0 %v7519, 56
      %v7588 = vpop.permute.xlu0 %7587
      %7589 = vrot.lane.b32.xlu0 %v7520, 56
      %v7590 = vpop.permute.xlu0 %7589
      %7591 = vrot.lane.b32.xlu0 %v7521, 56
      %v7592 = vpop.permute.xlu0 %7591
      %7593 = vrot.lane.b32.xlu0 %v7522, 56
      %v7594 = vpop.permute.xlu0 %7593
      %7595 = vrot.lane.b32.xlu0 %v7523, 56
      %v7596 = vpop.permute.xlu0 %7595
      %7597 = vrot.lane.b32.xlu0 %v7524, 56
      %v7598 = vpop.permute.xlu0 %7597
      %7599 = vrot.lane.b32.xlu0 %v7525, 56
      %v7600 = vpop.permute.xlu0 %7599
      %7601 = vrot.lane.b32.xlu0 %v7526, 56
      %v7602 = vpop.permute.xlu0 %7601
      %7603 = vrot.lane.b32.xlu0 %v7527, 56
      %v7604 = vpop.permute.xlu0 %7603
      %7605 = vrot.lane.b32.xlu0 %v7528, 56
      %v7606 = vpop.permute.xlu0 %7605
      %7607 = vrot.lane.b32.xlu0 %v7529, 56
      %v7608 = vpop.permute.xlu0 %7607
      %7609 = vrot.lane.b32.xlu0 %v7530, 56
      %v7610 = vpop.permute.xlu0 %7609
      %7611 = vrot.lane.b32.xlu0 %v7531, 56
      %v7612 = vpop.permute.xlu0 %7611
      %7613 = vrot.lane.b32.xlu0 %v7532, 56
      %v7614 = vpop.permute.xlu0 %7613
      %7615 = vrot.lane.b32.xlu0 %v7533, 56
      %v7616 = vpop.permute.xlu0 %7615
      %7617 = vrot.lane.b32.xlu0 %v7534, 56
      %v7618 = vpop.permute.xlu0 %7617
      %7619 = vrot.lane.b32.xlu0 %v7535, 56
      %v7620 = vpop.permute.xlu0 %7619
      %7621 = vrot.lane.b32.xlu0 %v7536, 56
      %v7622 = vpop.permute.xlu0 %7621
      %7623 = vrot.lane.b32.xlu0 %v7537, 56
      %v7624 = vpop.permute.xlu0 %7623
      %7625 = vrot.lane.b32.xlu0 %v7538, 56
      %v7626 = vpop.permute.xlu0 %7625
      %7627 = vrot.lane.b32.xlu0 %v7539, 56
      %v7628 = vpop.permute.xlu0 %7627
      %7629 = vrot.lane.b32.xlu0 %v7540, 56
      %v7630 = vpop.permute.xlu0 %7629
      %7631 = vrot.lane.b32.xlu0 %v7541, 56
      %v7632 = vpop.permute.xlu0 %7631
      %7633 = vrot.lane.b32.xlu0 %v7542, 56
      %v7634 = vpop.permute.xlu0 %7633
      %7635 = vrot.lane.b32.xlu0 %v7543, 56
      %v7636 = vpop.permute.xlu0 %7635
      %7637 = vrot.lane.b32.xlu0 %v7544, 56
      %v7638 = vpop.permute.xlu0 %7637
      %7639 = vrot.lane.b32.xlu0 %v7545, 56
      %v7640 = vpop.permute.xlu0 %7639
      %7641 = vrot.lane.b32.xlu0 %v7546, 56
      %v7642 = vpop.permute.xlu0 %7641
      %vm7675 = vcmask 523712
      %7676 = vst.msk [vmem:[#allocation5] sm:$0xff] %vm7675, %v7580
      %7677 = vst.msk [vmem:[#allocation5 + $0x8] sm:$0xff] %vm7675, %v7582
      %7678 = vst.msk [vmem:[#allocation5 + $0x10] sm:$0xff] %vm7675, %v7584
      %7679 = vst.msk [vmem:[#allocation5 + $0x18] sm:$0xff] %vm7675, %v7586
      %7680 = vst.msk [vmem:[#allocation5 + $0x20] sm:$0xff] %vm7675, %v7588
      %7681 = vst.msk [vmem:[#allocation5 + $0x28] sm:$0xff] %vm7675, %v7590
      %7682 = vst.msk [vmem:[#allocation5 + $0x30] sm:$0xff] %vm7675, %v7592
      %7683 = vst.msk [vmem:[#allocation5 + $0x38] sm:$0xff] %vm7675, %v7594
      %7684 = vst.msk [vmem:[#allocation5 + $0x40] sm:$0xff] %vm7675, %v7596
      %7685 = vst.msk [vmem:[#allocation5 + $0x48] sm:$0xff] %vm7675, %v7598
      %7686 = vst.msk [vmem:[#allocation5 + $0x50] sm:$0xff] %vm7675, %v7600
      %7687 = vst.msk [vmem:[#allocation5 + $0x58] sm:$0xff] %vm7675, %v7602
      %7688 = vst.msk [vmem:[#allocation5 + $0x60] sm:$0xff] %vm7675, %v7604
      %7689 = vst.msk [vmem:[#allocation5 + $0x68] sm:$0xff] %vm7675, %v7606
      %7690 = vst.msk [vmem:[#allocation5 + $0x70] sm:$0xff] %vm7675, %v7608
      %7691 = vst.msk [vmem:[#allocation5 + $0x78] sm:$0xff] %vm7675, %v7610
      %7692 = vst.msk [vmem:[#allocation5 + $0x80] sm:$0xff] %vm7675, %v7612
      %7693 = vst.msk [vmem:[#allocation5 + $0x88] sm:$0xff] %vm7675, %v7614
      %7694 = vst.msk [vmem:[#allocation5 + $0x90] sm:$0xff] %vm7675, %v7616
      %7695 = vst.msk [vmem:[#allocation5 + $0x98] sm:$0xff] %vm7675, %v7618
      %7696 = vst.msk [vmem:[#allocation5 + $0xa0] sm:$0xff] %vm7675, %v7620
      %7697 = vst.msk [vmem:[#allocation5 + $0xa8] sm:$0xff] %vm7675, %v7622
      %7698 = vst.msk [vmem:[#allocation5 + $0xb0] sm:$0xff] %vm7675, %v7624
      %7699 = vst.msk [vmem:[#allocation5 + $0xb8] sm:$0xff] %vm7675, %v7626
      %7700 = vst.msk [vmem:[#allocation5 + $0xc0] sm:$0xff] %vm7675, %v7628
      %7701 = vst.msk [vmem:[#allocation5 + $0xc8] sm:$0xff] %vm7675, %v7630
      %7702 = vst.msk [vmem:[#allocation5 + $0xd0] sm:$0xff] %vm7675, %v7632
      %7703 = vst.msk [vmem:[#allocation5 + $0xd8] sm:$0xff] %vm7675, %v7634
      %7704 = vst.msk [vmem:[#allocation5 + $0xe0] sm:$0xff] %vm7675, %v7636
      %7705 = vst.msk [vmem:[#allocation5 + $0xe8] sm:$0xff] %vm7675, %v7638
      %7706 = vst.msk [vmem:[#allocation5 + $0xf0] sm:$0xff] %vm7675, %v7640
      %7707 = vst.msk [vmem:[#allocation5 + $0xf8] sm:$0xff] %vm7675, %v7642
      %v7708 = vld [vmem:[#allocation3 + $0x29] sm:$0xff]
      %v7709 = vld [vmem:[#allocation3 + $0x31] sm:$0xff]
      %v7710 = vld [vmem:[#allocation3 + $0x39] sm:$0xff]
      %v7711 = vld [vmem:[#allocation3 + $0x41] sm:$0xff]
      %v7712 = vld [vmem:[#allocation3 + $0x49] sm:$0xff]
      %v7713 = vld [vmem:[#allocation3 + $0x51] sm:$0xff]
      %v7714 = vld [vmem:[#allocation3 + $0x59] sm:$0xff]
      %v7715 = vld [vmem:[#allocation3 + $0x61] sm:$0xff]
      %v7716 = vld [vmem:[#allocation3 + $0x69] sm:$0xff]
      %v7717 = vld [vmem:[#allocation3 + $0x71] sm:$0xff]
      %v7718 = vld [vmem:[#allocation3 + $0x79] sm:$0xff]
      %v7719 = vld [vmem:[#allocation3 + $0x81] sm:$0xff]
      %v7720 = vld [vmem:[#allocation3 + $0x89] sm:$0xff]
      %v7721 = vld [vmem:[#allocation3 + $0x91] sm:$0xff]
      %v7722 = vld [vmem:[#allocation3 + $0x99] sm:$0xff]
      %v7723 = vld [vmem:[#allocation3 + $0xa1] sm:$0xff]
      %v7724 = vld [vmem:[#allocation3 + $0xa9] sm:$0xff]
      %v7725 = vld [vmem:[#allocation3 + $0xb1] sm:$0xff]
      %v7726 = vld [vmem:[#allocation3 + $0xb9] sm:$0xff]
      %v7727 = vld [vmem:[#allocation3 + $0xc1] sm:$0xff]
      %v7728 = vld [vmem:[#allocation3 + $0xc9] sm:$0xff]
      %v7729 = vld [vmem:[#allocation3 + $0xd1] sm:$0xff]
      %v7730 = vld [vmem:[#allocation3 + $0xd9] sm:$0xff]
      %v7731 = vld [vmem:[#allocation3 + $0xe1] sm:$0xff]
      %v7732 = vld [vmem:[#allocation3 + $0xe9] sm:$0xff]
      %v7733 = vld [vmem:[#allocation3 + $0xf1] sm:$0xff]
      %v7734 = vld [vmem:[#allocation3 + $0xf9] sm:$0xff]
      %v7735 = vld [vmem:[#allocation3 + $0x101] sm:$0xff]
      %v7736 = vld [vmem:[#allocation3 + $0x109] sm:$0xff]
      %v7737 = vld [vmem:[#allocation3 + $0x111] sm:$0xff]
      %v7738 = vld [vmem:[#allocation3 + $0x119] sm:$0xff]
      %v7739 = vld [vmem:[#allocation3 + $0x121] sm:$0xff]
      %v7740 = vmul.f32 %v7708, %v580
      %v7741 = vmul.f32 %v7709, %v581
      %v7742 = vmul.f32 %v7710, %v582
      %v7743 = vmul.f32 %v7711, %v583
      %v7744 = vmul.f32 %v7712, %v584
      %v7745 = vmul.f32 %v7713, %v585
      %v7746 = vmul.f32 %v7714, %v586
      %v7747 = vmul.f32 %v7715, %v587
      %v7748 = vmul.f32 %v7716, %v588
      %v7749 = vmul.f32 %v7717, %v589
      %v7750 = vmul.f32 %v7718, %v590
      %v7751 = vmul.f32 %v7719, %v591
      %v7752 = vmul.f32 %v7720, %v592
      %v7753 = vmul.f32 %v7721, %v593
      %v7754 = vmul.f32 %v7722, %v594
      %v7755 = vmul.f32 %v7723, %v595
      %v7756 = vmul.f32 %v7724, %v596
      %v7757 = vmul.f32 %v7725, %v597
      %v7758 = vmul.f32 %v7726, %v598
      %v7759 = vmul.f32 %v7727, %v599
      %v7760 = vmul.f32 %v7728, %v600
      %v7761 = vmul.f32 %v7729, %v601
      %v7762 = vmul.f32 %v7730, %v602
      %v7763 = vmul.f32 %v7731, %v603
      %v7764 = vmul.f32 %v7732, %v604
      %v7765 = vmul.f32 %v7733, %v605
      %v7766 = vmul.f32 %v7734, %v606
      %v7767 = vmul.f32 %v7735, %v607
      %v7768 = vmul.f32 %v7736, %v608
      %v7769 = vmul.f32 %v7737, %v609
      %v7770 = vmul.f32 %v7738, %v610
      %v7771 = vmul.f32 %v7739, %v611
      %7804 = vrot.lane.b32.xlu0 %v7740, 64
      %v7805 = vpop.permute.xlu0 %7804
      %7806 = vrot.lane.b32.xlu0 %v7741, 64
      %v7807 = vpop.permute.xlu0 %7806
      %7808 = vrot.lane.b32.xlu0 %v7742, 64
      %v7809 = vpop.permute.xlu0 %7808
      %7810 = vrot.lane.b32.xlu0 %v7743, 64
      %v7811 = vpop.permute.xlu0 %7810
      %7812 = vrot.lane.b32.xlu0 %v7744, 64
      %v7813 = vpop.permute.xlu0 %7812
      %7814 = vrot.lane.b32.xlu0 %v7745, 64
      %v7815 = vpop.permute.xlu0 %7814
      %7816 = vrot.lane.b32.xlu0 %v7746, 64
      %v7817 = vpop.permute.xlu0 %7816
      %7818 = vrot.lane.b32.xlu0 %v7747, 64
      %v7819 = vpop.permute.xlu0 %7818
      %7820 = vrot.lane.b32.xlu0 %v7748, 64
      %v7821 = vpop.permute.xlu0 %7820
      %7822 = vrot.lane.b32.xlu0 %v7749, 64
      %v7823 = vpop.permute.xlu0 %7822
      %7824 = vrot.lane.b32.xlu0 %v7750, 64
      %v7825 = vpop.permute.xlu0 %7824
      %7826 = vrot.lane.b32.xlu0 %v7751, 64
      %v7827 = vpop.permute.xlu0 %7826
      %7828 = vrot.lane.b32.xlu0 %v7752, 64
      %v7829 = vpop.permute.xlu0 %7828
      %7830 = vrot.lane.b32.xlu0 %v7753, 64
      %v7831 = vpop.permute.xlu0 %7830
      %7832 = vrot.lane.b32.xlu0 %v7754, 64
      %v7833 = vpop.permute.xlu0 %7832
      %7834 = vrot.lane.b32.xlu0 %v7755, 64
      %v7835 = vpop.permute.xlu0 %7834
      %7836 = vrot.lane.b32.xlu0 %v7756, 64
      %v7837 = vpop.permute.xlu0 %7836
      %7838 = vrot.lane.b32.xlu0 %v7757, 64
      %v7839 = vpop.permute.xlu0 %7838
      %7840 = vrot.lane.b32.xlu0 %v7758, 64
      %v7841 = vpop.permute.xlu0 %7840
      %7842 = vrot.lane.b32.xlu0 %v7759, 64
      %v7843 = vpop.permute.xlu0 %7842
      %7844 = vrot.lane.b32.xlu0 %v7760, 64
      %v7845 = vpop.permute.xlu0 %7844
      %7846 = vrot.lane.b32.xlu0 %v7761, 64
      %v7847 = vpop.permute.xlu0 %7846
      %7848 = vrot.lane.b32.xlu0 %v7762, 64
      %v7849 = vpop.permute.xlu0 %7848
      %7850 = vrot.lane.b32.xlu0 %v7763, 64
      %v7851 = vpop.permute.xlu0 %7850
      %7852 = vrot.lane.b32.xlu0 %v7764, 64
      %v7853 = vpop.permute.xlu0 %7852
      %7854 = vrot.lane.b32.xlu0 %v7765, 64
      %v7855 = vpop.permute.xlu0 %7854
      %7856 = vrot.lane.b32.xlu0 %v7766, 64
      %v7857 = vpop.permute.xlu0 %7856
      %7858 = vrot.lane.b32.xlu0 %v7767, 64
      %v7859 = vpop.permute.xlu0 %7858
      %7860 = vrot.lane.b32.xlu0 %v7768, 64
      %v7861 = vpop.permute.xlu0 %7860
      %7862 = vrot.lane.b32.xlu0 %v7769, 64
      %v7863 = vpop.permute.xlu0 %7862
      %7864 = vrot.lane.b32.xlu0 %v7770, 64
      %v7865 = vpop.permute.xlu0 %7864
      %7866 = vrot.lane.b32.xlu0 %v7771, 64
      %v7867 = vpop.permute.xlu0 %7866
      %vm7900 = vcmask 589312
      %7901 = vst.msk [vmem:[#allocation5] sm:$0xff] %vm7900, %v7805
      %7902 = vst.msk [vmem:[#allocation5 + $0x8] sm:$0xff] %vm7900, %v7807
      %7903 = vst.msk [vmem:[#allocation5 + $0x10] sm:$0xff] %vm7900, %v7809
      %7904 = vst.msk [vmem:[#allocation5 + $0x18] sm:$0xff] %vm7900, %v7811
      %7905 = vst.msk [vmem:[#allocation5 + $0x20] sm:$0xff] %vm7900, %v7813
      %7906 = vst.msk [vmem:[#allocation5 + $0x28] sm:$0xff] %vm7900, %v7815
      %7907 = vst.msk [vmem:[#allocation5 + $0x30] sm:$0xff] %vm7900, %v7817
      %7908 = vst.msk [vmem:[#allocation5 + $0x38] sm:$0xff] %vm7900, %v7819
      %7909 = vst.msk [vmem:[#allocation5 + $0x40] sm:$0xff] %vm7900, %v7821
      %7910 = vst.msk [vmem:[#allocation5 + $0x48] sm:$0xff] %vm7900, %v7823
      %7911 = vst.msk [vmem:[#allocation5 + $0x50] sm:$0xff] %vm7900, %v7825
      %7912 = vst.msk [vmem:[#allocation5 + $0x58] sm:$0xff] %vm7900, %v7827
      %7913 = vst.msk [vmem:[#allocation5 + $0x60] sm:$0xff] %vm7900, %v7829
      %7914 = vst.msk [vmem:[#allocation5 + $0x68] sm:$0xff] %vm7900, %v7831
      %7915 = vst.msk [vmem:[#allocation5 + $0x70] sm:$0xff] %vm7900, %v7833
      %7916 = vst.msk [vmem:[#allocation5 + $0x78] sm:$0xff] %vm7900, %v7835
      %7917 = vst.msk [vmem:[#allocation5 + $0x80] sm:$0xff] %vm7900, %v7837
      %7918 = vst.msk [vmem:[#allocation5 + $0x88] sm:$0xff] %vm7900, %v7839
      %7919 = vst.msk [vmem:[#allocation5 + $0x90] sm:$0xff] %vm7900, %v7841
      %7920 = vst.msk [vmem:[#allocation5 + $0x98] sm:$0xff] %vm7900, %v7843
      %7921 = vst.msk [vmem:[#allocation5 + $0xa0] sm:$0xff] %vm7900, %v7845
      %7922 = vst.msk [vmem:[#allocation5 + $0xa8] sm:$0xff] %vm7900, %v7847
      %7923 = vst.msk [vmem:[#allocation5 + $0xb0] sm:$0xff] %vm7900, %v7849
      %7924 = vst.msk [vmem:[#allocation5 + $0xb8] sm:$0xff] %vm7900, %v7851
      %7925 = vst.msk [vmem:[#allocation5 + $0xc0] sm:$0xff] %vm7900, %v7853
      %7926 = vst.msk [vmem:[#allocation5 + $0xc8] sm:$0xff] %vm7900, %v7855
      %7927 = vst.msk [vmem:[#allocation5 + $0xd0] sm:$0xff] %vm7900, %v7857
      %7928 = vst.msk [vmem:[#allocation5 + $0xd8] sm:$0xff] %vm7900, %v7859
      %7929 = vst.msk [vmem:[#allocation5 + $0xe0] sm:$0xff] %vm7900, %v7861
      %7930 = vst.msk [vmem:[#allocation5 + $0xe8] sm:$0xff] %vm7900, %v7863
      %7931 = vst.msk [vmem:[#allocation5 + $0xf0] sm:$0xff] %vm7900, %v7865
      %7932 = vst.msk [vmem:[#allocation5 + $0xf8] sm:$0xff] %vm7900, %v7867
      %v7933 = vld [vmem:[#allocation5] sm:$0xff]
      %v7934 = vld [vmem:[#allocation5 + $0x8] sm:$0xff]
      %v7935 = vld [vmem:[#allocation5 + $0x10] sm:$0xff]
      %v7936 = vld [vmem:[#allocation5 + $0x18] sm:$0xff]
      %v7937 = vld [vmem:[#allocation5 + $0x20] sm:$0xff]
      %v7938 = vld [vmem:[#allocation5 + $0x28] sm:$0xff]
      %v7939 = vld [vmem:[#allocation5 + $0x30] sm:$0xff]
      %v7940 = vld [vmem:[#allocation5 + $0x38] sm:$0xff]
      %v7941 = vld [vmem:[#allocation5 + $0x40] sm:$0xff]
      %v7942 = vld [vmem:[#allocation5 + $0x48] sm:$0xff]
      %v7943 = vld [vmem:[#allocation5 + $0x50] sm:$0xff]
      %v7944 = vld [vmem:[#allocation5 + $0x58] sm:$0xff]
      %v7945 = vld [vmem:[#allocation5 + $0x60] sm:$0xff]
      %v7946 = vld [vmem:[#allocation5 + $0x68] sm:$0xff]
      %v7947 = vld [vmem:[#allocation5 + $0x70] sm:$0xff]
      %v7948 = vld [vmem:[#allocation5 + $0x78] sm:$0xff]
      %v7949 = vld [vmem:[#allocation5 + $0x80] sm:$0xff]
      %v7950 = vld [vmem:[#allocation5 + $0x88] sm:$0xff]
      %v7951 = vld [vmem:[#allocation5 + $0x90] sm:$0xff]
      %v7952 = vld [vmem:[#allocation5 + $0x98] sm:$0xff]
      %v7953 = vld [vmem:[#allocation5 + $0xa0] sm:$0xff]
      %v7954 = vld [vmem:[#allocation5 + $0xa8] sm:$0xff]
      %v7955 = vld [vmem:[#allocation5 + $0xb0] sm:$0xff]
      %v7956 = vld [vmem:[#allocation5 + $0xb8] sm:$0xff]
      %v7957 = vld [vmem:[#allocation5 + $0xc0] sm:$0xff]
      %v7958 = vld [vmem:[#allocation5 + $0xc8] sm:$0xff]
      %v7959 = vld [vmem:[#allocation5 + $0xd0] sm:$0xff]
      %v7960 = vld [vmem:[#allocation5 + $0xd8] sm:$0xff]
      %v7961 = vld [vmem:[#allocation5 + $0xe0] sm:$0xff]
      %v7962 = vld [vmem:[#allocation5 + $0xe8] sm:$0xff]
      %v7963 = vld [vmem:[#allocation5 + $0xf0] sm:$0xff]
      %v7964 = vld [vmem:[#allocation5 + $0xf8] sm:$0xff]
      %v7965 = vld [vmem:[%s3 + $0xa8] sm:$0xff]
      %v7966 = vld [vmem:[%s3 + $0xb0] sm:$0xff]
      %v7967 = vld [vmem:[%s3 + $0xb8] sm:$0xff]
      %v7968 = vld [vmem:[%s3 + $0xc0] sm:$0xff]
      %v7969 = vld [vmem:[%s3 + $0xc8] sm:$0xff]
      %v7970 = vld [vmem:[%s3 + $0xd0] sm:$0xff]
      %v7971 = vld [vmem:[%s3 + $0xd8] sm:$0xff]
      %v7972 = vld [vmem:[%s3 + $0xe0] sm:$0xff]
      %v7973 = vld [vmem:[%s3 + $0xe8] sm:$0xff]
      %v7974 = vperm.slane %v6133, 0
      %vm7975 = vcmask 588800
      %v7977 = vsel %vm7975, %v7933, 0
      %v7980 = vsel %vm7975, %v7934, 0
      %v7983 = vsel %vm7975, %v7935, 0
      %v7986 = vsel %vm7975, %v7936, 0
      %v7989 = vsel %vm7975, %v7937, 0
      %v7992 = vsel %vm7975, %v7938, 0
      %v7995 = vsel %vm7975, %v7939, 0
      %v7998 = vsel %vm7975, %v7940, 0
      %v8001 = vsel %vm7975, %v7941, 0
      %v8004 = vsel %vm7975, %v7942, 0
      %v8007 = vsel %vm7975, %v7943, 0
      %v8010 = vsel %vm7975, %v7944, 0
      %v8013 = vsel %vm7975, %v7945, 0
      %v8016 = vsel %vm7975, %v7946, 0
      %v8019 = vsel %vm7975, %v7947, 0
      %v8022 = vsel %vm7975, %v7948, 0
      %v8025 = vsel %vm7975, %v7949, 0
      %v8028 = vsel %vm7975, %v7950, 0
      %v8031 = vsel %vm7975, %v7951, 0
      %v8034 = vsel %vm7975, %v7952, 0
      %v8037 = vsel %vm7975, %v7953, 0
      %v8040 = vsel %vm7975, %v7954, 0
      %v8043 = vsel %vm7975, %v7955, 0
      %v8046 = vsel %vm7975, %v7956, 0
      %v8049 = vsel %vm7975, %v7957, 0
      %v8052 = vsel %vm7975, %v7958, 0
      %v8055 = vsel %vm7975, %v7959, 0
      %v8058 = vsel %vm7975, %v7960, 0
      %v8061 = vsel %vm7975, %v7961, 0
      %v8064 = vsel %vm7975, %v7962, 0
      %v8067 = vsel %vm7975, %v7963, 0
      %v8070 = vsel %vm7975, %v7964, 0
      %8072 = vmatpush.msra.mxu0 0.0
      %8073 = vmatpush.msra.mxu0 0.0
      %8074 = vmatpush.msra.mxu0 0.0
      %8075 = vmatpush.msra.mxu0 0.0
      %8076 = vmatpush.msra.mxu0 0.0
      %8077 = vmatpush.msra.mxu0 0.0
      %8078 = vmatpush.msra.mxu0 0.0
      %8079 = vmatpush.msra.mxu0 %v7973
      %8080 = vmatpush.msra.mxu0 %v7972
      %8081 = vmatpush.msra.mxu0 %v7971
      %8082 = vmatpush.msra.mxu0 %v7970
      %8083 = vmatpush.msra.mxu0 %v7969
      %8084 = vmatpush.msra.mxu0 %v7968
      %8085 = vmatpush.msra.mxu0 %v7967
      %8086 = vmatpush.msra.mxu0 %v7966
      %8087 = vmatpush.msra.mxu0 %v7965
      %8088 = vmatmul.f32.gmra.mxu0 %v7977
      %v8089 = vpop.f32.mrf.mxu0
      %v8090 = vadd.f32 %v7974, %v8089
      %8091 = vmatmul.f32.gmra.mxu0 %v7980
      %v8092 = vpop.f32.mrf.mxu0
      %v8093 = vadd.f32 %v7974, %v8092
      %8094 = vmatmul.f32.gmra.mxu0 %v7983
      %v8095 = vpop.f32.mrf.mxu0
      %v8096 = vadd.f32 %v7974, %v8095
      %8097 = vmatmul.f32.gmra.mxu0 %v7986
      %v8098 = vpop.f32.mrf.mxu0
      %v8099 = vadd.f32 %v7974, %v8098
      %8100 = vmatmul.f32.gmra.mxu0 %v7989
      %v8101 = vpop.f32.mrf.mxu0
      %v8102 = vadd.f32 %v7974, %v8101
      %8103 = vmatmul.f32.gmra.mxu0 %v7992
      %v8104 = vpop.f32.mrf.mxu0
      %v8105 = vadd.f32 %v7974, %v8104
      %8106 = vmatmul.f32.gmra.mxu0 %v7995
      %v8107 = vpop.f32.mrf.mxu0
      %v8108 = vadd.f32 %v7974, %v8107
      %8109 = vmatmul.f32.gmra.mxu0 %v7998
      %v8110 = vpop.f32.mrf.mxu0
      %v8111 = vadd.f32 %v7974, %v8110
      %8112 = vmatmul.f32.gmra.mxu0 %v8001
      %v8113 = vpop.f32.mrf.mxu0
      %v8114 = vadd.f32 %v7974, %v8113
      %8115 = vmatmul.f32.gmra.mxu0 %v8004
      %v8116 = vpop.f32.mrf.mxu0
      %v8117 = vadd.f32 %v7974, %v8116
      %8118 = vmatmul.f32.gmra.mxu0 %v8007
      %v8119 = vpop.f32.mrf.mxu0
      %v8120 = vadd.f32 %v7974, %v8119
      %8121 = vmatmul.f32.gmra.mxu0 %v8010
      %v8122 = vpop.f32.mrf.mxu0
      %v8123 = vadd.f32 %v7974, %v8122
      %8124 = vmatmul.f32.gmra.mxu0 %v8013
      %v8125 = vpop.f32.mrf.mxu0
      %v8126 = vadd.f32 %v7974, %v8125
      %8127 = vmatmul.f32.gmra.mxu0 %v8016
      %v8128 = vpop.f32.mrf.mxu0
      %v8129 = vadd.f32 %v7974, %v8128
      %8130 = vmatmul.f32.gmra.mxu0 %v8019
      %v8131 = vpop.f32.mrf.mxu0
      %v8132 = vadd.f32 %v7974, %v8131
      %8133 = vmatmul.f32.gmra.mxu0 %v8022
      %v8134 = vpop.f32.mrf.mxu0
      %v8135 = vadd.f32 %v7974, %v8134
      %8136 = vmatmul.f32.gmra.mxu0 %v8025
      %v8137 = vpop.f32.mrf.mxu0
      %v8138 = vadd.f32 %v7974, %v8137
      %8139 = vmatmul.f32.gmra.mxu0 %v8028
      %v8140 = vpop.f32.mrf.mxu0
      %v8141 = vadd.f32 %v7974, %v8140
      %8142 = vmatmul.f32.gmra.mxu0 %v8031
      %v8143 = vpop.f32.mrf.mxu0
      %v8144 = vadd.f32 %v7974, %v8143
      %8145 = vmatmul.f32.gmra.mxu0 %v8034
      %v8146 = vpop.f32.mrf.mxu0
      %v8147 = vadd.f32 %v7974, %v8146
      %8148 = vmatmul.f32.gmra.mxu0 %v8037
      %v8149 = vpop.f32.mrf.mxu0
      %v8150 = vadd.f32 %v7974, %v8149
      %8151 = vmatmul.f32.gmra.mxu0 %v8040
      %v8152 = vpop.f32.mrf.mxu0
      %v8153 = vadd.f32 %v7974, %v8152
      %8154 = vmatmul.f32.gmra.mxu0 %v8043
      %v8155 = vpop.f32.mrf.mxu0
      %v8156 = vadd.f32 %v7974, %v8155
      %8157 = vmatmul.f32.gmra.mxu0 %v8046
      %v8158 = vpop.f32.mrf.mxu0
      %v8159 = vadd.f32 %v7974, %v8158
      %8160 = vmatmul.f32.gmra.mxu0 %v8049
      %v8161 = vpop.f32.mrf.mxu0
      %v8162 = vadd.f32 %v7974, %v8161
      %8163 = vmatmul.f32.gmra.mxu0 %v8052
      %v8164 = vpop.f32.mrf.mxu0
      %v8165 = vadd.f32 %v7974, %v8164
      %8166 = vmatmul.f32.gmra.mxu0 %v8055
      %v8167 = vpop.f32.mrf.mxu0
      %v8168 = vadd.f32 %v7974, %v8167
      %8169 = vmatmul.f32.gmra.mxu0 %v8058
      %v8170 = vpop.f32.mrf.mxu0
      %v8171 = vadd.f32 %v7974, %v8170
      %8172 = vmatmul.f32.gmra.mxu0 %v8061
      %v8173 = vpop.f32.mrf.mxu0
      %v8174 = vadd.f32 %v7974, %v8173
      %8175 = vmatmul.f32.gmra.mxu0 %v8064
      %v8176 = vpop.f32.mrf.mxu0
      %v8177 = vadd.f32 %v7974, %v8176
      %8178 = vmatmul.f32.gmra.mxu0 %v8067
      %v8179 = vpop.f32.mrf.mxu0
      %v8180 = vadd.f32 %v7974, %v8179
      %8181 = vmatmul.f32.gmra.mxu0 %v8070
      %v8182 = vpop.f32.mrf.mxu0
      %v8183 = vadd.f32 %v7974, %v8182
      %8184 = vdwg.mxu0
      %v8185 = vld [vmem:[%s4 + $0x7] sm:$0x1]
      %v8186 = vld [vmem:[%s4 + $0x8] sm:$0x1]
      %v8187 = vsel %vm252, %v8090, 0.0
      %v8188 = vsel %vm252, %v8093, 0.0
      %v8189 = vadd.f32 %v8187, %v8188
      %v8190 = vsel %vm252, %v8096, 0.0
      %v8191 = vadd.f32 %v8189, %v8190
      %v8192 = vsel %vm252, %v8099, 0.0
      %v8193 = vadd.f32 %v8191, %v8192
      %v8194 = vsel %vm252, %v8102, 0.0
      %v8195 = vadd.f32 %v8193, %v8194
      %v8196 = vsel %vm252, %v8105, 0.0
      %v8197 = vadd.f32 %v8195, %v8196
      %v8198 = vsel %vm252, %v8108, 0.0
      %v8199 = vadd.f32 %v8197, %v8198
      %v8200 = vsel %vm252, %v8111, 0.0
      %v8201 = vadd.f32 %v8199, %v8200
      %v8202 = vsel %vm252, %v8114, 0.0
      %v8203 = vadd.f32 %v8201, %v8202
      %v8204 = vsel %vm252, %v8117, 0.0
      %v8205 = vadd.f32 %v8203, %v8204
      %v8206 = vsel %vm252, %v8120, 0.0
      %v8207 = vadd.f32 %v8205, %v8206
      %v8208 = vsel %vm252, %v8123, 0.0
      %v8209 = vadd.f32 %v8207, %v8208
      %v8210 = vsel %vm252, %v8126, 0.0
      %v8211 = vadd.f32 %v8209, %v8210
      %v8212 = vsel %vm252, %v8129, 0.0
      %v8213 = vadd.f32 %v8211, %v8212
      %v8214 = vsel %vm252, %v8132, 0.0
      %v8215 = vadd.f32 %v8213, %v8214
      %v8216 = vsel %vm252, %v8135, 0.0
      %v8217 = vadd.f32 %v8215, %v8216
      %v8218 = vsel %vm252, %v8138, 0.0
      %v8219 = vadd.f32 %v8217, %v8218
      %v8220 = vsel %vm252, %v8141, 0.0
      %v8221 = vadd.f32 %v8219, %v8220
      %v8222 = vsel %vm252, %v8144, 0.0
      %v8223 = vadd.f32 %v8221, %v8222
      %v8224 = vsel %vm252, %v8147, 0.0
      %v8225 = vadd.f32 %v8223, %v8224
      %v8226 = vsel %vm252, %v8150, 0.0
      %v8227 = vadd.f32 %v8225, %v8226
      %v8228 = vsel %vm252, %v8153, 0.0
      %v8229 = vadd.f32 %v8227, %v8228
      %v8230 = vsel %vm252, %v8156, 0.0
      %v8231 = vadd.f32 %v8229, %v8230
      %v8232 = vsel %vm252, %v8159, 0.0
      %v8233 = vadd.f32 %v8231, %v8232
      %v8234 = vsel %vm252, %v8162, 0.0
      %v8235 = vadd.f32 %v8233, %v8234
      %v8236 = vsel %vm252, %v8165, 0.0
      %v8237 = vadd.f32 %v8235, %v8236
      %v8238 = vsel %vm252, %v8168, 0.0
      %v8239 = vadd.f32 %v8237, %v8238
      %v8240 = vsel %vm252, %v8171, 0.0
      %v8241 = vadd.f32 %v8239, %v8240
      %v8242 = vsel %vm252, %v8174, 0.0
      %v8243 = vadd.f32 %v8241, %v8242
      %v8244 = vsel %vm252, %v8177, 0.0
      %v8245 = vadd.f32 %v8243, %v8244
      %v8246 = vsel %vm252, %v8180, 0.0
      %v8247 = vadd.f32 %v8245, %v8246
      %v8248 = vsel %vm252, %v8183, 0.0
      %v8249 = vadd.f32 %v8247, %v8248
      %8250 = vadd.xlane.f32.xlu0 %v8249
      %v8251 = vpop.xlane.xlu0 %8250
      %v8252 = vrot.slane %v8251, 4
      %v8253 = vadd.f32 %v8251, %v8252
      %v8254 = vrot.slane %v8253, 2
      %v8255 = vadd.f32 %v8253, %v8254
      %v8256 = vrot.slane %v8255, 1
      %v8257 = vadd.f32 %v8255, %v8256
      %s8258 = vtos %v8257
      %v8259 = vrcp.pop 2048.0
      %v8260 = vmul.f32 2048.0, %v8259
      %v8261 = vsub.f32 1.0, %v8260
      %v8262 = vmul.f32 %v8259, %v8261
      %v8263 = vadd.f32 %v8259, %v8262
      %vm8264 = vweird.f32 %v8259
      %v8265 = vsel %vm8264, %v8259, %v8263
      %s8266 = vtos %v8265
      %s8267 = smul.f32 %s8258, %s8266
      %v8268 = vstv %s8267
      %v8269 = vsub.f32 %v8090, %v8268
      %v8270 = vsub.f32 %v8093, %v8268
      %v8271 = vsub.f32 %v8096, %v8268
      %v8272 = vsub.f32 %v8099, %v8268
      %v8273 = vsub.f32 %v8102, %v8268
      %v8274 = vsub.f32 %v8105, %v8268
      %v8275 = vsub.f32 %v8108, %v8268
      %v8276 = vsub.f32 %v8111, %v8268
      %v8277 = vsub.f32 %v8114, %v8268
      %v8278 = vsub.f32 %v8117, %v8268
      %v8279 = vsub.f32 %v8120, %v8268
      %v8280 = vsub.f32 %v8123, %v8268
      %v8281 = vsub.f32 %v8126, %v8268
      %v8282 = vsub.f32 %v8129, %v8268
      %v8283 = vsub.f32 %v8132, %v8268
      %v8284 = vsub.f32 %v8135, %v8268
      %v8285 = vsub.f32 %v8138, %v8268
      %v8286 = vsub.f32 %v8141, %v8268
      %v8287 = vsub.f32 %v8144, %v8268
      %v8288 = vsub.f32 %v8147, %v8268
      %v8289 = vsub.f32 %v8150, %v8268
      %v8290 = vsub.f32 %v8153, %v8268
      %v8291 = vsub.f32 %v8156, %v8268
      %v8292 = vsub.f32 %v8159, %v8268
      %v8293 = vsub.f32 %v8162, %v8268
      %v8294 = vsub.f32 %v8165, %v8268
      %v8295 = vsub.f32 %v8168, %v8268
      %v8296 = vsub.f32 %v8171, %v8268
      %v8297 = vsub.f32 %v8174, %v8268
      %v8298 = vsub.f32 %v8177, %v8268
      %v8299 = vsub.f32 %v8180, %v8268
      %v8300 = vsub.f32 %v8183, %v8268
      %v8301 = vmul.f32 %v8269, %v8269
      %v8302 = vmul.f32 %v8270, %v8270
      %v8303 = vmul.f32 %v8271, %v8271
      %v8304 = vmul.f32 %v8272, %v8272
      %v8305 = vmul.f32 %v8273, %v8273
      %v8306 = vmul.f32 %v8274, %v8274
      %v8307 = vmul.f32 %v8275, %v8275
      %v8308 = vmul.f32 %v8276, %v8276
      %v8309 = vmul.f32 %v8277, %v8277
      %v8310 = vmul.f32 %v8278, %v8278
      %v8311 = vmul.f32 %v8279, %v8279
      %v8312 = vmul.f32 %v8280, %v8280
      %v8313 = vmul.f32 %v8281, %v8281
      %v8314 = vmul.f32 %v8282, %v8282
      %v8315 = vmul.f32 %v8283, %v8283
      %v8316 = vmul.f32 %v8284, %v8284
      %v8317 = vmul.f32 %v8285, %v8285
      %v8318 = vmul.f32 %v8286, %v8286
      %v8319 = vmul.f32 %v8287, %v8287
      %v8320 = vmul.f32 %v8288, %v8288
      %v8321 = vmul.f32 %v8289, %v8289
      %v8322 = vmul.f32 %v8290, %v8290
      %v8323 = vmul.f32 %v8291, %v8291
      %v8324 = vmul.f32 %v8292, %v8292
      %v8325 = vmul.f32 %v8293, %v8293
      %v8326 = vmul.f32 %v8294, %v8294
      %v8327 = vmul.f32 %v8295, %v8295
      %v8328 = vmul.f32 %v8296, %v8296
      %v8329 = vmul.f32 %v8297, %v8297
      %v8330 = vmul.f32 %v8298, %v8298
      %v8331 = vmul.f32 %v8299, %v8299
      %v8332 = vmul.f32 %v8300, %v8300
      %v8333 = vsel %vm252, %v8301, 0.0
      %v8334 = vsel %vm252, %v8302, 0.0
      %v8335 = vadd.f32 %v8333, %v8334
      %v8336 = vsel %vm252, %v8303, 0.0
      %v8337 = vadd.f32 %v8335, %v8336
      %v8338 = vsel %vm252, %v8304, 0.0
      %v8339 = vadd.f32 %v8337, %v8338
      %v8340 = vsel %vm252, %v8305, 0.0
      %v8341 = vadd.f32 %v8339, %v8340
      %v8342 = vsel %vm252, %v8306, 0.0
      %v8343 = vadd.f32 %v8341, %v8342
      %v8344 = vsel %vm252, %v8307, 0.0
      %v8345 = vadd.f32 %v8343, %v8344
      %v8346 = vsel %vm252, %v8308, 0.0
      %v8347 = vadd.f32 %v8345, %v8346
      %v8348 = vsel %vm252, %v8309, 0.0
      %v8349 = vadd.f32 %v8347, %v8348
      %v8350 = vsel %vm252, %v8310, 0.0
      %v8351 = vadd.f32 %v8349, %v8350
      %v8352 = vsel %vm252, %v8311, 0.0
      %v8353 = vadd.f32 %v8351, %v8352
      %v8354 = vsel %vm252, %v8312, 0.0
      %v8355 = vadd.f32 %v8353, %v8354
      %v8356 = vsel %vm252, %v8313, 0.0
      %v8357 = vadd.f32 %v8355, %v8356
      %v8358 = vsel %vm252, %v8314, 0.0
      %v8359 = vadd.f32 %v8357, %v8358
      %v8360 = vsel %vm252, %v8315, 0.0
      %v8361 = vadd.f32 %v8359, %v8360
      %v8362 = vsel %vm252, %v8316, 0.0
      %v8363 = vadd.f32 %v8361, %v8362
      %v8364 = vsel %vm252, %v8317, 0.0
      %v8365 = vadd.f32 %v8363, %v8364
      %v8366 = vsel %vm252, %v8318, 0.0
      %v8367 = vadd.f32 %v8365, %v8366
      %v8368 = vsel %vm252, %v8319, 0.0
      %v8369 = vadd.f32 %v8367, %v8368
      %v8370 = vsel %vm252, %v8320, 0.0
      %v8371 = vadd.f32 %v8369, %v8370
      %v8372 = vsel %vm252, %v8321, 0.0
      %v8373 = vadd.f32 %v8371, %v8372
      %v8374 = vsel %vm252, %v8322, 0.0
      %v8375 = vadd.f32 %v8373, %v8374
      %v8376 = vsel %vm252, %v8323, 0.0
      %v8377 = vadd.f32 %v8375, %v8376
      %v8378 = vsel %vm252, %v8324, 0.0
      %v8379 = vadd.f32 %v8377, %v8378
      %v8380 = vsel %vm252, %v8325, 0.0
      %v8381 = vadd.f32 %v8379, %v8380
      %v8382 = vsel %vm252, %v8326, 0.0
      %v8383 = vadd.f32 %v8381, %v8382
      %v8384 = vsel %vm252, %v8327, 0.0
      %v8385 = vadd.f32 %v8383, %v8384
      %v8386 = vsel %vm252, %v8328, 0.0
      %v8387 = vadd.f32 %v8385, %v8386
      %v8388 = vsel %vm252, %v8329, 0.0
      %v8389 = vadd.f32 %v8387, %v8388
      %v8390 = vsel %vm252, %v8330, 0.0
      %v8391 = vadd.f32 %v8389, %v8390
      %v8392 = vsel %vm252, %v8331, 0.0
      %v8393 = vadd.f32 %v8391, %v8392
      %v8394 = vsel %vm252, %v8332, 0.0
      %v8395 = vadd.f32 %v8393, %v8394
      %8396 = vadd.xlane.f32.xlu0 %v8395
      %v8397 = vpop.xlane.xlu0 %8396
      %v8398 = vrot.slane %v8397, 4
      %v8399 = vadd.f32 %v8397, %v8398
      %v8400 = vrot.slane %v8399, 2
      %v8401 = vadd.f32 %v8399, %v8400
      %v8402 = vrot.slane %v8401, 1
      %v8403 = vadd.f32 %v8401, %v8402
      %s8404 = vtos %v8403
      %v8405 = vrcp.pop 2048.0
      %v8406 = vmul.f32 2048.0, %v8405
      %v8407 = vsub.f32 1.0, %v8406
      %v8408 = vmul.f32 %v8405, %v8407
      %v8409 = vadd.f32 %v8405, %v8408
      %vm8410 = vweird.f32 %v8405
      %v8411 = vsel %vm8410, %v8405, %v8409
      %s8412 = vtos %v8411
      %s8413 = smul.f32 %s8404, %s8412
      %s8414 = sadd.f32 %s8413, 1e-05
      %v8415 = vstv %s8414
      %v8416 = vrsqrt.pop %v8415
      %v8417 = vmul.f32 %v8416, %v8415
      %v8418 = vmul.f32 %v8417, %v8416
      %v8419 = vmul.f32 0.5, %v8418
      %v8420 = vsub.f32 1.5, %v8419
      %v8421 = vmul.f32 %v8416, %v8420
      %vm8422 = vweird.f32 %v8415
      %vm8423 = vweird.f32 %v8416
      %vm8424 = vmor %vm8422, %vm8423
      %v8425 = vsel %vm8424, %v8416, %v8421
      %s8426 = vtos %v8425
      %v8427 = vstv %s8426
      %v8428 = vmul.f32 %v8269, %v8427
      %v8429 = vmul.f32 %v8270, %v8427
      %v8430 = vmul.f32 %v8271, %v8427
      %v8431 = vmul.f32 %v8272, %v8427
      %v8432 = vmul.f32 %v8273, %v8427
      %v8433 = vmul.f32 %v8274, %v8427
      %v8434 = vmul.f32 %v8275, %v8427
      %v8435 = vmul.f32 %v8276, %v8427
      %v8436 = vmul.f32 %v8277, %v8427
      %v8437 = vmul.f32 %v8278, %v8427
      %v8438 = vmul.f32 %v8279, %v8427
      %v8439 = vmul.f32 %v8280, %v8427
      %v8440 = vmul.f32 %v8281, %v8427
      %v8441 = vmul.f32 %v8282, %v8427
      %v8442 = vmul.f32 %v8283, %v8427
      %v8443 = vmul.f32 %v8284, %v8427
      %v8444 = vmul.f32 %v8285, %v8427
      %v8445 = vmul.f32 %v8286, %v8427
      %v8446 = vmul.f32 %v8287, %v8427
      %v8447 = vmul.f32 %v8288, %v8427
      %v8448 = vmul.f32 %v8289, %v8427
      %v8449 = vmul.f32 %v8290, %v8427
      %v8450 = vmul.f32 %v8291, %v8427
      %v8451 = vmul.f32 %v8292, %v8427
      %v8452 = vmul.f32 %v8293, %v8427
      %v8453 = vmul.f32 %v8294, %v8427
      %v8454 = vmul.f32 %v8295, %v8427
      %v8455 = vmul.f32 %v8296, %v8427
      %v8456 = vmul.f32 %v8297, %v8427
      %v8457 = vmul.f32 %v8298, %v8427
      %v8458 = vmul.f32 %v8299, %v8427
      %v8459 = vmul.f32 %v8300, %v8427
      %v8460 = vperm.slane %v8185, 0
      %v8461 = vmul.f32 %v8428, %v8460
      %v8462 = vmul.f32 %v8429, %v8460
      %v8463 = vmul.f32 %v8430, %v8460
      %v8464 = vmul.f32 %v8431, %v8460
      %v8465 = vmul.f32 %v8432, %v8460
      %v8466 = vmul.f32 %v8433, %v8460
      %v8467 = vmul.f32 %v8434, %v8460
      %v8468 = vmul.f32 %v8435, %v8460
      %v8469 = vmul.f32 %v8436, %v8460
      %v8470 = vmul.f32 %v8437, %v8460
      %v8471 = vmul.f32 %v8438, %v8460
      %v8472 = vmul.f32 %v8439, %v8460
      %v8473 = vmul.f32 %v8440, %v8460
      %v8474 = vmul.f32 %v8441, %v8460
      %v8475 = vmul.f32 %v8442, %v8460
      %v8476 = vmul.f32 %v8443, %v8460
      %v8477 = vmul.f32 %v8444, %v8460
      %v8478 = vmul.f32 %v8445, %v8460
      %v8479 = vmul.f32 %v8446, %v8460
      %v8480 = vmul.f32 %v8447, %v8460
      %v8481 = vmul.f32 %v8448, %v8460
      %v8482 = vmul.f32 %v8449, %v8460
      %v8483 = vmul.f32 %v8450, %v8460
      %v8484 = vmul.f32 %v8451, %v8460
      %v8485 = vmul.f32 %v8452, %v8460
      %v8486 = vmul.f32 %v8453, %v8460
      %v8487 = vmul.f32 %v8454, %v8460
      %v8488 = vmul.f32 %v8455, %v8460
      %v8489 = vmul.f32 %v8456, %v8460
      %v8490 = vmul.f32 %v8457, %v8460
      %v8491 = vmul.f32 %v8458, %v8460
      %v8492 = vmul.f32 %v8459, %v8460
      %v8493 = vperm.slane %v8186, 0
      %v8494 = vadd.f32 %v8461, %v8493
      %v8495 = vadd.f32 %v8462, %v8493
      %v8496 = vadd.f32 %v8463, %v8493
      %v8497 = vadd.f32 %v8464, %v8493
      %v8498 = vadd.f32 %v8465, %v8493
      %v8499 = vadd.f32 %v8466, %v8493
      %v8500 = vadd.f32 %v8467, %v8493
      %v8501 = vadd.f32 %v8468, %v8493
      %v8502 = vadd.f32 %v8469, %v8493
      %v8503 = vadd.f32 %v8470, %v8493
      %v8504 = vadd.f32 %v8471, %v8493
      %v8505 = vadd.f32 %v8472, %v8493
      %v8506 = vadd.f32 %v8473, %v8493
      %v8507 = vadd.f32 %v8474, %v8493
      %v8508 = vadd.f32 %v8475, %v8493
      %v8509 = vadd.f32 %v8476, %v8493
      %v8510 = vadd.f32 %v8477, %v8493
      %v8511 = vadd.f32 %v8478, %v8493
      %v8512 = vadd.f32 %v8479, %v8493
      %v8513 = vadd.f32 %v8480, %v8493
      %v8514 = vadd.f32 %v8481, %v8493
      %v8515 = vadd.f32 %v8482, %v8493
      %v8516 = vadd.f32 %v8483, %v8493
      %v8517 = vadd.f32 %v8484, %v8493
      %v8518 = vadd.f32 %v8485, %v8493
      %v8519 = vadd.f32 %v8486, %v8493
      %v8520 = vadd.f32 %v8487, %v8493
      %v8521 = vadd.f32 %v8488, %v8493
      %v8522 = vadd.f32 %v8489, %v8493
      %v8523 = vadd.f32 %v8490, %v8493
      %v8524 = vadd.f32 %v8491, %v8493
      %v8525 = vadd.f32 %v8492, %v8493
      %v8526 = vld [vmem:[#allocation2 + $0x18] sm:$0xff]
      %v8527 = vld [vmem:[#allocation2 + $0x20] sm:$0xff]
      %v8528 = vld [vmem:[#allocation2 + $0x28] sm:$0xff]
      %v8529 = vld [vmem:[#allocation2 + $0x30] sm:$0xff]
      %v8530 = vld [vmem:[#allocation2 + $0x38] sm:$0xff]
      %v8531 = vld [vmem:[#allocation2 + $0x40] sm:$0xff]
      %v8532 = vld [vmem:[#allocation2 + $0x48] sm:$0xff]
      %v8533 = vld [vmem:[#allocation2 + $0x50] sm:$0xff]
      %v8534 = vld [vmem:[#allocation2 + $0x58] sm:$0xff]
      %v8535 = vld [vmem:[#allocation2 + $0x60] sm:$0xff]
      %v8536 = vld [vmem:[#allocation2 + $0x68] sm:$0xff]
      %v8537 = vld [vmem:[#allocation2 + $0x70] sm:$0xff]
      %v8538 = vld [vmem:[#allocation2 + $0x78] sm:$0xff]
      %v8539 = vld [vmem:[#allocation2 + $0x80] sm:$0xff]
      %v8540 = vld [vmem:[#allocation2 + $0x88] sm:$0xff]
      %v8541 = vld [vmem:[#allocation2 + $0x90] sm:$0xff]
      %v8542 = vld [vmem:[#allocation2 + $0x98] sm:$0xff]
      %v8543 = vld [vmem:[#allocation2 + $0xa0] sm:$0xff]
      %v8544 = vld [vmem:[#allocation2 + $0xa8] sm:$0xff]
      %v8545 = vld [vmem:[#allocation2 + $0xb0] sm:$0xff]
      %v8546 = vld [vmem:[#allocation2 + $0xb8] sm:$0xff]
      %v8547 = vld [vmem:[#allocation2 + $0xc0] sm:$0xff]
      %v8548 = vld [vmem:[#allocation2 + $0xc8] sm:$0xff]
      %v8549 = vld [vmem:[#allocation2 + $0xd0] sm:$0xff]
      %v8550 = vld [vmem:[#allocation2 + $0xd8] sm:$0xff]
      %v8551 = vld [vmem:[#allocation2 + $0xe0] sm:$0xff]
      %v8552 = vld [vmem:[#allocation2 + $0xe8] sm:$0xff]
      %v8553 = vld [vmem:[#allocation2 + $0xf0] sm:$0xff]
      %v8554 = vld [vmem:[#allocation2 + $0xf8] sm:$0xff]
      %v8555 = vld [vmem:[#allocation2 + $0x100] sm:$0xff]
      %v8556 = vld [vmem:[#allocation2 + $0x108] sm:$0xff]
      %v8557 = vld [vmem:[#allocation2 + $0x110] sm:$0xff]
      %v8558 = vld [vmem:[%s3 + $0xf0] sm:$0xff]
      %v8559 = vld [vmem:[%s3 + $0xf8] sm:$0xff]
      %v8560 = vld [vmem:[%s4 + $0x9] sm:$0x1]
      %v8561 = vperm.slane %v8560, 0
      %v8563 = vsel %vm245, %v8526, 0
      %v8566 = vsel %vm245, %v8527, 0
      %v8569 = vsel %vm245, %v8528, 0
      %v8572 = vsel %vm245, %v8529, 0
      %v8575 = vsel %vm245, %v8530, 0
      %v8578 = vsel %vm245, %v8531, 0
      %v8581 = vsel %vm245, %v8532, 0
      %v8584 = vsel %vm245, %v8533, 0
      %v8587 = vsel %vm245, %v8534, 0
      %v8590 = vsel %vm245, %v8535, 0
      %v8593 = vsel %vm245, %v8536, 0
      %v8596 = vsel %vm245, %v8537, 0
      %v8599 = vsel %vm245, %v8538, 0
      %v8602 = vsel %vm245, %v8539, 0
      %v8605 = vsel %vm245, %v8540, 0
      %v8608 = vsel %vm245, %v8541, 0
      %v8611 = vsel %vm245, %v8542, 0
      %v8614 = vsel %vm245, %v8543, 0
      %v8617 = vsel %vm245, %v8544, 0
      %v8620 = vsel %vm245, %v8545, 0
      %v8623 = vsel %vm245, %v8546, 0
      %v8626 = vsel %vm245, %v8547, 0
      %v8629 = vsel %vm245, %v8548, 0
      %v8632 = vsel %vm245, %v8549, 0
      %v8635 = vsel %vm245, %v8550, 0
      %v8638 = vsel %vm245, %v8551, 0
      %v8641 = vsel %vm245, %v8552, 0
      %v8644 = vsel %vm245, %v8553, 0
      %v8647 = vsel %vm245, %v8554, 0
      %v8650 = vsel %vm245, %v8555, 0
      %v8653 = vsel %vm245, %v8556, 0
      %v8656 = vsel %vm245, %v8557, 0
      %8658 = vmatpush.msra.mxu0 0.0
      %8659 = vmatpush.msra.mxu0 0.0
      %8660 = vmatpush.msra.mxu0 0.0
      %8661 = vmatpush.msra.mxu0 0.0
      %8662 = vmatpush.msra.mxu0 0.0
      %8663 = vmatpush.msra.mxu0 0.0
      %8664 = vmatpush.msra.mxu0 0.0
      %8665 = vmatpush.msra.mxu0 0.0
      %8666 = vmatpush.msra.mxu0 0.0
      %8667 = vmatpush.msra.mxu0 0.0
      %8668 = vmatpush.msra.mxu0 0.0
      %8669 = vmatpush.msra.mxu0 0.0
      %8670 = vmatpush.msra.mxu0 0.0
      %8671 = vmatpush.msra.mxu0 0.0
      %8672 = vmatpush.msra.mxu0 %v8559
      %8673 = vmatpush.msra.mxu0 %v8558
      %8674 = vmatmul.f32.gmra.mxu0 %v8563
      %v8675 = vpop.f32.mrf.mxu0
      %v8676 = vadd.f32 %v8561, %v8675
      %8677 = vmatmul.f32.gmra.mxu0 %v8566
      %v8678 = vpop.f32.mrf.mxu0
      %v8679 = vadd.f32 %v8561, %v8678
      %8680 = vmatmul.f32.gmra.mxu0 %v8569
      %v8681 = vpop.f32.mrf.mxu0
      %v8682 = vadd.f32 %v8561, %v8681
      %8683 = vmatmul.f32.gmra.mxu0 %v8572
      %v8684 = vpop.f32.mrf.mxu0
      %v8685 = vadd.f32 %v8561, %v8684
      %8686 = vmatmul.f32.gmra.mxu0 %v8575
      %v8687 = vpop.f32.mrf.mxu0
      %v8688 = vadd.f32 %v8561, %v8687
      %8689 = vmatmul.f32.gmra.mxu0 %v8578
      %v8690 = vpop.f32.mrf.mxu0
      %v8691 = vadd.f32 %v8561, %v8690
      %8692 = vmatmul.f32.gmra.mxu0 %v8581
      %v8693 = vpop.f32.mrf.mxu0
      %v8694 = vadd.f32 %v8561, %v8693
      %8695 = vmatmul.f32.gmra.mxu0 %v8584
      %v8696 = vpop.f32.mrf.mxu0
      %v8697 = vadd.f32 %v8561, %v8696
      %8698 = vmatmul.f32.gmra.mxu0 %v8587
      %v8699 = vpop.f32.mrf.mxu0
      %v8700 = vadd.f32 %v8561, %v8699
      %8701 = vmatmul.f32.gmra.mxu0 %v8590
      %v8702 = vpop.f32.mrf.mxu0
      %v8703 = vadd.f32 %v8561, %v8702
      %8704 = vmatmul.f32.gmra.mxu0 %v8593
      %v8705 = vpop.f32.mrf.mxu0
      %v8706 = vadd.f32 %v8561, %v8705
      %8707 = vmatmul.f32.gmra.mxu0 %v8596
      %v8708 = vpop.f32.mrf.mxu0
      %v8709 = vadd.f32 %v8561, %v8708
      %8710 = vmatmul.f32.gmra.mxu0 %v8599
      %v8711 = vpop.f32.mrf.mxu0
      %v8712 = vadd.f32 %v8561, %v8711
      %8713 = vmatmul.f32.gmra.mxu0 %v8602
      %v8714 = vpop.f32.mrf.mxu0
      %v8715 = vadd.f32 %v8561, %v8714
      %8716 = vmatmul.f32.gmra.mxu0 %v8605
      %v8717 = vpop.f32.mrf.mxu0
      %v8718 = vadd.f32 %v8561, %v8717
      %8719 = vmatmul.f32.gmra.mxu0 %v8608
      %v8720 = vpop.f32.mrf.mxu0
      %v8721 = vadd.f32 %v8561, %v8720
      %8722 = vmatmul.f32.gmra.mxu0 %v8611
      %v8723 = vpop.f32.mrf.mxu0
      %v8724 = vadd.f32 %v8561, %v8723
      %8725 = vmatmul.f32.gmra.mxu0 %v8614
      %v8726 = vpop.f32.mrf.mxu0
      %v8727 = vadd.f32 %v8561, %v8726
      %8728 = vmatmul.f32.gmra.mxu0 %v8617
      %v8729 = vpop.f32.mrf.mxu0
      %v8730 = vadd.f32 %v8561, %v8729
      %8731 = vmatmul.f32.gmra.mxu0 %v8620
      %v8732 = vpop.f32.mrf.mxu0
      %v8733 = vadd.f32 %v8561, %v8732
      %8734 = vmatmul.f32.gmra.mxu0 %v8623
      %v8735 = vpop.f32.mrf.mxu0
      %v8736 = vadd.f32 %v8561, %v8735
      %8737 = vmatmul.f32.gmra.mxu0 %v8626
      %v8738 = vpop.f32.mrf.mxu0
      %v8739 = vadd.f32 %v8561, %v8738
      %8740 = vmatmul.f32.gmra.mxu0 %v8629
      %v8741 = vpop.f32.mrf.mxu0
      %v8742 = vadd.f32 %v8561, %v8741
      %8743 = vmatmul.f32.gmra.mxu0 %v8632
      %v8744 = vpop.f32.mrf.mxu0
      %v8745 = vadd.f32 %v8561, %v8744
      %8746 = vmatmul.f32.gmra.mxu0 %v8635
      %v8747 = vpop.f32.mrf.mxu0
      %v8748 = vadd.f32 %v8561, %v8747
      %8749 = vmatmul.f32.gmra.mxu0 %v8638
      %v8750 = vpop.f32.mrf.mxu0
      %v8751 = vadd.f32 %v8561, %v8750
      %8752 = vmatmul.f32.gmra.mxu0 %v8641
      %v8753 = vpop.f32.mrf.mxu0
      %v8754 = vadd.f32 %v8561, %v8753
      %8755 = vmatmul.f32.gmra.mxu0 %v8644
      %v8756 = vpop.f32.mrf.mxu0
      %v8757 = vadd.f32 %v8561, %v8756
      %8758 = vmatmul.f32.gmra.mxu0 %v8647
      %v8759 = vpop.f32.mrf.mxu0
      %v8760 = vadd.f32 %v8561, %v8759
      %8761 = vmatmul.f32.gmra.mxu0 %v8650
      %v8762 = vpop.f32.mrf.mxu0
      %v8763 = vadd.f32 %v8561, %v8762
      %8764 = vmatmul.f32.gmra.mxu0 %v8653
      %v8765 = vpop.f32.mrf.mxu0
      %v8766 = vadd.f32 %v8561, %v8765
      %8767 = vmatmul.f32.gmra.mxu0 %v8656
      %v8768 = vpop.f32.mrf.mxu0
      %v8769 = vadd.f32 %v8561, %v8768
      %8770 = vdwg.mxu0
      %v8771 = vadd.f32 %v8494, %v8676
      %v8772 = vadd.f32 %v8495, %v8679
      %v8773 = vadd.f32 %v8496, %v8682
      %v8774 = vadd.f32 %v8497, %v8685
      %v8775 = vadd.f32 %v8498, %v8688
      %v8776 = vadd.f32 %v8499, %v8691
      %v8777 = vadd.f32 %v8500, %v8694
      %v8778 = vadd.f32 %v8501, %v8697
      %v8779 = vadd.f32 %v8502, %v8700
      %v8780 = vadd.f32 %v8503, %v8703
      %v8781 = vadd.f32 %v8504, %v8706
      %v8782 = vadd.f32 %v8505, %v8709
      %v8783 = vadd.f32 %v8506, %v8712
      %v8784 = vadd.f32 %v8507, %v8715
      %v8785 = vadd.f32 %v8508, %v8718
      %v8786 = vadd.f32 %v8509, %v8721
      %v8787 = vadd.f32 %v8510, %v8724
      %v8788 = vadd.f32 %v8511, %v8727
      %v8789 = vadd.f32 %v8512, %v8730
      %v8790 = vadd.f32 %v8513, %v8733
      %v8791 = vadd.f32 %v8514, %v8736
      %v8792 = vadd.f32 %v8515, %v8739
      %v8793 = vadd.f32 %v8516, %v8742
      %v8794 = vadd.f32 %v8517, %v8745
      %v8795 = vadd.f32 %v8518, %v8748
      %v8796 = vadd.f32 %v8519, %v8751
      %v8797 = vadd.f32 %v8520, %v8754
      %v8798 = vadd.f32 %v8521, %v8757
      %v8799 = vadd.f32 %v8522, %v8760
      %v8800 = vadd.f32 %v8523, %v8763
      %v8801 = vadd.f32 %v8524, %v8766
      %v8802 = vadd.f32 %v8525, %v8769
      %v8803 = vmax.f32 %v8771, 0.0
      %v8804 = vmax.f32 %v8772, 0.0
      %v8805 = vmax.f32 %v8773, 0.0
      %v8806 = vmax.f32 %v8774, 0.0
      %v8807 = vmax.f32 %v8775, 0.0
      %v8808 = vmax.f32 %v8776, 0.0
      %v8809 = vmax.f32 %v8777, 0.0
      %v8810 = vmax.f32 %v8778, 0.0
      %v8811 = vmax.f32 %v8779, 0.0
      %v8812 = vmax.f32 %v8780, 0.0
      %v8813 = vmax.f32 %v8781, 0.0
      %v8814 = vmax.f32 %v8782, 0.0
      %v8815 = vmax.f32 %v8783, 0.0
      %v8816 = vmax.f32 %v8784, 0.0
      %v8817 = vmax.f32 %v8785, 0.0
      %v8818 = vmax.f32 %v8786, 0.0
      %v8819 = vmax.f32 %v8787, 0.0
      %v8820 = vmax.f32 %v8788, 0.0
      %v8821 = vmax.f32 %v8789, 0.0
      %v8822 = vmax.f32 %v8790, 0.0
      %v8823 = vmax.f32 %v8791, 0.0
      %v8824 = vmax.f32 %v8792, 0.0
      %v8825 = vmax.f32 %v8793, 0.0
      %v8826 = vmax.f32 %v8794, 0.0
      %v8827 = vmax.f32 %v8795, 0.0
      %v8828 = vmax.f32 %v8796, 0.0
      %v8829 = vmax.f32 %v8797, 0.0
      %v8830 = vmax.f32 %v8798, 0.0
      %v8831 = vmax.f32 %v8799, 0.0
      %v8832 = vmax.f32 %v8800, 0.0
      %v8833 = vmax.f32 %v8801, 0.0
      %v8834 = vmax.f32 %v8802, 0.0
      %8835 = vst.msk [vmem:[%s244] sm:$0xff] %vm252, %v8803
      %8836 = vst.msk [vmem:[%s244 + $0x8] sm:$0xff] %vm252, %v8804
      %8837 = vst.msk [vmem:[%s244 + $0x10] sm:$0xff] %vm252, %v8805
      %8838 = vst.msk [vmem:[%s244 + $0x18] sm:$0xff] %vm252, %v8806
      %8839 = vst.msk [vmem:[%s244 + $0x20] sm:$0xff] %vm252, %v8807
      %8840 = vst.msk [vmem:[%s244 + $0x28] sm:$0xff] %vm252, %v8808
      %8841 = vst.msk [vmem:[%s244 + $0x30] sm:$0xff] %vm252, %v8809
      %8842 = vst.msk [vmem:[%s244 + $0x38] sm:$0xff] %vm252, %v8810
      %8843 = vst.msk [vmem:[%s244 + $0x40] sm:$0xff] %vm252, %v8811
      %8844 = vst.msk [vmem:[%s244 + $0x48] sm:$0xff] %vm252, %v8812
      %8845 = vst.msk [vmem:[%s244 + $0x50] sm:$0xff] %vm252, %v8813
      %8846 = vst.msk [vmem:[%s244 + $0x58] sm:$0xff] %vm252, %v8814
      %8847 = vst.msk [vmem:[%s244 + $0x60] sm:$0xff] %vm252, %v8815
      %8848 = vst.msk [vmem:[%s244 + $0x68] sm:$0xff] %vm252, %v8816
      %8849 = vst.msk [vmem:[%s244 + $0x70] sm:$0xff] %vm252, %v8817
      %8850 = vst.msk [vmem:[%s244 + $0x78] sm:$0xff] %vm252, %v8818
      %8851 = vst.msk [vmem:[%s244 + $0x80] sm:$0xff] %vm252, %v8819
      %8852 = vst.msk [vmem:[%s244 + $0x88] sm:$0xff] %vm252, %v8820
      %8853 = vst.msk [vmem:[%s244 + $0x90] sm:$0xff] %vm252, %v8821
      %8854 = vst.msk [vmem:[%s244 + $0x98] sm:$0xff] %vm252, %v8822
      %8855 = vst.msk [vmem:[%s244 + $0xa0] sm:$0xff] %vm252, %v8823
      %8856 = vst.msk [vmem:[%s244 + $0xa8] sm:$0xff] %vm252, %v8824
      %8857 = vst.msk [vmem:[%s244 + $0xb0] sm:$0xff] %vm252, %v8825
      %8858 = vst.msk [vmem:[%s244 + $0xb8] sm:$0xff] %vm252, %v8826
      %8859 = vst.msk [vmem:[%s244 + $0xc0] sm:$0xff] %vm252, %v8827
      %8860 = vst.msk [vmem:[%s244 + $0xc8] sm:$0xff] %vm252, %v8828
      %8861 = vst.msk [vmem:[%s244 + $0xd0] sm:$0xff] %vm252, %v8829
      %8862 = vst.msk [vmem:[%s244 + $0xd8] sm:$0xff] %vm252, %v8830
      %8863 = vst.msk [vmem:[%s244 + $0xe0] sm:$0xff] %vm252, %v8831
      %8864 = vst.msk [vmem:[%s244 + $0xe8] sm:$0xff] %vm252, %v8832
      %8865 = vst.msk [vmem:[%s244 + $0xf0] sm:$0xff] %vm252, %v8833
      %8866 = vst.msk [vmem:[%s244 + $0xf8] sm:$0xff] %vm252, %v8834
      %p8867 = scmp.lt.s32.totalorder %s16, 1
      %s8868 = scalar_select %p8867, %s16, 1
      %s8869 = smul.addr %s8868, 32
      %s8870 = smul.addr %s8869, 8
      %s8871 = scalar_lea.vmem %s5, %s8870
      // Predicated region
      $region41: #{tpu_custom_call.1} parent=39 // pred_check
        %p8872 = pneg %p149
      $region42: #{tpu_custom_call.1} parent=39 // pred_check_branch
        %8874 = sbr.rel (%p8872) target = $region44
      $region43: #{tpu_custom_call.1} parent=39 // pred_region
        _
      $region44: #{tpu_custom_call.1} parent=39 // pred_fallthru
        _
    $region40: #{tpu_custom_call.1} parent=5 // pred_fallthru
      _
    %p8875 = scmp.le.s32.totalorder 2, %s11
    // Predicated region
    $region45: #{tpu_custom_call.1} parent=5 // pred_check
      %p8876 = pneg %p8875
    $region46: #{tpu_custom_call.1} parent=5 // pred_check_branch
      %8878 = sbr.rel (%p8876) target = $region48
    $region47: #{tpu_custom_call.1} parent=5 // pred_region
      %s8879 = ssub.s32 %s11, 2
      // Predicated region
      $region49: #{tpu_custom_call.1} parent=47 // pred_check
        %p8880 = pneg %p155
      $region50: #{tpu_custom_call.1} parent=47 // pred_check_branch
        %8882 = sbr.rel (%p8880) target = $region52
      $region51: #{tpu_custom_call.1} parent=47 // pred_region
        %p8883 = scmp.lt.s32.totalorder %s17, 1
        %s8884 = scalar_select %p8883, %s17, 1
        %s8885 = smul.addr %s8884, 32
        %s8886 = smul.addr %s8885, 8
        %s8887 = scalar_lea.vmem %s5, %s8886
      $region52: #{tpu_custom_call.1} parent=47 // pred_fallthru
        _
    $region48: #{tpu_custom_call.1} parent=5 // pred_fallthru
      _
  $region6: #{tpu_custom_call.1} parent=0 // loop_footer
    %s15 = sadd.s32 1, %s11
  $region7: #{tpu_custom_call.1} parent=0 // loop_footer_branch
    %10 = sbr.rel target = $region3
  $region8: #{tpu_custom_call.1} parent=0 // loop_exit
    _

</llo_original>
